<compile_context>
chip_gen: v7x
topology: tpu7x:2x2x1
jax: 0.10.0
libtpu: 0.0.40
codegen_flags: <defaults>
</compile_context>

<pallas_src>
import functools

import jax
import jax.numpy as jnp
from jax.experimental import pallas as pl
from jax.experimental.pallas import tpu as pltpu

KH = KW = 5
C1 = 32          # conv1 out channels
C2 = 64          # conv2 out channels
FC3_OUT = 20
HID = 128
NUM_CLASSES = 10


# ---------------------------------------------------------------------------
# fused kernel: conv1+ReLU -> (fc3·fc4 folded) -> pool1(+pad) -> conv2+ReLU
#               -> (pool2 folded) fc1+ReLU -> fc2, NB images per grid step.
# ---------------------------------------------------------------------------
def _fused_kernel(NB, H, W,
                  x_ref, t1_ref, b1_ref, lp_ref, rm_ref, t2_ref, b2_ref,
                  w1f_ref, fb1_ref, w2h_ref, fb2_ref, o_ref, r1_s, r2_s):
    # x_ref : (NB, H+4, W+4)        zero-padded single-channel images
    # t1_ref: (5*Wp, W*C1)          banded conv1 weights
    # b1_ref: (1, W*C1)             conv1 bias tiled over w
    # lp_ref: (Hp2*NB, NB*H)        vertical 2x2 avg-pool + pad (rows -> (h2pad, n))
    # rm_ref: (W*C1, Wp2*C1)        horizontal 2x2 avg-pool + pad (per channel)
    # t2_ref: (5*Wp2*C1, W2*C2)     banded conv2 weights with fc3·fc4 folded in
    # b2_ref: (1, W2*C2)            conv2 bias tiled over w2
    # w1f_ref: (H2, W2*C2, HID)     fc1 weights with pool2 + NCHW flatten folded in
    # fb1_ref: (1, HID)   w2h_ref: (HID, NC)   fb2_ref: (1, NC)
    # o_ref : (NB, NC)              logits
    # r1_s  : (NB*H, 5*Wp)          conv1 row-im2col scratch
    # r2_s  : (H2*NB, 5*Wp2*C1)     conv2 row-im2col scratch
    H2, W2 = H // 2, W // 2
    Wp = W + 4
    Hp2, Wp2 = H2 + 4, W2 + 4
    WC = Wp2 * C1

    # --- conv1 row-im2col: r1[(n,h), dh*Wp + w'] = xpad[n, h+dh, w'] ---------
    for dh in range(KH):
        win = x_ref[:, dh:dh + H, :]                       # (NB, H, Wp)
        r1_s[:, dh * Wp:(dh + 1) * Wp] = win.reshape(NB * H, Wp)

    # --- conv1 + bias + ReLU as one MXU matmul ------------------------------
    a = jnp.dot(r1_s[...], t1_ref[...],
                preferred_element_type=jnp.float32)        # (NB*H, W*C1)
    a = jnp.maximum(a + b1_ref[...], 0.0)

    # --- pool1 (2x2 avg) with conv2 zero-padding folded in ------------------
    # rows of p are (h2pad, n); cols are (w2pad, ci)
    q = jnp.dot(lp_ref[...], a, preferred_element_type=jnp.float32)
    p = jnp.dot(q, rm_ref[...], preferred_element_type=jnp.float32)

    # --- conv2 row-im2col: 128-lane-aligned 384-wide stores -----------------
    p3 = p.reshape(Hp2, NB, WC)
    for dh in range(KH):
        r2_s[:, dh * WC:(dh + 1) * WC] = p3[dh:dh + H2].reshape(H2 * NB, WC)

    # --- conv2 (fc3·fc4 already folded into t2) + bias + ReLU ---------------
    z2 = jnp.dot(r2_s[...], t2_ref[...],
                 preferred_element_type=jnp.float32)       # (H2*NB, W2*C2)
    z2 = jnp.maximum(z2 + b2_ref[...], 0.0)

    # --- head: pool2 + flatten folded into fc1; rows of z2 are (h2, n) so
    #     each h2 gives a contiguous (NB, W2*C2) slab. --------------------
    hid = jnp.zeros((NB, HID), jnp.float32)
    for h2 in range(H2):
        hid = hid + jnp.dot(z2[h2 * NB:(h2 + 1) * NB, :], w1f_ref[h2],
                            preferred_element_type=jnp.float32)
    hid = jnp.maximum(hid + fb1_ref[...], 0.0)
    o_ref[...] = jnp.dot(hid, w2h_ref[...],
                         preferred_element_type=jnp.float32) + fb2_ref[...]


def simple_cnn_forward(x_nchw, kp):
    """x_nchw: (N, 1, H, W) float32 (same convention as the PyTorch module)."""
    N, _, H, W = x_nchw.shape
    H2, W2 = H // 2, W // 2
    Hp, Wp = H + 4, W + 4
    Hp2, Wp2 = H2 + 4, W2 + 4
    NB = kp["lpool1"].shape[0] // Hp2        # batch tile baked into lpool1
    NC = kp["fc2_w"].shape[1]

    xpad = jnp.pad(x_nchw[:, 0], ((0, 0), (2, 2), (2, 2)))
    npad = pl.cdiv(N, NB) * NB
    if npad != N:
        xpad = jnp.pad(xpad, ((0, npad - N), (0, 0), (0, 0)))

    def const_spec(arr):
        nd = arr.ndim
        return pl.BlockSpec(arr.shape, lambda i, _nd=nd: (0,) * _nd)

    kernel = functools.partial(_fused_kernel, NB, H, W)
    out = pl.pallas_call(
        kernel,
        out_shape=jax.ShapeDtypeStruct((npad, NC), jnp.float32),
        grid=(npad // NB,),
        in_specs=[
            pl.BlockSpec((NB, Hp, Wp), lambda i: (i, 0, 0)),
            const_spec(kp["t1"]), const_spec(kp["b1row"]),
            const_spec(kp["lpool1"]), const_spec(kp["rpool1"]),
            const_spec(kp["t2"]), const_spec(kp["b2row"]),
            const_spec(kp["w1f"]), const_spec(kp["fc1_b"]),
            const_spec(kp["fc2_w"]), const_spec(kp["fc2_b"]),
        ],
        out_specs=pl.BlockSpec((NB, NC), lambda i: (i, 0)),
        scratch_shapes=[
            pltpu.VMEM((NB * H, KH * Wp), jnp.float32),
            pltpu.VMEM((H2 * NB, KH * Wp2 * C1), jnp.float32),
        ],
        compiler_params=pltpu.CompilerParams(
            dimension_semantics=("parallel",),
            vmem_limit_bytes=32 * 1024 * 1024),
    )(xpad, kp["t1"], kp["b1row"], kp["lpool1"], kp["rpool1"], kp["t2"],
      kp["b2row"], kp["w1f"], kp["fc1_b"], kp["fc2_w"], kp["fc2_b"])
    return out[:N]


# ---------------------------------------------------------------------------
# parameters (deterministic synthetic init; layouts documented per entry)
# ---------------------------------------------------------------------------
def init_params(key, inp_size=16, num_classes=NUM_CLASSES):
    flat_dim = inp_size * inp_size * 4
    ks = jax.random.split(key, 10)
    s = 0.05
    return {
        # conv1_w[dh*5+dw, o]      == torch conv1.weight[o, 0, dh, dw]
        "conv1_w": s * jax.random.normal(ks[0], (KH * KW, C1), jnp.float32),
        "conv1_b": s * jax.random.normal(ks[1], (1, C1), jnp.float32),
        # conv2_w[dh*5+dw, ci, co] == torch conv2.weight[co, ci, dh, dw]
        "conv2_w": s * jax.random.normal(ks[2], (KH * KW, C1, C2), jnp.float32),
        "conv2_b": s * jax.random.normal(ks[3], (1, C2), jnp.float32),
        "fc3_w": s * jax.random.normal(ks[4], (C1, FC3_OUT), jnp.float32),  # fc3.weight.T
        "fc4_w": s * jax.random.normal(ks[5], (FC3_OUT, C1), jnp.float32),  # fc4.weight.T
        # fc1_w rows in torch's NCHW-flat order (== fc1.weight.T)
        "fc1_w": s * jax.random.normal(ks[6], (flat_dim, HID), jnp.float32),
        "fc1_b": s * jax.random.normal(ks[7], (1, HID), jnp.float32),
        "fc2_w": s * jax.random.normal(ks[8], (HID, num_classes), jnp.float32),
        "fc2_b": s * jax.random.normal(ks[9], (1, num_classes), jnp.float32),
    }


def prepare_params(p, inp_size, batch_tile=8):
    """One-time algebraic folding / layout precomputation for the fused kernel.

    batch_tile (NB) images are processed per grid step; keep NB a multiple of 8
    and re-budget VMEM (T2 and the folded fc1 dominate) if you raise it or grow
    inp_size (v7x has only 64 MiB physical VMEM).
    """
    H = W = inp_size
    H2, W2, H4, W4 = H // 2, W // 2, H // 4, W // 4
    Wp = W + 4
    Hp2, Wp2 = H2 + 4, W2 + 4
    NB = batch_tile

    # --- conv1 as a banded matrix: T1[dh*Wp + w', w*C1 + c] = w1[dh,w'-w,c] ---
    r = jnp.arange(KH * Wp)
    dh = r // Wp
    wpr = r % Wp
    dw = wpr[:, None] - jnp.arange(W)[None, :]
    valid = (dw >= 0) & (dw < KW)
    tap = dh[:, None] * KW + jnp.clip(dw, 0, KW - 1)
    t1 = jnp.where(valid[:, :, None], p["conv1_w"][tap], 0.0)
    t1 = t1.reshape(KH * Wp, W * C1)
    b1row = jnp.tile(p["conv1_b"], (1, W))

    # --- pool1 (2x2 avg) + conv2 zero-pad as left/right matrices -------------
    lh = 0.5 * ((jnp.arange(Hp2)[:, None] - 2)
                == (jnp.arange(H)[None, :] // 2)).astype(jnp.float32)
    lpool1 = (lh[:, None, None, :]
              * jnp.eye(NB, dtype=jnp.float32)[None, :, :, None]
              ).reshape(Hp2 * NB, NB * H)                     # rows: (h2pad, n)
    rh = 0.5 * ((jnp.arange(Wp2)[None, :] - 2)
                == (jnp.arange(W)[:, None] // 2)).astype(jnp.float32)
    rpool1 = (rh[:, None, :, None]
              * jnp.eye(C1, dtype=jnp.float32)[None, :, None, :]
              ).reshape(W * C1, Wp2 * C1)                     # cols: (w2pad, ci)

    # --- fc3·fc4 (both bias-free, no nonlinearity between) folded into conv2,
    #     conv2 as a banded matrix over (dh, w', ci) -> (w2, co) --------------
    w34 = p["fc3_w"] @ p["fc4_w"]                             # (C1, C1)
    w2f = jnp.einsum("ij,tjo->tio", w34, p["conv2_w"])        # (25, C1, C2)
    r = jnp.arange(KH * Wp2)
    dh = r // Wp2
    wpr = r % Wp2
    dw = wpr[:, None] - jnp.arange(W2)[None, :]
    valid = (dw >= 0) & (dw < KW)
    tap = dh[:, None] * KW + jnp.clip(dw, 0, KW - 1)
    t2 = jnp.where(valid[:, :, None, None], w2f[tap], 0.0)    # (KH*Wp2, W2, C1, C2)
    t2 = t2.transpose(0, 2, 1, 3).reshape(KH * Wp2 * C1, W2 * C2)
    b2row = jnp.tile(p["conv2_b"], (1, W2))

    # --- pool2 + NCHW flatten folded into fc1: rows become (h2, w2, co) ------
    g = p["fc1_w"].reshape(C2, H4, W4, HID).transpose(1, 2, 0, 3)  # (H4,W4,C2,HID)
    g = jnp.repeat(jnp.repeat(g, 2, axis=0), 2, axis=1)            # (H2,W2,C2,HID)
    w1f = 0.25 * g.reshape(H2, W2 * C2, HID)

    return {
        "t1": t1, "b1row": b1row, "lpool1": lpool1, "rpool1": rpool1,
        "t2": t2, "b2row": b2row, "w1f": w1f,
        "fc1_b": p["fc1_b"], "fc2_w": p["fc2_w"], "fc2_b": p["fc2_b"],
    }


# ---------------------------------------------------------------------------
# pure-JAX reference of the PyTorch forward (error=0 path), for verification.
# ---------------------------------------------------------------------------
def reference_forward(x_nchw, p):
    N, _, H, W = x_nchw.shape
    xp = jnp.pad(x_nchw[:, 0], ((0, 0), (2, 2), (2, 2)))
    a = jnp.zeros((N, H, W, C1), jnp.float32)
    for dh in range(KH):
        for dw in range(KW):
            a = a + xp[:, dh:dh + H, dw:dw + W, None] * p["conv1_w"][dh * KW + dw]
    a = jax.nn.relu(a + p["conv1_b"][0])
    a = a @ p["fc3_w"] @ p["fc4_w"]                                 # channel mix
    a = a.reshape(N, H // 2, 2, W // 2, 2, C1).mean(axis=(2, 4))    # pool1
    ap = jnp.pad(a, ((0, 0), (2, 2), (2, 2), (0, 0)))
    z = jnp.zeros((N, H // 2, W // 2, C2), jnp.float32)
    for dh in range(KH):
        for dw in range(KW):
            z = z + jnp.einsum("nhwc,co->nhwo",
                               ap[:, dh:dh + H // 2, dw:dw + W // 2, :],
                               p["conv2_w"][dh * KW + dw])
    z = jax.nn.relu(z + p["conv2_b"][0])
    z = z.reshape(N, H // 4, 2, W // 4, 2, C2).mean(axis=(2, 4))    # pool2
    flat = z.transpose(0, 3, 1, 2).reshape(N, -1)                   # NCHW flatten
    h = jax.nn.relu(flat @ p["fc1_w"] + p["fc1_b"][0])
    return h @ p["fc2_w"] + p["fc2_b"][0]


if __name__ == "__main__":
    key = jax.random.PRNGKey(0)
    k_x, k_p = jax.random.split(key)
    inp_size = 16                                # small MNIST-like shape
    x = jax.random.normal(k_x, (2, 1, inp_size, inp_size), jnp.float32)
    raw_params = init_params(k_p, inp_size=inp_size)
    kparams = prepare_params(raw_params, inp_size=inp_size, batch_tile=8)

    out = jax.jit(simple_cnn_forward)(x, kparams)
    out = jax.block_until_ready(out)
    assert out.shape == (2, NUM_CLASSES) and out.dtype == jnp.float32

    ref = reference_forward(x, raw_params)
    err = float(jnp.max(jnp.abs(out - ref)))
    assert bool(jnp.allclose(out, ref, atol=2e-3, rtol=2e-3)), err
    print("KERNEL_OK")
</pallas_src>

<mosaic_0001>
module attributes {stable_mosaic.version = 11 : i64} {
  func.func @_fused_kernel(%arg0: i32, %arg1: memref<8x20x20xf32, #tpu.memory_space<vmem>>, %arg2: memref<100x512xf32, #tpu.memory_space<vmem>>, %arg3: memref<1x512xf32, #tpu.memory_space<vmem>>, %arg4: memref<96x128xf32, #tpu.memory_space<vmem>>, %arg5: memref<512x384xf32, #tpu.memory_space<vmem>>, %arg6: memref<1920x512xf32, #tpu.memory_space<vmem>>, %arg7: memref<1x512xf32, #tpu.memory_space<vmem>>, %arg8: memref<8x512x128xf32, #tpu.memory_space<vmem>>, %arg9: memref<1x128xf32, #tpu.memory_space<vmem>>, %arg10: memref<128x10xf32, #tpu.memory_space<vmem>>, %arg11: memref<1x10xf32, #tpu.memory_space<vmem>>, %arg12: memref<8x10xf32, #tpu.memory_space<vmem>>, %arg13: memref<128x100xf32, #tpu.memory_space<vmem>>, %arg14: memref<64x1920xf32, #tpu.memory_space<vmem>>) attributes {dimension_semantics = [#tpu.dimension_semantics<parallel>], iteration_bounds = array<i64: 1>, scalar_prefetch = 0 : i64, scratch_operands = 2 : i64, tpu.core_type = #tpu.core_type<tc>, window_params = [{transform_indices = @transform_0, window_bounds = array<i64: 8, 20, 20>}, {pipeline_mode = #tpu.pipeline_mode<synchronous>, transform_indices = @transform_1, window_bounds = array<i64: 100, 512>}, {pipeline_mode = #tpu.pipeline_mode<synchronous>, transform_indices = @transform_2, window_bounds = array<i64: 1, 512>}, {pipeline_mode = #tpu.pipeline_mode<synchronous>, transform_indices = @transform_3, window_bounds = array<i64: 96, 128>}, {pipeline_mode = #tpu.pipeline_mode<synchronous>, transform_indices = @transform_4, window_bounds = array<i64: 512, 384>}, {pipeline_mode = #tpu.pipeline_mode<synchronous>, transform_indices = @transform_5, window_bounds = array<i64: 1920, 512>}, {pipeline_mode = #tpu.pipeline_mode<synchronous>, transform_indices = @transform_6, window_bounds = array<i64: 1, 512>}, {pipeline_mode = #tpu.pipeline_mode<synchronous>, transform_indices = @transform_7, window_bounds = array<i64: 8, 512, 128>}, {pipeline_mode = #tpu.pipeline_mode<synchronous>, transform_indices = @transform_8, window_bounds = array<i64: 1, 128>}, {pipeline_mode = #tpu.pipeline_mode<synchronous>, transform_indices = @transform_9, window_bounds = array<i64: 128, 10>}, {pipeline_mode = #tpu.pipeline_mode<synchronous>, transform_indices = @transform_10, window_bounds = array<i64: 1, 10>}, {transform_indices = @transform_11, window_bounds = array<i64: 8, 10>}]} {
    %c0 = arith.constant 0 : index
    %c0_0 = arith.constant 0 : index
    %c0_1 = arith.constant 0 : index
    %0 = vector.load %arg1[%c0, %c0_0, %c0_1] : memref<8x20x20xf32, #tpu.memory_space<vmem>>, vector<8x16x20xf32>
    %1 = vector.shape_cast %0 : vector<8x16x20xf32> to vector<128x20xf32>
    %c0_2 = arith.constant 0 : index
    %c0_3 = arith.constant 0 : index
    %2 = vector.load %arg13[%c0_2, %c0_3] : memref<128x100xf32, #tpu.memory_space<vmem>>, vector<128x20xf32>
    tpu.vector_store %arg13[%c0_2, %c0_3], %1 {strides = array<i32>} : memref<128x100xf32, #tpu.memory_space<vmem>>, vector<128x20xf32>,
    %c0_4 = arith.constant 0 : index
    %c1 = arith.constant 1 : index
    %c0_5 = arith.constant 0 : index
    %3 = vector.load %arg1[%c0_4, %c1, %c0_5] : memref<8x20x20xf32, #tpu.memory_space<vmem>>, vector<8x16x20xf32>
    %4 = vector.shape_cast %3 : vector<8x16x20xf32> to vector<128x20xf32>
    %c0_6 = arith.constant 0 : index
    %c20 = arith.constant 20 : index
    %5 = vector.load %arg13[%c0_6, %c20] : memref<128x100xf32, #tpu.memory_space<vmem>>, vector<128x20xf32>
    tpu.vector_store %arg13[%c0_6, %c20], %4 {strides = array<i32>} : memref<128x100xf32, #tpu.memory_space<vmem>>, vector<128x20xf32>,
    %c0_7 = arith.constant 0 : index
    %c2 = arith.constant 2 : index
    %c0_8 = arith.constant 0 : index
    %6 = vector.load %arg1[%c0_7, %c2, %c0_8] : memref<8x20x20xf32, #tpu.memory_space<vmem>>, vector<8x16x20xf32>
    %7 = vector.shape_cast %6 : vector<8x16x20xf32> to vector<128x20xf32>
    %c0_9 = arith.constant 0 : index
    %c40 = arith.constant 40 : index
    %8 = vector.load %arg13[%c0_9, %c40] : memref<128x100xf32, #tpu.memory_space<vmem>>, vector<128x20xf32>
    tpu.vector_store %arg13[%c0_9, %c40], %7 {strides = array<i32>} : memref<128x100xf32, #tpu.memory_space<vmem>>, vector<128x20xf32>,
    %c0_10 = arith.constant 0 : index
    %c3 = arith.constant 3 : index
    %c0_11 = arith.constant 0 : index
    %9 = vector.load %arg1[%c0_10, %c3, %c0_11] : memref<8x20x20xf32, #tpu.memory_space<vmem>>, vector<8x16x20xf32>
    %10 = vector.shape_cast %9 : vector<8x16x20xf32> to vector<128x20xf32>
    %c0_12 = arith.constant 0 : index
    %c60 = arith.constant 60 : index
    %11 = vector.load %arg13[%c0_12, %c60] : memref<128x100xf32, #tpu.memory_space<vmem>>, vector<128x20xf32>
    tpu.vector_store %arg13[%c0_12, %c60], %10 {strides = array<i32>} : memref<128x100xf32, #tpu.memory_space<vmem>>, vector<128x20xf32>,
    %c0_13 = arith.constant 0 : index
    %c4 = arith.constant 4 : index
    %c0_14 = arith.constant 0 : index
    %12 = vector.load %arg1[%c0_13, %c4, %c0_14] : memref<8x20x20xf32, #tpu.memory_space<vmem>>, vector<8x16x20xf32>
    %13 = vector.shape_cast %12 : vector<8x16x20xf32> to vector<128x20xf32>
    %c0_15 = arith.constant 0 : index
    %c80 = arith.constant 80 : index
    %14 = vector.load %arg13[%c0_15, %c80] : memref<128x100xf32, #tpu.memory_space<vmem>>, vector<128x20xf32>
    tpu.vector_store %arg13[%c0_15, %c80], %13 {strides = array<i32>} : memref<128x100xf32, #tpu.memory_space<vmem>>, vector<128x20xf32>,
    %c0_16 = arith.constant 0 : index
    %c0_17 = arith.constant 0 : index
    %15 = vector.load %arg13[%c0_16, %c0_17] : memref<128x100xf32, #tpu.memory_space<vmem>>, vector<128x100xf32>
    %c0_18 = arith.constant 0 : index
    %c0_19 = arith.constant 0 : index
    %16 = vector.load %arg2[%c0_18, %c0_19] : memref<100x512xf32, #tpu.memory_space<vmem>>, vector<100x512xf32>
    %cst = arith.constant dense<0.000000e+00> : vector<128x512xf32>
    %17 = tpu.matmul %15, %16, %cst {dimension_numbers = #tpu.dot_dimension_numbers<[1], [0], [0], [1], [0, 0, 1, 1], [], []>} : vector<128x100xf32>, vector<100x512xf32>, vector<128x512xf32> -> vector<128x512xf32>
    %c0_20 = arith.constant 0 : index
    %c0_21 = arith.constant 0 : index
    %18 = vector.load %arg3[%c0_20, %c0_21] : memref<1x512xf32, #tpu.memory_space<vmem>>, vector<1x512xf32>
    %19 = vector.broadcast %18 : vector<1x512xf32> to vector<128x512xf32>
    %20 = arith.addf %17, %19 : vector<128x512xf32>
    %cst_22 = arith.constant 0.000000e+00 : f32
    %21 = vector.broadcast %cst_22 : f32 to vector<128x512xf32>
    %22 = arith.maximumf %20, %21 : vector<128x512xf32>
    %c0_23 = arith.constant 0 : index
    %c0_24 = arith.constant 0 : index
    %23 = vector.load %arg4[%c0_23, %c0_24] : memref<96x128xf32, #tpu.memory_space<vmem>>, vector<96x128xf32>
    %cst_25 = arith.constant dense<0.000000e+00> : vector<96x512xf32>
    %24 = tpu.matmul %23, %22, %cst_25 {dimension_numbers = #tpu.dot_dimension_numbers<[1], [0], [0], [1], [0, 0, 1, 1], [], []>} : vector<96x128xf32>, vector<128x512xf32>, vector<96x512xf32> -> vector<96x512xf32>
    %c0_26 = arith.constant 0 : index
    %c0_27 = arith.constant 0 : index
    %25 = vector.load %arg5[%c0_26, %c0_27] : memref<512x384xf32, #tpu.memory_space<vmem>>, vector<512x384xf32>
    %cst_28 = arith.constant dense<0.000000e+00> : vector<96x384xf32>
    %26 = tpu.matmul %24, %25, %cst_28 {dimension_numbers = #tpu.dot_dimension_numbers<[1], [0], [0], [1], [0, 0, 1, 1], [], []>} : vector<96x512xf32>, vector<512x384xf32>, vector<96x384xf32> -> vector<96x384xf32>
    %27 = vector.shape_cast %26 : vector<96x384xf32> to vector<12x8x384xf32>
    %28 = vector.extract_strided_slice %27 {offsets = [0, 0, 0], sizes = [8, 8, 384], strides = [1, 1, 1]} : vector<12x8x384xf32> to vector<8x8x384xf32>
    %29 = vector.shape_cast %28 : vector<8x8x384xf32> to vector<64x384xf32>
    %c0_29 = arith.constant 0 : index
    %c0_30 = arith.constant 0 : index
    %30 = vector.load %arg14[%c0_29, %c0_30] : memref<64x1920xf32, #tpu.memory_space<vmem>>, vector<64x384xf32>
    tpu.vector_store %arg14[%c0_29, %c0_30], %29 {strides = array<i32>} : memref<64x1920xf32, #tpu.memory_space<vmem>>, vector<64x384xf32>,
    %31 = vector.extract_strided_slice %27 {offsets = [1, 0, 0], sizes = [8, 8, 384], strides = [1, 1, 1]} : vector<12x8x384xf32> to vector<8x8x384xf32>
    %32 = vector.shape_cast %31 : vector<8x8x384xf32> to vector<64x384xf32>
    %c0_31 = arith.constant 0 : index
    %c384 = arith.constant 384 : index
    %33 = vector.load %arg14[%c0_31, %c384] : memref<64x1920xf32, #tpu.memory_space<vmem>>, vector<64x384xf32>
    tpu.vector_store %arg14[%c0_31, %c384], %32 {strides = array<i32>} : memref<64x1920xf32, #tpu.memory_space<vmem>>, vector<64x384xf32>,
    %34 = vector.extract_strided_slice %27 {offsets = [2, 0, 0], sizes = [8, 8, 384], strides = [1, 1, 1]} : vector<12x8x384xf32> to vector<8x8x384xf32>
    %35 = vector.shape_cast %34 : vector<8x8x384xf32> to vector<64x384xf32>
    %c0_32 = arith.constant 0 : index
    %c768 = arith.constant 768 : index
    %36 = vector.load %arg14[%c0_32, %c768] : memref<64x1920xf32, #tpu.memory_space<vmem>>, vector<64x384xf32>
    tpu.vector_store %arg14[%c0_32, %c768], %35 {strides = array<i32>} : memref<64x1920xf32, #tpu.memory_space<vmem>>, vector<64x384xf32>,
    %37 = vector.extract_strided_slice %27 {offsets = [3, 0, 0], sizes = [8, 8, 384], strides = [1, 1, 1]} : vector<12x8x384xf32> to vector<8x8x384xf32>
    %38 = vector.shape_cast %37 : vector<8x8x384xf32> to vector<64x384xf32>
    %c0_33 = arith.constant 0 : index
    %c1152 = arith.constant 1152 : index
    %39 = vector.load %arg14[%c0_33, %c1152] : memref<64x1920xf32, #tpu.memory_space<vmem>>, vector<64x384xf32>
    tpu.vector_store %arg14[%c0_33, %c1152], %38 {strides = array<i32>} : memref<64x1920xf32, #tpu.memory_space<vmem>>, vector<64x384xf32>,
    %40 = vector.extract_strided_slice %27 {offsets = [4, 0, 0], sizes = [8, 8, 384], strides = [1, 1, 1]} : vector<12x8x384xf32> to vector<8x8x384xf32>
    %41 = vector.shape_cast %40 : vector<8x8x384xf32> to vector<64x384xf32>
    %c0_34 = arith.constant 0 : index
    %c1536 = arith.constant 1536 : index
    %42 = vector.load %arg14[%c0_34, %c1536] : memref<64x1920xf32, #tpu.memory_space<vmem>>, vector<64x384xf32>
    tpu.vector_store %arg14[%c0_34, %c1536], %41 {strides = array<i32>} : memref<64x1920xf32, #tpu.memory_space<vmem>>, vector<64x384xf32>,
    %c0_35 = arith.constant 0 : index
    %c0_36 = arith.constant 0 : index
    %43 = vector.load %arg14[%c0_35, %c0_36] : memref<64x1920xf32, #tpu.memory_space<vmem>>, vector<64x1920xf32>
    %c0_37 = arith.constant 0 : index
    %c0_38 = arith.constant 0 : index
    %44 = vector.load %arg6[%c0_37, %c0_38] : memref<1920x512xf32, #tpu.memory_space<vmem>>, vector<1920x512xf32>
    %cst_39 = arith.constant dense<0.000000e+00> : vector<64x512xf32>
    %45 = tpu.matmul %43, %44, %cst_39 {dimension_numbers = #tpu.dot_dimension_numbers<[1], [0], [0], [1], [0, 0, 1, 1], [], []>} : vector<64x1920xf32>, vector<1920x512xf32>, vector<64x512xf32> -> vector<64x512xf32>
    %c0_40 = arith.constant 0 : index
    %c0_41 = arith.constant 0 : index
    %46 = vector.load %arg7[%c0_40, %c0_41] : memref<1x512xf32, #tpu.memory_space<vmem>>, vector<1x512xf32>
    %47 = vector.broadcast %46 : vector<1x512xf32> to vector<64x512xf32>
    %48 = arith.addf %45, %47 : vector<64x512xf32>
    %cst_42 = arith.constant 0.000000e+00 : f32
    %49 = vector.broadcast %cst_42 : f32 to vector<64x512xf32>
    %50 = arith.maximumf %48, %49 : vector<64x512xf32>
    %cst_43 = arith.constant 0.000000e+00 : f32
    %51 = vector.broadcast %cst_43 : f32 to vector<8x128xf32>
    %52 = vector.extract_strided_slice %50 {offsets = [0, 0], sizes = [8, 512], strides = [1, 1]} : vector<64x512xf32> to vector<8x512xf32>
    %c0_44 = arith.constant 0 : index
    %c0_45 = arith.constant 0 : index
    %c0_46 = arith.constant 0 : index
    %53 = vector.load %arg8[%c0_44, %c0_45, %c0_46] : memref<8x512x128xf32, #tpu.memory_space<vmem>>, vector<1x512x128xf32>
    %54 = vector.shape_cast %53 : vector<1x512x128xf32> to vector<512x128xf32>
    %cst_47 = arith.constant dense<0.000000e+00> : vector<8x128xf32>
    %55 = tpu.matmul %52, %54, %cst_47 {dimension_numbers = #tpu.dot_dimension_numbers<[1], [0], [0], [1], [0, 0, 1, 1], [], []>} : vector<8x512xf32>, vector<512x128xf32>, vector<8x128xf32> -> vector<8x128xf32>
    %56 = arith.addf %51, %55 : vector<8x128xf32>
    %57 = vector.extract_strided_slice %50 {offsets = [8, 0], sizes = [8, 512], strides = [1, 1]} : vector<64x512xf32> to vector<8x512xf32>
    %c1_48 = arith.constant 1 : index
    %c0_49 = arith.constant 0 : index
    %c0_50 = arith.constant 0 : index
    %58 = vector.load %arg8[%c1_48, %c0_49, %c0_50] : memref<8x512x128xf32, #tpu.memory_space<vmem>>, vector<1x512x128xf32>
    %59 = vector.shape_cast %58 : vector<1x512x128xf32> to vector<512x128xf32>
    %cst_51 = arith.constant dense<0.000000e+00> : vector<8x128xf32>
    %60 = tpu.matmul %57, %59, %cst_51 {dimension_numbers = #tpu.dot_dimension_numbers<[1], [0], [0], [1], [0, 0, 1, 1], [], []>} : vector<8x512xf32>, vector<512x128xf32>, vector<8x128xf32> -> vector<8x128xf32>
    %61 = arith.addf %56, %60 : vector<8x128xf32>
    %62 = vector.extract_strided_slice %50 {offsets = [16, 0], sizes = [8, 512], strides = [1, 1]} : vector<64x512xf32> to vector<8x512xf32>
    %c2_52 = arith.constant 2 : index
    %c0_53 = arith.constant 0 : index
    %c0_54 = arith.constant 0 : index
    %63 = vector.load %arg8[%c2_52, %c0_53, %c0_54] : memref<8x512x128xf32, #tpu.memory_space<vmem>>, vector<1x512x128xf32>
    %64 = vector.shape_cast %63 : vector<1x512x128xf32> to vector<512x128xf32>
    %cst_55 = arith.constant dense<0.000000e+00> : vector<8x128xf32>
    %65 = tpu.matmul %62, %64, %cst_55 {dimension_numbers = #tpu.dot_dimension_numbers<[1], [0], [0], [1], [0, 0, 1, 1], [], []>} : vector<8x512xf32>, vector<512x128xf32>, vector<8x128xf32> -> vector<8x128xf32>
    %66 = arith.addf %61, %65 : vector<8x128xf32>
    %67 = vector.extract_strided_slice %50 {offsets = [24, 0], sizes = [8, 512], strides = [1, 1]} : vector<64x512xf32> to vector<8x512xf32>
    %c3_56 = arith.constant 3 : index
    %c0_57 = arith.constant 0 : index
    %c0_58 = arith.constant 0 : index
    %68 = vector.load %arg8[%c3_56, %c0_57, %c0_58] : memref<8x512x128xf32, #tpu.memory_space<vmem>>, vector<1x512x128xf32>
    %69 = vector.shape_cast %68 : vector<1x512x128xf32> to vector<512x128xf32>
    %cst_59 = arith.constant dense<0.000000e+00> : vector<8x128xf32>
    %70 = tpu.matmul %67, %69, %cst_59 {dimension_numbers = #tpu.dot_dimension_numbers<[1], [0], [0], [1], [0, 0, 1, 1], [], []>} : vector<8x512xf32>, vector<512x128xf32>, vector<8x128xf32> -> vector<8x128xf32>
    %71 = arith.addf %66, %70 : vector<8x128xf32>
    %72 = vector.extract_strided_slice %50 {offsets = [32, 0], sizes = [8, 512], strides = [1, 1]} : vector<64x512xf32> to vector<8x512xf32>
    %c4_60 = arith.constant 4 : index
    %c0_61 = arith.constant 0 : index
    %c0_62 = arith.constant 0 : index
    %73 = vector.load %arg8[%c4_60, %c0_61, %c0_62] : memref<8x512x128xf32, #tpu.memory_space<vmem>>, vector<1x512x128xf32>
    %74 = vector.shape_cast %73 : vector<1x512x128xf32> to vector<512x128xf32>
    %cst_63 = arith.constant dense<0.000000e+00> : vector<8x128xf32>
    %75 = tpu.matmul %72, %74, %cst_63 {dimension_numbers = #tpu.dot_dimension_numbers<[1], [0], [0], [1], [0, 0, 1, 1], [], []>} : vector<8x512xf32>, vector<512x128xf32>, vector<8x128xf32> -> vector<8x128xf32>
    %76 = arith.addf %71, %75 : vector<8x128xf32>
    %77 = vector.extract_strided_slice %50 {offsets = [40, 0], sizes = [8, 512], strides = [1, 1]} : vector<64x512xf32> to vector<8x512xf32>
    %c5 = arith.constant 5 : index
    %c0_64 = arith.constant 0 : index
    %c0_65 = arith.constant 0 : index
    %78 = vector.load %arg8[%c5, %c0_64, %c0_65] : memref<8x512x128xf32, #tpu.memory_space<vmem>>, vector<1x512x128xf32>
    %79 = vector.shape_cast %78 : vector<1x512x128xf32> to vector<512x128xf32>
    %cst_66 = arith.constant dense<0.000000e+00> : vector<8x128xf32>
    %80 = tpu.matmul %77, %79, %cst_66 {dimension_numbers = #tpu.dot_dimension_numbers<[1], [0], [0], [1], [0, 0, 1, 1], [], []>} : vector<8x512xf32>, vector<512x128xf32>, vector<8x128xf32> -> vector<8x128xf32>
    %81 = arith.addf %76, %80 : vector<8x128xf32>
    %82 = vector.extract_strided_slice %50 {offsets = [48, 0], sizes = [8, 512], strides = [1, 1]} : vector<64x512xf32> to vector<8x512xf32>
    %c6 = arith.constant 6 : index
    %c0_67 = arith.constant 0 : index
    %c0_68 = arith.constant 0 : index
    %83 = vector.load %arg8[%c6, %c0_67, %c0_68] : memref<8x512x128xf32, #tpu.memory_space<vmem>>, vector<1x512x128xf32>
    %84 = vector.shape_cast %83 : vector<1x512x128xf32> to vector<512x128xf32>
    %cst_69 = arith.constant dense<0.000000e+00> : vector<8x128xf32>
    %85 = tpu.matmul %82, %84, %cst_69 {dimension_numbers = #tpu.dot_dimension_numbers<[1], [0], [0], [1], [0, 0, 1, 1], [], []>} : vector<8x512xf32>, vector<512x128xf32>, vector<8x128xf32> -> vector<8x128xf32>
    %86 = arith.addf %81, %85 : vector<8x128xf32>
    %87 = vector.extract_strided_slice %50 {offsets = [56, 0], sizes = [8, 512], strides = [1, 1]} : vector<64x512xf32> to vector<8x512xf32>
    %c7 = arith.constant 7 : index
    %c0_70 = arith.constant 0 : index
    %c0_71 = arith.constant 0 : index
    %88 = vector.load %arg8[%c7, %c0_70, %c0_71] : memref<8x512x128xf32, #tpu.memory_space<vmem>>, vector<1x512x128xf32>
    %89 = vector.shape_cast %88 : vector<1x512x128xf32> to vector<512x128xf32>
    %cst_72 = arith.constant dense<0.000000e+00> : vector<8x128xf32>
    %90 = tpu.matmul %87, %89, %cst_72 {dimension_numbers = #tpu.dot_dimension_numbers<[1], [0], [0], [1], [0, 0, 1, 1], [], []>} : vector<8x512xf32>, vector<512x128xf32>, vector<8x128xf32> -> vector<8x128xf32>
    %91 = arith.addf %86, %90 : vector<8x128xf32>
    %c0_73 = arith.constant 0 : index
    %c0_74 = arith.constant 0 : index
    %92 = vector.load %arg9[%c0_73, %c0_74] : memref<1x128xf32, #tpu.memory_space<vmem>>, vector<1x128xf32>
    %93 = vector.broadcast %92 : vector<1x128xf32> to vector<8x128xf32>
    %94 = arith.addf %91, %93 : vector<8x128xf32>
    %cst_75 = arith.constant 0.000000e+00 : f32
    %95 = vector.broadcast %cst_75 : f32 to vector<8x128xf32>
    %96 = arith.maximumf %94, %95 : vector<8x128xf32>
    %c0_76 = arith.constant 0 : index
    %c0_77 = arith.constant 0 : index
    %97 = vector.load %arg10[%c0_76, %c0_77] : memref<128x10xf32, #tpu.memory_space<vmem>>, vector<128x10xf32>
    %cst_78 = arith.constant dense<0.000000e+00> : vector<8x10xf32>
    %98 = tpu.matmul %96, %97, %cst_78 {dimension_numbers = #tpu.dot_dimension_numbers<[1], [0], [0], [1], [0, 0, 1, 1], [], []>} : vector<8x128xf32>, vector<128x10xf32>, vector<8x10xf32> -> vector<8x10xf32>
    %c0_79 = arith.constant 0 : index
    %c0_80 = arith.constant 0 : index
    %99 = vector.load %arg11[%c0_79, %c0_80] : memref<1x10xf32, #tpu.memory_space<vmem>>, vector<1x10xf32>
    %100 = vector.broadcast %99 : vector<1x10xf32> to vector<8x10xf32>
    %101 = arith.addf %98, %100 : vector<8x10xf32>
    %c0_81 = arith.constant 0 : index
    %c0_82 = arith.constant 0 : index
    %102 = vector.load %arg12[%c0_81, %c0_82] : memref<8x10xf32, #tpu.memory_space<vmem>>, vector<8x10xf32>
    tpu.vector_store %arg12[%c0_81, %c0_82], %101 {strides = array<i32>} : memref<8x10xf32, #tpu.memory_space<vmem>>, vector<8x10xf32>,
    return
  }
  func.func @transform_0(%arg0: i32) -> (i32, i32, i32) {
    %c0_i32 = arith.constant 0 : i32
    %c0_i32_0 = arith.constant 0 : i32
    %c0_i32_1 = arith.constant 0 : i32
    return %arg0, %c0_i32, %c0_i32_0 : i32, i32, i32
  }
  func.func @transform_1(%arg0: i32) -> (i32, i32) {
    %c0_i32 = arith.constant 0 : i32
    %c0_i32_0 = arith.constant 0 : i32
    %c0_i32_1 = arith.constant 0 : i32
    return %c0_i32, %c0_i32_0 : i32, i32
  }
  func.func @transform_2(%arg0: i32) -> (i32, i32) {
    %c0_i32 = arith.constant 0 : i32
    %c0_i32_0 = arith.constant 0 : i32
    %c0_i32_1 = arith.constant 0 : i32
    return %c0_i32, %c0_i32_0 : i32, i32
  }
  func.func @transform_3(%arg0: i32) -> (i32, i32) {
    %c0_i32 = arith.constant 0 : i32
    %c0_i32_0 = arith.constant 0 : i32
    %c0_i32_1 = arith.constant 0 : i32
    return %c0_i32, %c0_i32_0 : i32, i32
  }
  func.func @transform_4(%arg0: i32) -> (i32, i32) {
    %c0_i32 = arith.constant 0 : i32
    %c0_i32_0 = arith.constant 0 : i32
    %c0_i32_1 = arith.constant 0 : i32
    return %c0_i32, %c0_i32_0 : i32, i32
  }
  func.func @transform_5(%arg0: i32) -> (i32, i32) {
    %c0_i32 = arith.constant 0 : i32
    %c0_i32_0 = arith.constant 0 : i32
    %c0_i32_1 = arith.constant 0 : i32
    return %c0_i32, %c0_i32_0 : i32, i32
  }
  func.func @transform_6(%arg0: i32) -> (i32, i32) {
    %c0_i32 = arith.constant 0 : i32
    %c0_i32_0 = arith.constant 0 : i32
    %c0_i32_1 = arith.constant 0 : i32
    return %c0_i32, %c0_i32_0 : i32, i32
  }
  func.func @transform_7(%arg0: i32) -> (i32, i32, i32) {
    %c0_i32 = arith.constant 0 : i32
    %c0_i32_0 = arith.constant 0 : i32
    %c0_i32_1 = arith.constant 0 : i32
    %c0_i32_2 = arith.constant 0 : i32
    return %c0_i32, %c0_i32_0, %c0_i32_1 : i32, i32, i32
  }
  func.func @transform_8(%arg0: i32) -> (i32, i32) {
    %c0_i32 = arith.constant 0 : i32
    %c0_i32_0 = arith.constant 0 : i32
    %c0_i32_1 = arith.constant 0 : i32
    return %c0_i32, %c0_i32_0 : i32, i32
  }
  func.func @transform_9(%arg0: i32) -> (i32, i32) {
    %c0_i32 = arith.constant 0 : i32
    %c0_i32_0 = arith.constant 0 : i32
    %c0_i32_1 = arith.constant 0 : i32
    return %c0_i32, %c0_i32_0 : i32, i32
  }
  func.func @transform_10(%arg0: i32) -> (i32, i32) {
    %c0_i32 = arith.constant 0 : i32
    %c0_i32_0 = arith.constant 0 : i32
    %c0_i32_1 = arith.constant 0 : i32
    return %c0_i32, %c0_i32_0 : i32, i32
  }
  func.func @transform_11(%arg0: i32) -> (i32, i32) {
    %c0_i32 = arith.constant 0 : i32
    %c0_i32_0 = arith.constant 0 : i32
    return %arg0, %c0_i32 : i32, i32
  }
}

</mosaic_0001>

<llo_original>
// kernel: simple_cnn_forward.1
$region0: #{simple_cnn_forward.1}
  #allocation0 [shape = 'u32[]', space=smem, size = 0x4, offset = 0x4, fixed_abs, tag = 'smem constant byte address 0x4 - core index']
  #allocation1 [shape = 'u32[144,128]{1,0:T(1,128)}', space=vmem, size = 0x12000, scoped, tag = 'internal scratch']
  #allocation2 [shape = 'f32[128,100]{1,0:T(8,128)}', space=vmem, size = 0x10000, scoped, tag = 'scratch operand']
  #allocation3 [shape = 'f32[64,1920]{1,0:T(8,128)}', space=vmem, size = 0x78000, scoped, tag = 'scratch operand']
  %s0 = inlined_call_operand.vmem [shape: f32[8,20,20], index: 0, kind: input, shape index: {}]
  %s1 = inlined_call_operand.hbm [shape: f32[100,512], index: 1, kind: input, shape index: {}]
  %s2 = inlined_call_operand.hbm [shape: f32[1,512], index: 2, kind: input, shape index: {}]
  %s3 = inlined_call_operand.hbm [shape: f32[96,128], index: 3, kind: input, shape index: {}]
  %s4 = inlined_call_operand.hbm [shape: f32[512,384], index: 4, kind: input, shape index: {}]
  %s5 = inlined_call_operand.hbm [shape: f32[1920,512], index: 5, kind: input, shape index: {}]
  %s6 = inlined_call_operand.hbm [shape: f32[1,512], index: 6, kind: input, shape index: {}]
  %s7 = inlined_call_operand.hbm [shape: f32[8,512,128], index: 7, kind: input, shape index: {}]
  %s8 = inlined_call_operand.hbm [shape: f32[1,128], index: 8, kind: input, shape index: {}]
  %s9 = inlined_call_operand.vmem [shape: f32[128,10], index: 9, kind: input, shape index: {}]
  %s10 = inlined_call_operand.hbm [shape: f32[1,10], index: 10, kind: input, shape index: {}]
  %s11 = inlined_call_operand.vmem [shape: f32[8,10], index: 11, kind: output, shape index: {}]
  %s12 = sld [smem:[#allocation0]]
  $region90: #{simple_cnn_forward.1} parent=0
    _
  %s14 = ssub.s32 1, %s12
  %s15 = scalar_select 0, %s14, %s12
  $region1: #{simple_cnn_forward.1} parent=0
    #allocation4 [shape = 'u8[212992]{0}', space=vmem, size = 0x34000, scoped, tag = 'input window, operand 1, single buffered']
    #allocation5 [shape = 's32[1]{0}', space=sflag, size = 0x4, scoped, tag = 'scoped memory for simple_cnn_forward.1']
    #allocation6 [shape = 'u8[2048]{0}', space=vmem, size = 0x800, scoped, tag = 'input window, operand 2, single buffered']
    #allocation7 [shape = 's32[1]{0}', space=sflag, size = 0x4, scoped, tag = 'scoped memory for simple_cnn_forward.1']
    #allocation8 [shape = 'u8[49152]{0}', space=vmem, size = 0xc000, scoped, tag = 'input window, operand 3, single buffered']
    #allocation9 [shape = 'u8[786432]{0}', space=vmem, size = 0xc0000, scoped, tag = 'input window, operand 4, single buffered']
    #allocation10 [shape = 's32[1]{0}', space=sflag, size = 0x4, scoped, tag = 'scoped memory for simple_cnn_forward.1']
    #allocation11 [shape = 'u8[3932160]{0}', space=vmem, size = 0x3c0000, scoped, tag = 'input window, operand 5, single buffered']
    #allocation12 [shape = 'u8[2048]{0}', space=vmem, size = 0x800, scoped, tag = 'input window, operand 6, single buffered']
    #allocation13 [shape = 's32[1]{0}', space=sflag, size = 0x4, scoped, tag = 'scoped memory for simple_cnn_forward.1']
    #allocation14 [shape = 'u8[2097152]{0}', space=vmem, size = 0x200000, scoped, tag = 'input window, operand 7, single buffered']
    #allocation15 [shape = 'u8[512]{0}', space=vmem, size = 0x400, scoped, tag = 'input window, operand 8, single buffered']
    #allocation16 [shape = 's32[1]{0}', space=sflag, size = 0x4, scoped, tag = 'scoped memory for simple_cnn_forward.1']
    #allocation17 [shape = 'u8[512]{0}', space=vmem, size = 0x400, scoped, tag = 'input window, operand 10, single buffered']
    %16 = vsyncpa [#allocation5], 0
    %17 = vsyncpa [#allocation7], 0
    %18 = vsyncpa [#allocation10], 0
    %19 = vsyncpa [#allocation13], 0
    %20 = vsyncpa [#allocation16], 0
    // Predicated region
    $region2: #{simple_cnn_forward.1} parent=1 // pred_check
      _
    $region3: #{simple_cnn_forward.1} parent=1 // pred_check_branch
      %22 = sbr.rel (0) target = $region5
    $region4: #{simple_cnn_forward.1} parent=1 // pred_region
      _
    $region5: #{simple_cnn_forward.1} parent=1 // pred_fallthru
      _
    // Predicated region
    $region6: #{simple_cnn_forward.1} parent=1 // pred_check
      _
    $region7: #{simple_cnn_forward.1} parent=1 // pred_check_branch
      %24 = sbr.rel (0) target = $region9
    $region8: #{simple_cnn_forward.1} parent=1 // pred_region
      %s26 = ssub.s32 6656, 6656
      %27 = vsyncadd [#allocation5], %s26
      %s28 = sshll.u32 [#allocation4], 4
      %s29 = int_to_ptr.vmem [resolvable:$true] %s28
      %34 = dma.hbm_to_vmem [thread:$0]  %s1, 6656, %s29, [#allocation5], 512, 512, 32
    $region9: #{simple_cnn_forward.1} parent=1 // pred_fallthru
      _
    // Predicated region
    $region10: #{simple_cnn_forward.1} parent=1 // pred_check
      _
    $region11: #{simple_cnn_forward.1} parent=1 // pred_check_branch
      %36 = sbr.rel (0) target = $region13
    $region12: #{simple_cnn_forward.1} parent=1 // pred_region
      %s38 = ssub.s32 64, 64
      %39 = vsyncadd [#allocation7], %s38
      %s41 = sshll.u32 [#allocation6], 4
      %s42 = int_to_ptr.vmem [resolvable:$true] %s41
      %44 = dma.hbm_to_vmem [thread:$0]  %s2, 64, %s42, [#allocation7]
    $region13: #{simple_cnn_forward.1} parent=1 // pred_fallthru
      _
    // Predicated region
    $region14: #{simple_cnn_forward.1} parent=1 // pred_check
      _
    $region15: #{simple_cnn_forward.1} parent=1 // pred_check_branch
      %46 = sbr.rel (0) target = $region17
    $region16: #{simple_cnn_forward.1} parent=1 // pred_region
      %s48 = ssub.s32 1536, 1536
      %49 = vsyncadd [#allocation7], %s48
      %s50 = sshll.u32 [#allocation8], 4
      %s51 = int_to_ptr.vmem [resolvable:$true] %s50
      %56 = dma.hbm_to_vmem [thread:$0]  %s3, 1536, %s51, [#allocation7], 128, 128, 8
    $region17: #{simple_cnn_forward.1} parent=1 // pred_fallthru
      _
    // Predicated region
    $region18: #{simple_cnn_forward.1} parent=1 // pred_check
      _
    $region19: #{simple_cnn_forward.1} parent=1 // pred_check_branch
      %58 = sbr.rel (0) target = $region21
    $region20: #{simple_cnn_forward.1} parent=1 // pred_region
      %s60 = ssub.s32 24576, 24576
      %61 = vsyncadd [#allocation10], %s60
      %s62 = sshll.u32 [#allocation9], 4
      %s63 = int_to_ptr.vmem [resolvable:$true] %s62
      %68 = dma.hbm_to_vmem [thread:$0]  %s4, 24576, %s63, [#allocation10], 384, 384, 24
    $region21: #{simple_cnn_forward.1} parent=1 // pred_fallthru
      _
    // Predicated region
    $region22: #{simple_cnn_forward.1} parent=1 // pred_check
      _
    $region23: #{simple_cnn_forward.1} parent=1 // pred_check_branch
      %70 = sbr.rel (0) target = $region25
    $region24: #{simple_cnn_forward.1} parent=1 // pred_region
      %s72 = ssub.s32 122880, 122880
      %73 = vsyncadd [#allocation10], %s72
      %s74 = sshll.u32 [#allocation11], 4
      %s75 = int_to_ptr.vmem [resolvable:$true] %s74
      %80 = dma.hbm_to_vmem [thread:$0]  %s5, 122880, %s75, [#allocation10], 512, 512, 32
    $region25: #{simple_cnn_forward.1} parent=1 // pred_fallthru
      _
    // Predicated region
    $region26: #{simple_cnn_forward.1} parent=1 // pred_check
      _
    $region27: #{simple_cnn_forward.1} parent=1 // pred_check_branch
      %82 = sbr.rel (0) target = $region29
    $region28: #{simple_cnn_forward.1} parent=1 // pred_region
      %s84 = ssub.s32 64, 64
      %85 = vsyncadd [#allocation13], %s84
      %s87 = sshll.u32 [#allocation12], 4
      %s88 = int_to_ptr.vmem [resolvable:$true] %s87
      %90 = dma.hbm_to_vmem [thread:$0]  %s6, 64, %s88, [#allocation13]
    $region29: #{simple_cnn_forward.1} parent=1 // pred_fallthru
      _
    // Predicated region
    $region30: #{simple_cnn_forward.1} parent=1 // pred_check
      _
    $region31: #{simple_cnn_forward.1} parent=1 // pred_check_branch
      %92 = sbr.rel (0) target = $region33
    $region32: #{simple_cnn_forward.1} parent=1 // pred_region
      %s94 = ssub.s32 65536, 65536
      %95 = vsyncadd [#allocation13], %s94
      %s96 = sshll.u32 [#allocation14], 4
      %s97 = int_to_ptr.vmem [resolvable:$true] %s96
      %102 = dma.hbm_to_vmem [thread:$0]  %s7, 65536, %s97, [#allocation13], 128, 128, 8
    $region33: #{simple_cnn_forward.1} parent=1 // pred_fallthru
      _
    // Predicated region
    $region34: #{simple_cnn_forward.1} parent=1 // pred_check
      _
    $region35: #{simple_cnn_forward.1} parent=1 // pred_check_branch
      %104 = sbr.rel (0) target = $region37
    $region36: #{simple_cnn_forward.1} parent=1 // pred_region
      %s106 = ssub.s32 16, 16
      %107 = vsyncadd [#allocation16], %s106
      %s109 = sshll.u32 [#allocation15], 4
      %s110 = int_to_ptr.vmem [resolvable:$true] %s109
      %112 = dma.hbm_to_vmem [thread:$0]  %s8, 16, %s110, [#allocation16]
    $region37: #{simple_cnn_forward.1} parent=1 // pred_fallthru
      _
    // Predicated region
    $region38: #{simple_cnn_forward.1} parent=1 // pred_check
      _
    $region39: #{simple_cnn_forward.1} parent=1 // pred_check_branch
      %114 = sbr.rel (0) target = $region41
    $region40: #{simple_cnn_forward.1} parent=1 // pred_region
      _
    $region41: #{simple_cnn_forward.1} parent=1 // pred_fallthru
      _
    // Predicated region
    $region42: #{simple_cnn_forward.1} parent=1 // pred_check
      _
    $region43: #{simple_cnn_forward.1} parent=1 // pred_check_branch
      %116 = sbr.rel (0) target = $region45
    $region44: #{simple_cnn_forward.1} parent=1 // pred_region
      %s118 = ssub.s32 16, 16
      %119 = vsyncadd [#allocation16], %s118
      %s121 = sshll.u32 [#allocation17], 4
      %s122 = int_to_ptr.vmem [resolvable:$true] %s121
      %124 = dma.hbm_to_vmem [thread:$0]  %s10, 16, %s122, [#allocation16]
    $region45: #{simple_cnn_forward.1} parent=1 // pred_fallthru
      _
    // Predicated region
    $region46: #{simple_cnn_forward.1} parent=1 // pred_check
      _
    $region47: #{simple_cnn_forward.1} parent=1 // pred_check_branch
      %126 = sbr.rel (0) target = $region49
    $region48: #{simple_cnn_forward.1} parent=1 // pred_region
      %127 = dma.done [#allocation5], 6656
    $region49: #{simple_cnn_forward.1} parent=1 // pred_fallthru
      _
    // Predicated region
    $region50: #{simple_cnn_forward.1} parent=1 // pred_check
      _
    $region51: #{simple_cnn_forward.1} parent=1 // pred_check_branch
      %129 = sbr.rel (0) target = $region53
    $region52: #{simple_cnn_forward.1} parent=1 // pred_region
      %130 = dma.done [#allocation7], 64
    $region53: #{simple_cnn_forward.1} parent=1 // pred_fallthru
      _
    // Predicated region
    $region54: #{simple_cnn_forward.1} parent=1 // pred_check
      _
    $region55: #{simple_cnn_forward.1} parent=1 // pred_check_branch
      %132 = sbr.rel (0) target = $region57
    $region56: #{simple_cnn_forward.1} parent=1 // pred_region
      %133 = dma.done [#allocation7], 1536
    $region57: #{simple_cnn_forward.1} parent=1 // pred_fallthru
      _
    // Predicated region
    $region58: #{simple_cnn_forward.1} parent=1 // pred_check
      _
    $region59: #{simple_cnn_forward.1} parent=1 // pred_check_branch
      %135 = sbr.rel (0) target = $region61
    $region60: #{simple_cnn_forward.1} parent=1 // pred_region
      %136 = dma.done [#allocation10], 24576
    $region61: #{simple_cnn_forward.1} parent=1 // pred_fallthru
      _
    // Predicated region
    $region62: #{simple_cnn_forward.1} parent=1 // pred_check
      _
    $region63: #{simple_cnn_forward.1} parent=1 // pred_check_branch
      %138 = sbr.rel (0) target = $region65
    $region64: #{simple_cnn_forward.1} parent=1 // pred_region
      %139 = dma.done [#allocation10], 122880
    $region65: #{simple_cnn_forward.1} parent=1 // pred_fallthru
      _
    // Predicated region
    $region66: #{simple_cnn_forward.1} parent=1 // pred_check
      _
    $region67: #{simple_cnn_forward.1} parent=1 // pred_check_branch
      %141 = sbr.rel (0) target = $region69
    $region68: #{simple_cnn_forward.1} parent=1 // pred_region
      %142 = dma.done [#allocation13], 64
    $region69: #{simple_cnn_forward.1} parent=1 // pred_fallthru
      _
    // Predicated region
    $region70: #{simple_cnn_forward.1} parent=1 // pred_check
      _
    $region71: #{simple_cnn_forward.1} parent=1 // pred_check_branch
      %144 = sbr.rel (0) target = $region73
    $region72: #{simple_cnn_forward.1} parent=1 // pred_region
      %145 = dma.done [#allocation13], 65536
    $region73: #{simple_cnn_forward.1} parent=1 // pred_fallthru
      _
    // Predicated region
    $region74: #{simple_cnn_forward.1} parent=1 // pred_check
      _
    $region75: #{simple_cnn_forward.1} parent=1 // pred_check_branch
      %147 = sbr.rel (0) target = $region77
    $region76: #{simple_cnn_forward.1} parent=1 // pred_region
      %148 = dma.done [#allocation16], 16
    $region77: #{simple_cnn_forward.1} parent=1 // pred_fallthru
      _
    // Predicated region
    $region78: #{simple_cnn_forward.1} parent=1 // pred_check
      _
    $region79: #{simple_cnn_forward.1} parent=1 // pred_check_branch
      %150 = sbr.rel (0) target = $region81
    $region80: #{simple_cnn_forward.1} parent=1 // pred_region
      %151 = dma.done [#allocation16], 16
    $region81: #{simple_cnn_forward.1} parent=1 // pred_fallthru
      _
    %v152 = vld [vmem:[%s0] sm:$0xff]
    %v153 = vld [vmem:[%s0 + $0x8] sm:$0xff]
    %v154 = vld [vmem:[%s0 + $0x18] sm:$0xff]
    %v155 = vld [vmem:[%s0 + $0x20] sm:$0xff]
    %v156 = vld [vmem:[%s0 + $0x30] sm:$0xff]
    %v157 = vld [vmem:[%s0 + $0x38] sm:$0xff]
    %v158 = vld [vmem:[%s0 + $0x48] sm:$0xff]
    %v159 = vld [vmem:[%s0 + $0x50] sm:$0xff]
    %v160 = vld [vmem:[%s0 + $0x60] sm:$0xff]
    %v161 = vld [vmem:[%s0 + $0x68] sm:$0xff]
    %v162 = vld [vmem:[%s0 + $0x78] sm:$0xff]
    %v163 = vld [vmem:[%s0 + $0x80] sm:$0xff]
    %v164 = vld [vmem:[%s0 + $0x90] sm:$0xff]
    %v165 = vld [vmem:[%s0 + $0x98] sm:$0xff]
    %v166 = vld [vmem:[%s0 + $0xa8] sm:$0xff]
    %v167 = vld [vmem:[%s0 + $0xb0] sm:$0xff]
    %vm168 = vcmask 162816
    %169 = vst.msk [vmem:[#allocation2] sm:$0xff] %vm168, %v152
    %170 = vst.msk [vmem:[#allocation2 + $0x8] sm:$0xff] %vm168, %v153
    %171 = vst.msk [vmem:[#allocation2 + $0x10] sm:$0xff] %vm168, %v154
    %172 = vst.msk [vmem:[#allocation2 + $0x18] sm:$0xff] %vm168, %v155
    %173 = vst.msk [vmem:[#allocation2 + $0x20] sm:$0xff] %vm168, %v156
    %174 = vst.msk [vmem:[#allocation2 + $0x28] sm:$0xff] %vm168, %v157
    %175 = vst.msk [vmem:[#allocation2 + $0x30] sm:$0xff] %vm168, %v158
    %176 = vst.msk [vmem:[#allocation2 + $0x38] sm:$0xff] %vm168, %v159
    %177 = vst.msk [vmem:[#allocation2 + $0x40] sm:$0xff] %vm168, %v160
    %178 = vst.msk [vmem:[#allocation2 + $0x48] sm:$0xff] %vm168, %v161
    %179 = vst.msk [vmem:[#allocation2 + $0x50] sm:$0xff] %vm168, %v162
    %180 = vst.msk [vmem:[#allocation2 + $0x58] sm:$0xff] %vm168, %v163
    %181 = vst.msk [vmem:[#allocation2 + $0x60] sm:$0xff] %vm168, %v164
    %182 = vst.msk [vmem:[#allocation2 + $0x68] sm:$0xff] %vm168, %v165
    %183 = vst.msk [vmem:[#allocation2 + $0x70] sm:$0xff] %vm168, %v166
    %184 = vst.msk [vmem:[#allocation2 + $0x78] sm:$0xff] %vm168, %v167
    %v185 = vld [vmem:[%s0 + $0x1] sm:$0xff]
    %v186 = vld [vmem:[%s0 + $0x9] sm:$0xff]
    %v187 = vld [vmem:[%s0 + $0x19] sm:$0xff]
    %v188 = vld [vmem:[%s0 + $0x21] sm:$0xff]
    %v189 = vld [vmem:[%s0 + $0x31] sm:$0xff]
    %v190 = vld [vmem:[%s0 + $0x39] sm:$0xff]
    %v191 = vld [vmem:[%s0 + $0x49] sm:$0xff]
    %v192 = vld [vmem:[%s0 + $0x51] sm:$0xff]
    %v193 = vld [vmem:[%s0 + $0x61] sm:$0xff]
    %v194 = vld [vmem:[%s0 + $0x69] sm:$0xff]
    %v195 = vld [vmem:[%s0 + $0x79] sm:$0xff]
    %v196 = vld [vmem:[%s0 + $0x81] sm:$0xff]
    %v197 = vld [vmem:[%s0 + $0x91] sm:$0xff]
    %v198 = vld [vmem:[%s0 + $0x99] sm:$0xff]
    %v199 = vld [vmem:[%s0 + $0xa9] sm:$0xff]
    %v200 = vld [vmem:[%s0 + $0xb1] sm:$0xff]
    %217 = vrot.lane.b32.xlu0 %v185, 20
    %v218 = vpop.permute.xlu0 %217
    %219 = vrot.lane.b32.xlu0 %v186, 20
    %v220 = vpop.permute.xlu0 %219
    %221 = vrot.lane.b32.xlu0 %v187, 20
    %v222 = vpop.permute.xlu0 %221
    %223 = vrot.lane.b32.xlu0 %v188, 20
    %v224 = vpop.permute.xlu0 %223
    %225 = vrot.lane.b32.xlu0 %v189, 20
    %v226 = vpop.permute.xlu0 %225
    %227 = vrot.lane.b32.xlu0 %v190, 20
    %v228 = vpop.permute.xlu0 %227
    %229 = vrot.lane.b32.xlu0 %v191, 20
    %v230 = vpop.permute.xlu0 %229
    %231 = vrot.lane.b32.xlu0 %v192, 20
    %v232 = vpop.permute.xlu0 %231
    %233 = vrot.lane.b32.xlu0 %v193, 20
    %v234 = vpop.permute.xlu0 %233
    %235 = vrot.lane.b32.xlu0 %v194, 20
    %v236 = vpop.permute.xlu0 %235
    %237 = vrot.lane.b32.xlu0 %v195, 20
    %v238 = vpop.permute.xlu0 %237
    %239 = vrot.lane.b32.xlu0 %v196, 20
    %v240 = vpop.permute.xlu0 %239
    %241 = vrot.lane.b32.xlu0 %v197, 20
    %v242 = vpop.permute.xlu0 %241
    %243 = vrot.lane.b32.xlu0 %v198, 20
    %v244 = vpop.permute.xlu0 %243
    %245 = vrot.lane.b32.xlu0 %v199, 20
    %v246 = vpop.permute.xlu0 %245
    %247 = vrot.lane.b32.xlu0 %v200, 20
    %v248 = vpop.permute.xlu0 %247
    %vm265 = vcmask 326816
    %266 = vst.msk [vmem:[#allocation2] sm:$0xff] %vm265, %v218
    %267 = vst.msk [vmem:[#allocation2 + $0x8] sm:$0xff] %vm265, %v220
    %268 = vst.msk [vmem:[#allocation2 + $0x10] sm:$0xff] %vm265, %v222
    %269 = vst.msk [vmem:[#allocation2 + $0x18] sm:$0xff] %vm265, %v224
    %270 = vst.msk [vmem:[#allocation2 + $0x20] sm:$0xff] %vm265, %v226
    %271 = vst.msk [vmem:[#allocation2 + $0x28] sm:$0xff] %vm265, %v228
    %272 = vst.msk [vmem:[#allocation2 + $0x30] sm:$0xff] %vm265, %v230
    %273 = vst.msk [vmem:[#allocation2 + $0x38] sm:$0xff] %vm265, %v232
    %274 = vst.msk [vmem:[#allocation2 + $0x40] sm:$0xff] %vm265, %v234
    %275 = vst.msk [vmem:[#allocation2 + $0x48] sm:$0xff] %vm265, %v236
    %276 = vst.msk [vmem:[#allocation2 + $0x50] sm:$0xff] %vm265, %v238
    %277 = vst.msk [vmem:[#allocation2 + $0x58] sm:$0xff] %vm265, %v240
    %278 = vst.msk [vmem:[#allocation2 + $0x60] sm:$0xff] %vm265, %v242
    %279 = vst.msk [vmem:[#allocation2 + $0x68] sm:$0xff] %vm265, %v244
    %280 = vst.msk [vmem:[#allocation2 + $0x70] sm:$0xff] %vm265, %v246
    %281 = vst.msk [vmem:[#allocation2 + $0x78] sm:$0xff] %vm265, %v248
    %v282 = vld [vmem:[%s0 + $0x2] sm:$0xff]
    %v283 = vld [vmem:[%s0 + $0xa] sm:$0xff]
    %v284 = vld [vmem:[%s0 + $0x1a] sm:$0xff]
    %v285 = vld [vmem:[%s0 + $0x22] sm:$0xff]
    %v286 = vld [vmem:[%s0 + $0x32] sm:$0xff]
    %v287 = vld [vmem:[%s0 + $0x3a] sm:$0xff]
    %v288 = vld [vmem:[%s0 + $0x4a] sm:$0xff]
    %v289 = vld [vmem:[%s0 + $0x52] sm:$0xff]
    %v290 = vld [vmem:[%s0 + $0x62] sm:$0xff]
    %v291 = vld [vmem:[%s0 + $0x6a] sm:$0xff]
    %v292 = vld [vmem:[%s0 + $0x7a] sm:$0xff]
    %v293 = vld [vmem:[%s0 + $0x82] sm:$0xff]
    %v294 = vld [vmem:[%s0 + $0x92] sm:$0xff]
    %v295 = vld [vmem:[%s0 + $0x9a] sm:$0xff]
    %v296 = vld [vmem:[%s0 + $0xaa] sm:$0xff]
    %v297 = vld [vmem:[%s0 + $0xb2] sm:$0xff]
    %314 = vrot.lane.b32.xlu0 %v282, 40
    %v315 = vpop.permute.xlu0 %314
    %316 = vrot.lane.b32.xlu0 %v283, 40
    %v317 = vpop.permute.xlu0 %316
    %318 = vrot.lane.b32.xlu0 %v284, 40
    %v319 = vpop.permute.xlu0 %318
    %320 = vrot.lane.b32.xlu0 %v285, 40
    %v321 = vpop.permute.xlu0 %320
    %322 = vrot.lane.b32.xlu0 %v286, 40
    %v323 = vpop.permute.xlu0 %322
    %324 = vrot.lane.b32.xlu0 %v287, 40
    %v325 = vpop.permute.xlu0 %324
    %326 = vrot.lane.b32.xlu0 %v288, 40
    %v327 = vpop.permute.xlu0 %326
    %328 = vrot.lane.b32.xlu0 %v289, 40
    %v329 = vpop.permute.xlu0 %328
    %330 = vrot.lane.b32.xlu0 %v290, 40
    %v331 = vpop.permute.xlu0 %330
    %332 = vrot.lane.b32.xlu0 %v291, 40
    %v333 = vpop.permute.xlu0 %332
    %334 = vrot.lane.b32.xlu0 %v292, 40
    %v335 = vpop.permute.xlu0 %334
    %336 = vrot.lane.b32.xlu0 %v293, 40
    %v337 = vpop.permute.xlu0 %336
    %338 = vrot.lane.b32.xlu0 %v294, 40
    %v339 = vpop.permute.xlu0 %338
    %340 = vrot.lane.b32.xlu0 %v295, 40
    %v341 = vpop.permute.xlu0 %340
    %342 = vrot.lane.b32.xlu0 %v296, 40
    %v343 = vpop.permute.xlu0 %342
    %344 = vrot.lane.b32.xlu0 %v297, 40
    %v345 = vpop.permute.xlu0 %344
    %vm362 = vcmask 490816
    %363 = vst.msk [vmem:[#allocation2] sm:$0xff] %vm362, %v315
    %364 = vst.msk [vmem:[#allocation2 + $0x8] sm:$0xff] %vm362, %v317
    %365 = vst.msk [vmem:[#allocation2 + $0x10] sm:$0xff] %vm362, %v319
    %366 = vst.msk [vmem:[#allocation2 + $0x18] sm:$0xff] %vm362, %v321
    %367 = vst.msk [vmem:[#allocation2 + $0x20] sm:$0xff] %vm362, %v323
    %368 = vst.msk [vmem:[#allocation2 + $0x28] sm:$0xff] %vm362, %v325
    %369 = vst.msk [vmem:[#allocation2 + $0x30] sm:$0xff] %vm362, %v327
    %370 = vst.msk [vmem:[#allocation2 + $0x38] sm:$0xff] %vm362, %v329
    %371 = vst.msk [vmem:[#allocation2 + $0x40] sm:$0xff] %vm362, %v331
    %372 = vst.msk [vmem:[#allocation2 + $0x48] sm:$0xff] %vm362, %v333
    %373 = vst.msk [vmem:[#allocation2 + $0x50] sm:$0xff] %vm362, %v335
    %374 = vst.msk [vmem:[#allocation2 + $0x58] sm:$0xff] %vm362, %v337
    %375 = vst.msk [vmem:[#allocation2 + $0x60] sm:$0xff] %vm362, %v339
    %376 = vst.msk [vmem:[#allocation2 + $0x68] sm:$0xff] %vm362, %v341
    %377 = vst.msk [vmem:[#allocation2 + $0x70] sm:$0xff] %vm362, %v343
    %378 = vst.msk [vmem:[#allocation2 + $0x78] sm:$0xff] %vm362, %v345
    %v379 = vld [vmem:[%s0 + $0x3] sm:$0xff]
    %v380 = vld [vmem:[%s0 + $0xb] sm:$0xff]
    %v381 = vld [vmem:[%s0 + $0x1b] sm:$0xff]
    %v382 = vld [vmem:[%s0 + $0x23] sm:$0xff]
    %v383 = vld [vmem:[%s0 + $0x33] sm:$0xff]
    %v384 = vld [vmem:[%s0 + $0x3b] sm:$0xff]
    %v385 = vld [vmem:[%s0 + $0x4b] sm:$0xff]
    %v386 = vld [vmem:[%s0 + $0x53] sm:$0xff]
    %v387 = vld [vmem:[%s0 + $0x63] sm:$0xff]
    %v388 = vld [vmem:[%s0 + $0x6b] sm:$0xff]
    %v389 = vld [vmem:[%s0 + $0x7b] sm:$0xff]
    %v390 = vld [vmem:[%s0 + $0x83] sm:$0xff]
    %v391 = vld [vmem:[%s0 + $0x93] sm:$0xff]
    %v392 = vld [vmem:[%s0 + $0x9b] sm:$0xff]
    %v393 = vld [vmem:[%s0 + $0xab] sm:$0xff]
    %v394 = vld [vmem:[%s0 + $0xb3] sm:$0xff]
    %411 = vrot.lane.b32.xlu0 %v379, 60
    %v412 = vpop.permute.xlu0 %411
    %413 = vrot.lane.b32.xlu0 %v380, 60
    %v414 = vpop.permute.xlu0 %413
    %415 = vrot.lane.b32.xlu0 %v381, 60
    %v416 = vpop.permute.xlu0 %415
    %417 = vrot.lane.b32.xlu0 %v382, 60
    %v418 = vpop.permute.xlu0 %417
    %419 = vrot.lane.b32.xlu0 %v383, 60
    %v420 = vpop.permute.xlu0 %419
    %421 = vrot.lane.b32.xlu0 %v384, 60
    %v422 = vpop.permute.xlu0 %421
    %423 = vrot.lane.b32.xlu0 %v385, 60
    %v424 = vpop.permute.xlu0 %423
    %425 = vrot.lane.b32.xlu0 %v386, 60
    %v426 = vpop.permute.xlu0 %425
    %427 = vrot.lane.b32.xlu0 %v387, 60
    %v428 = vpop.permute.xlu0 %427
    %429 = vrot.lane.b32.xlu0 %v388, 60
    %v430 = vpop.permute.xlu0 %429
    %431 = vrot.lane.b32.xlu0 %v389, 60
    %v432 = vpop.permute.xlu0 %431
    %433 = vrot.lane.b32.xlu0 %v390, 60
    %v434 = vpop.permute.xlu0 %433
    %435 = vrot.lane.b32.xlu0 %v391, 60
    %v436 = vpop.permute.xlu0 %435
    %437 = vrot.lane.b32.xlu0 %v392, 60
    %v438 = vpop.permute.xlu0 %437
    %439 = vrot.lane.b32.xlu0 %v393, 60
    %v440 = vpop.permute.xlu0 %439
    %441 = vrot.lane.b32.xlu0 %v394, 60
    %v442 = vpop.permute.xlu0 %441
    %vm459 = vcmask 654816
    %460 = vst.msk [vmem:[#allocation2] sm:$0xff] %vm459, %v412
    %461 = vst.msk [vmem:[#allocation2 + $0x8] sm:$0xff] %vm459, %v414
    %462 = vst.msk [vmem:[#allocation2 + $0x10] sm:$0xff] %vm459, %v416
    %463 = vst.msk [vmem:[#allocation2 + $0x18] sm:$0xff] %vm459, %v418
    %464 = vst.msk [vmem:[#allocation2 + $0x20] sm:$0xff] %vm459, %v420
    %465 = vst.msk [vmem:[#allocation2 + $0x28] sm:$0xff] %vm459, %v422
    %466 = vst.msk [vmem:[#allocation2 + $0x30] sm:$0xff] %vm459, %v424
    %467 = vst.msk [vmem:[#allocation2 + $0x38] sm:$0xff] %vm459, %v426
    %468 = vst.msk [vmem:[#allocation2 + $0x40] sm:$0xff] %vm459, %v428
    %469 = vst.msk [vmem:[#allocation2 + $0x48] sm:$0xff] %vm459, %v430
    %470 = vst.msk [vmem:[#allocation2 + $0x50] sm:$0xff] %vm459, %v432
    %471 = vst.msk [vmem:[#allocation2 + $0x58] sm:$0xff] %vm459, %v434
    %472 = vst.msk [vmem:[#allocation2 + $0x60] sm:$0xff] %vm459, %v436
    %473 = vst.msk [vmem:[#allocation2 + $0x68] sm:$0xff] %vm459, %v438
    %474 = vst.msk [vmem:[#allocation2 + $0x70] sm:$0xff] %vm459, %v440
    %475 = vst.msk [vmem:[#allocation2 + $0x78] sm:$0xff] %vm459, %v442
    %v476 = vld [vmem:[%s0 + $0x4] sm:$0xff]
    %v477 = vld [vmem:[%s0 + $0xc] sm:$0xff]
    %v478 = vld [vmem:[%s0 + $0x1c] sm:$0xff]
    %v479 = vld [vmem:[%s0 + $0x24] sm:$0xff]
    %v480 = vld [vmem:[%s0 + $0x34] sm:$0xff]
    %v481 = vld [vmem:[%s0 + $0x3c] sm:$0xff]
    %v482 = vld [vmem:[%s0 + $0x4c] sm:$0xff]
    %v483 = vld [vmem:[%s0 + $0x54] sm:$0xff]
    %v484 = vld [vmem:[%s0 + $0x64] sm:$0xff]
    %v485 = vld [vmem:[%s0 + $0x6c] sm:$0xff]
    %v486 = vld [vmem:[%s0 + $0x7c] sm:$0xff]
    %v487 = vld [vmem:[%s0 + $0x84] sm:$0xff]
    %v488 = vld [vmem:[%s0 + $0x94] sm:$0xff]
    %v489 = vld [vmem:[%s0 + $0x9c] sm:$0xff]
    %v490 = vld [vmem:[%s0 + $0xac] sm:$0xff]
    %v491 = vld [vmem:[%s0 + $0xb4] sm:$0xff]
    %508 = vrot.lane.b32.xlu0 %v476, 80
    %v509 = vpop.permute.xlu0 %508
    %510 = vrot.lane.b32.xlu0 %v477, 80
    %v511 = vpop.permute.xlu0 %510
    %512 = vrot.lane.b32.xlu0 %v478, 80
    %v513 = vpop.permute.xlu0 %512
    %514 = vrot.lane.b32.xlu0 %v479, 80
    %v515 = vpop.permute.xlu0 %514
    %516 = vrot.lane.b32.xlu0 %v480, 80
    %v517 = vpop.permute.xlu0 %516
    %518 = vrot.lane.b32.xlu0 %v481, 80
    %v519 = vpop.permute.xlu0 %518
    %520 = vrot.lane.b32.xlu0 %v482, 80
    %v521 = vpop.permute.xlu0 %520
    %522 = vrot.lane.b32.xlu0 %v483, 80
    %v523 = vpop.permute.xlu0 %522
    %524 = vrot.lane.b32.xlu0 %v484, 80
    %v525 = vpop.permute.xlu0 %524
    %526 = vrot.lane.b32.xlu0 %v485, 80
    %v527 = vpop.permute.xlu0 %526
    %528 = vrot.lane.b32.xlu0 %v486, 80
    %v529 = vpop.permute.xlu0 %528
    %530 = vrot.lane.b32.xlu0 %v487, 80
    %v531 = vpop.permute.xlu0 %530
    %532 = vrot.lane.b32.xlu0 %v488, 80
    %v533 = vpop.permute.xlu0 %532
    %534 = vrot.lane.b32.xlu0 %v489, 80
    %v535 = vpop.permute.xlu0 %534
    %536 = vrot.lane.b32.xlu0 %v490, 80
    %v537 = vpop.permute.xlu0 %536
    %538 = vrot.lane.b32.xlu0 %v491, 80
    %v539 = vpop.permute.xlu0 %538
    %vm556 = vcmask 818816
    %557 = vst.msk [vmem:[#allocation2] sm:$0xff] %vm556, %v509
    %558 = vst.msk [vmem:[#allocation2 + $0x8] sm:$0xff] %vm556, %v511
    %559 = vst.msk [vmem:[#allocation2 + $0x10] sm:$0xff] %vm556, %v513
    %560 = vst.msk [vmem:[#allocation2 + $0x18] sm:$0xff] %vm556, %v515
    %561 = vst.msk [vmem:[#allocation2 + $0x20] sm:$0xff] %vm556, %v517
    %562 = vst.msk [vmem:[#allocation2 + $0x28] sm:$0xff] %vm556, %v519
    %563 = vst.msk [vmem:[#allocation2 + $0x30] sm:$0xff] %vm556, %v521
    %564 = vst.msk [vmem:[#allocation2 + $0x38] sm:$0xff] %vm556, %v523
    %565 = vst.msk [vmem:[#allocation2 + $0x40] sm:$0xff] %vm556, %v525
    %566 = vst.msk [vmem:[#allocation2 + $0x48] sm:$0xff] %vm556, %v527
    %567 = vst.msk [vmem:[#allocation2 + $0x50] sm:$0xff] %vm556, %v529
    %568 = vst.msk [vmem:[#allocation2 + $0x58] sm:$0xff] %vm556, %v531
    %569 = vst.msk [vmem:[#allocation2 + $0x60] sm:$0xff] %vm556, %v533
    %570 = vst.msk [vmem:[#allocation2 + $0x68] sm:$0xff] %vm556, %v535
    %571 = vst.msk [vmem:[#allocation2 + $0x70] sm:$0xff] %vm556, %v537
    %572 = vst.msk [vmem:[#allocation2 + $0x78] sm:$0xff] %vm556, %v539
    %v573 = vld [vmem:[#allocation2] sm:$0xff]
    %v574 = vld [vmem:[#allocation2 + $0x8] sm:$0xff]
    %v575 = vld [vmem:[#allocation2 + $0x10] sm:$0xff]
    %v576 = vld [vmem:[#allocation2 + $0x18] sm:$0xff]
    %v577 = vld [vmem:[#allocation2 + $0x20] sm:$0xff]
    %v578 = vld [vmem:[#allocation2 + $0x28] sm:$0xff]
    %v579 = vld [vmem:[#allocation2 + $0x30] sm:$0xff]
    %v580 = vld [vmem:[#allocation2 + $0x38] sm:$0xff]
    %v581 = vld [vmem:[#allocation2 + $0x40] sm:$0xff]
    %v582 = vld [vmem:[#allocation2 + $0x48] sm:$0xff]
    %v583 = vld [vmem:[#allocation2 + $0x50] sm:$0xff]
    %v584 = vld [vmem:[#allocation2 + $0x58] sm:$0xff]
    %v585 = vld [vmem:[#allocation2 + $0x60] sm:$0xff]
    %v586 = vld [vmem:[#allocation2 + $0x68] sm:$0xff]
    %v587 = vld [vmem:[#allocation2 + $0x70] sm:$0xff]
    %v588 = vld [vmem:[#allocation2 + $0x78] sm:$0xff]
    %v589 = vld [vmem:[#allocation4] sm:$0xff]
    %v590 = vld [vmem:[#allocation4 + $0x8] sm:$0xff]
    %v591 = vld [vmem:[#allocation4 + $0x10] sm:$0xff]
    %v592 = vld [vmem:[#allocation4 + $0x18] sm:$0xff]
    %v593 = vld [vmem:[#allocation4 + $0x20] sm:$0xff]
    %v594 = vld [vmem:[#allocation4 + $0x28] sm:$0xff]
    %v595 = vld [vmem:[#allocation4 + $0x30] sm:$0xff]
    %v596 = vld [vmem:[#allocation4 + $0x38] sm:$0xff]
    %v597 = vld [vmem:[#allocation4 + $0x40] sm:$0xff]
    %v598 = vld [vmem:[#allocation4 + $0x48] sm:$0xff]
    %v599 = vld [vmem:[#allocation4 + $0x50] sm:$0xff]
    %v600 = vld [vmem:[#allocation4 + $0x58] sm:$0xff]
    %v601 = vld [vmem:[#allocation4 + $0x60] sm:$0xff]
    %v602 = vld [vmem:[#allocation4 + $0x68] sm:$0xff]
    %v603 = vld [vmem:[#allocation4 + $0x70] sm:$0xff]
    %v604 = vld [vmem:[#allocation4 + $0x78] sm:$0xff]
    %v605 = vld [vmem:[#allocation4 + $0x80] sm:$0xff]
    %v606 = vld [vmem:[#allocation4 + $0x88] sm:$0xff]
    %v607 = vld [vmem:[#allocation4 + $0x90] sm:$0xff]
    %v608 = vld [vmem:[#allocation4 + $0x98] sm:$0xff]
    %v609 = vld [vmem:[#allocation4 + $0xa0] sm:$0xff]
    %v610 = vld [vmem:[#allocation4 + $0xa8] sm:$0xff]
    %v611 = vld [vmem:[#allocation4 + $0xb0] sm:$0xff]
    %v612 = vld [vmem:[#allocation4 + $0xb8] sm:$0xff]
    %v613 = vld [vmem:[#allocation4 + $0xc0] sm:$0xff]
    %v614 = vld [vmem:[#allocation4 + $0xc8] sm:$0xff]
    %v615 = vld [vmem:[#allocation4 + $0xd0] sm:$0xff]
    %v616 = vld [vmem:[#allocation4 + $0xd8] sm:$0xff]
    %v617 = vld [vmem:[#allocation4 + $0xe0] sm:$0xff]
    %v618 = vld [vmem:[#allocation4 + $0xe8] sm:$0xff]
    %v619 = vld [vmem:[#allocation4 + $0xf0] sm:$0xff]
    %v620 = vld [vmem:[#allocation4 + $0xf8] sm:$0xff]
    %v621 = vld [vmem:[#allocation4 + $0x100] sm:$0xff]
    %v622 = vld [vmem:[#allocation4 + $0x108] sm:$0xff]
    %v623 = vld [vmem:[#allocation4 + $0x110] sm:$0xff]
    %v624 = vld [vmem:[#allocation4 + $0x118] sm:$0xff]
    %v625 = vld [vmem:[#allocation4 + $0x120] sm:$0xff]
    %v626 = vld [vmem:[#allocation4 + $0x128] sm:$0xff]
    %v627 = vld [vmem:[#allocation4 + $0x130] sm:$0xff]
    %v628 = vld [vmem:[#allocation4 + $0x138] sm:$0xff]
    %v629 = vld [vmem:[#allocation4 + $0x140] sm:$0xff]
    %v630 = vld [vmem:[#allocation4 + $0x148] sm:$0xff]
    %v631 = vld [vmem:[#allocation4 + $0x150] sm:$0xff]
    %v632 = vld [vmem:[#allocation4 + $0x158] sm:$0xff]
    %v633 = vld [vmem:[#allocation4 + $0x160] sm:$0xff]
    %v634 = vld [vmem:[#allocation4 + $0x168] sm:$0xff]
    %v635 = vld [vmem:[#allocation4 + $0x170] sm:$0xff]
    %v636 = vld [vmem:[#allocation4 + $0x178] sm:$0xff]
    %v637 = vld [vmem:[#allocation4 + $0x180] sm:$0xf]
    %v638 = vld [vmem:[#allocation4 + $0x188] sm:$0xf]
    %v639 = vld [vmem:[#allocation4 + $0x190] sm:$0xf]
    %v640 = vld [vmem:[#allocation4 + $0x198] sm:$0xf]
    %v641 = vld [vmem:[#allocation6] sm:$0xf]
    %v643 = vlaneseq
    %v644 = vshrl.u32 %v643, 7
    %v645 = vsub.s32 0, %v644
    %v646 = vrot.slane %v641, %v645
    %v647 = vlaneseq
    %v648 = vshrl.u32 %v647, 7
    %v649 = vsub.s32 1, %v648
    %v650 = vrot.slane %v641, %v649
    %v651 = vlaneseq
    %v652 = vshrl.u32 %v651, 7
    %v653 = vsub.s32 2, %v652
    %v654 = vrot.slane %v641, %v653
    %v655 = vlaneseq
    %v656 = vshrl.u32 %v655, 7
    %v657 = vsub.s32 3, %v656
    %v658 = vrot.slane %v641, %v657
    %vm663 = vcmask 818176
    %v665 = vsel %vm663, %v573, 0
    %v668 = vsel %vm663, %v574, 0
    %v671 = vsel %vm663, %v575, 0
    %v674 = vsel %vm663, %v576, 0
    %v677 = vsel %vm663, %v577, 0
    %v680 = vsel %vm663, %v578, 0
    %v683 = vsel %vm663, %v579, 0
    %v686 = vsel %vm663, %v580, 0
    %v689 = vsel %vm663, %v581, 0
    %v692 = vsel %vm663, %v582, 0
    %v695 = vsel %vm663, %v583, 0
    %v698 = vsel %vm663, %v584, 0
    %v701 = vsel %vm663, %v585, 0
    %v704 = vsel %vm663, %v586, 0
    %v707 = vsel %vm663, %v587, 0
    %v710 = vsel %vm663, %v588, 0
    %vm712 = vcmask 1043456
    %v714 = vsel %vm712, %v637, 0
    %v717 = vsel %vm712, %v638, 0
    %v720 = vsel %vm712, %v639, 0
    %v723 = vsel %vm712, %v640, 0
    %725 = vmatprep.subr.mxu0 %v590
    %726 = vmatpush1.msra.mxu0 %v589
    %727 = vmatprep.subr.mxu0 %v594
    %728 = vmatpush1.msra.mxu0 %v593
    %729 = vmatprep.subr.mxu0 %v598
    %730 = vmatpush1.msra.mxu0 %v597
    %731 = vmatprep.subr.mxu0 %v602
    %732 = vmatpush1.msra.mxu0 %v601
    %733 = vmatprep.subr.mxu0 %v606
    %734 = vmatpush1.msra.mxu0 %v605
    %735 = vmatprep.subr.mxu0 %v610
    %736 = vmatpush1.msra.mxu0 %v609
    %737 = vmatprep.subr.mxu0 %v614
    %738 = vmatpush1.msra.mxu0 %v613
    %739 = vmatprep.subr.mxu0 %v618
    %740 = vmatpush1.msra.mxu0 %v617
    %741 = vmatprep.subr.mxu0 %v622
    %742 = vmatpush1.msra.mxu0 %v621
    %743 = vmatprep.subr.mxu0 %v626
    %744 = vmatpush1.msra.mxu0 %v625
    %745 = vmatprep.subr.mxu0 %v630
    %746 = vmatpush1.msra.mxu0 %v629
    %747 = vmatprep.subr.mxu0 %v634
    %748 = vmatpush1.msra.mxu0 %v633
    %749 = vmatprep.subr.mxu0 %v717
    %750 = vmatpush1.msra.mxu0 %v714
    %751 = vmatprep.subr.mxu0 0.0
    %752 = vmatpush1.msra.mxu0 0.0
    %753 = vmatprep.subr.mxu0 0.0
    %754 = vmatpush1.msra.mxu0 0.0
    %755 = vmatprep.subr.mxu0 0.0
    %756 = vmatpush1.msra.mxu0 0.0
    %757 = vmatprep.subr.mxu0 0.0
    %758 = vmatpush1.msra.mxu0 0.0
    %759 = vmatprep.subr.mxu0 0.0
    %760 = vmatpush1.msra.mxu0 0.0
    %761 = vmatprep.subr.mxu0 0.0
    %762 = vmatpush1.msra.mxu0 0.0
    %763 = vmatprep.subr.mxu0 0.0
    %764 = vmatpush1.msra.mxu0 0.0
    %765 = vmatprep.subr.mxu0 0.0
    %766 = vmatpush1.msra.mxu0 0.0
    %767 = vmatprep.subr.mxu0 0.0
    %768 = vmatpush1.msra.mxu0 0.0
    %769 = vmatprep.subr.mxu0 0.0
    %770 = vmatpush1.msra.mxu0 0.0
    %771 = vmatprep.subr.mxu0 0.0
    %772 = vmatpush1.msra.mxu0 0.0
    %773 = vmatprep.subr.mxu0 0.0
    %774 = vmatpush1.msra.mxu0 0.0
    %775 = vmatprep.subr.mxu0 0.0
    %776 = vmatpush1.msra.mxu0 0.0
    %777 = vmatprep.subr.mxu0 0.0
    %778 = vmatpush1.msra.mxu0 0.0
    %779 = vmatprep.subr.mxu0 0.0
    %780 = vmatpush1.msra.mxu0 0.0
    %781 = vmatprep.subr.mxu0 0.0
    %782 = vmatpush1.msra.mxu0 0.0
    %783 = vmatprep.subr.mxu0 0.0
    %784 = vmatpush1.msra.mxu0 0.0
    %785 = vmatprep.subr.mxu0 0.0
    %786 = vmatpush1.msra.mxu0 0.0
    %787 = vmatprep.subr.mxu0 0.0
    %788 = vmatpush1.msra.mxu0 0.0
    %789 = vmatprep.mubr.f32.mxu0 0.0
    %790 = vmatmul.mubr.f32.gmra.mrb[0].mxu0 %v665
    %v791 = vpop.f32.mrb[0].mxu0
    %v792 = vadd.f32 %v646, %v791
    %v793 = vpop.f32.mrb[0].mxu0
    %v794 = vadd.f32 %v650, %v793
    %795 = vmatprep.mubr.f32.mxu0 0.0
    %796 = vmatmul.mubr.f32.gmra.mrb[0].mxu0 %v668
    %v797 = vpop.f32.mrb[0].mxu0
    %v798 = vadd.f32 %v646, %v797
    %v799 = vpop.f32.mrb[0].mxu0
    %v800 = vadd.f32 %v650, %v799
    %801 = vmatprep.mubr.f32.mxu0 0.0
    %802 = vmatmul.mubr.f32.gmra.mrb[0].mxu0 %v671
    %v803 = vpop.f32.mrb[0].mxu0
    %v804 = vadd.f32 %v646, %v803
    %v805 = vpop.f32.mrb[0].mxu0
    %v806 = vadd.f32 %v650, %v805
    %807 = vmatprep.mubr.f32.mxu0 0.0
    %808 = vmatmul.mubr.f32.gmra.mrb[0].mxu0 %v674
    %v809 = vpop.f32.mrb[0].mxu0
    %v810 = vadd.f32 %v646, %v809
    %v811 = vpop.f32.mrb[0].mxu0
    %v812 = vadd.f32 %v650, %v811
    %813 = vmatprep.mubr.f32.mxu0 0.0
    %814 = vmatmul.mubr.f32.gmra.mrb[0].mxu0 %v677
    %v815 = vpop.f32.mrb[0].mxu0
    %v816 = vadd.f32 %v646, %v815
    %v817 = vpop.f32.mrb[0].mxu0
    %v818 = vadd.f32 %v650, %v817
    %819 = vmatprep.mubr.f32.mxu0 0.0
    %820 = vmatmul.mubr.f32.gmra.mrb[0].mxu0 %v680
    %v821 = vpop.f32.mrb[0].mxu0
    %v822 = vadd.f32 %v646, %v821
    %v823 = vpop.f32.mrb[0].mxu0
    %v824 = vadd.f32 %v650, %v823
    %825 = vmatprep.mubr.f32.mxu0 0.0
    %826 = vmatmul.mubr.f32.gmra.mrb[0].mxu0 %v683
    %v827 = vpop.f32.mrb[0].mxu0
    %v828 = vadd.f32 %v646, %v827
    %v829 = vpop.f32.mrb[0].mxu0
    %v830 = vadd.f32 %v650, %v829
    %831 = vmatprep.mubr.f32.mxu0 0.0
    %832 = vmatmul.mubr.f32.gmra.mrb[0].mxu0 %v686
    %v833 = vpop.f32.mrb[0].mxu0
    %v834 = vadd.f32 %v646, %v833
    %v835 = vpop.f32.mrb[0].mxu0
    %v836 = vadd.f32 %v650, %v835
    %837 = vmatprep.mubr.f32.mxu0 0.0
    %838 = vmatmul.mubr.f32.gmra.mrb[0].mxu0 %v689
    %v839 = vpop.f32.mrb[0].mxu0
    %v840 = vadd.f32 %v646, %v839
    %v841 = vpop.f32.mrb[0].mxu0
    %v842 = vadd.f32 %v650, %v841
    %843 = vmatprep.mubr.f32.mxu0 0.0
    %844 = vmatmul.mubr.f32.gmra.mrb[0].mxu0 %v692
    %v845 = vpop.f32.mrb[0].mxu0
    %v846 = vadd.f32 %v646, %v845
    %v847 = vpop.f32.mrb[0].mxu0
    %v848 = vadd.f32 %v650, %v847
    %849 = vmatprep.mubr.f32.mxu0 0.0
    %850 = vmatmul.mubr.f32.gmra.mrb[0].mxu0 %v695
    %v851 = vpop.f32.mrb[0].mxu0
    %v852 = vadd.f32 %v646, %v851
    %v853 = vpop.f32.mrb[0].mxu0
    %v854 = vadd.f32 %v650, %v853
    %855 = vmatprep.mubr.f32.mxu0 0.0
    %856 = vmatmul.mubr.f32.gmra.mrb[0].mxu0 %v698
    %v857 = vpop.f32.mrb[0].mxu0
    %v858 = vadd.f32 %v646, %v857
    %v859 = vpop.f32.mrb[0].mxu0
    %v860 = vadd.f32 %v650, %v859
    %861 = vmatprep.mubr.f32.mxu0 0.0
    %862 = vmatmul.mubr.f32.gmra.mrb[0].mxu0 %v701
    %v863 = vpop.f32.mrb[0].mxu0
    %v864 = vadd.f32 %v646, %v863
    %v865 = vpop.f32.mrb[0].mxu0
    %v866 = vadd.f32 %v650, %v865
    %867 = vmatprep.mubr.f32.mxu0 0.0
    %868 = vmatmul.mubr.f32.gmra.mrb[0].mxu0 %v704
    %v869 = vpop.f32.mrb[0].mxu0
    %v870 = vadd.f32 %v646, %v869
    %v871 = vpop.f32.mrb[0].mxu0
    %v872 = vadd.f32 %v650, %v871
    %873 = vmatprep.mubr.f32.mxu0 0.0
    %874 = vmatmul.mubr.f32.gmra.mrb[0].mxu0 %v707
    %v875 = vpop.f32.mrb[0].mxu0
    %v876 = vadd.f32 %v646, %v875
    %v877 = vpop.f32.mrb[0].mxu0
    %v878 = vadd.f32 %v650, %v877
    %879 = vmatprep.mubr.f32.mxu0 0.0
    %880 = vmatmul.mubr.f32.gmra.mrb[0].mxu0 %v710
    %v881 = vpop.f32.mrb[0].mxu0
    %v882 = vadd.f32 %v646, %v881
    %v883 = vpop.f32.mrb[0].mxu0
    %v884 = vadd.f32 %v650, %v883
    %885 = vdwg.mxu0
    %886 = vmatprep.subr.mxu0 %v592
    %887 = vmatpush1.msra.mxu0 %v591
    %888 = vmatprep.subr.mxu0 %v596
    %889 = vmatpush1.msra.mxu0 %v595
    %890 = vmatprep.subr.mxu0 %v600
    %891 = vmatpush1.msra.mxu0 %v599
    %892 = vmatprep.subr.mxu0 %v604
    %893 = vmatpush1.msra.mxu0 %v603
    %894 = vmatprep.subr.mxu0 %v608
    %895 = vmatpush1.msra.mxu0 %v607
    %896 = vmatprep.subr.mxu0 %v612
    %897 = vmatpush1.msra.mxu0 %v611
    %898 = vmatprep.subr.mxu0 %v616
    %899 = vmatpush1.msra.mxu0 %v615
    %900 = vmatprep.subr.mxu0 %v620
    %901 = vmatpush1.msra.mxu0 %v619
    %902 = vmatprep.subr.mxu0 %v624
    %903 = vmatpush1.msra.mxu0 %v623
    %904 = vmatprep.subr.mxu0 %v628
    %905 = vmatpush1.msra.mxu0 %v627
    %906 = vmatprep.subr.mxu0 %v632
    %907 = vmatpush1.msra.mxu0 %v631
    %908 = vmatprep.subr.mxu0 %v636
    %909 = vmatpush1.msra.mxu0 %v635
    %910 = vmatprep.subr.mxu0 %v723
    %911 = vmatpush1.msra.mxu0 %v720
    %912 = vmatprep.subr.mxu0 0.0
    %913 = vmatpush1.msra.mxu0 0.0
    %914 = vmatprep.subr.mxu0 0.0
    %915 = vmatpush1.msra.mxu0 0.0
    %916 = vmatprep.subr.mxu0 0.0
    %917 = vmatpush1.msra.mxu0 0.0
    %918 = vmatprep.subr.mxu0 0.0
    %919 = vmatpush1.msra.mxu0 0.0
    %920 = vmatprep.subr.mxu0 0.0
    %921 = vmatpush1.msra.mxu0 0.0
    %922 = vmatprep.subr.mxu0 0.0
    %923 = vmatpush1.msra.mxu0 0.0
    %924 = vmatprep.subr.mxu0 0.0
    %925 = vmatpush1.msra.mxu0 0.0
    %926 = vmatprep.subr.mxu0 0.0
    %927 = vmatpush1.msra.mxu0 0.0
    %928 = vmatprep.subr.mxu0 0.0
    %929 = vmatpush1.msra.mxu0 0.0
    %930 = vmatprep.subr.mxu0 0.0
    %931 = vmatpush1.msra.mxu0 0.0
    %932 = vmatprep.subr.mxu0 0.0
    %933 = vmatpush1.msra.mxu0 0.0
    %934 = vmatprep.subr.mxu0 0.0
    %935 = vmatpush1.msra.mxu0 0.0
    %936 = vmatprep.subr.mxu0 0.0
    %937 = vmatpush1.msra.mxu0 0.0
    %938 = vmatprep.subr.mxu0 0.0
    %939 = vmatpush1.msra.mxu0 0.0
    %940 = vmatprep.subr.mxu0 0.0
    %941 = vmatpush1.msra.mxu0 0.0
    %942 = vmatprep.subr.mxu0 0.0
    %943 = vmatpush1.msra.mxu0 0.0
    %944 = vmatprep.subr.mxu0 0.0
    %945 = vmatpush1.msra.mxu0 0.0
    %946 = vmatprep.subr.mxu0 0.0
    %947 = vmatpush1.msra.mxu0 0.0
    %948 = vmatprep.subr.mxu0 0.0
    %949 = vmatpush1.msra.mxu0 0.0
    %950 = vmatprep.mubr.f32.mxu0 0.0
    %951 = vmatmul.mubr.f32.gmra.mrb[0].mxu0 %v665
    %v952 = vpop.f32.mrb[0].mxu0
    %v953 = vadd.f32 %v654, %v952
    %v954 = vpop.f32.mrb[0].mxu0
    %v955 = vadd.f32 %v658, %v954
    %956 = vmatprep.mubr.f32.mxu0 0.0
    %957 = vmatmul.mubr.f32.gmra.mrb[0].mxu0 %v668
    %v958 = vpop.f32.mrb[0].mxu0
    %v959 = vadd.f32 %v654, %v958
    %v960 = vpop.f32.mrb[0].mxu0
    %v961 = vadd.f32 %v658, %v960
    %962 = vmatprep.mubr.f32.mxu0 0.0
    %963 = vmatmul.mubr.f32.gmra.mrb[0].mxu0 %v671
    %v964 = vpop.f32.mrb[0].mxu0
    %v965 = vadd.f32 %v654, %v964
    %v966 = vpop.f32.mrb[0].mxu0
    %v967 = vadd.f32 %v658, %v966
    %968 = vmatprep.mubr.f32.mxu0 0.0
    %969 = vmatmul.mubr.f32.gmra.mrb[0].mxu0 %v674
    %v970 = vpop.f32.mrb[0].mxu0
    %v971 = vadd.f32 %v654, %v970
    %v972 = vpop.f32.mrb[0].mxu0
    %v973 = vadd.f32 %v658, %v972
    %974 = vmatprep.mubr.f32.mxu0 0.0
    %975 = vmatmul.mubr.f32.gmra.mrb[0].mxu0 %v677
    %v976 = vpop.f32.mrb[0].mxu0
    %v977 = vadd.f32 %v654, %v976
    %v978 = vpop.f32.mrb[0].mxu0
    %v979 = vadd.f32 %v658, %v978
    %980 = vmatprep.mubr.f32.mxu0 0.0
    %981 = vmatmul.mubr.f32.gmra.mrb[0].mxu0 %v680
    %v982 = vpop.f32.mrb[0].mxu0
    %v983 = vadd.f32 %v654, %v982
    %v984 = vpop.f32.mrb[0].mxu0
    %v985 = vadd.f32 %v658, %v984
    %986 = vmatprep.mubr.f32.mxu0 0.0
    %987 = vmatmul.mubr.f32.gmra.mrb[0].mxu0 %v683
    %v988 = vpop.f32.mrb[0].mxu0
    %v989 = vadd.f32 %v654, %v988
    %v990 = vpop.f32.mrb[0].mxu0
    %v991 = vadd.f32 %v658, %v990
    %992 = vmatprep.mubr.f32.mxu0 0.0
    %993 = vmatmul.mubr.f32.gmra.mrb[0].mxu0 %v686
    %v994 = vpop.f32.mrb[0].mxu0
    %v995 = vadd.f32 %v654, %v994
    %v996 = vpop.f32.mrb[0].mxu0
    %v997 = vadd.f32 %v658, %v996
    %998 = vmatprep.mubr.f32.mxu0 0.0
    %999 = vmatmul.mubr.f32.gmra.mrb[0].mxu0 %v689
    %v1000 = vpop.f32.mrb[0].mxu0
    %v1001 = vadd.f32 %v654, %v1000
    %v1002 = vpop.f32.mrb[0].mxu0
    %v1003 = vadd.f32 %v658, %v1002
    %1004 = vmatprep.mubr.f32.mxu0 0.0
    %1005 = vmatmul.mubr.f32.gmra.mrb[0].mxu0 %v692
    %v1006 = vpop.f32.mrb[0].mxu0
    %v1007 = vadd.f32 %v654, %v1006
    %v1008 = vpop.f32.mrb[0].mxu0
    %v1009 = vadd.f32 %v658, %v1008
    %1010 = vmatprep.mubr.f32.mxu0 0.0
    %1011 = vmatmul.mubr.f32.gmra.mrb[0].mxu0 %v695
    %v1012 = vpop.f32.mrb[0].mxu0
    %v1013 = vadd.f32 %v654, %v1012
    %v1014 = vpop.f32.mrb[0].mxu0
    %v1015 = vadd.f32 %v658, %v1014
    %1016 = vmatprep.mubr.f32.mxu0 0.0
    %1017 = vmatmul.mubr.f32.gmra.mrb[0].mxu0 %v698
    %v1018 = vpop.f32.mrb[0].mxu0
    %v1019 = vadd.f32 %v654, %v1018
    %v1020 = vpop.f32.mrb[0].mxu0
    %v1021 = vadd.f32 %v658, %v1020
    %1022 = vmatprep.mubr.f32.mxu0 0.0
    %1023 = vmatmul.mubr.f32.gmra.mrb[0].mxu0 %v701
    %v1024 = vpop.f32.mrb[0].mxu0
    %v1025 = vadd.f32 %v654, %v1024
    %v1026 = vpop.f32.mrb[0].mxu0
    %v1027 = vadd.f32 %v658, %v1026
    %1028 = vmatprep.mubr.f32.mxu0 0.0
    %1029 = vmatmul.mubr.f32.gmra.mrb[0].mxu0 %v704
    %v1030 = vpop.f32.mrb[0].mxu0
    %v1031 = vadd.f32 %v654, %v1030
    %v1032 = vpop.f32.mrb[0].mxu0
    %v1033 = vadd.f32 %v658, %v1032
    %1034 = vmatprep.mubr.f32.mxu0 0.0
    %1035 = vmatmul.mubr.f32.gmra.mrb[0].mxu0 %v707
    %v1036 = vpop.f32.mrb[0].mxu0
    %v1037 = vadd.f32 %v654, %v1036
    %v1038 = vpop.f32.mrb[0].mxu0
    %v1039 = vadd.f32 %v658, %v1038
    %1040 = vmatprep.mubr.f32.mxu0 0.0
    %1041 = vmatmul.mubr.f32.gmra.mrb[0].mxu0 %v710
    %v1042 = vpop.f32.mrb[0].mxu0
    %v1043 = vadd.f32 %v654, %v1042
    %v1044 = vpop.f32.mrb[0].mxu0
    %v1045 = vadd.f32 %v658, %v1044
    %1046 = vdwg.mxu0
    %v1047 = vmax.f32 %v792, 0.0
    %v1048 = vmax.f32 %v794, 0.0
    %v1049 = vmax.f32 %v953, 0.0
    %v1050 = vmax.f32 %v955, 0.0
    %v1051 = vmax.f32 %v798, 0.0
    %v1052 = vmax.f32 %v800, 0.0
    %v1053 = vmax.f32 %v959, 0.0
    %v1054 = vmax.f32 %v961, 0.0
    %v1055 = vmax.f32 %v804, 0.0
    %v1056 = vmax.f32 %v806, 0.0
    %v1057 = vmax.f32 %v965, 0.0
    %v1058 = vmax.f32 %v967, 0.0
    %v1059 = vmax.f32 %v810, 0.0
    %v1060 = vmax.f32 %v812, 0.0
    %v1061 = vmax.f32 %v971, 0.0
    %v1062 = vmax.f32 %v973, 0.0
    %v1063 = vmax.f32 %v816, 0.0
    %v1064 = vmax.f32 %v818, 0.0
    %v1065 = vmax.f32 %v977, 0.0
    %v1066 = vmax.f32 %v979, 0.0
    %v1067 = vmax.f32 %v822, 0.0
    %v1068 = vmax.f32 %v824, 0.0
    %v1069 = vmax.f32 %v983, 0.0
    %v1070 = vmax.f32 %v985, 0.0
    %v1071 = vmax.f32 %v828, 0.0
    %v1072 = vmax.f32 %v830, 0.0
    %v1073 = vmax.f32 %v989, 0.0
    %v1074 = vmax.f32 %v991, 0.0
    %v1075 = vmax.f32 %v834, 0.0
    %v1076 = vmax.f32 %v836, 0.0
    %v1077 = vmax.f32 %v995, 0.0
    %v1078 = vmax.f32 %v997, 0.0
    %v1079 = vmax.f32 %v840, 0.0
    %v1080 = vmax.f32 %v842, 0.0
    %v1081 = vmax.f32 %v1001, 0.0
    %v1082 = vmax.f32 %v1003, 0.0
    %v1083 = vmax.f32 %v846, 0.0
    %v1084 = vmax.f32 %v848, 0.0
    %v1085 = vmax.f32 %v1007, 0.0
    %v1086 = vmax.f32 %v1009, 0.0
    %v1087 = vmax.f32 %v852, 0.0
    %v1088 = vmax.f32 %v854, 0.0
    %v1089 = vmax.f32 %v1013, 0.0
    %v1090 = vmax.f32 %v1015, 0.0
    %v1091 = vmax.f32 %v858, 0.0
    %v1092 = vmax.f32 %v860, 0.0
    %v1093 = vmax.f32 %v1019, 0.0
    %v1094 = vmax.f32 %v1021, 0.0
    %v1095 = vmax.f32 %v864, 0.0
    %v1096 = vmax.f32 %v866, 0.0
    %v1097 = vmax.f32 %v1025, 0.0
    %v1098 = vmax.f32 %v1027, 0.0
    %v1099 = vmax.f32 %v870, 0.0
    %v1100 = vmax.f32 %v872, 0.0
    %v1101 = vmax.f32 %v1031, 0.0
    %v1102 = vmax.f32 %v1033, 0.0
    %v1103 = vmax.f32 %v876, 0.0
    %v1104 = vmax.f32 %v878, 0.0
    %v1105 = vmax.f32 %v1037, 0.0
    %v1106 = vmax.f32 %v1039, 0.0
    %v1107 = vmax.f32 %v882, 0.0
    %v1108 = vmax.f32 %v884, 0.0
    %v1109 = vmax.f32 %v1043, 0.0
    %v1110 = vmax.f32 %v1045, 0.0
    %v1111 = vld [vmem:[#allocation8] sm:$0xff]
    %v1112 = vld [vmem:[#allocation8 + $0x8] sm:$0xff]
    %v1113 = vld [vmem:[#allocation8 + $0x10] sm:$0xff]
    %v1114 = vld [vmem:[#allocation8 + $0x18] sm:$0xff]
    %v1115 = vld [vmem:[#allocation8 + $0x20] sm:$0xff]
    %v1116 = vld [vmem:[#allocation8 + $0x28] sm:$0xff]
    %v1117 = vld [vmem:[#allocation8 + $0x30] sm:$0xff]
    %v1118 = vld [vmem:[#allocation8 + $0x38] sm:$0xff]
    %v1119 = vld [vmem:[#allocation8 + $0x40] sm:$0xff]
    %v1120 = vld [vmem:[#allocation8 + $0x48] sm:$0xff]
    %v1121 = vld [vmem:[#allocation8 + $0x50] sm:$0xff]
    %v1122 = vld [vmem:[#allocation8 + $0x58] sm:$0xff]
    %1123 = vmatprep.subr.mxu0 %v1048
    %1124 = vmatpush1.msra.mxu0 %v1047
    %1125 = vmatprep.subr.mxu0 %v1052
    %1126 = vmatpush1.msra.mxu0 %v1051
    %1127 = vmatprep.subr.mxu0 %v1056
    %1128 = vmatpush1.msra.mxu0 %v1055
    %1129 = vmatprep.subr.mxu0 %v1060
    %1130 = vmatpush1.msra.mxu0 %v1059
    %1131 = vmatprep.subr.mxu0 %v1064
    %1132 = vmatpush1.msra.mxu0 %v1063
    %1133 = vmatprep.subr.mxu0 %v1068
    %1134 = vmatpush1.msra.mxu0 %v1067
    %1135 = vmatprep.subr.mxu0 %v1072
    %1136 = vmatpush1.msra.mxu0 %v1071
    %1137 = vmatprep.subr.mxu0 %v1076
    %1138 = vmatpush1.msra.mxu0 %v1075
    %1139 = vmatprep.subr.mxu0 %v1080
    %1140 = vmatpush1.msra.mxu0 %v1079
    %1141 = vmatprep.subr.mxu0 %v1084
    %1142 = vmatpush1.msra.mxu0 %v1083
    %1143 = vmatprep.subr.mxu0 %v1088
    %1144 = vmatpush1.msra.mxu0 %v1087
    %1145 = vmatprep.subr.mxu0 %v1092
    %1146 = vmatpush1.msra.mxu0 %v1091
    %1147 = vmatprep.subr.mxu0 %v1096
    %1148 = vmatpush1.msra.mxu0 %v1095
    %1149 = vmatprep.subr.mxu0 %v1100
    %1150 = vmatpush1.msra.mxu0 %v1099
    %1151 = vmatprep.subr.mxu0 %v1104
    %1152 = vmatpush1.msra.mxu0 %v1103
    %1153 = vmatprep.subr.mxu0 %v1108
    %1154 = vmatpush1.msra.mxu0 %v1107
    %1155 = vmatprep.subr.mxu0 0.0
    %1156 = vmatpush1.msra.mxu0 0.0
    %1157 = vmatprep.subr.mxu0 0.0
    %1158 = vmatpush1.msra.mxu0 0.0
    %1159 = vmatprep.subr.mxu0 0.0
    %1160 = vmatpush1.msra.mxu0 0.0
    %1161 = vmatprep.subr.mxu0 0.0
    %1162 = vmatpush1.msra.mxu0 0.0
    %1163 = vmatprep.subr.mxu0 0.0
    %1164 = vmatpush1.msra.mxu0 0.0
    %1165 = vmatprep.subr.mxu0 0.0
    %1166 = vmatpush1.msra.mxu0 0.0
    %1167 = vmatprep.subr.mxu0 0.0
    %1168 = vmatpush1.msra.mxu0 0.0
    %1169 = vmatprep.subr.mxu0 0.0
    %1170 = vmatpush1.msra.mxu0 0.0
    %1171 = vmatprep.subr.mxu0 0.0
    %1172 = vmatpush1.msra.mxu0 0.0
    %1173 = vmatprep.subr.mxu0 0.0
    %1174 = vmatpush1.msra.mxu0 0.0
    %1175 = vmatprep.subr.mxu0 0.0
    %1176 = vmatpush1.msra.mxu0 0.0
    %1177 = vmatprep.subr.mxu0 0.0
    %1178 = vmatpush1.msra.mxu0 0.0
    %1179 = vmatprep.subr.mxu0 0.0
    %1180 = vmatpush1.msra.mxu0 0.0
    %1181 = vmatprep.subr.mxu0 0.0
    %1182 = vmatpush1.msra.mxu0 0.0
    %1183 = vmatprep.subr.mxu0 0.0
    %1184 = vmatpush1.msra.mxu0 0.0
    %1185 = vmatprep.subr.mxu0 0.0
    %1186 = vmatpush1.msra.mxu0 0.0
    %1187 = vmatprep.mubr.f32.mxu0 0.0
    %1188 = vmatmul.mubr.f32.gmra.mrb[0].mxu0 %v1111
    %v1189 = vpop.f32.mrb[0].mxu0
    %v1190 = vadd.f32 0.0, %v1189
    %v1191 = vpop.f32.mrb[0].mxu0
    %v1192 = vadd.f32 0.0, %v1191
    %1193 = vmatprep.mubr.f32.mxu0 0.0
    %1194 = vmatmul.mubr.f32.gmra.mrb[0].mxu0 %v1112
    %v1195 = vpop.f32.mrb[0].mxu0
    %v1196 = vadd.f32 0.0, %v1195
    %v1197 = vpop.f32.mrb[0].mxu0
    %v1198 = vadd.f32 0.0, %v1197
    %1199 = vmatprep.mubr.f32.mxu0 0.0
    %1200 = vmatmul.mubr.f32.gmra.mrb[0].mxu0 %v1113
    %v1201 = vpop.f32.mrb[0].mxu0
    %v1202 = vadd.f32 0.0, %v1201
    %v1203 = vpop.f32.mrb[0].mxu0
    %v1204 = vadd.f32 0.0, %v1203
    %1205 = vmatprep.mubr.f32.mxu0 0.0
    %1206 = vmatmul.mubr.f32.gmra.mrb[0].mxu0 %v1114
    %v1207 = vpop.f32.mrb[0].mxu0
    %v1208 = vadd.f32 0.0, %v1207
    %v1209 = vpop.f32.mrb[0].mxu0
    %v1210 = vadd.f32 0.0, %v1209
    %1211 = vmatprep.mubr.f32.mxu0 0.0
    %1212 = vmatmul.mubr.f32.gmra.mrb[0].mxu0 %v1115
    %v1213 = vpop.f32.mrb[0].mxu0
    %v1214 = vadd.f32 0.0, %v1213
    %v1215 = vpop.f32.mrb[0].mxu0
    %v1216 = vadd.f32 0.0, %v1215
    %1217 = vmatprep.mubr.f32.mxu0 0.0
    %1218 = vmatmul.mubr.f32.gmra.mrb[0].mxu0 %v1116
    %v1219 = vpop.f32.mrb[0].mxu0
    %v1220 = vadd.f32 0.0, %v1219
    %v1221 = vpop.f32.mrb[0].mxu0
    %v1222 = vadd.f32 0.0, %v1221
    %1223 = vmatprep.mubr.f32.mxu0 0.0
    %1224 = vmatmul.mubr.f32.gmra.mrb[0].mxu0 %v1117
    %v1225 = vpop.f32.mrb[0].mxu0
    %v1226 = vadd.f32 0.0, %v1225
    %v1227 = vpop.f32.mrb[0].mxu0
    %v1228 = vadd.f32 0.0, %v1227
    %1229 = vmatprep.mubr.f32.mxu0 0.0
    %1230 = vmatmul.mubr.f32.gmra.mrb[0].mxu0 %v1118
    %v1231 = vpop.f32.mrb[0].mxu0
    %v1232 = vadd.f32 0.0, %v1231
    %v1233 = vpop.f32.mrb[0].mxu0
    %v1234 = vadd.f32 0.0, %v1233
    %1235 = vmatprep.mubr.f32.mxu0 0.0
    %1236 = vmatmul.mubr.f32.gmra.mrb[0].mxu0 %v1119
    %v1237 = vpop.f32.mrb[0].mxu0
    %v1238 = vadd.f32 0.0, %v1237
    %v1239 = vpop.f32.mrb[0].mxu0
    %v1240 = vadd.f32 0.0, %v1239
    %1241 = vmatprep.mubr.f32.mxu0 0.0
    %1242 = vmatmul.mubr.f32.gmra.mrb[0].mxu0 %v1120
    %v1243 = vpop.f32.mrb[0].mxu0
    %v1244 = vadd.f32 0.0, %v1243
    %v1245 = vpop.f32.mrb[0].mxu0
    %v1246 = vadd.f32 0.0, %v1245
    %1247 = vmatprep.mubr.f32.mxu0 0.0
    %1248 = vmatmul.mubr.f32.gmra.mrb[0].mxu0 %v1121
    %v1249 = vpop.f32.mrb[0].mxu0
    %v1250 = vadd.f32 0.0, %v1249
    %v1251 = vpop.f32.mrb[0].mxu0
    %v1252 = vadd.f32 0.0, %v1251
    %1253 = vmatprep.mubr.f32.mxu0 0.0
    %1254 = vmatmul.mubr.f32.gmra.mrb[0].mxu0 %v1122
    %v1255 = vpop.f32.mrb[0].mxu0
    %v1256 = vadd.f32 0.0, %v1255
    %v1257 = vpop.f32.mrb[0].mxu0
    %v1258 = vadd.f32 0.0, %v1257
    %1259 = vdwg.mxu0
    %1260 = vmatprep.subr.mxu0 %v1050
    %1261 = vmatpush1.msra.mxu0 %v1049
    %1262 = vmatprep.subr.mxu0 %v1054
    %1263 = vmatpush1.msra.mxu0 %v1053
    %1264 = vmatprep.subr.mxu0 %v1058
    %1265 = vmatpush1.msra.mxu0 %v1057
    %1266 = vmatprep.subr.mxu0 %v1062
    %1267 = vmatpush1.msra.mxu0 %v1061
    %1268 = vmatprep.subr.mxu0 %v1066
    %1269 = vmatpush1.msra.mxu0 %v1065
    %1270 = vmatprep.subr.mxu0 %v1070
    %1271 = vmatpush1.msra.mxu0 %v1069
    %1272 = vmatprep.subr.mxu0 %v1074
    %1273 = vmatpush1.msra.mxu0 %v1073
    %1274 = vmatprep.subr.mxu0 %v1078
    %1275 = vmatpush1.msra.mxu0 %v1077
    %1276 = vmatprep.subr.mxu0 %v1082
    %1277 = vmatpush1.msra.mxu0 %v1081
    %1278 = vmatprep.subr.mxu0 %v1086
    %1279 = vmatpush1.msra.mxu0 %v1085
    %1280 = vmatprep.subr.mxu0 %v1090
    %1281 = vmatpush1.msra.mxu0 %v1089
    %1282 = vmatprep.subr.mxu0 %v1094
    %1283 = vmatpush1.msra.mxu0 %v1093
    %1284 = vmatprep.subr.mxu0 %v1098
    %1285 = vmatpush1.msra.mxu0 %v1097
    %1286 = vmatprep.subr.mxu0 %v1102
    %1287 = vmatpush1.msra.mxu0 %v1101
    %1288 = vmatprep.subr.mxu0 %v1106
    %1289 = vmatpush1.msra.mxu0 %v1105
    %1290 = vmatprep.subr.mxu0 %v1110
    %1291 = vmatpush1.msra.mxu0 %v1109
    %1292 = vmatprep.subr.mxu0 0.0
    %1293 = vmatpush1.msra.mxu0 0.0
    %1294 = vmatprep.subr.mxu0 0.0
    %1295 = vmatpush1.msra.mxu0 0.0
    %1296 = vmatprep.subr.mxu0 0.0
    %1297 = vmatpush1.msra.mxu0 0.0
    %1298 = vmatprep.subr.mxu0 0.0
    %1299 = vmatpush1.msra.mxu0 0.0
    %1300 = vmatprep.subr.mxu0 0.0
    %1301 = vmatpush1.msra.mxu0 0.0
    %1302 = vmatprep.subr.mxu0 0.0
    %1303 = vmatpush1.msra.mxu0 0.0
    %1304 = vmatprep.subr.mxu0 0.0
    %1305 = vmatpush1.msra.mxu0 0.0
    %1306 = vmatprep.subr.mxu0 0.0
    %1307 = vmatpush1.msra.mxu0 0.0
    %1308 = vmatprep.subr.mxu0 0.0
    %1309 = vmatpush1.msra.mxu0 0.0
    %1310 = vmatprep.subr.mxu0 0.0
    %1311 = vmatpush1.msra.mxu0 0.0
    %1312 = vmatprep.subr.mxu0 0.0
    %1313 = vmatpush1.msra.mxu0 0.0
    %1314 = vmatprep.subr.mxu0 0.0
    %1315 = vmatpush1.msra.mxu0 0.0
    %1316 = vmatprep.subr.mxu0 0.0
    %1317 = vmatpush1.msra.mxu0 0.0
    %1318 = vmatprep.subr.mxu0 0.0
    %1319 = vmatpush1.msra.mxu0 0.0
    %1320 = vmatprep.subr.mxu0 0.0
    %1321 = vmatpush1.msra.mxu0 0.0
    %1322 = vmatprep.subr.mxu0 0.0
    %1323 = vmatpush1.msra.mxu0 0.0
    %1324 = vmatprep.mubr.f32.mxu0 0.0
    %1325 = vmatmul.mubr.f32.gmra.mrb[0].mxu0 %v1111
    %v1326 = vpop.f32.mrb[0].mxu0
    %v1327 = vadd.f32 0.0, %v1326
    %v1328 = vpop.f32.mrb[0].mxu0
    %v1329 = vadd.f32 0.0, %v1328
    %1330 = vmatprep.mubr.f32.mxu0 0.0
    %1331 = vmatmul.mubr.f32.gmra.mrb[0].mxu0 %v1112
    %v1332 = vpop.f32.mrb[0].mxu0
    %v1333 = vadd.f32 0.0, %v1332
    %v1334 = vpop.f32.mrb[0].mxu0
    %v1335 = vadd.f32 0.0, %v1334
    %1336 = vmatprep.mubr.f32.mxu0 0.0
    %1337 = vmatmul.mubr.f32.gmra.mrb[0].mxu0 %v1113
    %v1338 = vpop.f32.mrb[0].mxu0
    %v1339 = vadd.f32 0.0, %v1338
    %v1340 = vpop.f32.mrb[0].mxu0
    %v1341 = vadd.f32 0.0, %v1340
    %1342 = vmatprep.mubr.f32.mxu0 0.0
    %1343 = vmatmul.mubr.f32.gmra.mrb[0].mxu0 %v1114
    %v1344 = vpop.f32.mrb[0].mxu0
    %v1345 = vadd.f32 0.0, %v1344
    %v1346 = vpop.f32.mrb[0].mxu0
    %v1347 = vadd.f32 0.0, %v1346
    %1348 = vmatprep.mubr.f32.mxu0 0.0
    %1349 = vmatmul.mubr.f32.gmra.mrb[0].mxu0 %v1115
    %v1350 = vpop.f32.mrb[0].mxu0
    %v1351 = vadd.f32 0.0, %v1350
    %v1352 = vpop.f32.mrb[0].mxu0
    %v1353 = vadd.f32 0.0, %v1352
    %1354 = vmatprep.mubr.f32.mxu0 0.0
    %1355 = vmatmul.mubr.f32.gmra.mrb[0].mxu0 %v1116
    %v1356 = vpop.f32.mrb[0].mxu0
    %v1357 = vadd.f32 0.0, %v1356
    %v1358 = vpop.f32.mrb[0].mxu0
    %v1359 = vadd.f32 0.0, %v1358
    %1360 = vmatprep.mubr.f32.mxu0 0.0
    %1361 = vmatmul.mubr.f32.gmra.mrb[0].mxu0 %v1117
    %v1362 = vpop.f32.mrb[0].mxu0
    %v1363 = vadd.f32 0.0, %v1362
    %v1364 = vpop.f32.mrb[0].mxu0
    %v1365 = vadd.f32 0.0, %v1364
    %1366 = vmatprep.mubr.f32.mxu0 0.0
    %1367 = vmatmul.mubr.f32.gmra.mrb[0].mxu0 %v1118
    %v1368 = vpop.f32.mrb[0].mxu0
    %v1369 = vadd.f32 0.0, %v1368
    %v1370 = vpop.f32.mrb[0].mxu0
    %v1371 = vadd.f32 0.0, %v1370
    %1372 = vmatprep.mubr.f32.mxu0 0.0
    %1373 = vmatmul.mubr.f32.gmra.mrb[0].mxu0 %v1119
    %v1374 = vpop.f32.mrb[0].mxu0
    %v1375 = vadd.f32 0.0, %v1374
    %v1376 = vpop.f32.mrb[0].mxu0
    %v1377 = vadd.f32 0.0, %v1376
    %1378 = vmatprep.mubr.f32.mxu0 0.0
    %1379 = vmatmul.mubr.f32.gmra.mrb[0].mxu0 %v1120
    %v1380 = vpop.f32.mrb[0].mxu0
    %v1381 = vadd.f32 0.0, %v1380
    %v1382 = vpop.f32.mrb[0].mxu0
    %v1383 = vadd.f32 0.0, %v1382
    %1384 = vmatprep.mubr.f32.mxu0 0.0
    %1385 = vmatmul.mubr.f32.gmra.mrb[0].mxu0 %v1121
    %v1386 = vpop.f32.mrb[0].mxu0
    %v1387 = vadd.f32 0.0, %v1386
    %v1388 = vpop.f32.mrb[0].mxu0
    %v1389 = vadd.f32 0.0, %v1388
    %1390 = vmatprep.mubr.f32.mxu0 0.0
    %1391 = vmatmul.mubr.f32.gmra.mrb[0].mxu0 %v1122
    %v1392 = vpop.f32.mrb[0].mxu0
    %v1393 = vadd.f32 0.0, %v1392
    %v1394 = vpop.f32.mrb[0].mxu0
    %v1395 = vadd.f32 0.0, %v1394
    %1396 = vdwg.mxu0
    %v1397 = vld [vmem:[#allocation9] sm:$0xff]
    %v1398 = vld [vmem:[#allocation9 + $0x8] sm:$0xff]
    %v1399 = vld [vmem:[#allocation9 + $0x10] sm:$0xff]
    %v1400 = vld [vmem:[#allocation9 + $0x18] sm:$0xff]
    %v1401 = vld [vmem:[#allocation9 + $0x20] sm:$0xff]
    %v1402 = vld [vmem:[#allocation9 + $0x28] sm:$0xff]
    %v1403 = vld [vmem:[#allocation9 + $0x30] sm:$0xff]
    %v1404 = vld [vmem:[#allocation9 + $0x38] sm:$0xff]
    %v1405 = vld [vmem:[#allocation9 + $0x40] sm:$0xff]
    %v1406 = vld [vmem:[#allocation9 + $0x48] sm:$0xff]
    %v1407 = vld [vmem:[#allocation9 + $0x50] sm:$0xff]
    %v1408 = vld [vmem:[#allocation9 + $0x58] sm:$0xff]
    %v1409 = vld [vmem:[#allocation9 + $0x60] sm:$0xff]
    %v1410 = vld [vmem:[#allocation9 + $0x68] sm:$0xff]
    %v1411 = vld [vmem:[#allocation9 + $0x70] sm:$0xff]
    %v1412 = vld [vmem:[#allocation9 + $0x78] sm:$0xff]
    %v1413 = vld [vmem:[#allocation9 + $0x80] sm:$0xff]
    %v1414 = vld [vmem:[#allocation9 + $0x88] sm:$0xff]
    %v1415 = vld [vmem:[#allocation9 + $0x90] sm:$0xff]
    %v1416 = vld [vmem:[#allocation9 + $0x98] sm:$0xff]
    %v1417 = vld [vmem:[#allocation9 + $0xa0] sm:$0xff]
    %v1418 = vld [vmem:[#allocation9 + $0xa8] sm:$0xff]
    %v1419 = vld [vmem:[#allocation9 + $0xb0] sm:$0xff]
    %v1420 = vld [vmem:[#allocation9 + $0xb8] sm:$0xff]
    %v1421 = vld [vmem:[#allocation9 + $0xc0] sm:$0xff]
    %v1422 = vld [vmem:[#allocation9 + $0xc8] sm:$0xff]
    %v1423 = vld [vmem:[#allocation9 + $0xd0] sm:$0xff]
    %v1424 = vld [vmem:[#allocation9 + $0xd8] sm:$0xff]
    %v1425 = vld [vmem:[#allocation9 + $0xe0] sm:$0xff]
    %v1426 = vld [vmem:[#allocation9 + $0xe8] sm:$0xff]
    %v1427 = vld [vmem:[#allocation9 + $0xf0] sm:$0xff]
    %v1428 = vld [vmem:[#allocation9 + $0xf8] sm:$0xff]
    %v1429 = vld [vmem:[#allocation9 + $0x100] sm:$0xff]
    %v1430 = vld [vmem:[#allocation9 + $0x108] sm:$0xff]
    %v1431 = vld [vmem:[#allocation9 + $0x110] sm:$0xff]
    %v1432 = vld [vmem:[#allocation9 + $0x118] sm:$0xff]
    %v1433 = vld [vmem:[#allocation9 + $0x120] sm:$0xff]
    %v1434 = vld [vmem:[#allocation9 + $0x128] sm:$0xff]
    %v1435 = vld [vmem:[#allocation9 + $0x130] sm:$0xff]
    %v1436 = vld [vmem:[#allocation9 + $0x138] sm:$0xff]
    %v1437 = vld [vmem:[#allocation9 + $0x140] sm:$0xff]
    %v1438 = vld [vmem:[#allocation9 + $0x148] sm:$0xff]
    %v1439 = vld [vmem:[#allocation9 + $0x150] sm:$0xff]
    %v1440 = vld [vmem:[#allocation9 + $0x158] sm:$0xff]
    %v1441 = vld [vmem:[#allocation9 + $0x160] sm:$0xff]
    %v1442 = vld [vmem:[#allocation9 + $0x168] sm:$0xff]
    %v1443 = vld [vmem:[#allocation9 + $0x170] sm:$0xff]
    %v1444 = vld [vmem:[#allocation9 + $0x178] sm:$0xff]
    %v1445 = vld [vmem:[#allocation9 + $0x180] sm:$0xff]
    %v1446 = vld [vmem:[#allocation9 + $0x188] sm:$0xff]
    %v1447 = vld [vmem:[#allocation9 + $0x190] sm:$0xff]
    %v1448 = vld [vmem:[#allocation9 + $0x198] sm:$0xff]
    %v1449 = vld [vmem:[#allocation9 + $0x1a0] sm:$0xff]
    %v1450 = vld [vmem:[#allocation9 + $0x1a8] sm:$0xff]
    %v1451 = vld [vmem:[#allocation9 + $0x1b0] sm:$0xff]
    %v1452 = vld [vmem:[#allocation9 + $0x1b8] sm:$0xff]
    %v1453 = vld [vmem:[#allocation9 + $0x1c0] sm:$0xff]
    %v1454 = vld [vmem:[#allocation9 + $0x1c8] sm:$0xff]
    %v1455 = vld [vmem:[#allocation9 + $0x1d0] sm:$0xff]
    %v1456 = vld [vmem:[#allocation9 + $0x1d8] sm:$0xff]
    %v1457 = vld [vmem:[#allocation9 + $0x1e0] sm:$0xff]
    %v1458 = vld [vmem:[#allocation9 + $0x1e8] sm:$0xff]
    %v1459 = vld [vmem:[#allocation9 + $0x1f0] sm:$0xff]
    %v1460 = vld [vmem:[#allocation9 + $0x1f8] sm:$0xff]
    %v1461 = vld [vmem:[#allocation9 + $0x200] sm:$0xff]
    %v1462 = vld [vmem:[#allocation9 + $0x208] sm:$0xff]
    %v1463 = vld [vmem:[#allocation9 + $0x210] sm:$0xff]
    %v1464 = vld [vmem:[#allocation9 + $0x218] sm:$0xff]
    %v1465 = vld [vmem:[#allocation9 + $0x220] sm:$0xff]
    %v1466 = vld [vmem:[#allocation9 + $0x228] sm:$0xff]
    %v1467 = vld [vmem:[#allocation9 + $0x230] sm:$0xff]
    %v1468 = vld [vmem:[#allocation9 + $0x238] sm:$0xff]
    %v1469 = vld [vmem:[#allocation9 + $0x240] sm:$0xff]
    %v1470 = vld [vmem:[#allocation9 + $0x248] sm:$0xff]
    %v1471 = vld [vmem:[#allocation9 + $0x250] sm:$0xff]
    %v1472 = vld [vmem:[#allocation9 + $0x258] sm:$0xff]
    %v1473 = vld [vmem:[#allocation9 + $0x260] sm:$0xff]
    %v1474 = vld [vmem:[#allocation9 + $0x268] sm:$0xff]
    %v1475 = vld [vmem:[#allocation9 + $0x270] sm:$0xff]
    %v1476 = vld [vmem:[#allocation9 + $0x278] sm:$0xff]
    %v1477 = vld [vmem:[#allocation9 + $0x280] sm:$0xff]
    %v1478 = vld [vmem:[#allocation9 + $0x288] sm:$0xff]
    %v1479 = vld [vmem:[#allocation9 + $0x290] sm:$0xff]
    %v1480 = vld [vmem:[#allocation9 + $0x298] sm:$0xff]
    %v1481 = vld [vmem:[#allocation9 + $0x2a0] sm:$0xff]
    %v1482 = vld [vmem:[#allocation9 + $0x2a8] sm:$0xff]
    %v1483 = vld [vmem:[#allocation9 + $0x2b0] sm:$0xff]
    %v1484 = vld [vmem:[#allocation9 + $0x2b8] sm:$0xff]
    %v1485 = vld [vmem:[#allocation9 + $0x2c0] sm:$0xff]
    %v1486 = vld [vmem:[#allocation9 + $0x2c8] sm:$0xff]
    %v1487 = vld [vmem:[#allocation9 + $0x2d0] sm:$0xff]
    %v1488 = vld [vmem:[#allocation9 + $0x2d8] sm:$0xff]
    %v1489 = vld [vmem:[#allocation9 + $0x2e0] sm:$0xff]
    %v1490 = vld [vmem:[#allocation9 + $0x2e8] sm:$0xff]
    %v1491 = vld [vmem:[#allocation9 + $0x2f0] sm:$0xff]
    %v1492 = vld [vmem:[#allocation9 + $0x2f8] sm:$0xff]
    %v1493 = vld [vmem:[#allocation9 + $0x300] sm:$0xff]
    %v1494 = vld [vmem:[#allocation9 + $0x308] sm:$0xff]
    %v1495 = vld [vmem:[#allocation9 + $0x310] sm:$0xff]
    %v1496 = vld [vmem:[#allocation9 + $0x318] sm:$0xff]
    %v1497 = vld [vmem:[#allocation9 + $0x320] sm:$0xff]
    %v1498 = vld [vmem:[#allocation9 + $0x328] sm:$0xff]
    %v1499 = vld [vmem:[#allocation9 + $0x330] sm:$0xff]
    %v1500 = vld [vmem:[#allocation9 + $0x338] sm:$0xff]
    %v1501 = vld [vmem:[#allocation9 + $0x340] sm:$0xff]
    %v1502 = vld [vmem:[#allocation9 + $0x348] sm:$0xff]
    %v1503 = vld [vmem:[#allocation9 + $0x350] sm:$0xff]
    %v1504 = vld [vmem:[#allocation9 + $0x358] sm:$0xff]
    %v1505 = vld [vmem:[#allocation9 + $0x360] sm:$0xff]
    %v1506 = vld [vmem:[#allocation9 + $0x368] sm:$0xff]
    %v1507 = vld [vmem:[#allocation9 + $0x370] sm:$0xff]
    %v1508 = vld [vmem:[#allocation9 + $0x378] sm:$0xff]
    %v1509 = vld [vmem:[#allocation9 + $0x380] sm:$0xff]
    %v1510 = vld [vmem:[#allocation9 + $0x388] sm:$0xff]
    %v1511 = vld [vmem:[#allocation9 + $0x390] sm:$0xff]
    %v1512 = vld [vmem:[#allocation9 + $0x398] sm:$0xff]
    %v1513 = vld [vmem:[#allocation9 + $0x3a0] sm:$0xff]
    %v1514 = vld [vmem:[#allocation9 + $0x3a8] sm:$0xff]
    %v1515 = vld [vmem:[#allocation9 + $0x3b0] sm:$0xff]
    %v1516 = vld [vmem:[#allocation9 + $0x3b8] sm:$0xff]
    %v1517 = vld [vmem:[#allocation9 + $0x3c0] sm:$0xff]
    %v1518 = vld [vmem:[#allocation9 + $0x3c8] sm:$0xff]
    %v1519 = vld [vmem:[#allocation9 + $0x3d0] sm:$0xff]
    %v1520 = vld [vmem:[#allocation9 + $0x3d8] sm:$0xff]
    %v1521 = vld [vmem:[#allocation9 + $0x3e0] sm:$0xff]
    %v1522 = vld [vmem:[#allocation9 + $0x3e8] sm:$0xff]
    %v1523 = vld [vmem:[#allocation9 + $0x3f0] sm:$0xff]
    %v1524 = vld [vmem:[#allocation9 + $0x3f8] sm:$0xff]
    %v1525 = vld [vmem:[#allocation9 + $0x400] sm:$0xff]
    %v1526 = vld [vmem:[#allocation9 + $0x408] sm:$0xff]
    %v1527 = vld [vmem:[#allocation9 + $0x410] sm:$0xff]
    %v1528 = vld [vmem:[#allocation9 + $0x418] sm:$0xff]
    %v1529 = vld [vmem:[#allocation9 + $0x420] sm:$0xff]
    %v1530 = vld [vmem:[#allocation9 + $0x428] sm:$0xff]
    %v1531 = vld [vmem:[#allocation9 + $0x430] sm:$0xff]
    %v1532 = vld [vmem:[#allocation9 + $0x438] sm:$0xff]
    %v1533 = vld [vmem:[#allocation9 + $0x440] sm:$0xff]
    %v1534 = vld [vmem:[#allocation9 + $0x448] sm:$0xff]
    %v1535 = vld [vmem:[#allocation9 + $0x450] sm:$0xff]
    %v1536 = vld [vmem:[#allocation9 + $0x458] sm:$0xff]
    %v1537 = vld [vmem:[#allocation9 + $0x460] sm:$0xff]
    %v1538 = vld [vmem:[#allocation9 + $0x468] sm:$0xff]
    %v1539 = vld [vmem:[#allocation9 + $0x470] sm:$0xff]
    %v1540 = vld [vmem:[#allocation9 + $0x478] sm:$0xff]
    %v1541 = vld [vmem:[#allocation9 + $0x480] sm:$0xff]
    %v1542 = vld [vmem:[#allocation9 + $0x488] sm:$0xff]
    %v1543 = vld [vmem:[#allocation9 + $0x490] sm:$0xff]
    %v1544 = vld [vmem:[#allocation9 + $0x498] sm:$0xff]
    %v1545 = vld [vmem:[#allocation9 + $0x4a0] sm:$0xff]
    %v1546 = vld [vmem:[#allocation9 + $0x4a8] sm:$0xff]
    %v1547 = vld [vmem:[#allocation9 + $0x4b0] sm:$0xff]
    %v1548 = vld [vmem:[#allocation9 + $0x4b8] sm:$0xff]
    %v1549 = vld [vmem:[#allocation9 + $0x4c0] sm:$0xff]
    %v1550 = vld [vmem:[#allocation9 + $0x4c8] sm:$0xff]
    %v1551 = vld [vmem:[#allocation9 + $0x4d0] sm:$0xff]
    %v1552 = vld [vmem:[#allocation9 + $0x4d8] sm:$0xff]
    %v1553 = vld [vmem:[#allocation9 + $0x4e0] sm:$0xff]
    %v1554 = vld [vmem:[#allocation9 + $0x4e8] sm:$0xff]
    %v1555 = vld [vmem:[#allocation9 + $0x4f0] sm:$0xff]
    %v1556 = vld [vmem:[#allocation9 + $0x4f8] sm:$0xff]
    %v1557 = vld [vmem:[#allocation9 + $0x500] sm:$0xff]
    %v1558 = vld [vmem:[#allocation9 + $0x508] sm:$0xff]
    %v1559 = vld [vmem:[#allocation9 + $0x510] sm:$0xff]
    %v1560 = vld [vmem:[#allocation9 + $0x518] sm:$0xff]
    %v1561 = vld [vmem:[#allocation9 + $0x520] sm:$0xff]
    %v1562 = vld [vmem:[#allocation9 + $0x528] sm:$0xff]
    %v1563 = vld [vmem:[#allocation9 + $0x530] sm:$0xff]
    %v1564 = vld [vmem:[#allocation9 + $0x538] sm:$0xff]
    %v1565 = vld [vmem:[#allocation9 + $0x540] sm:$0xff]
    %v1566 = vld [vmem:[#allocation9 + $0x548] sm:$0xff]
    %v1567 = vld [vmem:[#allocation9 + $0x550] sm:$0xff]
    %v1568 = vld [vmem:[#allocation9 + $0x558] sm:$0xff]
    %v1569 = vld [vmem:[#allocation9 + $0x560] sm:$0xff]
    %v1570 = vld [vmem:[#allocation9 + $0x568] sm:$0xff]
    %v1571 = vld [vmem:[#allocation9 + $0x570] sm:$0xff]
    %v1572 = vld [vmem:[#allocation9 + $0x578] sm:$0xff]
    %v1573 = vld [vmem:[#allocation9 + $0x580] sm:$0xff]
    %v1574 = vld [vmem:[#allocation9 + $0x588] sm:$0xff]
    %v1575 = vld [vmem:[#allocation9 + $0x590] sm:$0xff]
    %v1576 = vld [vmem:[#allocation9 + $0x598] sm:$0xff]
    %v1577 = vld [vmem:[#allocation9 + $0x5a0] sm:$0xff]
    %v1578 = vld [vmem:[#allocation9 + $0x5a8] sm:$0xff]
    %v1579 = vld [vmem:[#allocation9 + $0x5b0] sm:$0xff]
    %v1580 = vld [vmem:[#allocation9 + $0x5b8] sm:$0xff]
    %v1581 = vld [vmem:[#allocation9 + $0x5c0] sm:$0xff]
    %v1582 = vld [vmem:[#allocation9 + $0x5c8] sm:$0xff]
    %v1583 = vld [vmem:[#allocation9 + $0x5d0] sm:$0xff]
    %v1584 = vld [vmem:[#allocation9 + $0x5d8] sm:$0xff]
    %v1585 = vld [vmem:[#allocation9 + $0x5e0] sm:$0xff]
    %v1586 = vld [vmem:[#allocation9 + $0x5e8] sm:$0xff]
    %v1587 = vld [vmem:[#allocation9 + $0x5f0] sm:$0xff]
    %v1588 = vld [vmem:[#allocation9 + $0x5f8] sm:$0xff]
    %1589 = vmatprep.subr.mxu0 %v1398
    %1590 = vmatpush1.msra.mxu0 %v1397
    %1591 = vmatprep.subr.mxu0 %v1401
    %1592 = vmatpush1.msra.mxu0 %v1400
    %1593 = vmatprep.subr.mxu0 %v1404
    %1594 = vmatpush1.msra.mxu0 %v1403
    %1595 = vmatprep.subr.mxu0 %v1407
    %1596 = vmatpush1.msra.mxu0 %v1406
    %1597 = vmatprep.subr.mxu0 %v1410
    %1598 = vmatpush1.msra.mxu0 %v1409
    %1599 = vmatprep.subr.mxu0 %v1413
    %1600 = vmatpush1.msra.mxu0 %v1412
    %1601 = vmatprep.subr.mxu0 %v1416
    %1602 = vmatpush1.msra.mxu0 %v1415
    %1603 = vmatprep.subr.mxu0 %v1419
    %1604 = vmatpush1.msra.mxu0 %v1418
    %1605 = vmatprep.subr.mxu0 %v1422
    %1606 = vmatpush1.msra.mxu0 %v1421
    %1607 = vmatprep.subr.mxu0 %v1425
    %1608 = vmatpush1.msra.mxu0 %v1424
    %1609 = vmatprep.subr.mxu0 %v1428
    %1610 = vmatpush1.msra.mxu0 %v1427
    %1611 = vmatprep.subr.mxu0 %v1431
    %1612 = vmatpush1.msra.mxu0 %v1430
    %1613 = vmatprep.subr.mxu0 %v1434
    %1614 = vmatpush1.msra.mxu0 %v1433
    %1615 = vmatprep.subr.mxu0 %v1437
    %1616 = vmatpush1.msra.mxu0 %v1436
    %1617 = vmatprep.subr.mxu0 %v1440
    %1618 = vmatpush1.msra.mxu0 %v1439
    %1619 = vmatprep.subr.mxu0 %v1443
    %1620 = vmatpush1.msra.mxu0 %v1442
    %1621 = vmatprep.subr.mxu0 %v1446
    %1622 = vmatpush1.msra.mxu0 %v1445
    %1623 = vmatprep.subr.mxu0 %v1449
    %1624 = vmatpush1.msra.mxu0 %v1448
    %1625 = vmatprep.subr.mxu0 %v1452
    %1626 = vmatpush1.msra.mxu0 %v1451
    %1627 = vmatprep.subr.mxu0 %v1455
    %1628 = vmatpush1.msra.mxu0 %v1454
    %1629 = vmatprep.subr.mxu0 %v1458
    %1630 = vmatpush1.msra.mxu0 %v1457
    %1631 = vmatprep.subr.mxu0 %v1461
    %1632 = vmatpush1.msra.mxu0 %v1460
    %1633 = vmatprep.subr.mxu0 %v1464
    %1634 = vmatpush1.msra.mxu0 %v1463
    %1635 = vmatprep.subr.mxu0 %v1467
    %1636 = vmatpush1.msra.mxu0 %v1466
    %1637 = vmatprep.subr.mxu0 %v1470
    %1638 = vmatpush1.msra.mxu0 %v1469
    %1639 = vmatprep.subr.mxu0 %v1473
    %1640 = vmatpush1.msra.mxu0 %v1472
    %1641 = vmatprep.subr.mxu0 %v1476
    %1642 = vmatpush1.msra.mxu0 %v1475
    %1643 = vmatprep.subr.mxu0 %v1479
    %1644 = vmatpush1.msra.mxu0 %v1478
    %1645 = vmatprep.subr.mxu0 %v1482
    %1646 = vmatpush1.msra.mxu0 %v1481
    %1647 = vmatprep.subr.mxu0 %v1485
    %1648 = vmatpush1.msra.mxu0 %v1484
    %1649 = vmatprep.subr.mxu0 %v1488
    %1650 = vmatpush1.msra.mxu0 %v1487
    %1651 = vmatprep.subr.mxu0 %v1491
    %1652 = vmatpush1.msra.mxu0 %v1490
    %1653 = vmatprep.mubr.f32.mxu0 %v1192
    %1654 = vmatmul.mubr.f32.gmra.mrb[0].mxu0 %v1190
    %v1655 = vpop.f32.mrb[0].mxu0
    %v1656 = vadd.f32 0.0, %v1655
    %v1657 = vpop.f32.mrb[0].mxu0
    %v1658 = vadd.f32 0.0, %v1657
    %1659 = vmatprep.mubr.f32.mxu0 %v1198
    %1660 = vmatmul.mubr.f32.gmra.mrb[0].mxu0 %v1196
    %v1661 = vpop.f32.mrb[0].mxu0
    %v1662 = vadd.f32 0.0, %v1661
    %v1663 = vpop.f32.mrb[0].mxu0
    %v1664 = vadd.f32 0.0, %v1663
    %1665 = vmatprep.mubr.f32.mxu0 %v1204
    %1666 = vmatmul.mubr.f32.gmra.mrb[0].mxu0 %v1202
    %v1667 = vpop.f32.mrb[0].mxu0
    %v1668 = vadd.f32 0.0, %v1667
    %v1669 = vpop.f32.mrb[0].mxu0
    %v1670 = vadd.f32 0.0, %v1669
    %1671 = vmatprep.mubr.f32.mxu0 %v1210
    %1672 = vmatmul.mubr.f32.gmra.mrb[0].mxu0 %v1208
    %v1673 = vpop.f32.mrb[0].mxu0
    %v1674 = vadd.f32 0.0, %v1673
    %v1675 = vpop.f32.mrb[0].mxu0
    %v1676 = vadd.f32 0.0, %v1675
    %1677 = vmatprep.mubr.f32.mxu0 %v1216
    %1678 = vmatmul.mubr.f32.gmra.mrb[0].mxu0 %v1214
    %v1679 = vpop.f32.mrb[0].mxu0
    %v1680 = vadd.f32 0.0, %v1679
    %v1681 = vpop.f32.mrb[0].mxu0
    %v1682 = vadd.f32 0.0, %v1681
    %1683 = vmatprep.mubr.f32.mxu0 %v1222
    %1684 = vmatmul.mubr.f32.gmra.mrb[0].mxu0 %v1220
    %v1685 = vpop.f32.mrb[0].mxu0
    %v1686 = vadd.f32 0.0, %v1685
    %v1687 = vpop.f32.mrb[0].mxu0
    %v1688 = vadd.f32 0.0, %v1687
    %1689 = vmatprep.mubr.f32.mxu0 %v1228
    %1690 = vmatmul.mubr.f32.gmra.mrb[0].mxu0 %v1226
    %v1691 = vpop.f32.mrb[0].mxu0
    %v1692 = vadd.f32 0.0, %v1691
    %v1693 = vpop.f32.mrb[0].mxu0
    %v1694 = vadd.f32 0.0, %v1693
    %1695 = vmatprep.mubr.f32.mxu0 %v1234
    %1696 = vmatmul.mubr.f32.gmra.mrb[0].mxu0 %v1232
    %v1697 = vpop.f32.mrb[0].mxu0
    %v1698 = vadd.f32 0.0, %v1697
    %v1699 = vpop.f32.mrb[0].mxu0
    %v1700 = vadd.f32 0.0, %v1699
    %1701 = vmatprep.mubr.f32.mxu0 %v1240
    %1702 = vmatmul.mubr.f32.gmra.mrb[0].mxu0 %v1238
    %v1703 = vpop.f32.mrb[0].mxu0
    %v1704 = vadd.f32 0.0, %v1703
    %v1705 = vpop.f32.mrb[0].mxu0
    %v1706 = vadd.f32 0.0, %v1705
    %1707 = vmatprep.mubr.f32.mxu0 %v1246
    %1708 = vmatmul.mubr.f32.gmra.mrb[0].mxu0 %v1244
    %v1709 = vpop.f32.mrb[0].mxu0
    %v1710 = vadd.f32 0.0, %v1709
    %v1711 = vpop.f32.mrb[0].mxu0
    %v1712 = vadd.f32 0.0, %v1711
    %1713 = vmatprep.mubr.f32.mxu0 %v1252
    %1714 = vmatmul.mubr.f32.gmra.mrb[0].mxu0 %v1250
    %v1715 = vpop.f32.mrb[0].mxu0
    %v1716 = vadd.f32 0.0, %v1715
    %v1717 = vpop.f32.mrb[0].mxu0
    %v1718 = vadd.f32 0.0, %v1717
    %1719 = vmatprep.mubr.f32.mxu0 %v1258
    %1720 = vmatmul.mubr.f32.gmra.mrb[0].mxu0 %v1256
    %v1721 = vpop.f32.mrb[0].mxu0
    %v1722 = vadd.f32 0.0, %v1721
    %v1723 = vpop.f32.mrb[0].mxu0
    %v1724 = vadd.f32 0.0, %v1723
    %1725 = vdwg.mxu0
    %1726 = vmatprep.subr.mxu0 %v1494
    %1727 = vmatpush1.msra.mxu0 %v1493
    %1728 = vmatprep.subr.mxu0 %v1497
    %1729 = vmatpush1.msra.mxu0 %v1496
    %1730 = vmatprep.subr.mxu0 %v1500
    %1731 = vmatpush1.msra.mxu0 %v1499
    %1732 = vmatprep.subr.mxu0 %v1503
    %1733 = vmatpush1.msra.mxu0 %v1502
    %1734 = vmatprep.subr.mxu0 %v1506
    %1735 = vmatpush1.msra.mxu0 %v1505
    %1736 = vmatprep.subr.mxu0 %v1509
    %1737 = vmatpush1.msra.mxu0 %v1508
    %1738 = vmatprep.subr.mxu0 %v1512
    %1739 = vmatpush1.msra.mxu0 %v1511
    %1740 = vmatprep.subr.mxu0 %v1515
    %1741 = vmatpush1.msra.mxu0 %v1514
    %1742 = vmatprep.subr.mxu0 %v1518
    %1743 = vmatpush1.msra.mxu0 %v1517
    %1744 = vmatprep.subr.mxu0 %v1521
    %1745 = vmatpush1.msra.mxu0 %v1520
    %1746 = vmatprep.subr.mxu0 %v1524
    %1747 = vmatpush1.msra.mxu0 %v1523
    %1748 = vmatprep.subr.mxu0 %v1527
    %1749 = vmatpush1.msra.mxu0 %v1526
    %1750 = vmatprep.subr.mxu0 %v1530
    %1751 = vmatpush1.msra.mxu0 %v1529
    %1752 = vmatprep.subr.mxu0 %v1533
    %1753 = vmatpush1.msra.mxu0 %v1532
    %1754 = vmatprep.subr.mxu0 %v1536
    %1755 = vmatpush1.msra.mxu0 %v1535
    %1756 = vmatprep.subr.mxu0 %v1539
    %1757 = vmatpush1.msra.mxu0 %v1538
    %1758 = vmatprep.subr.mxu0 %v1542
    %1759 = vmatpush1.msra.mxu0 %v1541
    %1760 = vmatprep.subr.mxu0 %v1545
    %1761 = vmatpush1.msra.mxu0 %v1544
    %1762 = vmatprep.subr.mxu0 %v1548
    %1763 = vmatpush1.msra.mxu0 %v1547
    %1764 = vmatprep.subr.mxu0 %v1551
    %1765 = vmatpush1.msra.mxu0 %v1550
    %1766 = vmatprep.subr.mxu0 %v1554
    %1767 = vmatpush1.msra.mxu0 %v1553
    %1768 = vmatprep.subr.mxu0 %v1557
    %1769 = vmatpush1.msra.mxu0 %v1556
    %1770 = vmatprep.subr.mxu0 %v1560
    %1771 = vmatpush1.msra.mxu0 %v1559
    %1772 = vmatprep.subr.mxu0 %v1563
    %1773 = vmatpush1.msra.mxu0 %v1562
    %1774 = vmatprep.subr.mxu0 %v1566
    %1775 = vmatpush1.msra.mxu0 %v1565
    %1776 = vmatprep.subr.mxu0 %v1569
    %1777 = vmatpush1.msra.mxu0 %v1568
    %1778 = vmatprep.subr.mxu0 %v1572
    %1779 = vmatpush1.msra.mxu0 %v1571
    %1780 = vmatprep.subr.mxu0 %v1575
    %1781 = vmatpush1.msra.mxu0 %v1574
    %1782 = vmatprep.subr.mxu0 %v1578
    %1783 = vmatpush1.msra.mxu0 %v1577
    %1784 = vmatprep.subr.mxu0 %v1581
    %1785 = vmatpush1.msra.mxu0 %v1580
    %1786 = vmatprep.subr.mxu0 %v1584
    %1787 = vmatpush1.msra.mxu0 %v1583
    %1788 = vmatprep.subr.mxu0 %v1587
    %1789 = vmatpush1.msra.mxu0 %v1586
    %1790 = vmatprep.mubr.f32.mxu0 %v1329
    %1791 = vmatmul.mubr.f32.gmra.mrb[0].mxu0 %v1327
    %v1792 = vpop.f32.mrb[0].mxu0
    %v1793 = vadd.f32 %v1656, %v1792
    %v1794 = vpop.f32.mrb[0].mxu0
    %v1795 = vadd.f32 %v1658, %v1794
    %1796 = vmatprep.mubr.f32.mxu0 %v1335
    %1797 = vmatmul.mubr.f32.gmra.mrb[0].mxu0 %v1333
    %v1798 = vpop.f32.mrb[0].mxu0
    %v1799 = vadd.f32 %v1662, %v1798
    %v1800 = vpop.f32.mrb[0].mxu0
    %v1801 = vadd.f32 %v1664, %v1800
    %1802 = vmatprep.mubr.f32.mxu0 %v1341
    %1803 = vmatmul.mubr.f32.gmra.mrb[0].mxu0 %v1339
    %v1804 = vpop.f32.mrb[0].mxu0
    %v1805 = vadd.f32 %v1668, %v1804
    %v1806 = vpop.f32.mrb[0].mxu0
    %v1807 = vadd.f32 %v1670, %v1806
    %1808 = vmatprep.mubr.f32.mxu0 %v1347
    %1809 = vmatmul.mubr.f32.gmra.mrb[0].mxu0 %v1345
    %v1810 = vpop.f32.mrb[0].mxu0
    %v1811 = vadd.f32 %v1674, %v1810
    %v1812 = vpop.f32.mrb[0].mxu0
    %v1813 = vadd.f32 %v1676, %v1812
    %1814 = vmatprep.mubr.f32.mxu0 %v1353
    %1815 = vmatmul.mubr.f32.gmra.mrb[0].mxu0 %v1351
    %v1816 = vpop.f32.mrb[0].mxu0
    %v1817 = vadd.f32 %v1680, %v1816
    %v1818 = vpop.f32.mrb[0].mxu0
    %v1819 = vadd.f32 %v1682, %v1818
    %1820 = vmatprep.mubr.f32.mxu0 %v1359
    %1821 = vmatmul.mubr.f32.gmra.mrb[0].mxu0 %v1357
    %v1822 = vpop.f32.mrb[0].mxu0
    %v1823 = vadd.f32 %v1686, %v1822
    %v1824 = vpop.f32.mrb[0].mxu0
    %v1825 = vadd.f32 %v1688, %v1824
    %1826 = vmatprep.mubr.f32.mxu0 %v1365
    %1827 = vmatmul.mubr.f32.gmra.mrb[0].mxu0 %v1363
    %v1828 = vpop.f32.mrb[0].mxu0
    %v1829 = vadd.f32 %v1692, %v1828
    %v1830 = vpop.f32.mrb[0].mxu0
    %v1831 = vadd.f32 %v1694, %v1830
    %1832 = vmatprep.mubr.f32.mxu0 %v1371
    %1833 = vmatmul.mubr.f32.gmra.mrb[0].mxu0 %v1369
    %v1834 = vpop.f32.mrb[0].mxu0
    %v1835 = vadd.f32 %v1698, %v1834
    %v1836 = vpop.f32.mrb[0].mxu0
    %v1837 = vadd.f32 %v1700, %v1836
    %1838 = vmatprep.mubr.f32.mxu0 %v1377
    %1839 = vmatmul.mubr.f32.gmra.mrb[0].mxu0 %v1375
    %v1840 = vpop.f32.mrb[0].mxu0
    %v1841 = vadd.f32 %v1704, %v1840
    %v1842 = vpop.f32.mrb[0].mxu0
    %v1843 = vadd.f32 %v1706, %v1842
    %1844 = vmatprep.mubr.f32.mxu0 %v1383
    %1845 = vmatmul.mubr.f32.gmra.mrb[0].mxu0 %v1381
    %v1846 = vpop.f32.mrb[0].mxu0
    %v1847 = vadd.f32 %v1710, %v1846
    %v1848 = vpop.f32.mrb[0].mxu0
    %v1849 = vadd.f32 %v1712, %v1848
    %1850 = vmatprep.mubr.f32.mxu0 %v1389
    %1851 = vmatmul.mubr.f32.gmra.mrb[0].mxu0 %v1387
    %v1852 = vpop.f32.mrb[0].mxu0
    %v1853 = vadd.f32 %v1716, %v1852
    %v1854 = vpop.f32.mrb[0].mxu0
    %v1855 = vadd.f32 %v1718, %v1854
    %1856 = vmatprep.mubr.f32.mxu0 %v1395
    %1857 = vmatmul.mubr.f32.gmra.mrb[0].mxu0 %v1393
    %v1858 = vpop.f32.mrb[0].mxu0
    %v1859 = vadd.f32 %v1722, %v1858
    %v1860 = vpop.f32.mrb[0].mxu0
    %v1861 = vadd.f32 %v1724, %v1860
    %1862 = vdwg.mxu0
    %1863 = vmatprep.subr.mxu0 0.0
    %1864 = vmatpush1.msra.mxu0 %v1399
    %1865 = vmatprep.subr.mxu0 0.0
    %1866 = vmatpush1.msra.mxu0 %v1402
    %1867 = vmatprep.subr.mxu0 0.0
    %1868 = vmatpush1.msra.mxu0 %v1405
    %1869 = vmatprep.subr.mxu0 0.0
    %1870 = vmatpush1.msra.mxu0 %v1408
    %1871 = vmatprep.subr.mxu0 0.0
    %1872 = vmatpush1.msra.mxu0 %v1411
    %1873 = vmatprep.subr.mxu0 0.0
    %1874 = vmatpush1.msra.mxu0 %v1414
    %1875 = vmatprep.subr.mxu0 0.0
    %1876 = vmatpush1.msra.mxu0 %v1417
    %1877 = vmatprep.subr.mxu0 0.0
    %1878 = vmatpush1.msra.mxu0 %v1420
    %1879 = vmatprep.subr.mxu0 0.0
    %1880 = vmatpush1.msra.mxu0 %v1423
    %1881 = vmatprep.subr.mxu0 0.0
    %1882 = vmatpush1.msra.mxu0 %v1426
    %1883 = vmatprep.subr.mxu0 0.0
    %1884 = vmatpush1.msra.mxu0 %v1429
    %1885 = vmatprep.subr.mxu0 0.0
    %1886 = vmatpush1.msra.mxu0 %v1432
    %1887 = vmatprep.subr.mxu0 0.0
    %1888 = vmatpush1.msra.mxu0 %v1435
    %1889 = vmatprep.subr.mxu0 0.0
    %1890 = vmatpush1.msra.mxu0 %v1438
    %1891 = vmatprep.subr.mxu0 0.0
    %1892 = vmatpush1.msra.mxu0 %v1441
    %1893 = vmatprep.subr.mxu0 0.0
    %1894 = vmatpush1.msra.mxu0 %v1444
    %1895 = vmatprep.subr.mxu0 0.0
    %1896 = vmatpush1.msra.mxu0 %v1447
    %1897 = vmatprep.subr.mxu0 0.0
    %1898 = vmatpush1.msra.mxu0 %v1450
    %1899 = vmatprep.subr.mxu0 0.0
    %1900 = vmatpush1.msra.mxu0 %v1453
    %1901 = vmatprep.subr.mxu0 0.0
    %1902 = vmatpush1.msra.mxu0 %v1456
    %1903 = vmatprep.subr.mxu0 0.0
    %1904 = vmatpush1.msra.mxu0 %v1459
    %1905 = vmatprep.subr.mxu0 0.0
    %1906 = vmatpush1.msra.mxu0 %v1462
    %1907 = vmatprep.subr.mxu0 0.0
    %1908 = vmatpush1.msra.mxu0 %v1465
    %1909 = vmatprep.subr.mxu0 0.0
    %1910 = vmatpush1.msra.mxu0 %v1468
    %1911 = vmatprep.subr.mxu0 0.0
    %1912 = vmatpush1.msra.mxu0 %v1471
    %1913 = vmatprep.subr.mxu0 0.0
    %1914 = vmatpush1.msra.mxu0 %v1474
    %1915 = vmatprep.subr.mxu0 0.0
    %1916 = vmatpush1.msra.mxu0 %v1477
    %1917 = vmatprep.subr.mxu0 0.0
    %1918 = vmatpush1.msra.mxu0 %v1480
    %1919 = vmatprep.subr.mxu0 0.0
    %1920 = vmatpush1.msra.mxu0 %v1483
    %1921 = vmatprep.subr.mxu0 0.0
    %1922 = vmatpush1.msra.mxu0 %v1486
    %1923 = vmatprep.subr.mxu0 0.0
    %1924 = vmatpush1.msra.mxu0 %v1489
    %1925 = vmatprep.subr.mxu0 0.0
    %1926 = vmatpush1.msra.mxu0 %v1492
    %1927 = vmatprep.mubr.f32.mxu0 %v1192
    %1928 = vmatmul.mubr.f32.gmra.mrb[0].mxu0 %v1190
    %v1929 = vpop.f32.mrb[0].mxu0
    %v1930 = vadd.f32 0.0, %v1929
    %v1931 = vpop.f32.mrb[0].mxu0
    %1932 = vmatprep.mubr.f32.mxu0 %v1198
    %1933 = vmatmul.mubr.f32.gmra.mrb[0].mxu0 %v1196
    %v1934 = vpop.f32.mrb[0].mxu0
    %v1935 = vadd.f32 0.0, %v1934
    %v1936 = vpop.f32.mrb[0].mxu0
    %1937 = vmatprep.mubr.f32.mxu0 %v1204
    %1938 = vmatmul.mubr.f32.gmra.mrb[0].mxu0 %v1202
    %v1939 = vpop.f32.mrb[0].mxu0
    %v1940 = vadd.f32 0.0, %v1939
    %v1941 = vpop.f32.mrb[0].mxu0
    %1942 = vmatprep.mubr.f32.mxu0 %v1210
    %1943 = vmatmul.mubr.f32.gmra.mrb[0].mxu0 %v1208
    %v1944 = vpop.f32.mrb[0].mxu0
    %v1945 = vadd.f32 0.0, %v1944
    %v1946 = vpop.f32.mrb[0].mxu0
    %1947 = vmatprep.mubr.f32.mxu0 %v1216
    %1948 = vmatmul.mubr.f32.gmra.mrb[0].mxu0 %v1214
    %v1949 = vpop.f32.mrb[0].mxu0
    %v1950 = vadd.f32 0.0, %v1949
    %v1951 = vpop.f32.mrb[0].mxu0
    %1952 = vmatprep.mubr.f32.mxu0 %v1222
    %1953 = vmatmul.mubr.f32.gmra.mrb[0].mxu0 %v1220
    %v1954 = vpop.f32.mrb[0].mxu0
    %v1955 = vadd.f32 0.0, %v1954
    %v1956 = vpop.f32.mrb[0].mxu0
    %1957 = vmatprep.mubr.f32.mxu0 %v1228
    %1958 = vmatmul.mubr.f32.gmra.mrb[0].mxu0 %v1226
    %v1959 = vpop.f32.mrb[0].mxu0
    %v1960 = vadd.f32 0.0, %v1959
    %v1961 = vpop.f32.mrb[0].mxu0
    %1962 = vmatprep.mubr.f32.mxu0 %v1234
    %1963 = vmatmul.mubr.f32.gmra.mrb[0].mxu0 %v1232
    %v1964 = vpop.f32.mrb[0].mxu0
    %v1965 = vadd.f32 0.0, %v1964
    %v1966 = vpop.f32.mrb[0].mxu0
    %1967 = vmatprep.mubr.f32.mxu0 %v1240
    %1968 = vmatmul.mubr.f32.gmra.mrb[0].mxu0 %v1238
    %v1969 = vpop.f32.mrb[0].mxu0
    %v1970 = vadd.f32 0.0, %v1969
    %v1971 = vpop.f32.mrb[0].mxu0
    %1972 = vmatprep.mubr.f32.mxu0 %v1246
    %1973 = vmatmul.mubr.f32.gmra.mrb[0].mxu0 %v1244
    %v1974 = vpop.f32.mrb[0].mxu0
    %v1975 = vadd.f32 0.0, %v1974
    %v1976 = vpop.f32.mrb[0].mxu0
    %1977 = vmatprep.mubr.f32.mxu0 %v1252
    %1978 = vmatmul.mubr.f32.gmra.mrb[0].mxu0 %v1250
    %v1979 = vpop.f32.mrb[0].mxu0
    %v1980 = vadd.f32 0.0, %v1979
    %v1981 = vpop.f32.mrb[0].mxu0
    %1982 = vmatprep.mubr.f32.mxu0 %v1258
    %1983 = vmatmul.mubr.f32.gmra.mrb[0].mxu0 %v1256
    %v1984 = vpop.f32.mrb[0].mxu0
    %v1985 = vadd.f32 0.0, %v1984
    %v1986 = vpop.f32.mrb[0].mxu0
    %1987 = vdwg.mxu0
    %1988 = vmatprep.subr.mxu0 0.0
    %1989 = vmatpush1.msra.mxu0 %v1495
    %1990 = vmatprep.subr.mxu0 0.0
    %1991 = vmatpush1.msra.mxu0 %v1498
    %1992 = vmatprep.subr.mxu0 0.0
    %1993 = vmatpush1.msra.mxu0 %v1501
    %1994 = vmatprep.subr.mxu0 0.0
    %1995 = vmatpush1.msra.mxu0 %v1504
    %1996 = vmatprep.subr.mxu0 0.0
    %1997 = vmatpush1.msra.mxu0 %v1507
    %1998 = vmatprep.subr.mxu0 0.0
    %1999 = vmatpush1.msra.mxu0 %v1510
    %2000 = vmatprep.subr.mxu0 0.0
    %2001 = vmatpush1.msra.mxu0 %v1513
    %2002 = vmatprep.subr.mxu0 0.0
    %2003 = vmatpush1.msra.mxu0 %v1516
    %2004 = vmatprep.subr.mxu0 0.0
    %2005 = vmatpush1.msra.mxu0 %v1519
    %2006 = vmatprep.subr.mxu0 0.0
    %2007 = vmatpush1.msra.mxu0 %v1522
    %2008 = vmatprep.subr.mxu0 0.0
    %2009 = vmatpush1.msra.mxu0 %v1525
    %2010 = vmatprep.subr.mxu0 0.0
    %2011 = vmatpush1.msra.mxu0 %v1528
    %2012 = vmatprep.subr.mxu0 0.0
    %2013 = vmatpush1.msra.mxu0 %v1531
    %2014 = vmatprep.subr.mxu0 0.0
    %2015 = vmatpush1.msra.mxu0 %v1534
    %2016 = vmatprep.subr.mxu0 0.0
    %2017 = vmatpush1.msra.mxu0 %v1537
    %2018 = vmatprep.subr.mxu0 0.0
    %2019 = vmatpush1.msra.mxu0 %v1540
    %2020 = vmatprep.subr.mxu0 0.0
    %2021 = vmatpush1.msra.mxu0 %v1543
    %2022 = vmatprep.subr.mxu0 0.0
    %2023 = vmatpush1.msra.mxu0 %v1546
    %2024 = vmatprep.subr.mxu0 0.0
    %2025 = vmatpush1.msra.mxu0 %v1549
    %2026 = vmatprep.subr.mxu0 0.0
    %2027 = vmatpush1.msra.mxu0 %v1552
    %2028 = vmatprep.subr.mxu0 0.0
    %2029 = vmatpush1.msra.mxu0 %v1555
    %2030 = vmatprep.subr.mxu0 0.0
    %2031 = vmatpush1.msra.mxu0 %v1558
    %2032 = vmatprep.subr.mxu0 0.0
    %2033 = vmatpush1.msra.mxu0 %v1561
    %2034 = vmatprep.subr.mxu0 0.0
    %2035 = vmatpush1.msra.mxu0 %v1564
    %2036 = vmatprep.subr.mxu0 0.0
    %2037 = vmatpush1.msra.mxu0 %v1567
    %2038 = vmatprep.subr.mxu0 0.0
    %2039 = vmatpush1.msra.mxu0 %v1570
    %2040 = vmatprep.subr.mxu0 0.0
    %2041 = vmatpush1.msra.mxu0 %v1573
    %2042 = vmatprep.subr.mxu0 0.0
    %2043 = vmatpush1.msra.mxu0 %v1576
    %2044 = vmatprep.subr.mxu0 0.0
    %2045 = vmatpush1.msra.mxu0 %v1579
    %2046 = vmatprep.subr.mxu0 0.0
    %2047 = vmatpush1.msra.mxu0 %v1582
    %2048 = vmatprep.subr.mxu0 0.0
    %2049 = vmatpush1.msra.mxu0 %v1585
    %2050 = vmatprep.subr.mxu0 0.0
    %2051 = vmatpush1.msra.mxu0 %v1588
    %2052 = vmatprep.mubr.f32.mxu0 %v1329
    %2053 = vmatmul.mubr.f32.gmra.mrb[0].mxu0 %v1327
    %v2054 = vpop.f32.mrb[0].mxu0
    %v2055 = vadd.f32 %v1930, %v2054
    %v2056 = vpop.f32.mrb[0].mxu0
    %2057 = vmatprep.mubr.f32.mxu0 %v1335
    %2058 = vmatmul.mubr.f32.gmra.mrb[0].mxu0 %v1333
    %v2059 = vpop.f32.mrb[0].mxu0
    %v2060 = vadd.f32 %v1935, %v2059
    %v2061 = vpop.f32.mrb[0].mxu0
    %2062 = vmatprep.mubr.f32.mxu0 %v1341
    %2063 = vmatmul.mubr.f32.gmra.mrb[0].mxu0 %v1339
    %v2064 = vpop.f32.mrb[0].mxu0
    %v2065 = vadd.f32 %v1940, %v2064
    %v2066 = vpop.f32.mrb[0].mxu0
    %2067 = vmatprep.mubr.f32.mxu0 %v1347
    %2068 = vmatmul.mubr.f32.gmra.mrb[0].mxu0 %v1345
    %v2069 = vpop.f32.mrb[0].mxu0
    %v2070 = vadd.f32 %v1945, %v2069
    %v2071 = vpop.f32.mrb[0].mxu0
    %2072 = vmatprep.mubr.f32.mxu0 %v1353
    %2073 = vmatmul.mubr.f32.gmra.mrb[0].mxu0 %v1351
    %v2074 = vpop.f32.mrb[0].mxu0
    %v2075 = vadd.f32 %v1950, %v2074
    %v2076 = vpop.f32.mrb[0].mxu0
    %2077 = vmatprep.mubr.f32.mxu0 %v1359
    %2078 = vmatmul.mubr.f32.gmra.mrb[0].mxu0 %v1357
    %v2079 = vpop.f32.mrb[0].mxu0
    %v2080 = vadd.f32 %v1955, %v2079
    %v2081 = vpop.f32.mrb[0].mxu0
    %2082 = vmatprep.mubr.f32.mxu0 %v1365
    %2083 = vmatmul.mubr.f32.gmra.mrb[0].mxu0 %v1363
    %v2084 = vpop.f32.mrb[0].mxu0
    %v2085 = vadd.f32 %v1960, %v2084
    %v2086 = vpop.f32.mrb[0].mxu0
    %2087 = vmatprep.mubr.f32.mxu0 %v1371
    %2088 = vmatmul.mubr.f32.gmra.mrb[0].mxu0 %v1369
    %v2089 = vpop.f32.mrb[0].mxu0
    %v2090 = vadd.f32 %v1965, %v2089
    %v2091 = vpop.f32.mrb[0].mxu0
    %2092 = vmatprep.mubr.f32.mxu0 %v1377
    %2093 = vmatmul.mubr.f32.gmra.mrb[0].mxu0 %v1375
    %v2094 = vpop.f32.mrb[0].mxu0
    %v2095 = vadd.f32 %v1970, %v2094
    %v2096 = vpop.f32.mrb[0].mxu0
    %2097 = vmatprep.mubr.f32.mxu0 %v1383
    %2098 = vmatmul.mubr.f32.gmra.mrb[0].mxu0 %v1381
    %v2099 = vpop.f32.mrb[0].mxu0
    %v2100 = vadd.f32 %v1975, %v2099
    %v2101 = vpop.f32.mrb[0].mxu0
    %2102 = vmatprep.mubr.f32.mxu0 %v1389
    %2103 = vmatmul.mubr.f32.gmra.mrb[0].mxu0 %v1387
    %v2104 = vpop.f32.mrb[0].mxu0
    %v2105 = vadd.f32 %v1980, %v2104
    %v2106 = vpop.f32.mrb[0].mxu0
    %2107 = vmatprep.mubr.f32.mxu0 %v1395
    %2108 = vmatmul.mubr.f32.gmra.mrb[0].mxu0 %v1393
    %v2109 = vpop.f32.mrb[0].mxu0
    %v2110 = vadd.f32 %v1985, %v2109
    %v2111 = vpop.f32.mrb[0].mxu0
    %2112 = vdwg.mxu0
    %2113 = vst [vmem:[#allocation3] sm:$0xff] %v1793
    %2114 = vst [vmem:[#allocation3 + $0x8] sm:$0xff] %v1795
    %2115 = vst [vmem:[#allocation3 + $0x10] sm:$0xff] %v2055
    %2116 = vst [vmem:[#allocation3 + $0x78] sm:$0xff] %v1799
    %2117 = vst [vmem:[#allocation3 + $0x80] sm:$0xff] %v1801
    %2118 = vst [vmem:[#allocation3 + $0x88] sm:$0xff] %v2060
    %2119 = vst [vmem:[#allocation3 + $0xf0] sm:$0xff] %v1805
    %2120 = vst [vmem:[#allocation3 + $0xf8] sm:$0xff] %v1807
    %2121 = vst [vmem:[#allocation3 + $0x100] sm:$0xff] %v2065
    %2122 = vst [vmem:[#allocation3 + $0x168] sm:$0xff] %v1811
    %2123 = vst [vmem:[#allocation3 + $0x170] sm:$0xff] %v1813
    %2124 = vst [vmem:[#allocation3 + $0x178] sm:$0xff] %v2070
    %2125 = vst [vmem:[#allocation3 + $0x1e0] sm:$0xff] %v1817
    %2126 = vst [vmem:[#allocation3 + $0x1e8] sm:$0xff] %v1819
    %2127 = vst [vmem:[#allocation3 + $0x1f0] sm:$0xff] %v2075
    %2128 = vst [vmem:[#allocation3 + $0x258] sm:$0xff] %v1823
    %2129 = vst [vmem:[#allocation3 + $0x260] sm:$0xff] %v1825
    %2130 = vst [vmem:[#allocation3 + $0x268] sm:$0xff] %v2080
    %2131 = vst [vmem:[#allocation3 + $0x2d0] sm:$0xff] %v1829
    %2132 = vst [vmem:[#allocation3 + $0x2d8] sm:$0xff] %v1831
    %2133 = vst [vmem:[#allocation3 + $0x2e0] sm:$0xff] %v2085
    %2134 = vst [vmem:[#allocation3 + $0x348] sm:$0xff] %v1835
    %2135 = vst [vmem:[#allocation3 + $0x350] sm:$0xff] %v1837
    %2136 = vst [vmem:[#allocation3 + $0x358] sm:$0xff] %v2090
    %2137 = vst [vmem:[#allocation3 + $0x18] sm:$0xff] %v1799
    %2138 = vst [vmem:[#allocation3 + $0x20] sm:$0xff] %v1801
    %2139 = vst [vmem:[#allocation3 + $0x28] sm:$0xff] %v2060
    %2140 = vst [vmem:[#allocation3 + $0x90] sm:$0xff] %v1805
    %2141 = vst [vmem:[#allocation3 + $0x98] sm:$0xff] %v1807
    %2142 = vst [vmem:[#allocation3 + $0xa0] sm:$0xff] %v2065
    %2143 = vst [vmem:[#allocation3 + $0x108] sm:$0xff] %v1811
    %2144 = vst [vmem:[#allocation3 + $0x110] sm:$0xff] %v1813
    %2145 = vst [vmem:[#allocation3 + $0x118] sm:$0xff] %v2070
    %2146 = vst [vmem:[#allocation3 + $0x180] sm:$0xff] %v1817
    %2147 = vst [vmem:[#allocation3 + $0x188] sm:$0xff] %v1819
    %2148 = vst [vmem:[#allocation3 + $0x190] sm:$0xff] %v2075
    %2149 = vst [vmem:[#allocation3 + $0x1f8] sm:$0xff] %v1823
    %2150 = vst [vmem:[#allocation3 + $0x200] sm:$0xff] %v1825
    %2151 = vst [vmem:[#allocation3 + $0x208] sm:$0xff] %v2080
    %2152 = vst [vmem:[#allocation3 + $0x270] sm:$0xff] %v1829
    %2153 = vst [vmem:[#allocation3 + $0x278] sm:$0xff] %v1831
    %2154 = vst [vmem:[#allocation3 + $0x280] sm:$0xff] %v2085
    %2155 = vst [vmem:[#allocation3 + $0x2e8] sm:$0xff] %v1835
    %2156 = vst [vmem:[#allocation3 + $0x2f0] sm:$0xff] %v1837
    %2157 = vst [vmem:[#allocation3 + $0x2f8] sm:$0xff] %v2090
    %2158 = vst [vmem:[#allocation3 + $0x360] sm:$0xff] %v1841
    %2159 = vst [vmem:[#allocation3 + $0x368] sm:$0xff] %v1843
    %2160 = vst [vmem:[#allocation3 + $0x370] sm:$0xff] %v2095
    %2161 = vst [vmem:[#allocation3 + $0x30] sm:$0xff] %v1805
    %2162 = vst [vmem:[#allocation3 + $0x38] sm:$0xff] %v1807
    %2163 = vst [vmem:[#allocation3 + $0x40] sm:$0xff] %v2065
    %2164 = vst [vmem:[#allocation3 + $0xa8] sm:$0xff] %v1811
    %2165 = vst [vmem:[#allocation3 + $0xb0] sm:$0xff] %v1813
    %2166 = vst [vmem:[#allocation3 + $0xb8] sm:$0xff] %v2070
    %2167 = vst [vmem:[#allocation3 + $0x120] sm:$0xff] %v1817
    %2168 = vst [vmem:[#allocation3 + $0x128] sm:$0xff] %v1819
    %2169 = vst [vmem:[#allocation3 + $0x130] sm:$0xff] %v2075
    %2170 = vst [vmem:[#allocation3 + $0x198] sm:$0xff] %v1823
    %2171 = vst [vmem:[#allocation3 + $0x1a0] sm:$0xff] %v1825
    %2172 = vst [vmem:[#allocation3 + $0x1a8] sm:$0xff] %v2080
    %2173 = vst [vmem:[#allocation3 + $0x210] sm:$0xff] %v1829
    %2174 = vst [vmem:[#allocation3 + $0x218] sm:$0xff] %v1831
    %2175 = vst [vmem:[#allocation3 + $0x220] sm:$0xff] %v2085
    %2176 = vst [vmem:[#allocation3 + $0x288] sm:$0xff] %v1835
    %2177 = vst [vmem:[#allocation3 + $0x290] sm:$0xff] %v1837
    %2178 = vst [vmem:[#allocation3 + $0x298] sm:$0xff] %v2090
    %2179 = vst [vmem:[#allocation3 + $0x300] sm:$0xff] %v1841
    %2180 = vst [vmem:[#allocation3 + $0x308] sm:$0xff] %v1843
    %2181 = vst [vmem:[#allocation3 + $0x310] sm:$0xff] %v2095
    %2182 = vst [vmem:[#allocation3 + $0x378] sm:$0xff] %v1847
    %2183 = vst [vmem:[#allocation3 + $0x380] sm:$0xff] %v1849
    %2184 = vst [vmem:[#allocation3 + $0x388] sm:$0xff] %v2100
    %2185 = vst [vmem:[#allocation3 + $0x48] sm:$0xff] %v1811
    %2186 = vst [vmem:[#allocation3 + $0x50] sm:$0xff] %v1813
    %2187 = vst [vmem:[#allocation3 + $0x58] sm:$0xff] %v2070
    %2188 = vst [vmem:[#allocation3 + $0xc0] sm:$0xff] %v1817
    %2189 = vst [vmem:[#allocation3 + $0xc8] sm:$0xff] %v1819
    %2190 = vst [vmem:[#allocation3 + $0xd0] sm:$0xff] %v2075
    %2191 = vst [vmem:[#allocation3 + $0x138] sm:$0xff] %v1823
    %2192 = vst [vmem:[#allocation3 + $0x140] sm:$0xff] %v1825
    %2193 = vst [vmem:[#allocation3 + $0x148] sm:$0xff] %v2080
    %2194 = vst [vmem:[#allocation3 + $0x1b0] sm:$0xff] %v1829
    %2195 = vst [vmem:[#allocation3 + $0x1b8] sm:$0xff] %v1831
    %2196 = vst [vmem:[#allocation3 + $0x1c0] sm:$0xff] %v2085
    %2197 = vst [vmem:[#allocation3 + $0x228] sm:$0xff] %v1835
    %2198 = vst [vmem:[#allocation3 + $0x230] sm:$0xff] %v1837
    %2199 = vst [vmem:[#allocation3 + $0x238] sm:$0xff] %v2090
    %2200 = vst [vmem:[#allocation3 + $0x2a0] sm:$0xff] %v1841
    %2201 = vst [vmem:[#allocation3 + $0x2a8] sm:$0xff] %v1843
    %2202 = vst [vmem:[#allocation3 + $0x2b0] sm:$0xff] %v2095
    %2203 = vst [vmem:[#allocation3 + $0x318] sm:$0xff] %v1847
    %2204 = vst [vmem:[#allocation3 + $0x320] sm:$0xff] %v1849
    %2205 = vst [vmem:[#allocation3 + $0x328] sm:$0xff] %v2100
    %2206 = vst [vmem:[#allocation3 + $0x390] sm:$0xff] %v1853
    %2207 = vst [vmem:[#allocation3 + $0x398] sm:$0xff] %v1855
    %2208 = vst [vmem:[#allocation3 + $0x3a0] sm:$0xff] %v2105
    %2209 = vst [vmem:[#allocation3 + $0x60] sm:$0xff] %v1817
    %2210 = vst [vmem:[#allocation3 + $0x68] sm:$0xff] %v1819
    %2211 = vst [vmem:[#allocation3 + $0x70] sm:$0xff] %v2075
    %2212 = vst [vmem:[#allocation3 + $0xd8] sm:$0xff] %v1823
    %2213 = vst [vmem:[#allocation3 + $0xe0] sm:$0xff] %v1825
    %2214 = vst [vmem:[#allocation3 + $0xe8] sm:$0xff] %v2080
    %2215 = vst [vmem:[#allocation3 + $0x150] sm:$0xff] %v1829
    %2216 = vst [vmem:[#allocation3 + $0x158] sm:$0xff] %v1831
    %2217 = vst [vmem:[#allocation3 + $0x160] sm:$0xff] %v2085
    %2218 = vst [vmem:[#allocation3 + $0x1c8] sm:$0xff] %v1835
    %2219 = vst [vmem:[#allocation3 + $0x1d0] sm:$0xff] %v1837
    %2220 = vst [vmem:[#allocation3 + $0x1d8] sm:$0xff] %v2090
    %2221 = vst [vmem:[#allocation3 + $0x240] sm:$0xff] %v1841
    %2222 = vst [vmem:[#allocation3 + $0x248] sm:$0xff] %v1843
    %2223 = vst [vmem:[#allocation3 + $0x250] sm:$0xff] %v2095
    %2224 = vst [vmem:[#allocation3 + $0x2b8] sm:$0xff] %v1847
    %2225 = vst [vmem:[#allocation3 + $0x2c0] sm:$0xff] %v1849
    %2226 = vst [vmem:[#allocation3 + $0x2c8] sm:$0xff] %v2100
    %2227 = vst [vmem:[#allocation3 + $0x330] sm:$0xff] %v1853
    %2228 = vst [vmem:[#allocation3 + $0x338] sm:$0xff] %v1855
    %2229 = vst [vmem:[#allocation3 + $0x340] sm:$0xff] %v2105
    %2230 = vst [vmem:[#allocation3 + $0x3a8] sm:$0xff] %v1859
    %2231 = vst [vmem:[#allocation3 + $0x3b0] sm:$0xff] %v1861
    %2232 = vst [vmem:[#allocation3 + $0x3b8] sm:$0xff] %v2110
    %v2233 = vld [vmem:[#allocation3] sm:$0xff]
    %v2234 = vld [vmem:[#allocation3 + $0x8] sm:$0xff]
    %v2235 = vld [vmem:[#allocation3 + $0x10] sm:$0xff]
    %v2236 = vld [vmem:[#allocation3 + $0x18] sm:$0xff]
    %v2237 = vld [vmem:[#allocation3 + $0x20] sm:$0xff]
    %v2238 = vld [vmem:[#allocation3 + $0x28] sm:$0xff]
    %v2239 = vld [vmem:[#allocation3 + $0x30] sm:$0xff]
    %v2240 = vld [vmem:[#allocation3 + $0x38] sm:$0xff]
    %v2241 = vld [vmem:[#allocation3 + $0x40] sm:$0xff]
    %v2242 = vld [vmem:[#allocation3 + $0x48] sm:$0xff]
    %v2243 = vld [vmem:[#allocation3 + $0x50] sm:$0xff]
    %v2244 = vld [vmem:[#allocation3 + $0x58] sm:$0xff]
    %v2245 = vld [vmem:[#allocation3 + $0x60] sm:$0xff]
    %v2246 = vld [vmem:[#allocation3 + $0x68] sm:$0xff]
    %v2247 = vld [vmem:[#allocation3 + $0x70] sm:$0xff]
    %v2248 = vld [vmem:[#allocation3 + $0x78] sm:$0xff]
    %v2249 = vld [vmem:[#allocation3 + $0x80] sm:$0xff]
    %v2250 = vld [vmem:[#allocation3 + $0x88] sm:$0xff]
    %v2251 = vld [vmem:[#allocation3 + $0x90] sm:$0xff]
    %v2252 = vld [vmem:[#allocation3 + $0x98] sm:$0xff]
    %v2253 = vld [vmem:[#allocation3 + $0xa0] sm:$0xff]
    %v2254 = vld [vmem:[#allocation3 + $0xa8] sm:$0xff]
    %v2255 = vld [vmem:[#allocation3 + $0xb0] sm:$0xff]
    %v2256 = vld [vmem:[#allocation3 + $0xb8] sm:$0xff]
    %v2257 = vld [vmem:[#allocation3 + $0xc0] sm:$0xff]
    %v2258 = vld [vmem:[#allocation3 + $0xc8] sm:$0xff]
    %v2259 = vld [vmem:[#allocation3 + $0xd0] sm:$0xff]
    %v2260 = vld [vmem:[#allocation3 + $0xd8] sm:$0xff]
    %v2261 = vld [vmem:[#allocation3 + $0xe0] sm:$0xff]
    %v2262 = vld [vmem:[#allocation3 + $0xe8] sm:$0xff]
    %v2263 = vld [vmem:[#allocation3 + $0xf0] sm:$0xff]
    %v2264 = vld [vmem:[#allocation3 + $0xf8] sm:$0xff]
    %v2265 = vld [vmem:[#allocation3 + $0x100] sm:$0xff]
    %v2266 = vld [vmem:[#allocation3 + $0x108] sm:$0xff]
    %v2267 = vld [vmem:[#allocation3 + $0x110] sm:$0xff]
    %v2268 = vld [vmem:[#allocation3 + $0x118] sm:$0xff]
    %v2269 = vld [vmem:[#allocation3 + $0x120] sm:$0xff]
    %v2270 = vld [vmem:[#allocation3 + $0x128] sm:$0xff]
    %v2271 = vld [vmem:[#allocation3 + $0x130] sm:$0xff]
    %v2272 = vld [vmem:[#allocation3 + $0x138] sm:$0xff]
    %v2273 = vld [vmem:[#allocation3 + $0x140] sm:$0xff]
    %v2274 = vld [vmem:[#allocation3 + $0x148] sm:$0xff]
    %v2275 = vld [vmem:[#allocation3 + $0x150] sm:$0xff]
    %v2276 = vld [vmem:[#allocation3 + $0x158] sm:$0xff]
    %v2277 = vld [vmem:[#allocation3 + $0x160] sm:$0xff]
    %v2278 = vld [vmem:[#allocation3 + $0x168] sm:$0xff]
    %v2279 = vld [vmem:[#allocation3 + $0x170] sm:$0xff]
    %v2280 = vld [vmem:[#allocation3 + $0x178] sm:$0xff]
    %v2281 = vld [vmem:[#allocation3 + $0x180] sm:$0xff]
    %v2282 = vld [vmem:[#allocation3 + $0x188] sm:$0xff]
    %v2283 = vld [vmem:[#allocation3 + $0x190] sm:$0xff]
    %v2284 = vld [vmem:[#allocation3 + $0x198] sm:$0xff]
    %v2285 = vld [vmem:[#allocation3 + $0x1a0] sm:$0xff]
    %v2286 = vld [vmem:[#allocation3 + $0x1a8] sm:$0xff]
    %v2287 = vld [vmem:[#allocation3 + $0x1b0] sm:$0xff]
    %v2288 = vld [vmem:[#allocation3 + $0x1b8] sm:$0xff]
    %v2289 = vld [vmem:[#allocation3 + $0x1c0] sm:$0xff]
    %v2290 = vld [vmem:[#allocation3 + $0x1c8] sm:$0xff]
    %v2291 = vld [vmem:[#allocation3 + $0x1d0] sm:$0xff]
    %v2292 = vld [vmem:[#allocation3 + $0x1d8] sm:$0xff]
    %v2293 = vld [vmem:[#allocation3 + $0x1e0] sm:$0xff]
    %v2294 = vld [vmem:[#allocation3 + $0x1e8] sm:$0xff]
    %v2295 = vld [vmem:[#allocation3 + $0x1f0] sm:$0xff]
    %v2296 = vld [vmem:[#allocation3 + $0x1f8] sm:$0xff]
    %v2297 = vld [vmem:[#allocation3 + $0x200] sm:$0xff]
    %v2298 = vld [vmem:[#allocation3 + $0x208] sm:$0xff]
    %v2299 = vld [vmem:[#allocation3 + $0x210] sm:$0xff]
    %v2300 = vld [vmem:[#allocation3 + $0x218] sm:$0xff]
    %v2301 = vld [vmem:[#allocation3 + $0x220] sm:$0xff]
    %v2302 = vld [vmem:[#allocation3 + $0x228] sm:$0xff]
    %v2303 = vld [vmem:[#allocation3 + $0x230] sm:$0xff]
    %v2304 = vld [vmem:[#allocation3 + $0x238] sm:$0xff]
    %v2305 = vld [vmem:[#allocation3 + $0x240] sm:$0xff]
    %v2306 = vld [vmem:[#allocation3 + $0x248] sm:$0xff]
    %v2307 = vld [vmem:[#allocation3 + $0x250] sm:$0xff]
    %v2308 = vld [vmem:[#allocation3 + $0x258] sm:$0xff]
    %v2309 = vld [vmem:[#allocation3 + $0x260] sm:$0xff]
    %v2310 = vld [vmem:[#allocation3 + $0x268] sm:$0xff]
    %v2311 = vld [vmem:[#allocation3 + $0x270] sm:$0xff]
    %v2312 = vld [vmem:[#allocation3 + $0x278] sm:$0xff]
    %v2313 = vld [vmem:[#allocation3 + $0x280] sm:$0xff]
    %v2314 = vld [vmem:[#allocation3 + $0x288] sm:$0xff]
    %v2315 = vld [vmem:[#allocation3 + $0x290] sm:$0xff]
    %v2316 = vld [vmem:[#allocation3 + $0x298] sm:$0xff]
    %v2317 = vld [vmem:[#allocation3 + $0x2a0] sm:$0xff]
    %v2318 = vld [vmem:[#allocation3 + $0x2a8] sm:$0xff]
    %v2319 = vld [vmem:[#allocation3 + $0x2b0] sm:$0xff]
    %v2320 = vld [vmem:[#allocation3 + $0x2b8] sm:$0xff]
    %v2321 = vld [vmem:[#allocation3 + $0x2c0] sm:$0xff]
    %v2322 = vld [vmem:[#allocation3 + $0x2c8] sm:$0xff]
    %v2323 = vld [vmem:[#allocation3 + $0x2d0] sm:$0xff]
    %v2324 = vld [vmem:[#allocation3 + $0x2d8] sm:$0xff]
    %v2325 = vld [vmem:[#allocation3 + $0x2e0] sm:$0xff]
    %v2326 = vld [vmem:[#allocation3 + $0x2e8] sm:$0xff]
    %v2327 = vld [vmem:[#allocation3 + $0x2f0] sm:$0xff]
    %v2328 = vld [vmem:[#allocation3 + $0x2f8] sm:$0xff]
    %v2329 = vld [vmem:[#allocation3 + $0x300] sm:$0xff]
    %v2330 = vld [vmem:[#allocation3 + $0x308] sm:$0xff]
    %v2331 = vld [vmem:[#allocation3 + $0x310] sm:$0xff]
    %v2332 = vld [vmem:[#allocation3 + $0x318] sm:$0xff]
    %v2333 = vld [vmem:[#allocation3 + $0x320] sm:$0xff]
    %v2334 = vld [vmem:[#allocation3 + $0x328] sm:$0xff]
    %v2335 = vld [vmem:[#allocation3 + $0x330] sm:$0xff]
    %v2336 = vld [vmem:[#allocation3 + $0x338] sm:$0xff]
    %v2337 = vld [vmem:[#allocation3 + $0x340] sm:$0xff]
    %v2338 = vld [vmem:[#allocation3 + $0x348] sm:$0xff]
    %v2339 = vld [vmem:[#allocation3 + $0x350] sm:$0xff]
    %v2340 = vld [vmem:[#allocation3 + $0x358] sm:$0xff]
    %v2341 = vld [vmem:[#allocation3 + $0x360] sm:$0xff]
    %v2342 = vld [vmem:[#allocation3 + $0x368] sm:$0xff]
    %v2343 = vld [vmem:[#allocation3 + $0x370] sm:$0xff]
    %v2344 = vld [vmem:[#allocation3 + $0x378] sm:$0xff]
    %v2345 = vld [vmem:[#allocation3 + $0x380] sm:$0xff]
    %v2346 = vld [vmem:[#allocation3 + $0x388] sm:$0xff]
    %v2347 = vld [vmem:[#allocation3 + $0x390] sm:$0xff]
    %v2348 = vld [vmem:[#allocation3 + $0x398] sm:$0xff]
    %v2349 = vld [vmem:[#allocation3 + $0x3a0] sm:$0xff]
    %v2350 = vld [vmem:[#allocation3 + $0x3a8] sm:$0xff]
    %v2351 = vld [vmem:[#allocation3 + $0x3b0] sm:$0xff]
    %v2352 = vld [vmem:[#allocation3 + $0x3b8] sm:$0xff]
    %v2353 = vld [vmem:[#allocation11] sm:$0xff]
    %v2354 = vld [vmem:[#allocation11 + $0x8] sm:$0xff]
    %v2355 = vld [vmem:[#allocation11 + $0x10] sm:$0xff]
    %v2356 = vld [vmem:[#allocation11 + $0x18] sm:$0xff]
    %v2357 = vld [vmem:[#allocation11 + $0x20] sm:$0xff]
    %v2358 = vld [vmem:[#allocation11 + $0x28] sm:$0xff]
    %v2359 = vld [vmem:[#allocation11 + $0x30] sm:$0xff]
    %v2360 = vld [vmem:[#allocation11 + $0x38] sm:$0xff]
    %v2361 = vld [vmem:[#allocation11 + $0x40] sm:$0xff]
    %v2362 = vld [vmem:[#allocation11 + $0x48] sm:$0xff]
    %v2363 = vld [vmem:[#allocation11 + $0x50] sm:$0xff]
    %v2364 = vld [vmem:[#allocation11 + $0x58] sm:$0xff]
    %v2365 = vld [vmem:[#allocation11 + $0x60] sm:$0xff]
    %v2366 = vld [vmem:[#allocation11 + $0x68] sm:$0xff]
    %v2367 = vld [vmem:[#allocation11 + $0x70] sm:$0xff]
    %v2368 = vld [vmem:[#allocation11 + $0x78] sm:$0xff]
    %v2369 = vld [vmem:[#allocation11 + $0x80] sm:$0xff]
    %v2370 = vld [vmem:[#allocation11 + $0x88] sm:$0xff]
    %v2371 = vld [vmem:[#allocation11 + $0x90] sm:$0xff]
    %v2372 = vld [vmem:[#allocation11 + $0x98] sm:$0xff]
    %v2373 = vld [vmem:[#allocation11 + $0xa0] sm:$0xff]
    %v2374 = vld [vmem:[#allocation11 + $0xa8] sm:$0xff]
    %v2375 = vld [vmem:[#allocation11 + $0xb0] sm:$0xff]
    %v2376 = vld [vmem:[#allocation11 + $0xb8] sm:$0xff]
    %v2377 = vld [vmem:[#allocation11 + $0xc0] sm:$0xff]
    %v2378 = vld [vmem:[#allocation11 + $0xc8] sm:$0xff]
    %v2379 = vld [vmem:[#allocation11 + $0xd0] sm:$0xff]
    %v2380 = vld [vmem:[#allocation11 + $0xd8] sm:$0xff]
    %v2381 = vld [vmem:[#allocation11 + $0xe0] sm:$0xff]
    %v2382 = vld [vmem:[#allocation11 + $0xe8] sm:$0xff]
    %v2383 = vld [vmem:[#allocation11 + $0xf0] sm:$0xff]
    %v2384 = vld [vmem:[#allocation11 + $0xf8] sm:$0xff]
    %v2385 = vld [vmem:[#allocation11 + $0x100] sm:$0xff]
    %v2386 = vld [vmem:[#allocation11 + $0x108] sm:$0xff]
    %v2387 = vld [vmem:[#allocation11 + $0x110] sm:$0xff]
    %v2388 = vld [vmem:[#allocation11 + $0x118] sm:$0xff]
    %v2389 = vld [vmem:[#allocation11 + $0x120] sm:$0xff]
    %v2390 = vld [vmem:[#allocation11 + $0x128] sm:$0xff]
    %v2391 = vld [vmem:[#allocation11 + $0x130] sm:$0xff]
    %v2392 = vld [vmem:[#allocation11 + $0x138] sm:$0xff]
    %v2393 = vld [vmem:[#allocation11 + $0x140] sm:$0xff]
    %v2394 = vld [vmem:[#allocation11 + $0x148] sm:$0xff]
    %v2395 = vld [vmem:[#allocation11 + $0x150] sm:$0xff]
    %v2396 = vld [vmem:[#allocation11 + $0x158] sm:$0xff]
    %v2397 = vld [vmem:[#allocation11 + $0x160] sm:$0xff]
    %v2398 = vld [vmem:[#allocation11 + $0x168] sm:$0xff]
    %v2399 = vld [vmem:[#allocation11 + $0x170] sm:$0xff]
    %v2400 = vld [vmem:[#allocation11 + $0x178] sm:$0xff]
    %v2401 = vld [vmem:[#allocation11 + $0x180] sm:$0xff]
    %v2402 = vld [vmem:[#allocation11 + $0x188] sm:$0xff]
    %v2403 = vld [vmem:[#allocation11 + $0x190] sm:$0xff]
    %v2404 = vld [vmem:[#allocation11 + $0x198] sm:$0xff]
    %v2405 = vld [vmem:[#allocation11 + $0x1a0] sm:$0xff]
    %v2406 = vld [vmem:[#allocation11 + $0x1a8] sm:$0xff]
    %v2407 = vld [vmem:[#allocation11 + $0x1b0] sm:$0xff]
    %v2408 = vld [vmem:[#allocation11 + $0x1b8] sm:$0xff]
    %v2409 = vld [vmem:[#allocation11 + $0x1c0] sm:$0xff]
    %v2410 = vld [vmem:[#allocation11 + $0x1c8] sm:$0xff]
    %v2411 = vld [vmem:[#allocation11 + $0x1d0] sm:$0xff]
    %v2412 = vld [vmem:[#allocation11 + $0x1d8] sm:$0xff]
    %v2413 = vld [vmem:[#allocation11 + $0x1e0] sm:$0xff]
    %v2414 = vld [vmem:[#allocation11 + $0x1e8] sm:$0xff]
    %v2415 = vld [vmem:[#allocation11 + $0x1f0] sm:$0xff]
    %v2416 = vld [vmem:[#allocation11 + $0x1f8] sm:$0xff]
    %v2417 = vld [vmem:[#allocation11 + $0x200] sm:$0xff]
    %v2418 = vld [vmem:[#allocation11 + $0x208] sm:$0xff]
    %v2419 = vld [vmem:[#allocation11 + $0x210] sm:$0xff]
    %v2420 = vld [vmem:[#allocation11 + $0x218] sm:$0xff]
    %v2421 = vld [vmem:[#allocation11 + $0x220] sm:$0xff]
    %v2422 = vld [vmem:[#allocation11 + $0x228] sm:$0xff]
    %v2423 = vld [vmem:[#allocation11 + $0x230] sm:$0xff]
    %v2424 = vld [vmem:[#allocation11 + $0x238] sm:$0xff]
    %v2425 = vld [vmem:[#allocation11 + $0x240] sm:$0xff]
    %v2426 = vld [vmem:[#allocation11 + $0x248] sm:$0xff]
    %v2427 = vld [vmem:[#allocation11 + $0x250] sm:$0xff]
    %v2428 = vld [vmem:[#allocation11 + $0x258] sm:$0xff]
    %v2429 = vld [vmem:[#allocation11 + $0x260] sm:$0xff]
    %v2430 = vld [vmem:[#allocation11 + $0x268] sm:$0xff]
    %v2431 = vld [vmem:[#allocation11 + $0x270] sm:$0xff]
    %v2432 = vld [vmem:[#allocation11 + $0x278] sm:$0xff]
    %v2433 = vld [vmem:[#allocation11 + $0x280] sm:$0xff]
    %v2434 = vld [vmem:[#allocation11 + $0x288] sm:$0xff]
    %v2435 = vld [vmem:[#allocation11 + $0x290] sm:$0xff]
    %v2436 = vld [vmem:[#allocation11 + $0x298] sm:$0xff]
    %v2437 = vld [vmem:[#allocation11 + $0x2a0] sm:$0xff]
    %v2438 = vld [vmem:[#allocation11 + $0x2a8] sm:$0xff]
    %v2439 = vld [vmem:[#allocation11 + $0x2b0] sm:$0xff]
    %v2440 = vld [vmem:[#allocation11 + $0x2b8] sm:$0xff]
    %v2441 = vld [vmem:[#allocation11 + $0x2c0] sm:$0xff]
    %v2442 = vld [vmem:[#allocation11 + $0x2c8] sm:$0xff]
    %v2443 = vld [vmem:[#allocation11 + $0x2d0] sm:$0xff]
    %v2444 = vld [vmem:[#allocation11 + $0x2d8] sm:$0xff]
    %v2445 = vld [vmem:[#allocation11 + $0x2e0] sm:$0xff]
    %v2446 = vld [vmem:[#allocation11 + $0x2e8] sm:$0xff]
    %v2447 = vld [vmem:[#allocation11 + $0x2f0] sm:$0xff]
    %v2448 = vld [vmem:[#allocation11 + $0x2f8] sm:$0xff]
    %v2449 = vld [vmem:[#allocation11 + $0x300] sm:$0xff]
    %v2450 = vld [vmem:[#allocation11 + $0x308] sm:$0xff]
    %v2451 = vld [vmem:[#allocation11 + $0x310] sm:$0xff]
    %v2452 = vld [vmem:[#allocation11 + $0x318] sm:$0xff]
    %v2453 = vld [vmem:[#allocation11 + $0x320] sm:$0xff]
    %v2454 = vld [vmem:[#allocation11 + $0x328] sm:$0xff]
    %v2455 = vld [vmem:[#allocation11 + $0x330] sm:$0xff]
    %v2456 = vld [vmem:[#allocation11 + $0x338] sm:$0xff]
    %v2457 = vld [vmem:[#allocation11 + $0x340] sm:$0xff]
    %v2458 = vld [vmem:[#allocation11 + $0x348] sm:$0xff]
    %v2459 = vld [vmem:[#allocation11 + $0x350] sm:$0xff]
    %v2460 = vld [vmem:[#allocation11 + $0x358] sm:$0xff]
    %v2461 = vld [vmem:[#allocation11 + $0x360] sm:$0xff]
    %v2462 = vld [vmem:[#allocation11 + $0x368] sm:$0xff]
    %v2463 = vld [vmem:[#allocation11 + $0x370] sm:$0xff]
    %v2464 = vld [vmem:[#allocation11 + $0x378] sm:$0xff]
    %v2465 = vld [vmem:[#allocation11 + $0x380] sm:$0xff]
    %v2466 = vld [vmem:[#allocation11 + $0x388] sm:$0xff]
    %v2467 = vld [vmem:[#allocation11 + $0x390] sm:$0xff]
    %v2468 = vld [vmem:[#allocation11 + $0x398] sm:$0xff]
    %v2469 = vld [vmem:[#allocation11 + $0x3a0] sm:$0xff]
    %v2470 = vld [vmem:[#allocation11 + $0x3a8] sm:$0xff]
    %v2471 = vld [vmem:[#allocation11 + $0x3b0] sm:$0xff]
    %v2472 = vld [vmem:[#allocation11 + $0x3b8] sm:$0xff]
    %v2473 = vld [vmem:[#allocation11 + $0x3c0] sm:$0xff]
    %v2474 = vld [vmem:[#allocation11 + $0x3c8] sm:$0xff]
    %v2475 = vld [vmem:[#allocation11 + $0x3d0] sm:$0xff]
    %v2476 = vld [vmem:[#allocation11 + $0x3d8] sm:$0xff]
    %v2477 = vld [vmem:[#allocation11 + $0x3e0] sm:$0xff]
    %v2478 = vld [vmem:[#allocation11 + $0x3e8] sm:$0xff]
    %v2479 = vld [vmem:[#allocation11 + $0x3f0] sm:$0xff]
    %v2480 = vld [vmem:[#allocation11 + $0x3f8] sm:$0xff]
    %v2481 = vld [vmem:[#allocation11 + $0x400] sm:$0xff]
    %v2482 = vld [vmem:[#allocation11 + $0x408] sm:$0xff]
    %v2483 = vld [vmem:[#allocation11 + $0x410] sm:$0xff]
    %v2484 = vld [vmem:[#allocation11 + $0x418] sm:$0xff]
    %v2485 = vld [vmem:[#allocation11 + $0x420] sm:$0xff]
    %v2486 = vld [vmem:[#allocation11 + $0x428] sm:$0xff]
    %v2487 = vld [vmem:[#allocation11 + $0x430] sm:$0xff]
    %v2488 = vld [vmem:[#allocation11 + $0x438] sm:$0xff]
    %v2489 = vld [vmem:[#allocation11 + $0x440] sm:$0xff]
    %v2490 = vld [vmem:[#allocation11 + $0x448] sm:$0xff]
    %v2491 = vld [vmem:[#allocation11 + $0x450] sm:$0xff]
    %v2492 = vld [vmem:[#allocation11 + $0x458] sm:$0xff]
    %v2493 = vld [vmem:[#allocation11 + $0x460] sm:$0xff]
    %v2494 = vld [vmem:[#allocation11 + $0x468] sm:$0xff]
    %v2495 = vld [vmem:[#allocation11 + $0x470] sm:$0xff]
    %v2496 = vld [vmem:[#allocation11 + $0x478] sm:$0xff]
    %v2497 = vld [vmem:[#allocation11 + $0x480] sm:$0xff]
    %v2498 = vld [vmem:[#allocation11 + $0x488] sm:$0xff]
    %v2499 = vld [vmem:[#allocation11 + $0x490] sm:$0xff]
    %v2500 = vld [vmem:[#allocation11 + $0x498] sm:$0xff]
    %v2501 = vld [vmem:[#allocation11 + $0x4a0] sm:$0xff]
    %v2502 = vld [vmem:[#allocation11 + $0x4a8] sm:$0xff]
    %v2503 = vld [vmem:[#allocation11 + $0x4b0] sm:$0xff]
    %v2504 = vld [vmem:[#allocation11 + $0x4b8] sm:$0xff]
    %v2505 = vld [vmem:[#allocation11 + $0x4c0] sm:$0xff]
    %v2506 = vld [vmem:[#allocation11 + $0x4c8] sm:$0xff]
    %v2507 = vld [vmem:[#allocation11 + $0x4d0] sm:$0xff]
    %v2508 = vld [vmem:[#allocation11 + $0x4d8] sm:$0xff]
    %v2509 = vld [vmem:[#allocation11 + $0x4e0] sm:$0xff]
    %v2510 = vld [vmem:[#allocation11 + $0x4e8] sm:$0xff]
    %v2511 = vld [vmem:[#allocation11 + $0x4f0] sm:$0xff]
    %v2512 = vld [vmem:[#allocation11 + $0x4f8] sm:$0xff]
    %v2513 = vld [vmem:[#allocation11 + $0x500] sm:$0xff]
    %v2514 = vld [vmem:[#allocation11 + $0x508] sm:$0xff]
    %v2515 = vld [vmem:[#allocation11 + $0x510] sm:$0xff]
    %v2516 = vld [vmem:[#allocation11 + $0x518] sm:$0xff]
    %v2517 = vld [vmem:[#allocation11 + $0x520] sm:$0xff]
    %v2518 = vld [vmem:[#allocation11 + $0x528] sm:$0xff]
    %v2519 = vld [vmem:[#allocation11 + $0x530] sm:$0xff]
    %v2520 = vld [vmem:[#allocation11 + $0x538] sm:$0xff]
    %v2521 = vld [vmem:[#allocation11 + $0x540] sm:$0xff]
    %v2522 = vld [vmem:[#allocation11 + $0x548] sm:$0xff]
    %v2523 = vld [vmem:[#allocation11 + $0x550] sm:$0xff]
    %v2524 = vld [vmem:[#allocation11 + $0x558] sm:$0xff]
    %v2525 = vld [vmem:[#allocation11 + $0x560] sm:$0xff]
    %v2526 = vld [vmem:[#allocation11 + $0x568] sm:$0xff]
    %v2527 = vld [vmem:[#allocation11 + $0x570] sm:$0xff]
    %v2528 = vld [vmem:[#allocation11 + $0x578] sm:$0xff]
    %v2529 = vld [vmem:[#allocation11 + $0x580] sm:$0xff]
    %v2530 = vld [vmem:[#allocation11 + $0x588] sm:$0xff]
    %v2531 = vld [vmem:[#allocation11 + $0x590] sm:$0xff]
    %v2532 = vld [vmem:[#allocation11 + $0x598] sm:$0xff]
    %v2533 = vld [vmem:[#allocation11 + $0x5a0] sm:$0xff]
    %v2534 = vld [vmem:[#allocation11 + $0x5a8] sm:$0xff]
    %v2535 = vld [vmem:[#allocation11 + $0x5b0] sm:$0xff]
    %v2536 = vld [vmem:[#allocation11 + $0x5b8] sm:$0xff]
    %v2537 = vld [vmem:[#allocation11 + $0x5c0] sm:$0xff]
    %v2538 = vld [vmem:[#allocation11 + $0x5c8] sm:$0xff]
    %v2539 = vld [vmem:[#allocation11 + $0x5d0] sm:$0xff]
    %v2540 = vld [vmem:[#allocation11 + $0x5d8] sm:$0xff]
    %v2541 = vld [vmem:[#allocation11 + $0x5e0] sm:$0xff]
    %v2542 = vld [vmem:[#allocation11 + $0x5e8] sm:$0xff]
    %v2543 = vld [vmem:[#allocation11 + $0x5f0] sm:$0xff]
    %v2544 = vld [vmem:[#allocation11 + $0x5f8] sm:$0xff]
    %v2545 = vld [vmem:[#allocation11 + $0x600] sm:$0xff]
    %v2546 = vld [vmem:[#allocation11 + $0x608] sm:$0xff]
    %v2547 = vld [vmem:[#allocation11 + $0x610] sm:$0xff]
    %v2548 = vld [vmem:[#allocation11 + $0x618] sm:$0xff]
    %v2549 = vld [vmem:[#allocation11 + $0x620] sm:$0xff]
    %v2550 = vld [vmem:[#allocation11 + $0x628] sm:$0xff]
    %v2551 = vld [vmem:[#allocation11 + $0x630] sm:$0xff]
    %v2552 = vld [vmem:[#allocation11 + $0x638] sm:$0xff]
    %v2553 = vld [vmem:[#allocation11 + $0x640] sm:$0xff]
    %v2554 = vld [vmem:[#allocation11 + $0x648] sm:$0xff]
    %v2555 = vld [vmem:[#allocation11 + $0x650] sm:$0xff]
    %v2556 = vld [vmem:[#allocation11 + $0x658] sm:$0xff]
    %v2557 = vld [vmem:[#allocation11 + $0x660] sm:$0xff]
    %v2558 = vld [vmem:[#allocation11 + $0x668] sm:$0xff]
    %v2559 = vld [vmem:[#allocation11 + $0x670] sm:$0xff]
    %v2560 = vld [vmem:[#allocation11 + $0x678] sm:$0xff]
    %v2561 = vld [vmem:[#allocation11 + $0x680] sm:$0xff]
    %v2562 = vld [vmem:[#allocation11 + $0x688] sm:$0xff]
    %v2563 = vld [vmem:[#allocation11 + $0x690] sm:$0xff]
    %v2564 = vld [vmem:[#allocation11 + $0x698] sm:$0xff]
    %v2565 = vld [vmem:[#allocation11 + $0x6a0] sm:$0xff]
    %v2566 = vld [vmem:[#allocation11 + $0x6a8] sm:$0xff]
    %v2567 = vld [vmem:[#allocation11 + $0x6b0] sm:$0xff]
    %v2568 = vld [vmem:[#allocation11 + $0x6b8] sm:$0xff]
    %v2569 = vld [vmem:[#allocation11 + $0x6c0] sm:$0xff]
    %v2570 = vld [vmem:[#allocation11 + $0x6c8] sm:$0xff]
    %v2571 = vld [vmem:[#allocation11 + $0x6d0] sm:$0xff]
    %v2572 = vld [vmem:[#allocation11 + $0x6d8] sm:$0xff]
    %v2573 = vld [vmem:[#allocation11 + $0x6e0] sm:$0xff]
    %v2574 = vld [vmem:[#allocation11 + $0x6e8] sm:$0xff]
    %v2575 = vld [vmem:[#allocation11 + $0x6f0] sm:$0xff]
    %v2576 = vld [vmem:[#allocation11 + $0x6f8] sm:$0xff]
    %v2577 = vld [vmem:[#allocation11 + $0x700] sm:$0xff]
    %v2578 = vld [vmem:[#allocation11 + $0x708] sm:$0xff]
    %v2579 = vld [vmem:[#allocation11 + $0x710] sm:$0xff]
    %v2580 = vld [vmem:[#allocation11 + $0x718] sm:$0xff]
    %v2581 = vld [vmem:[#allocation11 + $0x720] sm:$0xff]
    %v2582 = vld [vmem:[#allocation11 + $0x728] sm:$0xff]
    %v2583 = vld [vmem:[#allocation11 + $0x730] sm:$0xff]
    %v2584 = vld [vmem:[#allocation11 + $0x738] sm:$0xff]
    %v2585 = vld [vmem:[#allocation11 + $0x740] sm:$0xff]
    %v2586 = vld [vmem:[#allocation11 + $0x748] sm:$0xff]
    %v2587 = vld [vmem:[#allocation11 + $0x750] sm:$0xff]
    %v2588 = vld [vmem:[#allocation11 + $0x758] sm:$0xff]
    %v2589 = vld [vmem:[#allocation11 + $0x760] sm:$0xff]
    %v2590 = vld [vmem:[#allocation11 + $0x768] sm:$0xff]
    %v2591 = vld [vmem:[#allocation11 + $0x770] sm:$0xff]
    %v2592 = vld [vmem:[#allocation11 + $0x778] sm:$0xff]
    %v2593 = vld [vmem:[#allocation11 + $0x780] sm:$0xff]
    %v2594 = vld [vmem:[#allocation11 + $0x788] sm:$0xff]
    %v2595 = vld [vmem:[#allocation11 + $0x790] sm:$0xff]
    %v2596 = vld [vmem:[#allocation11 + $0x798] sm:$0xff]
    %v2597 = vld [vmem:[#allocation11 + $0x7a0] sm:$0xff]
    %v2598 = vld [vmem:[#allocation11 + $0x7a8] sm:$0xff]
    %v2599 = vld [vmem:[#allocation11 + $0x7b0] sm:$0xff]
    %v2600 = vld [vmem:[#allocation11 + $0x7b8] sm:$0xff]
    %v2601 = vld [vmem:[#allocation11 + $0x7c0] sm:$0xff]
    %v2602 = vld [vmem:[#allocation11 + $0x7c8] sm:$0xff]
    %v2603 = vld [vmem:[#allocation11 + $0x7d0] sm:$0xff]
    %v2604 = vld [vmem:[#allocation11 + $0x7d8] sm:$0xff]
    %v2605 = vld [vmem:[#allocation11 + $0x7e0] sm:$0xff]
    %v2606 = vld [vmem:[#allocation11 + $0x7e8] sm:$0xff]
    %v2607 = vld [vmem:[#allocation11 + $0x7f0] sm:$0xff]
    %v2608 = vld [vmem:[#allocation11 + $0x7f8] sm:$0xff]
    %v2609 = vld [vmem:[#allocation11 + $0x800] sm:$0xff]
    %v2610 = vld [vmem:[#allocation11 + $0x808] sm:$0xff]
    %v2611 = vld [vmem:[#allocation11 + $0x810] sm:$0xff]
    %v2612 = vld [vmem:[#allocation11 + $0x818] sm:$0xff]
    %v2613 = vld [vmem:[#allocation11 + $0x820] sm:$0xff]
    %v2614 = vld [vmem:[#allocation11 + $0x828] sm:$0xff]
    %v2615 = vld [vmem:[#allocation11 + $0x830] sm:$0xff]
    %v2616 = vld [vmem:[#allocation11 + $0x838] sm:$0xff]
    %v2617 = vld [vmem:[#allocation11 + $0x840] sm:$0xff]
    %v2618 = vld [vmem:[#allocation11 + $0x848] sm:$0xff]
    %v2619 = vld [vmem:[#allocation11 + $0x850] sm:$0xff]
    %v2620 = vld [vmem:[#allocation11 + $0x858] sm:$0xff]
    %v2621 = vld [vmem:[#allocation11 + $0x860] sm:$0xff]
    %v2622 = vld [vmem:[#allocation11 + $0x868] sm:$0xff]
    %v2623 = vld [vmem:[#allocation11 + $0x870] sm:$0xff]
    %v2624 = vld [vmem:[#allocation11 + $0x878] sm:$0xff]
    %v2625 = vld [vmem:[#allocation11 + $0x880] sm:$0xff]
    %v2626 = vld [vmem:[#allocation11 + $0x888] sm:$0xff]
    %v2627 = vld [vmem:[#allocation11 + $0x890] sm:$0xff]
    %v2628 = vld [vmem:[#allocation11 + $0x898] sm:$0xff]
    %v2629 = vld [vmem:[#allocation11 + $0x8a0] sm:$0xff]
    %v2630 = vld [vmem:[#allocation11 + $0x8a8] sm:$0xff]
    %v2631 = vld [vmem:[#allocation11 + $0x8b0] sm:$0xff]
    %v2632 = vld [vmem:[#allocation11 + $0x8b8] sm:$0xff]
    %v2633 = vld [vmem:[#allocation11 + $0x8c0] sm:$0xff]
    %v2634 = vld [vmem:[#allocation11 + $0x8c8] sm:$0xff]
    %v2635 = vld [vmem:[#allocation11 + $0x8d0] sm:$0xff]
    %v2636 = vld [vmem:[#allocation11 + $0x8d8] sm:$0xff]
    %v2637 = vld [vmem:[#allocation11 + $0x8e0] sm:$0xff]
    %v2638 = vld [vmem:[#allocation11 + $0x8e8] sm:$0xff]
    %v2639 = vld [vmem:[#allocation11 + $0x8f0] sm:$0xff]
    %v2640 = vld [vmem:[#allocation11 + $0x8f8] sm:$0xff]
    %v2641 = vld [vmem:[#allocation11 + $0x900] sm:$0xff]
    %v2642 = vld [vmem:[#allocation11 + $0x908] sm:$0xff]
    %v2643 = vld [vmem:[#allocation11 + $0x910] sm:$0xff]
    %v2644 = vld [vmem:[#allocation11 + $0x918] sm:$0xff]
    %v2645 = vld [vmem:[#allocation11 + $0x920] sm:$0xff]
    %v2646 = vld [vmem:[#allocation11 + $0x928] sm:$0xff]
    %v2647 = vld [vmem:[#allocation11 + $0x930] sm:$0xff]
    %v2648 = vld [vmem:[#allocation11 + $0x938] sm:$0xff]
    %v2649 = vld [vmem:[#allocation11 + $0x940] sm:$0xff]
    %v2650 = vld [vmem:[#allocation11 + $0x948] sm:$0xff]
    %v2651 = vld [vmem:[#allocation11 + $0x950] sm:$0xff]
    %v2652 = vld [vmem:[#allocation11 + $0x958] sm:$0xff]
    %v2653 = vld [vmem:[#allocation11 + $0x960] sm:$0xff]
    %v2654 = vld [vmem:[#allocation11 + $0x968] sm:$0xff]
    %v2655 = vld [vmem:[#allocation11 + $0x970] sm:$0xff]
    %v2656 = vld [vmem:[#allocation11 + $0x978] sm:$0xff]
    %v2657 = vld [vmem:[#allocation11 + $0x980] sm:$0xff]
    %v2658 = vld [vmem:[#allocation11 + $0x988] sm:$0xff]
    %v2659 = vld [vmem:[#allocation11 + $0x990] sm:$0xff]
    %v2660 = vld [vmem:[#allocation11 + $0x998] sm:$0xff]
    %v2661 = vld [vmem:[#allocation11 + $0x9a0] sm:$0xff]
    %v2662 = vld [vmem:[#allocation11 + $0x9a8] sm:$0xff]
    %v2663 = vld [vmem:[#allocation11 + $0x9b0] sm:$0xff]
    %v2664 = vld [vmem:[#allocation11 + $0x9b8] sm:$0xff]
    %v2665 = vld [vmem:[#allocation11 + $0x9c0] sm:$0xff]
    %v2666 = vld [vmem:[#allocation11 + $0x9c8] sm:$0xff]
    %v2667 = vld [vmem:[#allocation11 + $0x9d0] sm:$0xff]
    %v2668 = vld [vmem:[#allocation11 + $0x9d8] sm:$0xff]
    %v2669 = vld [vmem:[#allocation11 + $0x9e0] sm:$0xff]
    %v2670 = vld [vmem:[#allocation11 + $0x9e8] sm:$0xff]
    %v2671 = vld [vmem:[#allocation11 + $0x9f0] sm:$0xff]
    %v2672 = vld [vmem:[#allocation11 + $0x9f8] sm:$0xff]
    %v2673 = vld [vmem:[#allocation11 + $0xa00] sm:$0xff]
    %v2674 = vld [vmem:[#allocation11 + $0xa08] sm:$0xff]
    %v2675 = vld [vmem:[#allocation11 + $0xa10] sm:$0xff]
    %v2676 = vld [vmem:[#allocation11 + $0xa18] sm:$0xff]
    %v2677 = vld [vmem:[#allocation11 + $0xa20] sm:$0xff]
    %v2678 = vld [vmem:[#allocation11 + $0xa28] sm:$0xff]
    %v2679 = vld [vmem:[#allocation11 + $0xa30] sm:$0xff]
    %v2680 = vld [vmem:[#allocation11 + $0xa38] sm:$0xff]
    %v2681 = vld [vmem:[#allocation11 + $0xa40] sm:$0xff]
    %v2682 = vld [vmem:[#allocation11 + $0xa48] sm:$0xff]
    %v2683 = vld [vmem:[#allocation11 + $0xa50] sm:$0xff]
    %v2684 = vld [vmem:[#allocation11 + $0xa58] sm:$0xff]
    %v2685 = vld [vmem:[#allocation11 + $0xa60] sm:$0xff]
    %v2686 = vld [vmem:[#allocation11 + $0xa68] sm:$0xff]
    %v2687 = vld [vmem:[#allocation11 + $0xa70] sm:$0xff]
    %v2688 = vld [vmem:[#allocation11 + $0xa78] sm:$0xff]
    %v2689 = vld [vmem:[#allocation11 + $0xa80] sm:$0xff]
    %v2690 = vld [vmem:[#allocation11 + $0xa88] sm:$0xff]
    %v2691 = vld [vmem:[#allocation11 + $0xa90] sm:$0xff]
    %v2692 = vld [vmem:[#allocation11 + $0xa98] sm:$0xff]
    %v2693 = vld [vmem:[#allocation11 + $0xaa0] sm:$0xff]
    %v2694 = vld [vmem:[#allocation11 + $0xaa8] sm:$0xff]
    %v2695 = vld [vmem:[#allocation11 + $0xab0] sm:$0xff]
    %v2696 = vld [vmem:[#allocation11 + $0xab8] sm:$0xff]
    %v2697 = vld [vmem:[#allocation11 + $0xac0] sm:$0xff]
    %v2698 = vld [vmem:[#allocation11 + $0xac8] sm:$0xff]
    %v2699 = vld [vmem:[#allocation11 + $0xad0] sm:$0xff]
    %v2700 = vld [vmem:[#allocation11 + $0xad8] sm:$0xff]
    %v2701 = vld [vmem:[#allocation11 + $0xae0] sm:$0xff]
    %v2702 = vld [vmem:[#allocation11 + $0xae8] sm:$0xff]
    %v2703 = vld [vmem:[#allocation11 + $0xaf0] sm:$0xff]
    %v2704 = vld [vmem:[#allocation11 + $0xaf8] sm:$0xff]
    %v2705 = vld [vmem:[#allocation11 + $0xb00] sm:$0xff]
    %v2706 = vld [vmem:[#allocation11 + $0xb08] sm:$0xff]
    %v2707 = vld [vmem:[#allocation11 + $0xb10] sm:$0xff]
    %v2708 = vld [vmem:[#allocation11 + $0xb18] sm:$0xff]
    %v2709 = vld [vmem:[#allocation11 + $0xb20] sm:$0xff]
    %v2710 = vld [vmem:[#allocation11 + $0xb28] sm:$0xff]
    %v2711 = vld [vmem:[#allocation11 + $0xb30] sm:$0xff]
    %v2712 = vld [vmem:[#allocation11 + $0xb38] sm:$0xff]
    %v2713 = vld [vmem:[#allocation11 + $0xb40] sm:$0xff]
    %v2714 = vld [vmem:[#allocation11 + $0xb48] sm:$0xff]
    %v2715 = vld [vmem:[#allocation11 + $0xb50] sm:$0xff]
    %v2716 = vld [vmem:[#allocation11 + $0xb58] sm:$0xff]
    %v2717 = vld [vmem:[#allocation11 + $0xb60] sm:$0xff]
    %v2718 = vld [vmem:[#allocation11 + $0xb68] sm:$0xff]
    %v2719 = vld [vmem:[#allocation11 + $0xb70] sm:$0xff]
    %v2720 = vld [vmem:[#allocation11 + $0xb78] sm:$0xff]
    %v2721 = vld [vmem:[#allocation11 + $0xb80] sm:$0xff]
    %v2722 = vld [vmem:[#allocation11 + $0xb88] sm:$0xff]
    %v2723 = vld [vmem:[#allocation11 + $0xb90] sm:$0xff]
    %v2724 = vld [vmem:[#allocation11 + $0xb98] sm:$0xff]
    %v2725 = vld [vmem:[#allocation11 + $0xba0] sm:$0xff]
    %v2726 = vld [vmem:[#allocation11 + $0xba8] sm:$0xff]
    %v2727 = vld [vmem:[#allocation11 + $0xbb0] sm:$0xff]
    %v2728 = vld [vmem:[#allocation11 + $0xbb8] sm:$0xff]
    %v2729 = vld [vmem:[#allocation11 + $0xbc0] sm:$0xff]
    %v2730 = vld [vmem:[#allocation11 + $0xbc8] sm:$0xff]
    %v2731 = vld [vmem:[#allocation11 + $0xbd0] sm:$0xff]
    %v2732 = vld [vmem:[#allocation11 + $0xbd8] sm:$0xff]
    %v2733 = vld [vmem:[#allocation11 + $0xbe0] sm:$0xff]
    %v2734 = vld [vmem:[#allocation11 + $0xbe8] sm:$0xff]
    %v2735 = vld [vmem:[#allocation11 + $0xbf0] sm:$0xff]
    %v2736 = vld [vmem:[#allocation11 + $0xbf8] sm:$0xff]
    %v2737 = vld [vmem:[#allocation11 + $0xc00] sm:$0xff]
    %v2738 = vld [vmem:[#allocation11 + $0xc08] sm:$0xff]
    %v2739 = vld [vmem:[#allocation11 + $0xc10] sm:$0xff]
    %v2740 = vld [vmem:[#allocation11 + $0xc18] sm:$0xff]
    %v2741 = vld [vmem:[#allocation11 + $0xc20] sm:$0xff]
    %v2742 = vld [vmem:[#allocation11 + $0xc28] sm:$0xff]
    %v2743 = vld [vmem:[#allocation11 + $0xc30] sm:$0xff]
    %v2744 = vld [vmem:[#allocation11 + $0xc38] sm:$0xff]
    %v2745 = vld [vmem:[#allocation11 + $0xc40] sm:$0xff]
    %v2746 = vld [vmem:[#allocation11 + $0xc48] sm:$0xff]
    %v2747 = vld [vmem:[#allocation11 + $0xc50] sm:$0xff]
    %v2748 = vld [vmem:[#allocation11 + $0xc58] sm:$0xff]
    %v2749 = vld [vmem:[#allocation11 + $0xc60] sm:$0xff]
    %v2750 = vld [vmem:[#allocation11 + $0xc68] sm:$0xff]
    %v2751 = vld [vmem:[#allocation11 + $0xc70] sm:$0xff]
    %v2752 = vld [vmem:[#allocation11 + $0xc78] sm:$0xff]
    %v2753 = vld [vmem:[#allocation11 + $0xc80] sm:$0xff]
    %v2754 = vld [vmem:[#allocation11 + $0xc88] sm:$0xff]
    %v2755 = vld [vmem:[#allocation11 + $0xc90] sm:$0xff]
    %v2756 = vld [vmem:[#allocation11 + $0xc98] sm:$0xff]
    %v2757 = vld [vmem:[#allocation11 + $0xca0] sm:$0xff]
    %v2758 = vld [vmem:[#allocation11 + $0xca8] sm:$0xff]
    %v2759 = vld [vmem:[#allocation11 + $0xcb0] sm:$0xff]
    %v2760 = vld [vmem:[#allocation11 + $0xcb8] sm:$0xff]
    %v2761 = vld [vmem:[#allocation11 + $0xcc0] sm:$0xff]
    %v2762 = vld [vmem:[#allocation11 + $0xcc8] sm:$0xff]
    %v2763 = vld [vmem:[#allocation11 + $0xcd0] sm:$0xff]
    %v2764 = vld [vmem:[#allocation11 + $0xcd8] sm:$0xff]
    %v2765 = vld [vmem:[#allocation11 + $0xce0] sm:$0xff]
    %v2766 = vld [vmem:[#allocation11 + $0xce8] sm:$0xff]
    %v2767 = vld [vmem:[#allocation11 + $0xcf0] sm:$0xff]
    %v2768 = vld [vmem:[#allocation11 + $0xcf8] sm:$0xff]
    %v2769 = vld [vmem:[#allocation11 + $0xd00] sm:$0xff]
    %v2770 = vld [vmem:[#allocation11 + $0xd08] sm:$0xff]
    %v2771 = vld [vmem:[#allocation11 + $0xd10] sm:$0xff]
    %v2772 = vld [vmem:[#allocation11 + $0xd18] sm:$0xff]
    %v2773 = vld [vmem:[#allocation11 + $0xd20] sm:$0xff]
    %v2774 = vld [vmem:[#allocation11 + $0xd28] sm:$0xff]
    %v2775 = vld [vmem:[#allocation11 + $0xd30] sm:$0xff]
    %v2776 = vld [vmem:[#allocation11 + $0xd38] sm:$0xff]
    %v2777 = vld [vmem:[#allocation11 + $0xd40] sm:$0xff]
    %v2778 = vld [vmem:[#allocation11 + $0xd48] sm:$0xff]
    %v2779 = vld [vmem:[#allocation11 + $0xd50] sm:$0xff]
    %v2780 = vld [vmem:[#allocation11 + $0xd58] sm:$0xff]
    %v2781 = vld [vmem:[#allocation11 + $0xd60] sm:$0xff]
    %v2782 = vld [vmem:[#allocation11 + $0xd68] sm:$0xff]
    %v2783 = vld [vmem:[#allocation11 + $0xd70] sm:$0xff]
    %v2784 = vld [vmem:[#allocation11 + $0xd78] sm:$0xff]
    %v2785 = vld [vmem:[#allocation11 + $0xd80] sm:$0xff]
    %v2786 = vld [vmem:[#allocation11 + $0xd88] sm:$0xff]
    %v2787 = vld [vmem:[#allocation11 + $0xd90] sm:$0xff]
    %v2788 = vld [vmem:[#allocation11 + $0xd98] sm:$0xff]
    %v2789 = vld [vmem:[#allocation11 + $0xda0] sm:$0xff]
    %v2790 = vld [vmem:[#allocation11 + $0xda8] sm:$0xff]
    %v2791 = vld [vmem:[#allocation11 + $0xdb0] sm:$0xff]
    %v2792 = vld [vmem:[#allocation11 + $0xdb8] sm:$0xff]
    %v2793 = vld [vmem:[#allocation11 + $0xdc0] sm:$0xff]
    %v2794 = vld [vmem:[#allocation11 + $0xdc8] sm:$0xff]
    %v2795 = vld [vmem:[#allocation11 + $0xdd0] sm:$0xff]
    %v2796 = vld [vmem:[#allocation11 + $0xdd8] sm:$0xff]
    %v2797 = vld [vmem:[#allocation11 + $0xde0] sm:$0xff]
    %v2798 = vld [vmem:[#allocation11 + $0xde8] sm:$0xff]
    %v2799 = vld [vmem:[#allocation11 + $0xdf0] sm:$0xff]
    %v2800 = vld [vmem:[#allocation11 + $0xdf8] sm:$0xff]
    %v2801 = vld [vmem:[#allocation11 + $0xe00] sm:$0xff]
    %v2802 = vld [vmem:[#allocation11 + $0xe08] sm:$0xff]
    %v2803 = vld [vmem:[#allocation11 + $0xe10] sm:$0xff]
    %v2804 = vld [vmem:[#allocation11 + $0xe18] sm:$0xff]
    %v2805 = vld [vmem:[#allocation11 + $0xe20] sm:$0xff]
    %v2806 = vld [vmem:[#allocation11 + $0xe28] sm:$0xff]
    %v2807 = vld [vmem:[#allocation11 + $0xe30] sm:$0xff]
    %v2808 = vld [vmem:[#allocation11 + $0xe38] sm:$0xff]
    %v2809 = vld [vmem:[#allocation11 + $0xe40] sm:$0xff]
    %v2810 = vld [vmem:[#allocation11 + $0xe48] sm:$0xff]
    %v2811 = vld [vmem:[#allocation11 + $0xe50] sm:$0xff]
    %v2812 = vld [vmem:[#allocation11 + $0xe58] sm:$0xff]
    %v2813 = vld [vmem:[#allocation11 + $0xe60] sm:$0xff]
    %v2814 = vld [vmem:[#allocation11 + $0xe68] sm:$0xff]
    %v2815 = vld [vmem:[#allocation11 + $0xe70] sm:$0xff]
    %v2816 = vld [vmem:[#allocation11 + $0xe78] sm:$0xff]
    %v2817 = vld [vmem:[#allocation11 + $0xe80] sm:$0xff]
    %v2818 = vld [vmem:[#allocation11 + $0xe88] sm:$0xff]
    %v2819 = vld [vmem:[#allocation11 + $0xe90] sm:$0xff]
    %v2820 = vld [vmem:[#allocation11 + $0xe98] sm:$0xff]
    %v2821 = vld [vmem:[#allocation11 + $0xea0] sm:$0xff]
    %v2822 = vld [vmem:[#allocation11 + $0xea8] sm:$0xff]
    %v2823 = vld [vmem:[#allocation11 + $0xeb0] sm:$0xff]
    %v2824 = vld [vmem:[#allocation11 + $0xeb8] sm:$0xff]
    %v2825 = vld [vmem:[#allocation11 + $0xec0] sm:$0xff]
    %v2826 = vld [vmem:[#allocation11 + $0xec8] sm:$0xff]
    %v2827 = vld [vmem:[#allocation11 + $0xed0] sm:$0xff]
    %v2828 = vld [vmem:[#allocation11 + $0xed8] sm:$0xff]
    %v2829 = vld [vmem:[#allocation11 + $0xee0] sm:$0xff]
    %v2830 = vld [vmem:[#allocation11 + $0xee8] sm:$0xff]
    %v2831 = vld [vmem:[#allocation11 + $0xef0] sm:$0xff]
    %v2832 = vld [vmem:[#allocation11 + $0xef8] sm:$0xff]
    %v2833 = vld [vmem:[#allocation11 + $0xf00] sm:$0xff]
    %v2834 = vld [vmem:[#allocation11 + $0xf08] sm:$0xff]
    %v2835 = vld [vmem:[#allocation11 + $0xf10] sm:$0xff]
    %v2836 = vld [vmem:[#allocation11 + $0xf18] sm:$0xff]
    %v2837 = vld [vmem:[#allocation11 + $0xf20] sm:$0xff]
    %v2838 = vld [vmem:[#allocation11 + $0xf28] sm:$0xff]
    %v2839 = vld [vmem:[#allocation11 + $0xf30] sm:$0xff]
    %v2840 = vld [vmem:[#allocation11 + $0xf38] sm:$0xff]
    %v2841 = vld [vmem:[#allocation11 + $0xf40] sm:$0xff]
    %v2842 = vld [vmem:[#allocation11 + $0xf48] sm:$0xff]
    %v2843 = vld [vmem:[#allocation11 + $0xf50] sm:$0xff]
    %v2844 = vld [vmem:[#allocation11 + $0xf58] sm:$0xff]
    %v2845 = vld [vmem:[#allocation11 + $0xf60] sm:$0xff]
    %v2846 = vld [vmem:[#allocation11 + $0xf68] sm:$0xff]
    %v2847 = vld [vmem:[#allocation11 + $0xf70] sm:$0xff]
    %v2848 = vld [vmem:[#allocation11 + $0xf78] sm:$0xff]
    %v2849 = vld [vmem:[#allocation11 + $0xf80] sm:$0xff]
    %v2850 = vld [vmem:[#allocation11 + $0xf88] sm:$0xff]
    %v2851 = vld [vmem:[#allocation11 + $0xf90] sm:$0xff]
    %v2852 = vld [vmem:[#allocation11 + $0xf98] sm:$0xff]
    %v2853 = vld [vmem:[#allocation11 + $0xfa0] sm:$0xff]
    %v2854 = vld [vmem:[#allocation11 + $0xfa8] sm:$0xff]
    %v2855 = vld [vmem:[#allocation11 + $0xfb0] sm:$0xff]
    %v2856 = vld [vmem:[#allocation11 + $0xfb8] sm:$0xff]
    %v2857 = vld [vmem:[#allocation11 + $0xfc0] sm:$0xff]
    %v2858 = vld [vmem:[#allocation11 + $0xfc8] sm:$0xff]
    %v2859 = vld [vmem:[#allocation11 + $0xfd0] sm:$0xff]
    %v2860 = vld [vmem:[#allocation11 + $0xfd8] sm:$0xff]
    %v2861 = vld [vmem:[#allocation11 + $0xfe0] sm:$0xff]
    %v2862 = vld [vmem:[#allocation11 + $0xfe8] sm:$0xff]
    %v2863 = vld [vmem:[#allocation11 + $0xff0] sm:$0xff]
    %v2864 = vld [vmem:[#allocation11 + $0xff8] sm:$0xff]
    %v2865 = vld [vmem:[#allocation11 + $0x1000] sm:$0xff]
    %v2866 = vld [vmem:[#allocation11 + $0x1008] sm:$0xff]
    %v2867 = vld [vmem:[#allocation11 + $0x1010] sm:$0xff]
    %v2868 = vld [vmem:[#allocation11 + $0x1018] sm:$0xff]
    %v2869 = vld [vmem:[#allocation11 + $0x1020] sm:$0xff]
    %v2870 = vld [vmem:[#allocation11 + $0x1028] sm:$0xff]
    %v2871 = vld [vmem:[#allocation11 + $0x1030] sm:$0xff]
    %v2872 = vld [vmem:[#allocation11 + $0x1038] sm:$0xff]
    %v2873 = vld [vmem:[#allocation11 + $0x1040] sm:$0xff]
    %v2874 = vld [vmem:[#allocation11 + $0x1048] sm:$0xff]
    %v2875 = vld [vmem:[#allocation11 + $0x1050] sm:$0xff]
    %v2876 = vld [vmem:[#allocation11 + $0x1058] sm:$0xff]
    %v2877 = vld [vmem:[#allocation11 + $0x1060] sm:$0xff]
    %v2878 = vld [vmem:[#allocation11 + $0x1068] sm:$0xff]
    %v2879 = vld [vmem:[#allocation11 + $0x1070] sm:$0xff]
    %v2880 = vld [vmem:[#allocation11 + $0x1078] sm:$0xff]
    %v2881 = vld [vmem:[#allocation11 + $0x1080] sm:$0xff]
    %v2882 = vld [vmem:[#allocation11 + $0x1088] sm:$0xff]
    %v2883 = vld [vmem:[#allocation11 + $0x1090] sm:$0xff]
    %v2884 = vld [vmem:[#allocation11 + $0x1098] sm:$0xff]
    %v2885 = vld [vmem:[#allocation11 + $0x10a0] sm:$0xff]
    %v2886 = vld [vmem:[#allocation11 + $0x10a8] sm:$0xff]
    %v2887 = vld [vmem:[#allocation11 + $0x10b0] sm:$0xff]
    %v2888 = vld [vmem:[#allocation11 + $0x10b8] sm:$0xff]
    %v2889 = vld [vmem:[#allocation11 + $0x10c0] sm:$0xff]
    %v2890 = vld [vmem:[#allocation11 + $0x10c8] sm:$0xff]
    %v2891 = vld [vmem:[#allocation11 + $0x10d0] sm:$0xff]
    %v2892 = vld [vmem:[#allocation11 + $0x10d8] sm:$0xff]
    %v2893 = vld [vmem:[#allocation11 + $0x10e0] sm:$0xff]
    %v2894 = vld [vmem:[#allocation11 + $0x10e8] sm:$0xff]
    %v2895 = vld [vmem:[#allocation11 + $0x10f0] sm:$0xff]
    %v2896 = vld [vmem:[#allocation11 + $0x10f8] sm:$0xff]
    %v2897 = vld [vmem:[#allocation11 + $0x1100] sm:$0xff]
    %v2898 = vld [vmem:[#allocation11 + $0x1108] sm:$0xff]
    %v2899 = vld [vmem:[#allocation11 + $0x1110] sm:$0xff]
    %v2900 = vld [vmem:[#allocation11 + $0x1118] sm:$0xff]
    %v2901 = vld [vmem:[#allocation11 + $0x1120] sm:$0xff]
    %v2902 = vld [vmem:[#allocation11 + $0x1128] sm:$0xff]
    %v2903 = vld [vmem:[#allocation11 + $0x1130] sm:$0xff]
    %v2904 = vld [vmem:[#allocation11 + $0x1138] sm:$0xff]
    %v2905 = vld [vmem:[#allocation11 + $0x1140] sm:$0xff]
    %v2906 = vld [vmem:[#allocation11 + $0x1148] sm:$0xff]
    %v2907 = vld [vmem:[#allocation11 + $0x1150] sm:$0xff]
    %v2908 = vld [vmem:[#allocation11 + $0x1158] sm:$0xff]
    %v2909 = vld [vmem:[#allocation11 + $0x1160] sm:$0xff]
    %v2910 = vld [vmem:[#allocation11 + $0x1168] sm:$0xff]
    %v2911 = vld [vmem:[#allocation11 + $0x1170] sm:$0xff]
    %v2912 = vld [vmem:[#allocation11 + $0x1178] sm:$0xff]
    %v2913 = vld [vmem:[#allocation11 + $0x1180] sm:$0xff]
    %v2914 = vld [vmem:[#allocation11 + $0x1188] sm:$0xff]
    %v2915 = vld [vmem:[#allocation11 + $0x1190] sm:$0xff]
    %v2916 = vld [vmem:[#allocation11 + $0x1198] sm:$0xff]
    %v2917 = vld [vmem:[#allocation11 + $0x11a0] sm:$0xff]
    %v2918 = vld [vmem:[#allocation11 + $0x11a8] sm:$0xff]
    %v2919 = vld [vmem:[#allocation11 + $0x11b0] sm:$0xff]
    %v2920 = vld [vmem:[#allocation11 + $0x11b8] sm:$0xff]
    %v2921 = vld [vmem:[#allocation11 + $0x11c0] sm:$0xff]
    %v2922 = vld [vmem:[#allocation11 + $0x11c8] sm:$0xff]
    %v2923 = vld [vmem:[#allocation11 + $0x11d0] sm:$0xff]
    %v2924 = vld [vmem:[#allocation11 + $0x11d8] sm:$0xff]
    %v2925 = vld [vmem:[#allocation11 + $0x11e0] sm:$0xff]
    %v2926 = vld [vmem:[#allocation11 + $0x11e8] sm:$0xff]
    %v2927 = vld [vmem:[#allocation11 + $0x11f0] sm:$0xff]
    %v2928 = vld [vmem:[#allocation11 + $0x11f8] sm:$0xff]
    %v2929 = vld [vmem:[#allocation11 + $0x1200] sm:$0xff]
    %v2930 = vld [vmem:[#allocation11 + $0x1208] sm:$0xff]
    %v2931 = vld [vmem:[#allocation11 + $0x1210] sm:$0xff]
    %v2932 = vld [vmem:[#allocation11 + $0x1218] sm:$0xff]
    %v2933 = vld [vmem:[#allocation11 + $0x1220] sm:$0xff]
    %v2934 = vld [vmem:[#allocation11 + $0x1228] sm:$0xff]
    %v2935 = vld [vmem:[#allocation11 + $0x1230] sm:$0xff]
    %v2936 = vld [vmem:[#allocation11 + $0x1238] sm:$0xff]
    %v2937 = vld [vmem:[#allocation11 + $0x1240] sm:$0xff]
    %v2938 = vld [vmem:[#allocation11 + $0x1248] sm:$0xff]
    %v2939 = vld [vmem:[#allocation11 + $0x1250] sm:$0xff]
    %v2940 = vld [vmem:[#allocation11 + $0x1258] sm:$0xff]
    %v2941 = vld [vmem:[#allocation11 + $0x1260] sm:$0xff]
    %v2942 = vld [vmem:[#allocation11 + $0x1268] sm:$0xff]
    %v2943 = vld [vmem:[#allocation11 + $0x1270] sm:$0xff]
    %v2944 = vld [vmem:[#allocation11 + $0x1278] sm:$0xff]
    %v2945 = vld [vmem:[#allocation11 + $0x1280] sm:$0xff]
    %v2946 = vld [vmem:[#allocation11 + $0x1288] sm:$0xff]
    %v2947 = vld [vmem:[#allocation11 + $0x1290] sm:$0xff]
    %v2948 = vld [vmem:[#allocation11 + $0x1298] sm:$0xff]
    %v2949 = vld [vmem:[#allocation11 + $0x12a0] sm:$0xff]
    %v2950 = vld [vmem:[#allocation11 + $0x12a8] sm:$0xff]
    %v2951 = vld [vmem:[#allocation11 + $0x12b0] sm:$0xff]
    %v2952 = vld [vmem:[#allocation11 + $0x12b8] sm:$0xff]
    %v2953 = vld [vmem:[#allocation11 + $0x12c0] sm:$0xff]
    %v2954 = vld [vmem:[#allocation11 + $0x12c8] sm:$0xff]
    %v2955 = vld [vmem:[#allocation11 + $0x12d0] sm:$0xff]
    %v2956 = vld [vmem:[#allocation11 + $0x12d8] sm:$0xff]
    %v2957 = vld [vmem:[#allocation11 + $0x12e0] sm:$0xff]
    %v2958 = vld [vmem:[#allocation11 + $0x12e8] sm:$0xff]
    %v2959 = vld [vmem:[#allocation11 + $0x12f0] sm:$0xff]
    %v2960 = vld [vmem:[#allocation11 + $0x12f8] sm:$0xff]
    %v2961 = vld [vmem:[#allocation11 + $0x1300] sm:$0xff]
    %v2962 = vld [vmem:[#allocation11 + $0x1308] sm:$0xff]
    %v2963 = vld [vmem:[#allocation11 + $0x1310] sm:$0xff]
    %v2964 = vld [vmem:[#allocation11 + $0x1318] sm:$0xff]
    %v2965 = vld [vmem:[#allocation11 + $0x1320] sm:$0xff]
    %v2966 = vld [vmem:[#allocation11 + $0x1328] sm:$0xff]
    %v2967 = vld [vmem:[#allocation11 + $0x1330] sm:$0xff]
    %v2968 = vld [vmem:[#allocation11 + $0x1338] sm:$0xff]
    %v2969 = vld [vmem:[#allocation11 + $0x1340] sm:$0xff]
    %v2970 = vld [vmem:[#allocation11 + $0x1348] sm:$0xff]
    %v2971 = vld [vmem:[#allocation11 + $0x1350] sm:$0xff]
    %v2972 = vld [vmem:[#allocation11 + $0x1358] sm:$0xff]
    %v2973 = vld [vmem:[#allocation11 + $0x1360] sm:$0xff]
    %v2974 = vld [vmem:[#allocation11 + $0x1368] sm:$0xff]
    %v2975 = vld [vmem:[#allocation11 + $0x1370] sm:$0xff]
    %v2976 = vld [vmem:[#allocation11 + $0x1378] sm:$0xff]
    %v2977 = vld [vmem:[#allocation11 + $0x1380] sm:$0xff]
    %v2978 = vld [vmem:[#allocation11 + $0x1388] sm:$0xff]
    %v2979 = vld [vmem:[#allocation11 + $0x1390] sm:$0xff]
    %v2980 = vld [vmem:[#allocation11 + $0x1398] sm:$0xff]
    %v2981 = vld [vmem:[#allocation11 + $0x13a0] sm:$0xff]
    %v2982 = vld [vmem:[#allocation11 + $0x13a8] sm:$0xff]
    %v2983 = vld [vmem:[#allocation11 + $0x13b0] sm:$0xff]
    %v2984 = vld [vmem:[#allocation11 + $0x13b8] sm:$0xff]
    %v2985 = vld [vmem:[#allocation11 + $0x13c0] sm:$0xff]
    %v2986 = vld [vmem:[#allocation11 + $0x13c8] sm:$0xff]
    %v2987 = vld [vmem:[#allocation11 + $0x13d0] sm:$0xff]
    %v2988 = vld [vmem:[#allocation11 + $0x13d8] sm:$0xff]
    %v2989 = vld [vmem:[#allocation11 + $0x13e0] sm:$0xff]
    %v2990 = vld [vmem:[#allocation11 + $0x13e8] sm:$0xff]
    %v2991 = vld [vmem:[#allocation11 + $0x13f0] sm:$0xff]
    %v2992 = vld [vmem:[#allocation11 + $0x13f8] sm:$0xff]
    %v2993 = vld [vmem:[#allocation11 + $0x1400] sm:$0xff]
    %v2994 = vld [vmem:[#allocation11 + $0x1408] sm:$0xff]
    %v2995 = vld [vmem:[#allocation11 + $0x1410] sm:$0xff]
    %v2996 = vld [vmem:[#allocation11 + $0x1418] sm:$0xff]
    %v2997 = vld [vmem:[#allocation11 + $0x1420] sm:$0xff]
    %v2998 = vld [vmem:[#allocation11 + $0x1428] sm:$0xff]
    %v2999 = vld [vmem:[#allocation11 + $0x1430] sm:$0xff]
    %v3000 = vld [vmem:[#allocation11 + $0x1438] sm:$0xff]
    %v3001 = vld [vmem:[#allocation11 + $0x1440] sm:$0xff]
    %v3002 = vld [vmem:[#allocation11 + $0x1448] sm:$0xff]
    %v3003 = vld [vmem:[#allocation11 + $0x1450] sm:$0xff]
    %v3004 = vld [vmem:[#allocation11 + $0x1458] sm:$0xff]
    %v3005 = vld [vmem:[#allocation11 + $0x1460] sm:$0xff]
    %v3006 = vld [vmem:[#allocation11 + $0x1468] sm:$0xff]
    %v3007 = vld [vmem:[#allocation11 + $0x1470] sm:$0xff]
    %v3008 = vld [vmem:[#allocation11 + $0x1478] sm:$0xff]
    %v3009 = vld [vmem:[#allocation11 + $0x1480] sm:$0xff]
    %v3010 = vld [vmem:[#allocation11 + $0x1488] sm:$0xff]
    %v3011 = vld [vmem:[#allocation11 + $0x1490] sm:$0xff]
    %v3012 = vld [vmem:[#allocation11 + $0x1498] sm:$0xff]
    %v3013 = vld [vmem:[#allocation11 + $0x14a0] sm:$0xff]
    %v3014 = vld [vmem:[#allocation11 + $0x14a8] sm:$0xff]
    %v3015 = vld [vmem:[#allocation11 + $0x14b0] sm:$0xff]
    %v3016 = vld [vmem:[#allocation11 + $0x14b8] sm:$0xff]
    %v3017 = vld [vmem:[#allocation11 + $0x14c0] sm:$0xff]
    %v3018 = vld [vmem:[#allocation11 + $0x14c8] sm:$0xff]
    %v3019 = vld [vmem:[#allocation11 + $0x14d0] sm:$0xff]
    %v3020 = vld [vmem:[#allocation11 + $0x14d8] sm:$0xff]
    %v3021 = vld [vmem:[#allocation11 + $0x14e0] sm:$0xff]
    %v3022 = vld [vmem:[#allocation11 + $0x14e8] sm:$0xff]
    %v3023 = vld [vmem:[#allocation11 + $0x14f0] sm:$0xff]
    %v3024 = vld [vmem:[#allocation11 + $0x14f8] sm:$0xff]
    %v3025 = vld [vmem:[#allocation11 + $0x1500] sm:$0xff]
    %v3026 = vld [vmem:[#allocation11 + $0x1508] sm:$0xff]
    %v3027 = vld [vmem:[#allocation11 + $0x1510] sm:$0xff]
    %v3028 = vld [vmem:[#allocation11 + $0x1518] sm:$0xff]
    %v3029 = vld [vmem:[#allocation11 + $0x1520] sm:$0xff]
    %v3030 = vld [vmem:[#allocation11 + $0x1528] sm:$0xff]
    %v3031 = vld [vmem:[#allocation11 + $0x1530] sm:$0xff]
    %v3032 = vld [vmem:[#allocation11 + $0x1538] sm:$0xff]
    %v3033 = vld [vmem:[#allocation11 + $0x1540] sm:$0xff]
    %v3034 = vld [vmem:[#allocation11 + $0x1548] sm:$0xff]
    %v3035 = vld [vmem:[#allocation11 + $0x1550] sm:$0xff]
    %v3036 = vld [vmem:[#allocation11 + $0x1558] sm:$0xff]
    %v3037 = vld [vmem:[#allocation11 + $0x1560] sm:$0xff]
    %v3038 = vld [vmem:[#allocation11 + $0x1568] sm:$0xff]
    %v3039 = vld [vmem:[#allocation11 + $0x1570] sm:$0xff]
    %v3040 = vld [vmem:[#allocation11 + $0x1578] sm:$0xff]
    %v3041 = vld [vmem:[#allocation11 + $0x1580] sm:$0xff]
    %v3042 = vld [vmem:[#allocation11 + $0x1588] sm:$0xff]
    %v3043 = vld [vmem:[#allocation11 + $0x1590] sm:$0xff]
    %v3044 = vld [vmem:[#allocation11 + $0x1598] sm:$0xff]
    %v3045 = vld [vmem:[#allocation11 + $0x15a0] sm:$0xff]
    %v3046 = vld [vmem:[#allocation11 + $0x15a8] sm:$0xff]
    %v3047 = vld [vmem:[#allocation11 + $0x15b0] sm:$0xff]
    %v3048 = vld [vmem:[#allocation11 + $0x15b8] sm:$0xff]
    %v3049 = vld [vmem:[#allocation11 + $0x15c0] sm:$0xff]
    %v3050 = vld [vmem:[#allocation11 + $0x15c8] sm:$0xff]
    %v3051 = vld [vmem:[#allocation11 + $0x15d0] sm:$0xff]
    %v3052 = vld [vmem:[#allocation11 + $0x15d8] sm:$0xff]
    %v3053 = vld [vmem:[#allocation11 + $0x15e0] sm:$0xff]
    %v3054 = vld [vmem:[#allocation11 + $0x15e8] sm:$0xff]
    %v3055 = vld [vmem:[#allocation11 + $0x15f0] sm:$0xff]
    %v3056 = vld [vmem:[#allocation11 + $0x15f8] sm:$0xff]
    %v3057 = vld [vmem:[#allocation11 + $0x1600] sm:$0xff]
    %v3058 = vld [vmem:[#allocation11 + $0x1608] sm:$0xff]
    %v3059 = vld [vmem:[#allocation11 + $0x1610] sm:$0xff]
    %v3060 = vld [vmem:[#allocation11 + $0x1618] sm:$0xff]
    %v3061 = vld [vmem:[#allocation11 + $0x1620] sm:$0xff]
    %v3062 = vld [vmem:[#allocation11 + $0x1628] sm:$0xff]
    %v3063 = vld [vmem:[#allocation11 + $0x1630] sm:$0xff]
    %v3064 = vld [vmem:[#allocation11 + $0x1638] sm:$0xff]
    %v3065 = vld [vmem:[#allocation11 + $0x1640] sm:$0xff]
    %v3066 = vld [vmem:[#allocation11 + $0x1648] sm:$0xff]
    %v3067 = vld [vmem:[#allocation11 + $0x1650] sm:$0xff]
    %v3068 = vld [vmem:[#allocation11 + $0x1658] sm:$0xff]
    %v3069 = vld [vmem:[#allocation11 + $0x1660] sm:$0xff]
    %v3070 = vld [vmem:[#allocation11 + $0x1668] sm:$0xff]
    %v3071 = vld [vmem:[#allocation11 + $0x1670] sm:$0xff]
    %v3072 = vld [vmem:[#allocation11 + $0x1678] sm:$0xff]
    %v3073 = vld [vmem:[#allocation11 + $0x1680] sm:$0xff]
    %v3074 = vld [vmem:[#allocation11 + $0x1688] sm:$0xff]
    %v3075 = vld [vmem:[#allocation11 + $0x1690] sm:$0xff]
    %v3076 = vld [vmem:[#allocation11 + $0x1698] sm:$0xff]
    %v3077 = vld [vmem:[#allocation11 + $0x16a0] sm:$0xff]
    %v3078 = vld [vmem:[#allocation11 + $0x16a8] sm:$0xff]
    %v3079 = vld [vmem:[#allocation11 + $0x16b0] sm:$0xff]
    %v3080 = vld [vmem:[#allocation11 + $0x16b8] sm:$0xff]
    %v3081 = vld [vmem:[#allocation11 + $0x16c0] sm:$0xff]
    %v3082 = vld [vmem:[#allocation11 + $0x16c8] sm:$0xff]
    %v3083 = vld [vmem:[#allocation11 + $0x16d0] sm:$0xff]
    %v3084 = vld [vmem:[#allocation11 + $0x16d8] sm:$0xff]
    %v3085 = vld [vmem:[#allocation11 + $0x16e0] sm:$0xff]
    %v3086 = vld [vmem:[#allocation11 + $0x16e8] sm:$0xff]
    %v3087 = vld [vmem:[#allocation11 + $0x16f0] sm:$0xff]
    %v3088 = vld [vmem:[#allocation11 + $0x16f8] sm:$0xff]
    %v3089 = vld [vmem:[#allocation11 + $0x1700] sm:$0xff]
    %v3090 = vld [vmem:[#allocation11 + $0x1708] sm:$0xff]
    %v3091 = vld [vmem:[#allocation11 + $0x1710] sm:$0xff]
    %v3092 = vld [vmem:[#allocation11 + $0x1718] sm:$0xff]
    %v3093 = vld [vmem:[#allocation11 + $0x1720] sm:$0xff]
    %v3094 = vld [vmem:[#allocation11 + $0x1728] sm:$0xff]
    %v3095 = vld [vmem:[#allocation11 + $0x1730] sm:$0xff]
    %v3096 = vld [vmem:[#allocation11 + $0x1738] sm:$0xff]
    %v3097 = vld [vmem:[#allocation11 + $0x1740] sm:$0xff]
    %v3098 = vld [vmem:[#allocation11 + $0x1748] sm:$0xff]
    %v3099 = vld [vmem:[#allocation11 + $0x1750] sm:$0xff]
    %v3100 = vld [vmem:[#allocation11 + $0x1758] sm:$0xff]
    %v3101 = vld [vmem:[#allocation11 + $0x1760] sm:$0xff]
    %v3102 = vld [vmem:[#allocation11 + $0x1768] sm:$0xff]
    %v3103 = vld [vmem:[#allocation11 + $0x1770] sm:$0xff]
    %v3104 = vld [vmem:[#allocation11 + $0x1778] sm:$0xff]
    %v3105 = vld [vmem:[#allocation11 + $0x1780] sm:$0xff]
    %v3106 = vld [vmem:[#allocation11 + $0x1788] sm:$0xff]
    %v3107 = vld [vmem:[#allocation11 + $0x1790] sm:$0xff]
    %v3108 = vld [vmem:[#allocation11 + $0x1798] sm:$0xff]
    %v3109 = vld [vmem:[#allocation11 + $0x17a0] sm:$0xff]
    %v3110 = vld [vmem:[#allocation11 + $0x17a8] sm:$0xff]
    %v3111 = vld [vmem:[#allocation11 + $0x17b0] sm:$0xff]
    %v3112 = vld [vmem:[#allocation11 + $0x17b8] sm:$0xff]
    %v3113 = vld [vmem:[#allocation11 + $0x17c0] sm:$0xff]
    %v3114 = vld [vmem:[#allocation11 + $0x17c8] sm:$0xff]
    %v3115 = vld [vmem:[#allocation11 + $0x17d0] sm:$0xff]
    %v3116 = vld [vmem:[#allocation11 + $0x17d8] sm:$0xff]
    %v3117 = vld [vmem:[#allocation11 + $0x17e0] sm:$0xff]
    %v3118 = vld [vmem:[#allocation11 + $0x17e8] sm:$0xff]
    %v3119 = vld [vmem:[#allocation11 + $0x17f0] sm:$0xff]
    %v3120 = vld [vmem:[#allocation11 + $0x17f8] sm:$0xff]
    %v3121 = vld [vmem:[#allocation11 + $0x1800] sm:$0xff]
    %v3122 = vld [vmem:[#allocation11 + $0x1808] sm:$0xff]
    %v3123 = vld [vmem:[#allocation11 + $0x1810] sm:$0xff]
    %v3124 = vld [vmem:[#allocation11 + $0x1818] sm:$0xff]
    %v3125 = vld [vmem:[#allocation11 + $0x1820] sm:$0xff]
    %v3126 = vld [vmem:[#allocation11 + $0x1828] sm:$0xff]
    %v3127 = vld [vmem:[#allocation11 + $0x1830] sm:$0xff]
    %v3128 = vld [vmem:[#allocation11 + $0x1838] sm:$0xff]
    %v3129 = vld [vmem:[#allocation11 + $0x1840] sm:$0xff]
    %v3130 = vld [vmem:[#allocation11 + $0x1848] sm:$0xff]
    %v3131 = vld [vmem:[#allocation11 + $0x1850] sm:$0xff]
    %v3132 = vld [vmem:[#allocation11 + $0x1858] sm:$0xff]
    %v3133 = vld [vmem:[#allocation11 + $0x1860] sm:$0xff]
    %v3134 = vld [vmem:[#allocation11 + $0x1868] sm:$0xff]
    %v3135 = vld [vmem:[#allocation11 + $0x1870] sm:$0xff]
    %v3136 = vld [vmem:[#allocation11 + $0x1878] sm:$0xff]
    %v3137 = vld [vmem:[#allocation11 + $0x1880] sm:$0xff]
    %v3138 = vld [vmem:[#allocation11 + $0x1888] sm:$0xff]
    %v3139 = vld [vmem:[#allocation11 + $0x1890] sm:$0xff]
    %v3140 = vld [vmem:[#allocation11 + $0x1898] sm:$0xff]
    %v3141 = vld [vmem:[#allocation11 + $0x18a0] sm:$0xff]
    %v3142 = vld [vmem:[#allocation11 + $0x18a8] sm:$0xff]
    %v3143 = vld [vmem:[#allocation11 + $0x18b0] sm:$0xff]
    %v3144 = vld [vmem:[#allocation11 + $0x18b8] sm:$0xff]
    %v3145 = vld [vmem:[#allocation11 + $0x18c0] sm:$0xff]
    %v3146 = vld [vmem:[#allocation11 + $0x18c8] sm:$0xff]
    %v3147 = vld [vmem:[#allocation11 + $0x18d0] sm:$0xff]
    %v3148 = vld [vmem:[#allocation11 + $0x18d8] sm:$0xff]
    %v3149 = vld [vmem:[#allocation11 + $0x18e0] sm:$0xff]
    %v3150 = vld [vmem:[#allocation11 + $0x18e8] sm:$0xff]
    %v3151 = vld [vmem:[#allocation11 + $0x18f0] sm:$0xff]
    %v3152 = vld [vmem:[#allocation11 + $0x18f8] sm:$0xff]
    %v3153 = vld [vmem:[#allocation11 + $0x1900] sm:$0xff]
    %v3154 = vld [vmem:[#allocation11 + $0x1908] sm:$0xff]
    %v3155 = vld [vmem:[#allocation11 + $0x1910] sm:$0xff]
    %v3156 = vld [vmem:[#allocation11 + $0x1918] sm:$0xff]
    %v3157 = vld [vmem:[#allocation11 + $0x1920] sm:$0xff]
    %v3158 = vld [vmem:[#allocation11 + $0x1928] sm:$0xff]
    %v3159 = vld [vmem:[#allocation11 + $0x1930] sm:$0xff]
    %v3160 = vld [vmem:[#allocation11 + $0x1938] sm:$0xff]
    %v3161 = vld [vmem:[#allocation11 + $0x1940] sm:$0xff]
    %v3162 = vld [vmem:[#allocation11 + $0x1948] sm:$0xff]
    %v3163 = vld [vmem:[#allocation11 + $0x1950] sm:$0xff]
    %v3164 = vld [vmem:[#allocation11 + $0x1958] sm:$0xff]
    %v3165 = vld [vmem:[#allocation11 + $0x1960] sm:$0xff]
    %v3166 = vld [vmem:[#allocation11 + $0x1968] sm:$0xff]
    %v3167 = vld [vmem:[#allocation11 + $0x1970] sm:$0xff]
    %v3168 = vld [vmem:[#allocation11 + $0x1978] sm:$0xff]
    %v3169 = vld [vmem:[#allocation11 + $0x1980] sm:$0xff]
    %v3170 = vld [vmem:[#allocation11 + $0x1988] sm:$0xff]
    %v3171 = vld [vmem:[#allocation11 + $0x1990] sm:$0xff]
    %v3172 = vld [vmem:[#allocation11 + $0x1998] sm:$0xff]
    %v3173 = vld [vmem:[#allocation11 + $0x19a0] sm:$0xff]
    %v3174 = vld [vmem:[#allocation11 + $0x19a8] sm:$0xff]
    %v3175 = vld [vmem:[#allocation11 + $0x19b0] sm:$0xff]
    %v3176 = vld [vmem:[#allocation11 + $0x19b8] sm:$0xff]
    %v3177 = vld [vmem:[#allocation11 + $0x19c0] sm:$0xff]
    %v3178 = vld [vmem:[#allocation11 + $0x19c8] sm:$0xff]
    %v3179 = vld [vmem:[#allocation11 + $0x19d0] sm:$0xff]
    %v3180 = vld [vmem:[#allocation11 + $0x19d8] sm:$0xff]
    %v3181 = vld [vmem:[#allocation11 + $0x19e0] sm:$0xff]
    %v3182 = vld [vmem:[#allocation11 + $0x19e8] sm:$0xff]
    %v3183 = vld [vmem:[#allocation11 + $0x19f0] sm:$0xff]
    %v3184 = vld [vmem:[#allocation11 + $0x19f8] sm:$0xff]
    %v3185 = vld [vmem:[#allocation11 + $0x1a00] sm:$0xff]
    %v3186 = vld [vmem:[#allocation11 + $0x1a08] sm:$0xff]
    %v3187 = vld [vmem:[#allocation11 + $0x1a10] sm:$0xff]
    %v3188 = vld [vmem:[#allocation11 + $0x1a18] sm:$0xff]
    %v3189 = vld [vmem:[#allocation11 + $0x1a20] sm:$0xff]
    %v3190 = vld [vmem:[#allocation11 + $0x1a28] sm:$0xff]
    %v3191 = vld [vmem:[#allocation11 + $0x1a30] sm:$0xff]
    %v3192 = vld [vmem:[#allocation11 + $0x1a38] sm:$0xff]
    %v3193 = vld [vmem:[#allocation11 + $0x1a40] sm:$0xff]
    %v3194 = vld [vmem:[#allocation11 + $0x1a48] sm:$0xff]
    %v3195 = vld [vmem:[#allocation11 + $0x1a50] sm:$0xff]
    %v3196 = vld [vmem:[#allocation11 + $0x1a58] sm:$0xff]
    %v3197 = vld [vmem:[#allocation11 + $0x1a60] sm:$0xff]
    %v3198 = vld [vmem:[#allocation11 + $0x1a68] sm:$0xff]
    %v3199 = vld [vmem:[#allocation11 + $0x1a70] sm:$0xff]
    %v3200 = vld [vmem:[#allocation11 + $0x1a78] sm:$0xff]
    %v3201 = vld [vmem:[#allocation11 + $0x1a80] sm:$0xff]
    %v3202 = vld [vmem:[#allocation11 + $0x1a88] sm:$0xff]
    %v3203 = vld [vmem:[#allocation11 + $0x1a90] sm:$0xff]
    %v3204 = vld [vmem:[#allocation11 + $0x1a98] sm:$0xff]
    %v3205 = vld [vmem:[#allocation11 + $0x1aa0] sm:$0xff]
    %v3206 = vld [vmem:[#allocation11 + $0x1aa8] sm:$0xff]
    %v3207 = vld [vmem:[#allocation11 + $0x1ab0] sm:$0xff]
    %v3208 = vld [vmem:[#allocation11 + $0x1ab8] sm:$0xff]
    %v3209 = vld [vmem:[#allocation11 + $0x1ac0] sm:$0xff]
    %v3210 = vld [vmem:[#allocation11 + $0x1ac8] sm:$0xff]
    %v3211 = vld [vmem:[#allocation11 + $0x1ad0] sm:$0xff]
    %v3212 = vld [vmem:[#allocation11 + $0x1ad8] sm:$0xff]
    %v3213 = vld [vmem:[#allocation11 + $0x1ae0] sm:$0xff]
    %v3214 = vld [vmem:[#allocation11 + $0x1ae8] sm:$0xff]
    %v3215 = vld [vmem:[#allocation11 + $0x1af0] sm:$0xff]
    %v3216 = vld [vmem:[#allocation11 + $0x1af8] sm:$0xff]
    %v3217 = vld [vmem:[#allocation11 + $0x1b00] sm:$0xff]
    %v3218 = vld [vmem:[#allocation11 + $0x1b08] sm:$0xff]
    %v3219 = vld [vmem:[#allocation11 + $0x1b10] sm:$0xff]
    %v3220 = vld [vmem:[#allocation11 + $0x1b18] sm:$0xff]
    %v3221 = vld [vmem:[#allocation11 + $0x1b20] sm:$0xff]
    %v3222 = vld [vmem:[#allocation11 + $0x1b28] sm:$0xff]
    %v3223 = vld [vmem:[#allocation11 + $0x1b30] sm:$0xff]
    %v3224 = vld [vmem:[#allocation11 + $0x1b38] sm:$0xff]
    %v3225 = vld [vmem:[#allocation11 + $0x1b40] sm:$0xff]
    %v3226 = vld [vmem:[#allocation11 + $0x1b48] sm:$0xff]
    %v3227 = vld [vmem:[#allocation11 + $0x1b50] sm:$0xff]
    %v3228 = vld [vmem:[#allocation11 + $0x1b58] sm:$0xff]
    %v3229 = vld [vmem:[#allocation11 + $0x1b60] sm:$0xff]
    %v3230 = vld [vmem:[#allocation11 + $0x1b68] sm:$0xff]
    %v3231 = vld [vmem:[#allocation11 + $0x1b70] sm:$0xff]
    %v3232 = vld [vmem:[#allocation11 + $0x1b78] sm:$0xff]
    %v3233 = vld [vmem:[#allocation11 + $0x1b80] sm:$0xff]
    %v3234 = vld [vmem:[#allocation11 + $0x1b88] sm:$0xff]
    %v3235 = vld [vmem:[#allocation11 + $0x1b90] sm:$0xff]
    %v3236 = vld [vmem:[#allocation11 + $0x1b98] sm:$0xff]
    %v3237 = vld [vmem:[#allocation11 + $0x1ba0] sm:$0xff]
    %v3238 = vld [vmem:[#allocation11 + $0x1ba8] sm:$0xff]
    %v3239 = vld [vmem:[#allocation11 + $0x1bb0] sm:$0xff]
    %v3240 = vld [vmem:[#allocation11 + $0x1bb8] sm:$0xff]
    %v3241 = vld [vmem:[#allocation11 + $0x1bc0] sm:$0xff]
    %v3242 = vld [vmem:[#allocation11 + $0x1bc8] sm:$0xff]
    %v3243 = vld [vmem:[#allocation11 + $0x1bd0] sm:$0xff]
    %v3244 = vld [vmem:[#allocation11 + $0x1bd8] sm:$0xff]
    %v3245 = vld [vmem:[#allocation11 + $0x1be0] sm:$0xff]
    %v3246 = vld [vmem:[#allocation11 + $0x1be8] sm:$0xff]
    %v3247 = vld [vmem:[#allocation11 + $0x1bf0] sm:$0xff]
    %v3248 = vld [vmem:[#allocation11 + $0x1bf8] sm:$0xff]
    %v3249 = vld [vmem:[#allocation11 + $0x1c00] sm:$0xff]
    %v3250 = vld [vmem:[#allocation11 + $0x1c08] sm:$0xff]
    %v3251 = vld [vmem:[#allocation11 + $0x1c10] sm:$0xff]
    %v3252 = vld [vmem:[#allocation11 + $0x1c18] sm:$0xff]
    %v3253 = vld [vmem:[#allocation11 + $0x1c20] sm:$0xff]
    %v3254 = vld [vmem:[#allocation11 + $0x1c28] sm:$0xff]
    %v3255 = vld [vmem:[#allocation11 + $0x1c30] sm:$0xff]
    %v3256 = vld [vmem:[#allocation11 + $0x1c38] sm:$0xff]
    %v3257 = vld [vmem:[#allocation11 + $0x1c40] sm:$0xff]
    %v3258 = vld [vmem:[#allocation11 + $0x1c48] sm:$0xff]
    %v3259 = vld [vmem:[#allocation11 + $0x1c50] sm:$0xff]
    %v3260 = vld [vmem:[#allocation11 + $0x1c58] sm:$0xff]
    %v3261 = vld [vmem:[#allocation11 + $0x1c60] sm:$0xff]
    %v3262 = vld [vmem:[#allocation11 + $0x1c68] sm:$0xff]
    %v3263 = vld [vmem:[#allocation11 + $0x1c70] sm:$0xff]
    %v3264 = vld [vmem:[#allocation11 + $0x1c78] sm:$0xff]
    %v3265 = vld [vmem:[#allocation11 + $0x1c80] sm:$0xff]
    %v3266 = vld [vmem:[#allocation11 + $0x1c88] sm:$0xff]
    %v3267 = vld [vmem:[#allocation11 + $0x1c90] sm:$0xff]
    %v3268 = vld [vmem:[#allocation11 + $0x1c98] sm:$0xff]
    %v3269 = vld [vmem:[#allocation11 + $0x1ca0] sm:$0xff]
    %v3270 = vld [vmem:[#allocation11 + $0x1ca8] sm:$0xff]
    %v3271 = vld [vmem:[#allocation11 + $0x1cb0] sm:$0xff]
    %v3272 = vld [vmem:[#allocation11 + $0x1cb8] sm:$0xff]
    %v3273 = vld [vmem:[#allocation11 + $0x1cc0] sm:$0xff]
    %v3274 = vld [vmem:[#allocation11 + $0x1cc8] sm:$0xff]
    %v3275 = vld [vmem:[#allocation11 + $0x1cd0] sm:$0xff]
    %v3276 = vld [vmem:[#allocation11 + $0x1cd8] sm:$0xff]
    %v3277 = vld [vmem:[#allocation11 + $0x1ce0] sm:$0xff]
    %v3278 = vld [vmem:[#allocation11 + $0x1ce8] sm:$0xff]
    %v3279 = vld [vmem:[#allocation11 + $0x1cf0] sm:$0xff]
    %v3280 = vld [vmem:[#allocation11 + $0x1cf8] sm:$0xff]
    %v3281 = vld [vmem:[#allocation11 + $0x1d00] sm:$0xff]
    %v3282 = vld [vmem:[#allocation11 + $0x1d08] sm:$0xff]
    %v3283 = vld [vmem:[#allocation11 + $0x1d10] sm:$0xff]
    %v3284 = vld [vmem:[#allocation11 + $0x1d18] sm:$0xff]
    %v3285 = vld [vmem:[#allocation11 + $0x1d20] sm:$0xff]
    %v3286 = vld [vmem:[#allocation11 + $0x1d28] sm:$0xff]
    %v3287 = vld [vmem:[#allocation11 + $0x1d30] sm:$0xff]
    %v3288 = vld [vmem:[#allocation11 + $0x1d38] sm:$0xff]
    %v3289 = vld [vmem:[#allocation11 + $0x1d40] sm:$0xff]
    %v3290 = vld [vmem:[#allocation11 + $0x1d48] sm:$0xff]
    %v3291 = vld [vmem:[#allocation11 + $0x1d50] sm:$0xff]
    %v3292 = vld [vmem:[#allocation11 + $0x1d58] sm:$0xff]
    %v3293 = vld [vmem:[#allocation11 + $0x1d60] sm:$0xff]
    %v3294 = vld [vmem:[#allocation11 + $0x1d68] sm:$0xff]
    %v3295 = vld [vmem:[#allocation11 + $0x1d70] sm:$0xff]
    %v3296 = vld [vmem:[#allocation11 + $0x1d78] sm:$0xff]
    %v3297 = vld [vmem:[#allocation11 + $0x1d80] sm:$0xff]
    %v3298 = vld [vmem:[#allocation11 + $0x1d88] sm:$0xff]
    %v3299 = vld [vmem:[#allocation11 + $0x1d90] sm:$0xff]
    %v3300 = vld [vmem:[#allocation11 + $0x1d98] sm:$0xff]
    %v3301 = vld [vmem:[#allocation11 + $0x1da0] sm:$0xff]
    %v3302 = vld [vmem:[#allocation11 + $0x1da8] sm:$0xff]
    %v3303 = vld [vmem:[#allocation11 + $0x1db0] sm:$0xff]
    %v3304 = vld [vmem:[#allocation11 + $0x1db8] sm:$0xff]
    %v3305 = vld [vmem:[#allocation11 + $0x1dc0] sm:$0xff]
    %v3306 = vld [vmem:[#allocation11 + $0x1dc8] sm:$0xff]
    %v3307 = vld [vmem:[#allocation11 + $0x1dd0] sm:$0xff]
    %v3308 = vld [vmem:[#allocation11 + $0x1dd8] sm:$0xff]
    %v3309 = vld [vmem:[#allocation11 + $0x1de0] sm:$0xff]
    %v3310 = vld [vmem:[#allocation11 + $0x1de8] sm:$0xff]
    %v3311 = vld [vmem:[#allocation11 + $0x1df0] sm:$0xff]
    %v3312 = vld [vmem:[#allocation11 + $0x1df8] sm:$0xff]
    %v3313 = vld [vmem:[#allocation12] sm:$0xf]
    %v3315 = vlaneseq
    %v3316 = vshrl.u32 %v3315, 7
    %v3317 = vsub.s32 0, %v3316
    %v3318 = vrot.slane %v3313, %v3317
    %v3319 = vlaneseq
    %v3320 = vshrl.u32 %v3319, 7
    %v3321 = vsub.s32 1, %v3320
    %v3322 = vrot.slane %v3313, %v3321
    %v3323 = vlaneseq
    %v3324 = vshrl.u32 %v3323, 7
    %v3325 = vsub.s32 2, %v3324
    %v3326 = vrot.slane %v3313, %v3325
    %v3327 = vlaneseq
    %v3328 = vshrl.u32 %v3327, 7
    %v3329 = vsub.s32 3, %v3328
    %v3330 = vrot.slane %v3313, %v3329
    %3335 = vmatprep.subr.mxu0 %v2354
    %3336 = vmatpush1.msra.mxu0 %v2353
    %3337 = vmatprep.subr.mxu0 %v2358
    %3338 = vmatpush1.msra.mxu0 %v2357
    %3339 = vmatprep.subr.mxu0 %v2362
    %3340 = vmatpush1.msra.mxu0 %v2361
    %3341 = vmatprep.subr.mxu0 %v2366
    %3342 = vmatpush1.msra.mxu0 %v2365
    %3343 = vmatprep.subr.mxu0 %v2370
    %3344 = vmatpush1.msra.mxu0 %v2369
    %3345 = vmatprep.subr.mxu0 %v2374
    %3346 = vmatpush1.msra.mxu0 %v2373
    %3347 = vmatprep.subr.mxu0 %v2378
    %3348 = vmatpush1.msra.mxu0 %v2377
    %3349 = vmatprep.subr.mxu0 %v2382
    %3350 = vmatpush1.msra.mxu0 %v2381
    %3351 = vmatprep.subr.mxu0 %v2386
    %3352 = vmatpush1.msra.mxu0 %v2385
    %3353 = vmatprep.subr.mxu0 %v2390
    %3354 = vmatpush1.msra.mxu0 %v2389
    %3355 = vmatprep.subr.mxu0 %v2394
    %3356 = vmatpush1.msra.mxu0 %v2393
    %3357 = vmatprep.subr.mxu0 %v2398
    %3358 = vmatpush1.msra.mxu0 %v2397
    %3359 = vmatprep.subr.mxu0 %v2402
    %3360 = vmatpush1.msra.mxu0 %v2401
    %3361 = vmatprep.subr.mxu0 %v2406
    %3362 = vmatpush1.msra.mxu0 %v2405
    %3363 = vmatprep.subr.mxu0 %v2410
    %3364 = vmatpush1.msra.mxu0 %v2409
    %3365 = vmatprep.subr.mxu0 %v2414
    %3366 = vmatpush1.msra.mxu0 %v2413
    %3367 = vmatprep.subr.mxu0 %v2418
    %3368 = vmatpush1.msra.mxu0 %v2417
    %3369 = vmatprep.subr.mxu0 %v2422
    %3370 = vmatpush1.msra.mxu0 %v2421
    %3371 = vmatprep.subr.mxu0 %v2426
    %3372 = vmatpush1.msra.mxu0 %v2425
    %3373 = vmatprep.subr.mxu0 %v2430
    %3374 = vmatpush1.msra.mxu0 %v2429
    %3375 = vmatprep.subr.mxu0 %v2434
    %3376 = vmatpush1.msra.mxu0 %v2433
    %3377 = vmatprep.subr.mxu0 %v2438
    %3378 = vmatpush1.msra.mxu0 %v2437
    %3379 = vmatprep.subr.mxu0 %v2442
    %3380 = vmatpush1.msra.mxu0 %v2441
    %3381 = vmatprep.subr.mxu0 %v2446
    %3382 = vmatpush1.msra.mxu0 %v2445
    %3383 = vmatprep.subr.mxu0 %v2450
    %3384 = vmatpush1.msra.mxu0 %v2449
    %3385 = vmatprep.subr.mxu0 %v2454
    %3386 = vmatpush1.msra.mxu0 %v2453
    %3387 = vmatprep.subr.mxu0 %v2458
    %3388 = vmatpush1.msra.mxu0 %v2457
    %3389 = vmatprep.subr.mxu0 %v2462
    %3390 = vmatpush1.msra.mxu0 %v2461
    %3391 = vmatprep.subr.mxu0 %v2466
    %3392 = vmatpush1.msra.mxu0 %v2465
    %3393 = vmatprep.subr.mxu0 %v2470
    %3394 = vmatpush1.msra.mxu0 %v2469
    %3395 = vmatprep.subr.mxu0 %v2474
    %3396 = vmatpush1.msra.mxu0 %v2473
    %3397 = vmatprep.subr.mxu0 %v2478
    %3398 = vmatpush1.msra.mxu0 %v2477
    %3399 = vmatprep.mubr.f32.mxu0 %v2234
    %3400 = vmatmul.mubr.f32.gmra.mrb[0].mxu0 %v2233
    %v3401 = vpop.f32.mrb[0].mxu0
    %v3402 = vadd.f32 %v3318, %v3401
    %v3403 = vpop.f32.mrb[0].mxu0
    %v3404 = vadd.f32 %v3322, %v3403
    %3405 = vmatprep.mubr.f32.mxu0 %v2249
    %3406 = vmatmul.mubr.f32.gmra.mrb[0].mxu0 %v2248
    %v3407 = vpop.f32.mrb[0].mxu0
    %v3408 = vadd.f32 %v3318, %v3407
    %v3409 = vpop.f32.mrb[0].mxu0
    %v3410 = vadd.f32 %v3322, %v3409
    %3411 = vmatprep.mubr.f32.mxu0 %v2264
    %3412 = vmatmul.mubr.f32.gmra.mrb[0].mxu0 %v2263
    %v3413 = vpop.f32.mrb[0].mxu0
    %v3414 = vadd.f32 %v3318, %v3413
    %v3415 = vpop.f32.mrb[0].mxu0
    %v3416 = vadd.f32 %v3322, %v3415
    %3417 = vmatprep.mubr.f32.mxu0 %v2279
    %3418 = vmatmul.mubr.f32.gmra.mrb[0].mxu0 %v2278
    %v3419 = vpop.f32.mrb[0].mxu0
    %v3420 = vadd.f32 %v3318, %v3419
    %v3421 = vpop.f32.mrb[0].mxu0
    %v3422 = vadd.f32 %v3322, %v3421
    %3423 = vmatprep.mubr.f32.mxu0 %v2294
    %3424 = vmatmul.mubr.f32.gmra.mrb[0].mxu0 %v2293
    %v3425 = vpop.f32.mrb[0].mxu0
    %v3426 = vadd.f32 %v3318, %v3425
    %v3427 = vpop.f32.mrb[0].mxu0
    %v3428 = vadd.f32 %v3322, %v3427
    %3429 = vmatprep.mubr.f32.mxu0 %v2309
    %3430 = vmatmul.mubr.f32.gmra.mrb[0].mxu0 %v2308
    %v3431 = vpop.f32.mrb[0].mxu0
    %v3432 = vadd.f32 %v3318, %v3431
    %v3433 = vpop.f32.mrb[0].mxu0
    %v3434 = vadd.f32 %v3322, %v3433
    %3435 = vmatprep.mubr.f32.mxu0 %v2324
    %3436 = vmatmul.mubr.f32.gmra.mrb[0].mxu0 %v2323
    %v3437 = vpop.f32.mrb[0].mxu0
    %v3438 = vadd.f32 %v3318, %v3437
    %v3439 = vpop.f32.mrb[0].mxu0
    %v3440 = vadd.f32 %v3322, %v3439
    %3441 = vmatprep.mubr.f32.mxu0 %v2339
    %3442 = vmatmul.mubr.f32.gmra.mrb[0].mxu0 %v2338
    %v3443 = vpop.f32.mrb[0].mxu0
    %v3444 = vadd.f32 %v3318, %v3443
    %v3445 = vpop.f32.mrb[0].mxu0
    %v3446 = vadd.f32 %v3322, %v3445
    %3447 = vdwg.mxu0
    %3448 = vmatprep.subr.mxu0 %v2482
    %3449 = vmatpush1.msra.mxu0 %v2481
    %3450 = vmatprep.subr.mxu0 %v2486
    %3451 = vmatpush1.msra.mxu0 %v2485
    %3452 = vmatprep.subr.mxu0 %v2490
    %3453 = vmatpush1.msra.mxu0 %v2489
    %3454 = vmatprep.subr.mxu0 %v2494
    %3455 = vmatpush1.msra.mxu0 %v2493
    %3456 = vmatprep.subr.mxu0 %v2498
    %3457 = vmatpush1.msra.mxu0 %v2497
    %3458 = vmatprep.subr.mxu0 %v2502
    %3459 = vmatpush1.msra.mxu0 %v2501
    %3460 = vmatprep.subr.mxu0 %v2506
    %3461 = vmatpush1.msra.mxu0 %v2505
    %3462 = vmatprep.subr.mxu0 %v2510
    %3463 = vmatpush1.msra.mxu0 %v2509
    %3464 = vmatprep.subr.mxu0 %v2514
    %3465 = vmatpush1.msra.mxu0 %v2513
    %3466 = vmatprep.subr.mxu0 %v2518
    %3467 = vmatpush1.msra.mxu0 %v2517
    %3468 = vmatprep.subr.mxu0 %v2522
    %3469 = vmatpush1.msra.mxu0 %v2521
    %3470 = vmatprep.subr.mxu0 %v2526
    %3471 = vmatpush1.msra.mxu0 %v2525
    %3472 = vmatprep.subr.mxu0 %v2530
    %3473 = vmatpush1.msra.mxu0 %v2529
    %3474 = vmatprep.subr.mxu0 %v2534
    %3475 = vmatpush1.msra.mxu0 %v2533
    %3476 = vmatprep.subr.mxu0 %v2538
    %3477 = vmatpush1.msra.mxu0 %v2537
    %3478 = vmatprep.subr.mxu0 %v2542
    %3479 = vmatpush1.msra.mxu0 %v2541
    %3480 = vmatprep.subr.mxu0 %v2546
    %3481 = vmatpush1.msra.mxu0 %v2545
    %3482 = vmatprep.subr.mxu0 %v2550
    %3483 = vmatpush1.msra.mxu0 %v2549
    %3484 = vmatprep.subr.mxu0 %v2554
    %3485 = vmatpush1.msra.mxu0 %v2553
    %3486 = vmatprep.subr.mxu0 %v2558
    %3487 = vmatpush1.msra.mxu0 %v2557
    %3488 = vmatprep.subr.mxu0 %v2562
    %3489 = vmatpush1.msra.mxu0 %v2561
    %3490 = vmatprep.subr.mxu0 %v2566
    %3491 = vmatpush1.msra.mxu0 %v2565
    %3492 = vmatprep.subr.mxu0 %v2570
    %3493 = vmatpush1.msra.mxu0 %v2569
    %3494 = vmatprep.subr.mxu0 %v2574
    %3495 = vmatpush1.msra.mxu0 %v2573
    %3496 = vmatprep.subr.mxu0 %v2578
    %3497 = vmatpush1.msra.mxu0 %v2577
    %3498 = vmatprep.subr.mxu0 %v2582
    %3499 = vmatpush1.msra.mxu0 %v2581
    %3500 = vmatprep.subr.mxu0 %v2586
    %3501 = vmatpush1.msra.mxu0 %v2585
    %3502 = vmatprep.subr.mxu0 %v2590
    %3503 = vmatpush1.msra.mxu0 %v2589
    %3504 = vmatprep.subr.mxu0 %v2594
    %3505 = vmatpush1.msra.mxu0 %v2593
    %3506 = vmatprep.subr.mxu0 %v2598
    %3507 = vmatpush1.msra.mxu0 %v2597
    %3508 = vmatprep.subr.mxu0 %v2602
    %3509 = vmatpush1.msra.mxu0 %v2601
    %3510 = vmatprep.subr.mxu0 %v2606
    %3511 = vmatpush1.msra.mxu0 %v2605
    %3512 = vmatprep.mubr.f32.mxu0 %v2236
    %3513 = vmatmul.mubr.f32.gmra.mrb[0].mxu0 %v2235
    %v3514 = vpop.f32.mrb[0].mxu0
    %v3515 = vadd.f32 %v3402, %v3514
    %v3516 = vpop.f32.mrb[0].mxu0
    %v3517 = vadd.f32 %v3404, %v3516
    %3518 = vmatprep.mubr.f32.mxu0 %v2251
    %3519 = vmatmul.mubr.f32.gmra.mrb[0].mxu0 %v2250
    %v3520 = vpop.f32.mrb[0].mxu0
    %v3521 = vadd.f32 %v3408, %v3520
    %v3522 = vpop.f32.mrb[0].mxu0
    %v3523 = vadd.f32 %v3410, %v3522
    %3524 = vmatprep.mubr.f32.mxu0 %v2266
    %3525 = vmatmul.mubr.f32.gmra.mrb[0].mxu0 %v2265
    %v3526 = vpop.f32.mrb[0].mxu0
    %v3527 = vadd.f32 %v3414, %v3526
    %v3528 = vpop.f32.mrb[0].mxu0
    %v3529 = vadd.f32 %v3416, %v3528
    %3530 = vmatprep.mubr.f32.mxu0 %v2281
    %3531 = vmatmul.mubr.f32.gmra.mrb[0].mxu0 %v2280
    %v3532 = vpop.f32.mrb[0].mxu0
    %v3533 = vadd.f32 %v3420, %v3532
    %v3534 = vpop.f32.mrb[0].mxu0
    %v3535 = vadd.f32 %v3422, %v3534
    %3536 = vmatprep.mubr.f32.mxu0 %v2296
    %3537 = vmatmul.mubr.f32.gmra.mrb[0].mxu0 %v2295
    %v3538 = vpop.f32.mrb[0].mxu0
    %v3539 = vadd.f32 %v3426, %v3538
    %v3540 = vpop.f32.mrb[0].mxu0
    %v3541 = vadd.f32 %v3428, %v3540
    %3542 = vmatprep.mubr.f32.mxu0 %v2311
    %3543 = vmatmul.mubr.f32.gmra.mrb[0].mxu0 %v2310
    %v3544 = vpop.f32.mrb[0].mxu0
    %v3545 = vadd.f32 %v3432, %v3544
    %v3546 = vpop.f32.mrb[0].mxu0
    %v3547 = vadd.f32 %v3434, %v3546
    %3548 = vmatprep.mubr.f32.mxu0 %v2326
    %3549 = vmatmul.mubr.f32.gmra.mrb[0].mxu0 %v2325
    %v3550 = vpop.f32.mrb[0].mxu0
    %v3551 = vadd.f32 %v3438, %v3550
    %v3552 = vpop.f32.mrb[0].mxu0
    %v3553 = vadd.f32 %v3440, %v3552
    %3554 = vmatprep.mubr.f32.mxu0 %v2341
    %3555 = vmatmul.mubr.f32.gmra.mrb[0].mxu0 %v2340
    %v3556 = vpop.f32.mrb[0].mxu0
    %v3557 = vadd.f32 %v3444, %v3556
    %v3558 = vpop.f32.mrb[0].mxu0
    %v3559 = vadd.f32 %v3446, %v3558
    %3560 = vdwg.mxu0
    %3561 = vmatprep.subr.mxu0 %v2610
    %3562 = vmatpush1.msra.mxu0 %v2609
    %3563 = vmatprep.subr.mxu0 %v2614
    %3564 = vmatpush1.msra.mxu0 %v2613
    %3565 = vmatprep.subr.mxu0 %v2618
    %3566 = vmatpush1.msra.mxu0 %v2617
    %3567 = vmatprep.subr.mxu0 %v2622
    %3568 = vmatpush1.msra.mxu0 %v2621
    %3569 = vmatprep.subr.mxu0 %v2626
    %3570 = vmatpush1.msra.mxu0 %v2625
    %3571 = vmatprep.subr.mxu0 %v2630
    %3572 = vmatpush1.msra.mxu0 %v2629
    %3573 = vmatprep.subr.mxu0 %v2634
    %3574 = vmatpush1.msra.mxu0 %v2633
    %3575 = vmatprep.subr.mxu0 %v2638
    %3576 = vmatpush1.msra.mxu0 %v2637
    %3577 = vmatprep.subr.mxu0 %v2642
    %3578 = vmatpush1.msra.mxu0 %v2641
    %3579 = vmatprep.subr.mxu0 %v2646
    %3580 = vmatpush1.msra.mxu0 %v2645
    %3581 = vmatprep.subr.mxu0 %v2650
    %3582 = vmatpush1.msra.mxu0 %v2649
    %3583 = vmatprep.subr.mxu0 %v2654
    %3584 = vmatpush1.msra.mxu0 %v2653
    %3585 = vmatprep.subr.mxu0 %v2658
    %3586 = vmatpush1.msra.mxu0 %v2657
    %3587 = vmatprep.subr.mxu0 %v2662
    %3588 = vmatpush1.msra.mxu0 %v2661
    %3589 = vmatprep.subr.mxu0 %v2666
    %3590 = vmatpush1.msra.mxu0 %v2665
    %3591 = vmatprep.subr.mxu0 %v2670
    %3592 = vmatpush1.msra.mxu0 %v2669
    %3593 = vmatprep.subr.mxu0 %v2674
    %3594 = vmatpush1.msra.mxu0 %v2673
    %3595 = vmatprep.subr.mxu0 %v2678
    %3596 = vmatpush1.msra.mxu0 %v2677
    %3597 = vmatprep.subr.mxu0 %v2682
    %3598 = vmatpush1.msra.mxu0 %v2681
    %3599 = vmatprep.subr.mxu0 %v2686
    %3600 = vmatpush1.msra.mxu0 %v2685
    %3601 = vmatprep.subr.mxu0 %v2690
    %3602 = vmatpush1.msra.mxu0 %v2689
    %3603 = vmatprep.subr.mxu0 %v2694
    %3604 = vmatpush1.msra.mxu0 %v2693
    %3605 = vmatprep.subr.mxu0 %v2698
    %3606 = vmatpush1.msra.mxu0 %v2697
    %3607 = vmatprep.subr.mxu0 %v2702
    %3608 = vmatpush1.msra.mxu0 %v2701
    %3609 = vmatprep.subr.mxu0 %v2706
    %3610 = vmatpush1.msra.mxu0 %v2705
    %3611 = vmatprep.subr.mxu0 %v2710
    %3612 = vmatpush1.msra.mxu0 %v2709
    %3613 = vmatprep.subr.mxu0 %v2714
    %3614 = vmatpush1.msra.mxu0 %v2713
    %3615 = vmatprep.subr.mxu0 %v2718
    %3616 = vmatpush1.msra.mxu0 %v2717
    %3617 = vmatprep.subr.mxu0 %v2722
    %3618 = vmatpush1.msra.mxu0 %v2721
    %3619 = vmatprep.subr.mxu0 %v2726
    %3620 = vmatpush1.msra.mxu0 %v2725
    %3621 = vmatprep.subr.mxu0 %v2730
    %3622 = vmatpush1.msra.mxu0 %v2729
    %3623 = vmatprep.subr.mxu0 %v2734
    %3624 = vmatpush1.msra.mxu0 %v2733
    %3625 = vmatprep.mubr.f32.mxu0 %v2238
    %3626 = vmatmul.mubr.f32.gmra.mrb[0].mxu0 %v2237
    %v3627 = vpop.f32.mrb[0].mxu0
    %v3628 = vadd.f32 %v3515, %v3627
    %v3629 = vpop.f32.mrb[0].mxu0
    %v3630 = vadd.f32 %v3517, %v3629
    %3631 = vmatprep.mubr.f32.mxu0 %v2253
    %3632 = vmatmul.mubr.f32.gmra.mrb[0].mxu0 %v2252
    %v3633 = vpop.f32.mrb[0].mxu0
    %v3634 = vadd.f32 %v3521, %v3633
    %v3635 = vpop.f32.mrb[0].mxu0
    %v3636 = vadd.f32 %v3523, %v3635
    %3637 = vmatprep.mubr.f32.mxu0 %v2268
    %3638 = vmatmul.mubr.f32.gmra.mrb[0].mxu0 %v2267
    %v3639 = vpop.f32.mrb[0].mxu0
    %v3640 = vadd.f32 %v3527, %v3639
    %v3641 = vpop.f32.mrb[0].mxu0
    %v3642 = vadd.f32 %v3529, %v3641
    %3643 = vmatprep.mubr.f32.mxu0 %v2283
    %3644 = vmatmul.mubr.f32.gmra.mrb[0].mxu0 %v2282
    %v3645 = vpop.f32.mrb[0].mxu0
    %v3646 = vadd.f32 %v3533, %v3645
    %v3647 = vpop.f32.mrb[0].mxu0
    %v3648 = vadd.f32 %v3535, %v3647
    %3649 = vmatprep.mubr.f32.mxu0 %v2298
    %3650 = vmatmul.mubr.f32.gmra.mrb[0].mxu0 %v2297
    %v3651 = vpop.f32.mrb[0].mxu0
    %v3652 = vadd.f32 %v3539, %v3651
    %v3653 = vpop.f32.mrb[0].mxu0
    %v3654 = vadd.f32 %v3541, %v3653
    %3655 = vmatprep.mubr.f32.mxu0 %v2313
    %3656 = vmatmul.mubr.f32.gmra.mrb[0].mxu0 %v2312
    %v3657 = vpop.f32.mrb[0].mxu0
    %v3658 = vadd.f32 %v3545, %v3657
    %v3659 = vpop.f32.mrb[0].mxu0
    %v3660 = vadd.f32 %v3547, %v3659
    %3661 = vmatprep.mubr.f32.mxu0 %v2328
    %3662 = vmatmul.mubr.f32.gmra.mrb[0].mxu0 %v2327
    %v3663 = vpop.f32.mrb[0].mxu0
    %v3664 = vadd.f32 %v3551, %v3663
    %v3665 = vpop.f32.mrb[0].mxu0
    %v3666 = vadd.f32 %v3553, %v3665
    %3667 = vmatprep.mubr.f32.mxu0 %v2343
    %3668 = vmatmul.mubr.f32.gmra.mrb[0].mxu0 %v2342
    %v3669 = vpop.f32.mrb[0].mxu0
    %v3670 = vadd.f32 %v3557, %v3669
    %v3671 = vpop.f32.mrb[0].mxu0
    %v3672 = vadd.f32 %v3559, %v3671
    %3673 = vdwg.mxu0
    %3674 = vmatprep.subr.mxu0 %v2738
    %3675 = vmatpush1.msra.mxu0 %v2737
    %3676 = vmatprep.subr.mxu0 %v2742
    %3677 = vmatpush1.msra.mxu0 %v2741
    %3678 = vmatprep.subr.mxu0 %v2746
    %3679 = vmatpush1.msra.mxu0 %v2745
    %3680 = vmatprep.subr.mxu0 %v2750
    %3681 = vmatpush1.msra.mxu0 %v2749
    %3682 = vmatprep.subr.mxu0 %v2754
    %3683 = vmatpush1.msra.mxu0 %v2753
    %3684 = vmatprep.subr.mxu0 %v2758
    %3685 = vmatpush1.msra.mxu0 %v2757
    %3686 = vmatprep.subr.mxu0 %v2762
    %3687 = vmatpush1.msra.mxu0 %v2761
    %3688 = vmatprep.subr.mxu0 %v2766
    %3689 = vmatpush1.msra.mxu0 %v2765
    %3690 = vmatprep.subr.mxu0 %v2770
    %3691 = vmatpush1.msra.mxu0 %v2769
    %3692 = vmatprep.subr.mxu0 %v2774
    %3693 = vmatpush1.msra.mxu0 %v2773
    %3694 = vmatprep.subr.mxu0 %v2778
    %3695 = vmatpush1.msra.mxu0 %v2777
    %3696 = vmatprep.subr.mxu0 %v2782
    %3697 = vmatpush1.msra.mxu0 %v2781
    %3698 = vmatprep.subr.mxu0 %v2786
    %3699 = vmatpush1.msra.mxu0 %v2785
    %3700 = vmatprep.subr.mxu0 %v2790
    %3701 = vmatpush1.msra.mxu0 %v2789
    %3702 = vmatprep.subr.mxu0 %v2794
    %3703 = vmatpush1.msra.mxu0 %v2793
    %3704 = vmatprep.subr.mxu0 %v2798
    %3705 = vmatpush1.msra.mxu0 %v2797
    %3706 = vmatprep.subr.mxu0 %v2802
    %3707 = vmatpush1.msra.mxu0 %v2801
    %3708 = vmatprep.subr.mxu0 %v2806
    %3709 = vmatpush1.msra.mxu0 %v2805
    %3710 = vmatprep.subr.mxu0 %v2810
    %3711 = vmatpush1.msra.mxu0 %v2809
    %3712 = vmatprep.subr.mxu0 %v2814
    %3713 = vmatpush1.msra.mxu0 %v2813
    %3714 = vmatprep.subr.mxu0 %v2818
    %3715 = vmatpush1.msra.mxu0 %v2817
    %3716 = vmatprep.subr.mxu0 %v2822
    %3717 = vmatpush1.msra.mxu0 %v2821
    %3718 = vmatprep.subr.mxu0 %v2826
    %3719 = vmatpush1.msra.mxu0 %v2825
    %3720 = vmatprep.subr.mxu0 %v2830
    %3721 = vmatpush1.msra.mxu0 %v2829
    %3722 = vmatprep.subr.mxu0 %v2834
    %3723 = vmatpush1.msra.mxu0 %v2833
    %3724 = vmatprep.subr.mxu0 %v2838
    %3725 = vmatpush1.msra.mxu0 %v2837
    %3726 = vmatprep.subr.mxu0 %v2842
    %3727 = vmatpush1.msra.mxu0 %v2841
    %3728 = vmatprep.subr.mxu0 %v2846
    %3729 = vmatpush1.msra.mxu0 %v2845
    %3730 = vmatprep.subr.mxu0 %v2850
    %3731 = vmatpush1.msra.mxu0 %v2849
    %3732 = vmatprep.subr.mxu0 %v2854
    %3733 = vmatpush1.msra.mxu0 %v2853
    %3734 = vmatprep.subr.mxu0 %v2858
    %3735 = vmatpush1.msra.mxu0 %v2857
    %3736 = vmatprep.subr.mxu0 %v2862
    %3737 = vmatpush1.msra.mxu0 %v2861
    %3738 = vmatprep.mubr.f32.mxu0 %v2240
    %3739 = vmatmul.mubr.f32.gmra.mrb[0].mxu0 %v2239
    %v3740 = vpop.f32.mrb[0].mxu0
    %v3741 = vadd.f32 %v3628, %v3740
    %v3742 = vpop.f32.mrb[0].mxu0
    %v3743 = vadd.f32 %v3630, %v3742
    %3744 = vmatprep.mubr.f32.mxu0 %v2255
    %3745 = vmatmul.mubr.f32.gmra.mrb[0].mxu0 %v2254
    %v3746 = vpop.f32.mrb[0].mxu0
    %v3747 = vadd.f32 %v3634, %v3746
    %v3748 = vpop.f32.mrb[0].mxu0
    %v3749 = vadd.f32 %v3636, %v3748
    %3750 = vmatprep.mubr.f32.mxu0 %v2270
    %3751 = vmatmul.mubr.f32.gmra.mrb[0].mxu0 %v2269
    %v3752 = vpop.f32.mrb[0].mxu0
    %v3753 = vadd.f32 %v3640, %v3752
    %v3754 = vpop.f32.mrb[0].mxu0
    %v3755 = vadd.f32 %v3642, %v3754
    %3756 = vmatprep.mubr.f32.mxu0 %v2285
    %3757 = vmatmul.mubr.f32.gmra.mrb[0].mxu0 %v2284
    %v3758 = vpop.f32.mrb[0].mxu0
    %v3759 = vadd.f32 %v3646, %v3758
    %v3760 = vpop.f32.mrb[0].mxu0
    %v3761 = vadd.f32 %v3648, %v3760
    %3762 = vmatprep.mubr.f32.mxu0 %v2300
    %3763 = vmatmul.mubr.f32.gmra.mrb[0].mxu0 %v2299
    %v3764 = vpop.f32.mrb[0].mxu0
    %v3765 = vadd.f32 %v3652, %v3764
    %v3766 = vpop.f32.mrb[0].mxu0
    %v3767 = vadd.f32 %v3654, %v3766
    %3768 = vmatprep.mubr.f32.mxu0 %v2315
    %3769 = vmatmul.mubr.f32.gmra.mrb[0].mxu0 %v2314
    %v3770 = vpop.f32.mrb[0].mxu0
    %v3771 = vadd.f32 %v3658, %v3770
    %v3772 = vpop.f32.mrb[0].mxu0
    %v3773 = vadd.f32 %v3660, %v3772
    %3774 = vmatprep.mubr.f32.mxu0 %v2330
    %3775 = vmatmul.mubr.f32.gmra.mrb[0].mxu0 %v2329
    %v3776 = vpop.f32.mrb[0].mxu0
    %v3777 = vadd.f32 %v3664, %v3776
    %v3778 = vpop.f32.mrb[0].mxu0
    %v3779 = vadd.f32 %v3666, %v3778
    %3780 = vmatprep.mubr.f32.mxu0 %v2345
    %3781 = vmatmul.mubr.f32.gmra.mrb[0].mxu0 %v2344
    %v3782 = vpop.f32.mrb[0].mxu0
    %v3783 = vadd.f32 %v3670, %v3782
    %v3784 = vpop.f32.mrb[0].mxu0
    %v3785 = vadd.f32 %v3672, %v3784
    %3786 = vdwg.mxu0
    %3787 = vmatprep.subr.mxu0 %v2866
    %3788 = vmatpush1.msra.mxu0 %v2865
    %3789 = vmatprep.subr.mxu0 %v2870
    %3790 = vmatpush1.msra.mxu0 %v2869
    %3791 = vmatprep.subr.mxu0 %v2874
    %3792 = vmatpush1.msra.mxu0 %v2873
    %3793 = vmatprep.subr.mxu0 %v2878
    %3794 = vmatpush1.msra.mxu0 %v2877
    %3795 = vmatprep.subr.mxu0 %v2882
    %3796 = vmatpush1.msra.mxu0 %v2881
    %3797 = vmatprep.subr.mxu0 %v2886
    %3798 = vmatpush1.msra.mxu0 %v2885
    %3799 = vmatprep.subr.mxu0 %v2890
    %3800 = vmatpush1.msra.mxu0 %v2889
    %3801 = vmatprep.subr.mxu0 %v2894
    %3802 = vmatpush1.msra.mxu0 %v2893
    %3803 = vmatprep.subr.mxu0 %v2898
    %3804 = vmatpush1.msra.mxu0 %v2897
    %3805 = vmatprep.subr.mxu0 %v2902
    %3806 = vmatpush1.msra.mxu0 %v2901
    %3807 = vmatprep.subr.mxu0 %v2906
    %3808 = vmatpush1.msra.mxu0 %v2905
    %3809 = vmatprep.subr.mxu0 %v2910
    %3810 = vmatpush1.msra.mxu0 %v2909
    %3811 = vmatprep.subr.mxu0 %v2914
    %3812 = vmatpush1.msra.mxu0 %v2913
    %3813 = vmatprep.subr.mxu0 %v2918
    %3814 = vmatpush1.msra.mxu0 %v2917
    %3815 = vmatprep.subr.mxu0 %v2922
    %3816 = vmatpush1.msra.mxu0 %v2921
    %3817 = vmatprep.subr.mxu0 %v2926
    %3818 = vmatpush1.msra.mxu0 %v2925
    %3819 = vmatprep.subr.mxu0 %v2930
    %3820 = vmatpush1.msra.mxu0 %v2929
    %3821 = vmatprep.subr.mxu0 %v2934
    %3822 = vmatpush1.msra.mxu0 %v2933
    %3823 = vmatprep.subr.mxu0 %v2938
    %3824 = vmatpush1.msra.mxu0 %v2937
    %3825 = vmatprep.subr.mxu0 %v2942
    %3826 = vmatpush1.msra.mxu0 %v2941
    %3827 = vmatprep.subr.mxu0 %v2946
    %3828 = vmatpush1.msra.mxu0 %v2945
    %3829 = vmatprep.subr.mxu0 %v2950
    %3830 = vmatpush1.msra.mxu0 %v2949
    %3831 = vmatprep.subr.mxu0 %v2954
    %3832 = vmatpush1.msra.mxu0 %v2953
    %3833 = vmatprep.subr.mxu0 %v2958
    %3834 = vmatpush1.msra.mxu0 %v2957
    %3835 = vmatprep.subr.mxu0 %v2962
    %3836 = vmatpush1.msra.mxu0 %v2961
    %3837 = vmatprep.subr.mxu0 %v2966
    %3838 = vmatpush1.msra.mxu0 %v2965
    %3839 = vmatprep.subr.mxu0 %v2970
    %3840 = vmatpush1.msra.mxu0 %v2969
    %3841 = vmatprep.subr.mxu0 %v2974
    %3842 = vmatpush1.msra.mxu0 %v2973
    %3843 = vmatprep.subr.mxu0 %v2978
    %3844 = vmatpush1.msra.mxu0 %v2977
    %3845 = vmatprep.subr.mxu0 %v2982
    %3846 = vmatpush1.msra.mxu0 %v2981
    %3847 = vmatprep.subr.mxu0 %v2986
    %3848 = vmatpush1.msra.mxu0 %v2985
    %3849 = vmatprep.subr.mxu0 %v2990
    %3850 = vmatpush1.msra.mxu0 %v2989
    %3851 = vmatprep.mubr.f32.mxu0 %v2242
    %3852 = vmatmul.mubr.f32.gmra.mrb[0].mxu0 %v2241
    %v3853 = vpop.f32.mrb[0].mxu0
    %v3854 = vadd.f32 %v3741, %v3853
    %v3855 = vpop.f32.mrb[0].mxu0
    %v3856 = vadd.f32 %v3743, %v3855
    %3857 = vmatprep.mubr.f32.mxu0 %v2257
    %3858 = vmatmul.mubr.f32.gmra.mrb[0].mxu0 %v2256
    %v3859 = vpop.f32.mrb[0].mxu0
    %v3860 = vadd.f32 %v3747, %v3859
    %v3861 = vpop.f32.mrb[0].mxu0
    %v3862 = vadd.f32 %v3749, %v3861
    %3863 = vmatprep.mubr.f32.mxu0 %v2272
    %3864 = vmatmul.mubr.f32.gmra.mrb[0].mxu0 %v2271
    %v3865 = vpop.f32.mrb[0].mxu0
    %v3866 = vadd.f32 %v3753, %v3865
    %v3867 = vpop.f32.mrb[0].mxu0
    %v3868 = vadd.f32 %v3755, %v3867
    %3869 = vmatprep.mubr.f32.mxu0 %v2287
    %3870 = vmatmul.mubr.f32.gmra.mrb[0].mxu0 %v2286
    %v3871 = vpop.f32.mrb[0].mxu0
    %v3872 = vadd.f32 %v3759, %v3871
    %v3873 = vpop.f32.mrb[0].mxu0
    %v3874 = vadd.f32 %v3761, %v3873
    %3875 = vmatprep.mubr.f32.mxu0 %v2302
    %3876 = vmatmul.mubr.f32.gmra.mrb[0].mxu0 %v2301
    %v3877 = vpop.f32.mrb[0].mxu0
    %v3878 = vadd.f32 %v3765, %v3877
    %v3879 = vpop.f32.mrb[0].mxu0
    %v3880 = vadd.f32 %v3767, %v3879
    %3881 = vmatprep.mubr.f32.mxu0 %v2317
    %3882 = vmatmul.mubr.f32.gmra.mrb[0].mxu0 %v2316
    %v3883 = vpop.f32.mrb[0].mxu0
    %v3884 = vadd.f32 %v3771, %v3883
    %v3885 = vpop.f32.mrb[0].mxu0
    %v3886 = vadd.f32 %v3773, %v3885
    %3887 = vmatprep.mubr.f32.mxu0 %v2332
    %3888 = vmatmul.mubr.f32.gmra.mrb[0].mxu0 %v2331
    %v3889 = vpop.f32.mrb[0].mxu0
    %v3890 = vadd.f32 %v3777, %v3889
    %v3891 = vpop.f32.mrb[0].mxu0
    %v3892 = vadd.f32 %v3779, %v3891
    %3893 = vmatprep.mubr.f32.mxu0 %v2347
    %3894 = vmatmul.mubr.f32.gmra.mrb[0].mxu0 %v2346
    %v3895 = vpop.f32.mrb[0].mxu0
    %v3896 = vadd.f32 %v3783, %v3895
    %v3897 = vpop.f32.mrb[0].mxu0
    %v3898 = vadd.f32 %v3785, %v3897
    %3899 = vdwg.mxu0
    %3900 = vmatprep.subr.mxu0 %v2994
    %3901 = vmatpush1.msra.mxu0 %v2993
    %3902 = vmatprep.subr.mxu0 %v2998
    %3903 = vmatpush1.msra.mxu0 %v2997
    %3904 = vmatprep.subr.mxu0 %v3002
    %3905 = vmatpush1.msra.mxu0 %v3001
    %3906 = vmatprep.subr.mxu0 %v3006
    %3907 = vmatpush1.msra.mxu0 %v3005
    %3908 = vmatprep.subr.mxu0 %v3010
    %3909 = vmatpush1.msra.mxu0 %v3009
    %3910 = vmatprep.subr.mxu0 %v3014
    %3911 = vmatpush1.msra.mxu0 %v3013
    %3912 = vmatprep.subr.mxu0 %v3018
    %3913 = vmatpush1.msra.mxu0 %v3017
    %3914 = vmatprep.subr.mxu0 %v3022
    %3915 = vmatpush1.msra.mxu0 %v3021
    %3916 = vmatprep.subr.mxu0 %v3026
    %3917 = vmatpush1.msra.mxu0 %v3025
    %3918 = vmatprep.subr.mxu0 %v3030
    %3919 = vmatpush1.msra.mxu0 %v3029
    %3920 = vmatprep.subr.mxu0 %v3034
    %3921 = vmatpush1.msra.mxu0 %v3033
    %3922 = vmatprep.subr.mxu0 %v3038
    %3923 = vmatpush1.msra.mxu0 %v3037
    %3924 = vmatprep.subr.mxu0 %v3042
    %3925 = vmatpush1.msra.mxu0 %v3041
    %3926 = vmatprep.subr.mxu0 %v3046
    %3927 = vmatpush1.msra.mxu0 %v3045
    %3928 = vmatprep.subr.mxu0 %v3050
    %3929 = vmatpush1.msra.mxu0 %v3049
    %3930 = vmatprep.subr.mxu0 %v3054
    %3931 = vmatpush1.msra.mxu0 %v3053
    %3932 = vmatprep.subr.mxu0 %v3058
    %3933 = vmatpush1.msra.mxu0 %v3057
    %3934 = vmatprep.subr.mxu0 %v3062
    %3935 = vmatpush1.msra.mxu0 %v3061
    %3936 = vmatprep.subr.mxu0 %v3066
    %3937 = vmatpush1.msra.mxu0 %v3065
    %3938 = vmatprep.subr.mxu0 %v3070
    %3939 = vmatpush1.msra.mxu0 %v3069
    %3940 = vmatprep.subr.mxu0 %v3074
    %3941 = vmatpush1.msra.mxu0 %v3073
    %3942 = vmatprep.subr.mxu0 %v3078
    %3943 = vmatpush1.msra.mxu0 %v3077
    %3944 = vmatprep.subr.mxu0 %v3082
    %3945 = vmatpush1.msra.mxu0 %v3081
    %3946 = vmatprep.subr.mxu0 %v3086
    %3947 = vmatpush1.msra.mxu0 %v3085
    %3948 = vmatprep.subr.mxu0 %v3090
    %3949 = vmatpush1.msra.mxu0 %v3089
    %3950 = vmatprep.subr.mxu0 %v3094
    %3951 = vmatpush1.msra.mxu0 %v3093
    %3952 = vmatprep.subr.mxu0 %v3098
    %3953 = vmatpush1.msra.mxu0 %v3097
    %3954 = vmatprep.subr.mxu0 %v3102
    %3955 = vmatpush1.msra.mxu0 %v3101
    %3956 = vmatprep.subr.mxu0 %v3106
    %3957 = vmatpush1.msra.mxu0 %v3105
    %3958 = vmatprep.subr.mxu0 %v3110
    %3959 = vmatpush1.msra.mxu0 %v3109
    %3960 = vmatprep.subr.mxu0 %v3114
    %3961 = vmatpush1.msra.mxu0 %v3113
    %3962 = vmatprep.subr.mxu0 %v3118
    %3963 = vmatpush1.msra.mxu0 %v3117
    %3964 = vmatprep.mubr.f32.mxu0 %v2244
    %3965 = vmatmul.mubr.f32.gmra.mrb[0].mxu0 %v2243
    %v3966 = vpop.f32.mrb[0].mxu0
    %v3967 = vadd.f32 %v3854, %v3966
    %v3968 = vpop.f32.mrb[0].mxu0
    %v3969 = vadd.f32 %v3856, %v3968
    %3970 = vmatprep.mubr.f32.mxu0 %v2259
    %3971 = vmatmul.mubr.f32.gmra.mrb[0].mxu0 %v2258
    %v3972 = vpop.f32.mrb[0].mxu0
    %v3973 = vadd.f32 %v3860, %v3972
    %v3974 = vpop.f32.mrb[0].mxu0
    %v3975 = vadd.f32 %v3862, %v3974
    %3976 = vmatprep.mubr.f32.mxu0 %v2274
    %3977 = vmatmul.mubr.f32.gmra.mrb[0].mxu0 %v2273
    %v3978 = vpop.f32.mrb[0].mxu0
    %v3979 = vadd.f32 %v3866, %v3978
    %v3980 = vpop.f32.mrb[0].mxu0
    %v3981 = vadd.f32 %v3868, %v3980
    %3982 = vmatprep.mubr.f32.mxu0 %v2289
    %3983 = vmatmul.mubr.f32.gmra.mrb[0].mxu0 %v2288
    %v3984 = vpop.f32.mrb[0].mxu0
    %v3985 = vadd.f32 %v3872, %v3984
    %v3986 = vpop.f32.mrb[0].mxu0
    %v3987 = vadd.f32 %v3874, %v3986
    %3988 = vmatprep.mubr.f32.mxu0 %v2304
    %3989 = vmatmul.mubr.f32.gmra.mrb[0].mxu0 %v2303
    %v3990 = vpop.f32.mrb[0].mxu0
    %v3991 = vadd.f32 %v3878, %v3990
    %v3992 = vpop.f32.mrb[0].mxu0
    %v3993 = vadd.f32 %v3880, %v3992
    %3994 = vmatprep.mubr.f32.mxu0 %v2319
    %3995 = vmatmul.mubr.f32.gmra.mrb[0].mxu0 %v2318
    %v3996 = vpop.f32.mrb[0].mxu0
    %v3997 = vadd.f32 %v3884, %v3996
    %v3998 = vpop.f32.mrb[0].mxu0
    %v3999 = vadd.f32 %v3886, %v3998
    %4000 = vmatprep.mubr.f32.mxu0 %v2334
    %4001 = vmatmul.mubr.f32.gmra.mrb[0].mxu0 %v2333
    %v4002 = vpop.f32.mrb[0].mxu0
    %v4003 = vadd.f32 %v3890, %v4002
    %v4004 = vpop.f32.mrb[0].mxu0
    %v4005 = vadd.f32 %v3892, %v4004
    %4006 = vmatprep.mubr.f32.mxu0 %v2349
    %4007 = vmatmul.mubr.f32.gmra.mrb[0].mxu0 %v2348
    %v4008 = vpop.f32.mrb[0].mxu0
    %v4009 = vadd.f32 %v3896, %v4008
    %v4010 = vpop.f32.mrb[0].mxu0
    %v4011 = vadd.f32 %v3898, %v4010
    %4012 = vdwg.mxu0
    %4013 = vmatprep.subr.mxu0 %v3122
    %4014 = vmatpush1.msra.mxu0 %v3121
    %4015 = vmatprep.subr.mxu0 %v3126
    %4016 = vmatpush1.msra.mxu0 %v3125
    %4017 = vmatprep.subr.mxu0 %v3130
    %4018 = vmatpush1.msra.mxu0 %v3129
    %4019 = vmatprep.subr.mxu0 %v3134
    %4020 = vmatpush1.msra.mxu0 %v3133
    %4021 = vmatprep.subr.mxu0 %v3138
    %4022 = vmatpush1.msra.mxu0 %v3137
    %4023 = vmatprep.subr.mxu0 %v3142
    %4024 = vmatpush1.msra.mxu0 %v3141
    %4025 = vmatprep.subr.mxu0 %v3146
    %4026 = vmatpush1.msra.mxu0 %v3145
    %4027 = vmatprep.subr.mxu0 %v3150
    %4028 = vmatpush1.msra.mxu0 %v3149
    %4029 = vmatprep.subr.mxu0 %v3154
    %4030 = vmatpush1.msra.mxu0 %v3153
    %4031 = vmatprep.subr.mxu0 %v3158
    %4032 = vmatpush1.msra.mxu0 %v3157
    %4033 = vmatprep.subr.mxu0 %v3162
    %4034 = vmatpush1.msra.mxu0 %v3161
    %4035 = vmatprep.subr.mxu0 %v3166
    %4036 = vmatpush1.msra.mxu0 %v3165
    %4037 = vmatprep.subr.mxu0 %v3170
    %4038 = vmatpush1.msra.mxu0 %v3169
    %4039 = vmatprep.subr.mxu0 %v3174
    %4040 = vmatpush1.msra.mxu0 %v3173
    %4041 = vmatprep.subr.mxu0 %v3178
    %4042 = vmatpush1.msra.mxu0 %v3177
    %4043 = vmatprep.subr.mxu0 %v3182
    %4044 = vmatpush1.msra.mxu0 %v3181
    %4045 = vmatprep.subr.mxu0 %v3186
    %4046 = vmatpush1.msra.mxu0 %v3185
    %4047 = vmatprep.subr.mxu0 %v3190
    %4048 = vmatpush1.msra.mxu0 %v3189
    %4049 = vmatprep.subr.mxu0 %v3194
    %4050 = vmatpush1.msra.mxu0 %v3193
    %4051 = vmatprep.subr.mxu0 %v3198
    %4052 = vmatpush1.msra.mxu0 %v3197
    %4053 = vmatprep.subr.mxu0 %v3202
    %4054 = vmatpush1.msra.mxu0 %v3201
    %4055 = vmatprep.subr.mxu0 %v3206
    %4056 = vmatpush1.msra.mxu0 %v3205
    %4057 = vmatprep.subr.mxu0 %v3210
    %4058 = vmatpush1.msra.mxu0 %v3209
    %4059 = vmatprep.subr.mxu0 %v3214
    %4060 = vmatpush1.msra.mxu0 %v3213
    %4061 = vmatprep.subr.mxu0 %v3218
    %4062 = vmatpush1.msra.mxu0 %v3217
    %4063 = vmatprep.subr.mxu0 %v3222
    %4064 = vmatpush1.msra.mxu0 %v3221
    %4065 = vmatprep.subr.mxu0 %v3226
    %4066 = vmatpush1.msra.mxu0 %v3225
    %4067 = vmatprep.subr.mxu0 %v3230
    %4068 = vmatpush1.msra.mxu0 %v3229
    %4069 = vmatprep.subr.mxu0 %v3234
    %4070 = vmatpush1.msra.mxu0 %v3233
    %4071 = vmatprep.subr.mxu0 %v3238
    %4072 = vmatpush1.msra.mxu0 %v3237
    %4073 = vmatprep.subr.mxu0 %v3242
    %4074 = vmatpush1.msra.mxu0 %v3241
    %4075 = vmatprep.subr.mxu0 %v3246
    %4076 = vmatpush1.msra.mxu0 %v3245
    %4077 = vmatprep.mubr.f32.mxu0 %v2246
    %4078 = vmatmul.mubr.f32.gmra.mrb[0].mxu0 %v2245
    %v4079 = vpop.f32.mrb[0].mxu0
    %v4080 = vadd.f32 %v3967, %v4079
    %v4081 = vpop.f32.mrb[0].mxu0
    %v4082 = vadd.f32 %v3969, %v4081
    %4083 = vmatprep.mubr.f32.mxu0 %v2261
    %4084 = vmatmul.mubr.f32.gmra.mrb[0].mxu0 %v2260
    %v4085 = vpop.f32.mrb[0].mxu0
    %v4086 = vadd.f32 %v3973, %v4085
    %v4087 = vpop.f32.mrb[0].mxu0
    %v4088 = vadd.f32 %v3975, %v4087
    %4089 = vmatprep.mubr.f32.mxu0 %v2276
    %4090 = vmatmul.mubr.f32.gmra.mrb[0].mxu0 %v2275
    %v4091 = vpop.f32.mrb[0].mxu0
    %v4092 = vadd.f32 %v3979, %v4091
    %v4093 = vpop.f32.mrb[0].mxu0
    %v4094 = vadd.f32 %v3981, %v4093
    %4095 = vmatprep.mubr.f32.mxu0 %v2291
    %4096 = vmatmul.mubr.f32.gmra.mrb[0].mxu0 %v2290
    %v4097 = vpop.f32.mrb[0].mxu0
    %v4098 = vadd.f32 %v3985, %v4097
    %v4099 = vpop.f32.mrb[0].mxu0
    %v4100 = vadd.f32 %v3987, %v4099
    %4101 = vmatprep.mubr.f32.mxu0 %v2306
    %4102 = vmatmul.mubr.f32.gmra.mrb[0].mxu0 %v2305
    %v4103 = vpop.f32.mrb[0].mxu0
    %v4104 = vadd.f32 %v3991, %v4103
    %v4105 = vpop.f32.mrb[0].mxu0
    %v4106 = vadd.f32 %v3993, %v4105
    %4107 = vmatprep.mubr.f32.mxu0 %v2321
    %4108 = vmatmul.mubr.f32.gmra.mrb[0].mxu0 %v2320
    %v4109 = vpop.f32.mrb[0].mxu0
    %v4110 = vadd.f32 %v3997, %v4109
    %v4111 = vpop.f32.mrb[0].mxu0
    %v4112 = vadd.f32 %v3999, %v4111
    %4113 = vmatprep.mubr.f32.mxu0 %v2336
    %4114 = vmatmul.mubr.f32.gmra.mrb[0].mxu0 %v2335
    %v4115 = vpop.f32.mrb[0].mxu0
    %v4116 = vadd.f32 %v4003, %v4115
    %v4117 = vpop.f32.mrb[0].mxu0
    %v4118 = vadd.f32 %v4005, %v4117
    %4119 = vmatprep.mubr.f32.mxu0 %v2351
    %4120 = vmatmul.mubr.f32.gmra.mrb[0].mxu0 %v2350
    %v4121 = vpop.f32.mrb[0].mxu0
    %v4122 = vadd.f32 %v4009, %v4121
    %v4123 = vpop.f32.mrb[0].mxu0
    %v4124 = vadd.f32 %v4011, %v4123
    %4125 = vdwg.mxu0
    %4126 = vmatprep.subr.mxu0 %v3250
    %4127 = vmatpush1.msra.mxu0 %v3249
    %4128 = vmatprep.subr.mxu0 %v3254
    %4129 = vmatpush1.msra.mxu0 %v3253
    %4130 = vmatprep.subr.mxu0 %v3258
    %4131 = vmatpush1.msra.mxu0 %v3257
    %4132 = vmatprep.subr.mxu0 %v3262
    %4133 = vmatpush1.msra.mxu0 %v3261
    %4134 = vmatprep.subr.mxu0 %v3266
    %4135 = vmatpush1.msra.mxu0 %v3265
    %4136 = vmatprep.subr.mxu0 %v3270
    %4137 = vmatpush1.msra.mxu0 %v3269
    %4138 = vmatprep.subr.mxu0 %v3274
    %4139 = vmatpush1.msra.mxu0 %v3273
    %4140 = vmatprep.subr.mxu0 %v3278
    %4141 = vmatpush1.msra.mxu0 %v3277
    %4142 = vmatprep.subr.mxu0 %v3282
    %4143 = vmatpush1.msra.mxu0 %v3281
    %4144 = vmatprep.subr.mxu0 %v3286
    %4145 = vmatpush1.msra.mxu0 %v3285
    %4146 = vmatprep.subr.mxu0 %v3290
    %4147 = vmatpush1.msra.mxu0 %v3289
    %4148 = vmatprep.subr.mxu0 %v3294
    %4149 = vmatpush1.msra.mxu0 %v3293
    %4150 = vmatprep.subr.mxu0 %v3298
    %4151 = vmatpush1.msra.mxu0 %v3297
    %4152 = vmatprep.subr.mxu0 %v3302
    %4153 = vmatpush1.msra.mxu0 %v3301
    %4154 = vmatprep.subr.mxu0 %v3306
    %4155 = vmatpush1.msra.mxu0 %v3305
    %4156 = vmatprep.subr.mxu0 %v3310
    %4157 = vmatpush1.msra.mxu0 %v3309
    %4158 = vmatprep.subr.mxu0 0.0
    %4159 = vmatpush1.msra.mxu0 0.0
    %4160 = vmatprep.subr.mxu0 0.0
    %4161 = vmatpush1.msra.mxu0 0.0
    %4162 = vmatprep.subr.mxu0 0.0
    %4163 = vmatpush1.msra.mxu0 0.0
    %4164 = vmatprep.subr.mxu0 0.0
    %4165 = vmatpush1.msra.mxu0 0.0
    %4166 = vmatprep.subr.mxu0 0.0
    %4167 = vmatpush1.msra.mxu0 0.0
    %4168 = vmatprep.subr.mxu0 0.0
    %4169 = vmatpush1.msra.mxu0 0.0
    %4170 = vmatprep.subr.mxu0 0.0
    %4171 = vmatpush1.msra.mxu0 0.0
    %4172 = vmatprep.subr.mxu0 0.0
    %4173 = vmatpush1.msra.mxu0 0.0
    %4174 = vmatprep.subr.mxu0 0.0
    %4175 = vmatpush1.msra.mxu0 0.0
    %4176 = vmatprep.subr.mxu0 0.0
    %4177 = vmatpush1.msra.mxu0 0.0
    %4178 = vmatprep.subr.mxu0 0.0
    %4179 = vmatpush1.msra.mxu0 0.0
    %4180 = vmatprep.subr.mxu0 0.0
    %4181 = vmatpush1.msra.mxu0 0.0
    %4182 = vmatprep.subr.mxu0 0.0
    %4183 = vmatpush1.msra.mxu0 0.0
    %4184 = vmatprep.subr.mxu0 0.0
    %4185 = vmatpush1.msra.mxu0 0.0
    %4186 = vmatprep.subr.mxu0 0.0
    %4187 = vmatpush1.msra.mxu0 0.0
    %4188 = vmatprep.subr.mxu0 0.0
    %4189 = vmatpush1.msra.mxu0 0.0
    %4190 = vmatprep.mubr.f32.mxu0 0.0
    %4191 = vmatmul.mubr.f32.gmra.mrb[0].mxu0 %v2247
    %v4192 = vpop.f32.mrb[0].mxu0
    %v4193 = vadd.f32 %v4080, %v4192
    %v4194 = vpop.f32.mrb[0].mxu0
    %v4195 = vadd.f32 %v4082, %v4194
    %4196 = vmatprep.mubr.f32.mxu0 0.0
    %4197 = vmatmul.mubr.f32.gmra.mrb[0].mxu0 %v2262
    %v4198 = vpop.f32.mrb[0].mxu0
    %v4199 = vadd.f32 %v4086, %v4198
    %v4200 = vpop.f32.mrb[0].mxu0
    %v4201 = vadd.f32 %v4088, %v4200
    %4202 = vmatprep.mubr.f32.mxu0 0.0
    %4203 = vmatmul.mubr.f32.gmra.mrb[0].mxu0 %v2277
    %v4204 = vpop.f32.mrb[0].mxu0
    %v4205 = vadd.f32 %v4092, %v4204
    %v4206 = vpop.f32.mrb[0].mxu0
    %v4207 = vadd.f32 %v4094, %v4206
    %4208 = vmatprep.mubr.f32.mxu0 0.0
    %4209 = vmatmul.mubr.f32.gmra.mrb[0].mxu0 %v2292
    %v4210 = vpop.f32.mrb[0].mxu0
    %v4211 = vadd.f32 %v4098, %v4210
    %v4212 = vpop.f32.mrb[0].mxu0
    %v4213 = vadd.f32 %v4100, %v4212
    %4214 = vmatprep.mubr.f32.mxu0 0.0
    %4215 = vmatmul.mubr.f32.gmra.mrb[0].mxu0 %v2307
    %v4216 = vpop.f32.mrb[0].mxu0
    %v4217 = vadd.f32 %v4104, %v4216
    %v4218 = vpop.f32.mrb[0].mxu0
    %v4219 = vadd.f32 %v4106, %v4218
    %4220 = vmatprep.mubr.f32.mxu0 0.0
    %4221 = vmatmul.mubr.f32.gmra.mrb[0].mxu0 %v2322
    %v4222 = vpop.f32.mrb[0].mxu0
    %v4223 = vadd.f32 %v4110, %v4222
    %v4224 = vpop.f32.mrb[0].mxu0
    %v4225 = vadd.f32 %v4112, %v4224
    %4226 = vmatprep.mubr.f32.mxu0 0.0
    %4227 = vmatmul.mubr.f32.gmra.mrb[0].mxu0 %v2337
    %v4228 = vpop.f32.mrb[0].mxu0
    %v4229 = vadd.f32 %v4116, %v4228
    %v4230 = vpop.f32.mrb[0].mxu0
    %v4231 = vadd.f32 %v4118, %v4230
    %4232 = vmatprep.mubr.f32.mxu0 0.0
    %4233 = vmatmul.mubr.f32.gmra.mrb[0].mxu0 %v2352
    %v4234 = vpop.f32.mrb[0].mxu0
    %v4235 = vadd.f32 %v4122, %v4234
    %v4236 = vpop.f32.mrb[0].mxu0
    %v4237 = vadd.f32 %v4124, %v4236
    %4238 = vdwg.mxu0
    %4239 = vmatprep.subr.mxu0 %v2356
    %4240 = vmatpush1.msra.mxu0 %v2355
    %4241 = vmatprep.subr.mxu0 %v2360
    %4242 = vmatpush1.msra.mxu0 %v2359
    %4243 = vmatprep.subr.mxu0 %v2364
    %4244 = vmatpush1.msra.mxu0 %v2363
    %4245 = vmatprep.subr.mxu0 %v2368
    %4246 = vmatpush1.msra.mxu0 %v2367
    %4247 = vmatprep.subr.mxu0 %v2372
    %4248 = vmatpush1.msra.mxu0 %v2371
    %4249 = vmatprep.subr.mxu0 %v2376
    %4250 = vmatpush1.msra.mxu0 %v2375
    %4251 = vmatprep.subr.mxu0 %v2380
    %4252 = vmatpush1.msra.mxu0 %v2379
    %4253 = vmatprep.subr.mxu0 %v2384
    %4254 = vmatpush1.msra.mxu0 %v2383
    %4255 = vmatprep.subr.mxu0 %v2388
    %4256 = vmatpush1.msra.mxu0 %v2387
    %4257 = vmatprep.subr.mxu0 %v2392
    %4258 = vmatpush1.msra.mxu0 %v2391
    %4259 = vmatprep.subr.mxu0 %v2396
    %4260 = vmatpush1.msra.mxu0 %v2395
    %4261 = vmatprep.subr.mxu0 %v2400
    %4262 = vmatpush1.msra.mxu0 %v2399
    %4263 = vmatprep.subr.mxu0 %v2404
    %4264 = vmatpush1.msra.mxu0 %v2403
    %4265 = vmatprep.subr.mxu0 %v2408
    %4266 = vmatpush1.msra.mxu0 %v2407
    %4267 = vmatprep.subr.mxu0 %v2412
    %4268 = vmatpush1.msra.mxu0 %v2411
    %4269 = vmatprep.subr.mxu0 %v2416
    %4270 = vmatpush1.msra.mxu0 %v2415
    %4271 = vmatprep.subr.mxu0 %v2420
    %4272 = vmatpush1.msra.mxu0 %v2419
    %4273 = vmatprep.subr.mxu0 %v2424
    %4274 = vmatpush1.msra.mxu0 %v2423
    %4275 = vmatprep.subr.mxu0 %v2428
    %4276 = vmatpush1.msra.mxu0 %v2427
    %4277 = vmatprep.subr.mxu0 %v2432
    %4278 = vmatpush1.msra.mxu0 %v2431
    %4279 = vmatprep.subr.mxu0 %v2436
    %4280 = vmatpush1.msra.mxu0 %v2435
    %4281 = vmatprep.subr.mxu0 %v2440
    %4282 = vmatpush1.msra.mxu0 %v2439
    %4283 = vmatprep.subr.mxu0 %v2444
    %4284 = vmatpush1.msra.mxu0 %v2443
    %4285 = vmatprep.subr.mxu0 %v2448
    %4286 = vmatpush1.msra.mxu0 %v2447
    %4287 = vmatprep.subr.mxu0 %v2452
    %4288 = vmatpush1.msra.mxu0 %v2451
    %4289 = vmatprep.subr.mxu0 %v2456
    %4290 = vmatpush1.msra.mxu0 %v2455
    %4291 = vmatprep.subr.mxu0 %v2460
    %4292 = vmatpush1.msra.mxu0 %v2459
    %4293 = vmatprep.subr.mxu0 %v2464
    %4294 = vmatpush1.msra.mxu0 %v2463
    %4295 = vmatprep.subr.mxu0 %v2468
    %4296 = vmatpush1.msra.mxu0 %v2467
    %4297 = vmatprep.subr.mxu0 %v2472
    %4298 = vmatpush1.msra.mxu0 %v2471
    %4299 = vmatprep.subr.mxu0 %v2476
    %4300 = vmatpush1.msra.mxu0 %v2475
    %4301 = vmatprep.subr.mxu0 %v2480
    %4302 = vmatpush1.msra.mxu0 %v2479
    %4303 = vmatprep.mubr.f32.mxu0 %v2234
    %4304 = vmatmul.mubr.f32.gmra.mrb[0].mxu0 %v2233
    %v4305 = vpop.f32.mrb[0].mxu0
    %v4306 = vadd.f32 %v3326, %v4305
    %v4307 = vpop.f32.mrb[0].mxu0
    %v4308 = vadd.f32 %v3330, %v4307
    %4309 = vmatprep.mubr.f32.mxu0 %v2249
    %4310 = vmatmul.mubr.f32.gmra.mrb[0].mxu0 %v2248
    %v4311 = vpop.f32.mrb[0].mxu0
    %v4312 = vadd.f32 %v3326, %v4311
    %v4313 = vpop.f32.mrb[0].mxu0
    %v4314 = vadd.f32 %v3330, %v4313
    %4315 = vmatprep.mubr.f32.mxu0 %v2264
    %4316 = vmatmul.mubr.f32.gmra.mrb[0].mxu0 %v2263
    %v4317 = vpop.f32.mrb[0].mxu0
    %v4318 = vadd.f32 %v3326, %v4317
    %v4319 = vpop.f32.mrb[0].mxu0
    %v4320 = vadd.f32 %v3330, %v4319
    %4321 = vmatprep.mubr.f32.mxu0 %v2279
    %4322 = vmatmul.mubr.f32.gmra.mrb[0].mxu0 %v2278
    %v4323 = vpop.f32.mrb[0].mxu0
    %v4324 = vadd.f32 %v3326, %v4323
    %v4325 = vpop.f32.mrb[0].mxu0
    %v4326 = vadd.f32 %v3330, %v4325
    %4327 = vmatprep.mubr.f32.mxu0 %v2294
    %4328 = vmatmul.mubr.f32.gmra.mrb[0].mxu0 %v2293
    %v4329 = vpop.f32.mrb[0].mxu0
    %v4330 = vadd.f32 %v3326, %v4329
    %v4331 = vpop.f32.mrb[0].mxu0
    %v4332 = vadd.f32 %v3330, %v4331
    %4333 = vmatprep.mubr.f32.mxu0 %v2309
    %4334 = vmatmul.mubr.f32.gmra.mrb[0].mxu0 %v2308
    %v4335 = vpop.f32.mrb[0].mxu0
    %v4336 = vadd.f32 %v3326, %v4335
    %v4337 = vpop.f32.mrb[0].mxu0
    %v4338 = vadd.f32 %v3330, %v4337
    %4339 = vmatprep.mubr.f32.mxu0 %v2324
    %4340 = vmatmul.mubr.f32.gmra.mrb[0].mxu0 %v2323
    %v4341 = vpop.f32.mrb[0].mxu0
    %v4342 = vadd.f32 %v3326, %v4341
    %v4343 = vpop.f32.mrb[0].mxu0
    %v4344 = vadd.f32 %v3330, %v4343
    %4345 = vmatprep.mubr.f32.mxu0 %v2339
    %4346 = vmatmul.mubr.f32.gmra.mrb[0].mxu0 %v2338
    %v4347 = vpop.f32.mrb[0].mxu0
    %v4348 = vadd.f32 %v3326, %v4347
    %v4349 = vpop.f32.mrb[0].mxu0
    %v4350 = vadd.f32 %v3330, %v4349
    %4351 = vdwg.mxu0
    %4352 = vmatprep.subr.mxu0 %v2484
    %4353 = vmatpush1.msra.mxu0 %v2483
    %4354 = vmatprep.subr.mxu0 %v2488
    %4355 = vmatpush1.msra.mxu0 %v2487
    %4356 = vmatprep.subr.mxu0 %v2492
    %4357 = vmatpush1.msra.mxu0 %v2491
    %4358 = vmatprep.subr.mxu0 %v2496
    %4359 = vmatpush1.msra.mxu0 %v2495
    %4360 = vmatprep.subr.mxu0 %v2500
    %4361 = vmatpush1.msra.mxu0 %v2499
    %4362 = vmatprep.subr.mxu0 %v2504
    %4363 = vmatpush1.msra.mxu0 %v2503
    %4364 = vmatprep.subr.mxu0 %v2508
    %4365 = vmatpush1.msra.mxu0 %v2507
    %4366 = vmatprep.subr.mxu0 %v2512
    %4367 = vmatpush1.msra.mxu0 %v2511
    %4368 = vmatprep.subr.mxu0 %v2516
    %4369 = vmatpush1.msra.mxu0 %v2515
    %4370 = vmatprep.subr.mxu0 %v2520
    %4371 = vmatpush1.msra.mxu0 %v2519
    %4372 = vmatprep.subr.mxu0 %v2524
    %4373 = vmatpush1.msra.mxu0 %v2523
    %4374 = vmatprep.subr.mxu0 %v2528
    %4375 = vmatpush1.msra.mxu0 %v2527
    %4376 = vmatprep.subr.mxu0 %v2532
    %4377 = vmatpush1.msra.mxu0 %v2531
    %4378 = vmatprep.subr.mxu0 %v2536
    %4379 = vmatpush1.msra.mxu0 %v2535
    %4380 = vmatprep.subr.mxu0 %v2540
    %4381 = vmatpush1.msra.mxu0 %v2539
    %4382 = vmatprep.subr.mxu0 %v2544
    %4383 = vmatpush1.msra.mxu0 %v2543
    %4384 = vmatprep.subr.mxu0 %v2548
    %4385 = vmatpush1.msra.mxu0 %v2547
    %4386 = vmatprep.subr.mxu0 %v2552
    %4387 = vmatpush1.msra.mxu0 %v2551
    %4388 = vmatprep.subr.mxu0 %v2556
    %4389 = vmatpush1.msra.mxu0 %v2555
    %4390 = vmatprep.subr.mxu0 %v2560
    %4391 = vmatpush1.msra.mxu0 %v2559
    %4392 = vmatprep.subr.mxu0 %v2564
    %4393 = vmatpush1.msra.mxu0 %v2563
    %4394 = vmatprep.subr.mxu0 %v2568
    %4395 = vmatpush1.msra.mxu0 %v2567
    %4396 = vmatprep.subr.mxu0 %v2572
    %4397 = vmatpush1.msra.mxu0 %v2571
    %4398 = vmatprep.subr.mxu0 %v2576
    %4399 = vmatpush1.msra.mxu0 %v2575
    %4400 = vmatprep.subr.mxu0 %v2580
    %4401 = vmatpush1.msra.mxu0 %v2579
    %4402 = vmatprep.subr.mxu0 %v2584
    %4403 = vmatpush1.msra.mxu0 %v2583
    %4404 = vmatprep.subr.mxu0 %v2588
    %4405 = vmatpush1.msra.mxu0 %v2587
    %4406 = vmatprep.subr.mxu0 %v2592
    %4407 = vmatpush1.msra.mxu0 %v2591
    %4408 = vmatprep.subr.mxu0 %v2596
    %4409 = vmatpush1.msra.mxu0 %v2595
    %4410 = vmatprep.subr.mxu0 %v2600
    %4411 = vmatpush1.msra.mxu0 %v2599
    %4412 = vmatprep.subr.mxu0 %v2604
    %4413 = vmatpush1.msra.mxu0 %v2603
    %4414 = vmatprep.subr.mxu0 %v2608
    %4415 = vmatpush1.msra.mxu0 %v2607
    %4416 = vmatprep.mubr.f32.mxu0 %v2236
    %4417 = vmatmul.mubr.f32.gmra.mrb[0].mxu0 %v2235
    %v4418 = vpop.f32.mrb[0].mxu0
    %v4419 = vadd.f32 %v4306, %v4418
    %v4420 = vpop.f32.mrb[0].mxu0
    %v4421 = vadd.f32 %v4308, %v4420
    %4422 = vmatprep.mubr.f32.mxu0 %v2251
    %4423 = vmatmul.mubr.f32.gmra.mrb[0].mxu0 %v2250
    %v4424 = vpop.f32.mrb[0].mxu0
    %v4425 = vadd.f32 %v4312, %v4424
    %v4426 = vpop.f32.mrb[0].mxu0
    %v4427 = vadd.f32 %v4314, %v4426
    %4428 = vmatprep.mubr.f32.mxu0 %v2266
    %4429 = vmatmul.mubr.f32.gmra.mrb[0].mxu0 %v2265
    %v4430 = vpop.f32.mrb[0].mxu0
    %v4431 = vadd.f32 %v4318, %v4430
    %v4432 = vpop.f32.mrb[0].mxu0
    %v4433 = vadd.f32 %v4320, %v4432
    %4434 = vmatprep.mubr.f32.mxu0 %v2281
    %4435 = vmatmul.mubr.f32.gmra.mrb[0].mxu0 %v2280
    %v4436 = vpop.f32.mrb[0].mxu0
    %v4437 = vadd.f32 %v4324, %v4436
    %v4438 = vpop.f32.mrb[0].mxu0
    %v4439 = vadd.f32 %v4326, %v4438
    %4440 = vmatprep.mubr.f32.mxu0 %v2296
    %4441 = vmatmul.mubr.f32.gmra.mrb[0].mxu0 %v2295
    %v4442 = vpop.f32.mrb[0].mxu0
    %v4443 = vadd.f32 %v4330, %v4442
    %v4444 = vpop.f32.mrb[0].mxu0
    %v4445 = vadd.f32 %v4332, %v4444
    %4446 = vmatprep.mubr.f32.mxu0 %v2311
    %4447 = vmatmul.mubr.f32.gmra.mrb[0].mxu0 %v2310
    %v4448 = vpop.f32.mrb[0].mxu0
    %v4449 = vadd.f32 %v4336, %v4448
    %v4450 = vpop.f32.mrb[0].mxu0
    %v4451 = vadd.f32 %v4338, %v4450
    %4452 = vmatprep.mubr.f32.mxu0 %v2326
    %4453 = vmatmul.mubr.f32.gmra.mrb[0].mxu0 %v2325
    %v4454 = vpop.f32.mrb[0].mxu0
    %v4455 = vadd.f32 %v4342, %v4454
    %v4456 = vpop.f32.mrb[0].mxu0
    %v4457 = vadd.f32 %v4344, %v4456
    %4458 = vmatprep.mubr.f32.mxu0 %v2341
    %4459 = vmatmul.mubr.f32.gmra.mrb[0].mxu0 %v2340
    %v4460 = vpop.f32.mrb[0].mxu0
    %v4461 = vadd.f32 %v4348, %v4460
    %v4462 = vpop.f32.mrb[0].mxu0
    %v4463 = vadd.f32 %v4350, %v4462
    %4464 = vdwg.mxu0
    %4465 = vmatprep.subr.mxu0 %v2612
    %4466 = vmatpush1.msra.mxu0 %v2611
    %4467 = vmatprep.subr.mxu0 %v2616
    %4468 = vmatpush1.msra.mxu0 %v2615
    %4469 = vmatprep.subr.mxu0 %v2620
    %4470 = vmatpush1.msra.mxu0 %v2619
    %4471 = vmatprep.subr.mxu0 %v2624
    %4472 = vmatpush1.msra.mxu0 %v2623
    %4473 = vmatprep.subr.mxu0 %v2628
    %4474 = vmatpush1.msra.mxu0 %v2627
    %4475 = vmatprep.subr.mxu0 %v2632
    %4476 = vmatpush1.msra.mxu0 %v2631
    %4477 = vmatprep.subr.mxu0 %v2636
    %4478 = vmatpush1.msra.mxu0 %v2635
    %4479 = vmatprep.subr.mxu0 %v2640
    %4480 = vmatpush1.msra.mxu0 %v2639
    %4481 = vmatprep.subr.mxu0 %v2644
    %4482 = vmatpush1.msra.mxu0 %v2643
    %4483 = vmatprep.subr.mxu0 %v2648
    %4484 = vmatpush1.msra.mxu0 %v2647
    %4485 = vmatprep.subr.mxu0 %v2652
    %4486 = vmatpush1.msra.mxu0 %v2651
    %4487 = vmatprep.subr.mxu0 %v2656
    %4488 = vmatpush1.msra.mxu0 %v2655
    %4489 = vmatprep.subr.mxu0 %v2660
    %4490 = vmatpush1.msra.mxu0 %v2659
    %4491 = vmatprep.subr.mxu0 %v2664
    %4492 = vmatpush1.msra.mxu0 %v2663
    %4493 = vmatprep.subr.mxu0 %v2668
    %4494 = vmatpush1.msra.mxu0 %v2667
    %4495 = vmatprep.subr.mxu0 %v2672
    %4496 = vmatpush1.msra.mxu0 %v2671
    %4497 = vmatprep.subr.mxu0 %v2676
    %4498 = vmatpush1.msra.mxu0 %v2675
    %4499 = vmatprep.subr.mxu0 %v2680
    %4500 = vmatpush1.msra.mxu0 %v2679
    %4501 = vmatprep.subr.mxu0 %v2684
    %4502 = vmatpush1.msra.mxu0 %v2683
    %4503 = vmatprep.subr.mxu0 %v2688
    %4504 = vmatpush1.msra.mxu0 %v2687
    %4505 = vmatprep.subr.mxu0 %v2692
    %4506 = vmatpush1.msra.mxu0 %v2691
    %4507 = vmatprep.subr.mxu0 %v2696
    %4508 = vmatpush1.msra.mxu0 %v2695
    %4509 = vmatprep.subr.mxu0 %v2700
    %4510 = vmatpush1.msra.mxu0 %v2699
    %4511 = vmatprep.subr.mxu0 %v2704
    %4512 = vmatpush1.msra.mxu0 %v2703
    %4513 = vmatprep.subr.mxu0 %v2708
    %4514 = vmatpush1.msra.mxu0 %v2707
    %4515 = vmatprep.subr.mxu0 %v2712
    %4516 = vmatpush1.msra.mxu0 %v2711
    %4517 = vmatprep.subr.mxu0 %v2716
    %4518 = vmatpush1.msra.mxu0 %v2715
    %4519 = vmatprep.subr.mxu0 %v2720
    %4520 = vmatpush1.msra.mxu0 %v2719
    %4521 = vmatprep.subr.mxu0 %v2724
    %4522 = vmatpush1.msra.mxu0 %v2723
    %4523 = vmatprep.subr.mxu0 %v2728
    %4524 = vmatpush1.msra.mxu0 %v2727
    %4525 = vmatprep.subr.mxu0 %v2732
    %4526 = vmatpush1.msra.mxu0 %v2731
    %4527 = vmatprep.subr.mxu0 %v2736
    %4528 = vmatpush1.msra.mxu0 %v2735
    %4529 = vmatprep.mubr.f32.mxu0 %v2238
    %4530 = vmatmul.mubr.f32.gmra.mrb[0].mxu0 %v2237
    %v4531 = vpop.f32.mrb[0].mxu0
    %v4532 = vadd.f32 %v4419, %v4531
    %v4533 = vpop.f32.mrb[0].mxu0
    %v4534 = vadd.f32 %v4421, %v4533
    %4535 = vmatprep.mubr.f32.mxu0 %v2253
    %4536 = vmatmul.mubr.f32.gmra.mrb[0].mxu0 %v2252
    %v4537 = vpop.f32.mrb[0].mxu0
    %v4538 = vadd.f32 %v4425, %v4537
    %v4539 = vpop.f32.mrb[0].mxu0
    %v4540 = vadd.f32 %v4427, %v4539
    %4541 = vmatprep.mubr.f32.mxu0 %v2268
    %4542 = vmatmul.mubr.f32.gmra.mrb[0].mxu0 %v2267
    %v4543 = vpop.f32.mrb[0].mxu0
    %v4544 = vadd.f32 %v4431, %v4543
    %v4545 = vpop.f32.mrb[0].mxu0
    %v4546 = vadd.f32 %v4433, %v4545
    %4547 = vmatprep.mubr.f32.mxu0 %v2283
    %4548 = vmatmul.mubr.f32.gmra.mrb[0].mxu0 %v2282
    %v4549 = vpop.f32.mrb[0].mxu0
    %v4550 = vadd.f32 %v4437, %v4549
    %v4551 = vpop.f32.mrb[0].mxu0
    %v4552 = vadd.f32 %v4439, %v4551
    %4553 = vmatprep.mubr.f32.mxu0 %v2298
    %4554 = vmatmul.mubr.f32.gmra.mrb[0].mxu0 %v2297
    %v4555 = vpop.f32.mrb[0].mxu0
    %v4556 = vadd.f32 %v4443, %v4555
    %v4557 = vpop.f32.mrb[0].mxu0
    %v4558 = vadd.f32 %v4445, %v4557
    %4559 = vmatprep.mubr.f32.mxu0 %v2313
    %4560 = vmatmul.mubr.f32.gmra.mrb[0].mxu0 %v2312
    %v4561 = vpop.f32.mrb[0].mxu0
    %v4562 = vadd.f32 %v4449, %v4561
    %v4563 = vpop.f32.mrb[0].mxu0
    %v4564 = vadd.f32 %v4451, %v4563
    %4565 = vmatprep.mubr.f32.mxu0 %v2328
    %4566 = vmatmul.mubr.f32.gmra.mrb[0].mxu0 %v2327
    %v4567 = vpop.f32.mrb[0].mxu0
    %v4568 = vadd.f32 %v4455, %v4567
    %v4569 = vpop.f32.mrb[0].mxu0
    %v4570 = vadd.f32 %v4457, %v4569
    %4571 = vmatprep.mubr.f32.mxu0 %v2343
    %4572 = vmatmul.mubr.f32.gmra.mrb[0].mxu0 %v2342
    %v4573 = vpop.f32.mrb[0].mxu0
    %v4574 = vadd.f32 %v4461, %v4573
    %v4575 = vpop.f32.mrb[0].mxu0
    %v4576 = vadd.f32 %v4463, %v4575
    %4577 = vdwg.mxu0
    %4578 = vmatprep.subr.mxu0 %v2740
    %4579 = vmatpush1.msra.mxu0 %v2739
    %4580 = vmatprep.subr.mxu0 %v2744
    %4581 = vmatpush1.msra.mxu0 %v2743
    %4582 = vmatprep.subr.mxu0 %v2748
    %4583 = vmatpush1.msra.mxu0 %v2747
    %4584 = vmatprep.subr.mxu0 %v2752
    %4585 = vmatpush1.msra.mxu0 %v2751
    %4586 = vmatprep.subr.mxu0 %v2756
    %4587 = vmatpush1.msra.mxu0 %v2755
    %4588 = vmatprep.subr.mxu0 %v2760
    %4589 = vmatpush1.msra.mxu0 %v2759
    %4590 = vmatprep.subr.mxu0 %v2764
    %4591 = vmatpush1.msra.mxu0 %v2763
    %4592 = vmatprep.subr.mxu0 %v2768
    %4593 = vmatpush1.msra.mxu0 %v2767
    %4594 = vmatprep.subr.mxu0 %v2772
    %4595 = vmatpush1.msra.mxu0 %v2771
    %4596 = vmatprep.subr.mxu0 %v2776
    %4597 = vmatpush1.msra.mxu0 %v2775
    %4598 = vmatprep.subr.mxu0 %v2780
    %4599 = vmatpush1.msra.mxu0 %v2779
    %4600 = vmatprep.subr.mxu0 %v2784
    %4601 = vmatpush1.msra.mxu0 %v2783
    %4602 = vmatprep.subr.mxu0 %v2788
    %4603 = vmatpush1.msra.mxu0 %v2787
    %4604 = vmatprep.subr.mxu0 %v2792
    %4605 = vmatpush1.msra.mxu0 %v2791
    %4606 = vmatprep.subr.mxu0 %v2796
    %4607 = vmatpush1.msra.mxu0 %v2795
    %4608 = vmatprep.subr.mxu0 %v2800
    %4609 = vmatpush1.msra.mxu0 %v2799
    %4610 = vmatprep.subr.mxu0 %v2804
    %4611 = vmatpush1.msra.mxu0 %v2803
    %4612 = vmatprep.subr.mxu0 %v2808
    %4613 = vmatpush1.msra.mxu0 %v2807
    %4614 = vmatprep.subr.mxu0 %v2812
    %4615 = vmatpush1.msra.mxu0 %v2811
    %4616 = vmatprep.subr.mxu0 %v2816
    %4617 = vmatpush1.msra.mxu0 %v2815
    %4618 = vmatprep.subr.mxu0 %v2820
    %4619 = vmatpush1.msra.mxu0 %v2819
    %4620 = vmatprep.subr.mxu0 %v2824
    %4621 = vmatpush1.msra.mxu0 %v2823
    %4622 = vmatprep.subr.mxu0 %v2828
    %4623 = vmatpush1.msra.mxu0 %v2827
    %4624 = vmatprep.subr.mxu0 %v2832
    %4625 = vmatpush1.msra.mxu0 %v2831
    %4626 = vmatprep.subr.mxu0 %v2836
    %4627 = vmatpush1.msra.mxu0 %v2835
    %4628 = vmatprep.subr.mxu0 %v2840
    %4629 = vmatpush1.msra.mxu0 %v2839
    %4630 = vmatprep.subr.mxu0 %v2844
    %4631 = vmatpush1.msra.mxu0 %v2843
    %4632 = vmatprep.subr.mxu0 %v2848
    %4633 = vmatpush1.msra.mxu0 %v2847
    %4634 = vmatprep.subr.mxu0 %v2852
    %4635 = vmatpush1.msra.mxu0 %v2851
    %4636 = vmatprep.subr.mxu0 %v2856
    %4637 = vmatpush1.msra.mxu0 %v2855
    %4638 = vmatprep.subr.mxu0 %v2860
    %4639 = vmatpush1.msra.mxu0 %v2859
    %4640 = vmatprep.subr.mxu0 %v2864
    %4641 = vmatpush1.msra.mxu0 %v2863
    %4642 = vmatprep.mubr.f32.mxu0 %v2240
    %4643 = vmatmul.mubr.f32.gmra.mrb[0].mxu0 %v2239
    %v4644 = vpop.f32.mrb[0].mxu0
    %v4645 = vadd.f32 %v4532, %v4644
    %v4646 = vpop.f32.mrb[0].mxu0
    %v4647 = vadd.f32 %v4534, %v4646
    %4648 = vmatprep.mubr.f32.mxu0 %v2255
    %4649 = vmatmul.mubr.f32.gmra.mrb[0].mxu0 %v2254
    %v4650 = vpop.f32.mrb[0].mxu0
    %v4651 = vadd.f32 %v4538, %v4650
    %v4652 = vpop.f32.mrb[0].mxu0
    %v4653 = vadd.f32 %v4540, %v4652
    %4654 = vmatprep.mubr.f32.mxu0 %v2270
    %4655 = vmatmul.mubr.f32.gmra.mrb[0].mxu0 %v2269
    %v4656 = vpop.f32.mrb[0].mxu0
    %v4657 = vadd.f32 %v4544, %v4656
    %v4658 = vpop.f32.mrb[0].mxu0
    %v4659 = vadd.f32 %v4546, %v4658
    %4660 = vmatprep.mubr.f32.mxu0 %v2285
    %4661 = vmatmul.mubr.f32.gmra.mrb[0].mxu0 %v2284
    %v4662 = vpop.f32.mrb[0].mxu0
    %v4663 = vadd.f32 %v4550, %v4662
    %v4664 = vpop.f32.mrb[0].mxu0
    %v4665 = vadd.f32 %v4552, %v4664
    %4666 = vmatprep.mubr.f32.mxu0 %v2300
    %4667 = vmatmul.mubr.f32.gmra.mrb[0].mxu0 %v2299
    %v4668 = vpop.f32.mrb[0].mxu0
    %v4669 = vadd.f32 %v4556, %v4668
    %v4670 = vpop.f32.mrb[0].mxu0
    %v4671 = vadd.f32 %v4558, %v4670
    %4672 = vmatprep.mubr.f32.mxu0 %v2315
    %4673 = vmatmul.mubr.f32.gmra.mrb[0].mxu0 %v2314
    %v4674 = vpop.f32.mrb[0].mxu0
    %v4675 = vadd.f32 %v4562, %v4674
    %v4676 = vpop.f32.mrb[0].mxu0
    %v4677 = vadd.f32 %v4564, %v4676
    %4678 = vmatprep.mubr.f32.mxu0 %v2330
    %4679 = vmatmul.mubr.f32.gmra.mrb[0].mxu0 %v2329
    %v4680 = vpop.f32.mrb[0].mxu0
    %v4681 = vadd.f32 %v4568, %v4680
    %v4682 = vpop.f32.mrb[0].mxu0
    %v4683 = vadd.f32 %v4570, %v4682
    %4684 = vmatprep.mubr.f32.mxu0 %v2345
    %4685 = vmatmul.mubr.f32.gmra.mrb[0].mxu0 %v2344
    %v4686 = vpop.f32.mrb[0].mxu0
    %v4687 = vadd.f32 %v4574, %v4686
    %v4688 = vpop.f32.mrb[0].mxu0
    %v4689 = vadd.f32 %v4576, %v4688
    %4690 = vdwg.mxu0
    %4691 = vmatprep.subr.mxu0 %v2868
    %4692 = vmatpush1.msra.mxu0 %v2867
    %4693 = vmatprep.subr.mxu0 %v2872
    %4694 = vmatpush1.msra.mxu0 %v2871
    %4695 = vmatprep.subr.mxu0 %v2876
    %4696 = vmatpush1.msra.mxu0 %v2875
    %4697 = vmatprep.subr.mxu0 %v2880
    %4698 = vmatpush1.msra.mxu0 %v2879
    %4699 = vmatprep.subr.mxu0 %v2884
    %4700 = vmatpush1.msra.mxu0 %v2883
    %4701 = vmatprep.subr.mxu0 %v2888
    %4702 = vmatpush1.msra.mxu0 %v2887
    %4703 = vmatprep.subr.mxu0 %v2892
    %4704 = vmatpush1.msra.mxu0 %v2891
    %4705 = vmatprep.subr.mxu0 %v2896
    %4706 = vmatpush1.msra.mxu0 %v2895
    %4707 = vmatprep.subr.mxu0 %v2900
    %4708 = vmatpush1.msra.mxu0 %v2899
    %4709 = vmatprep.subr.mxu0 %v2904
    %4710 = vmatpush1.msra.mxu0 %v2903
    %4711 = vmatprep.subr.mxu0 %v2908
    %4712 = vmatpush1.msra.mxu0 %v2907
    %4713 = vmatprep.subr.mxu0 %v2912
    %4714 = vmatpush1.msra.mxu0 %v2911
    %4715 = vmatprep.subr.mxu0 %v2916
    %4716 = vmatpush1.msra.mxu0 %v2915
    %4717 = vmatprep.subr.mxu0 %v2920
    %4718 = vmatpush1.msra.mxu0 %v2919
    %4719 = vmatprep.subr.mxu0 %v2924
    %4720 = vmatpush1.msra.mxu0 %v2923
    %4721 = vmatprep.subr.mxu0 %v2928
    %4722 = vmatpush1.msra.mxu0 %v2927
    %4723 = vmatprep.subr.mxu0 %v2932
    %4724 = vmatpush1.msra.mxu0 %v2931
    %4725 = vmatprep.subr.mxu0 %v2936
    %4726 = vmatpush1.msra.mxu0 %v2935
    %4727 = vmatprep.subr.mxu0 %v2940
    %4728 = vmatpush1.msra.mxu0 %v2939
    %4729 = vmatprep.subr.mxu0 %v2944
    %4730 = vmatpush1.msra.mxu0 %v2943
    %4731 = vmatprep.subr.mxu0 %v2948
    %4732 = vmatpush1.msra.mxu0 %v2947
    %4733 = vmatprep.subr.mxu0 %v2952
    %4734 = vmatpush1.msra.mxu0 %v2951
    %4735 = vmatprep.subr.mxu0 %v2956
    %4736 = vmatpush1.msra.mxu0 %v2955
    %4737 = vmatprep.subr.mxu0 %v2960
    %4738 = vmatpush1.msra.mxu0 %v2959
    %4739 = vmatprep.subr.mxu0 %v2964
    %4740 = vmatpush1.msra.mxu0 %v2963
    %4741 = vmatprep.subr.mxu0 %v2968
    %4742 = vmatpush1.msra.mxu0 %v2967
    %4743 = vmatprep.subr.mxu0 %v2972
    %4744 = vmatpush1.msra.mxu0 %v2971
    %4745 = vmatprep.subr.mxu0 %v2976
    %4746 = vmatpush1.msra.mxu0 %v2975
    %4747 = vmatprep.subr.mxu0 %v2980
    %4748 = vmatpush1.msra.mxu0 %v2979
    %4749 = vmatprep.subr.mxu0 %v2984
    %4750 = vmatpush1.msra.mxu0 %v2983
    %4751 = vmatprep.subr.mxu0 %v2988
    %4752 = vmatpush1.msra.mxu0 %v2987
    %4753 = vmatprep.subr.mxu0 %v2992
    %4754 = vmatpush1.msra.mxu0 %v2991
    %4755 = vmatprep.mubr.f32.mxu0 %v2242
    %4756 = vmatmul.mubr.f32.gmra.mrb[0].mxu0 %v2241
    %v4757 = vpop.f32.mrb[0].mxu0
    %v4758 = vadd.f32 %v4645, %v4757
    %v4759 = vpop.f32.mrb[0].mxu0
    %v4760 = vadd.f32 %v4647, %v4759
    %4761 = vmatprep.mubr.f32.mxu0 %v2257
    %4762 = vmatmul.mubr.f32.gmra.mrb[0].mxu0 %v2256
    %v4763 = vpop.f32.mrb[0].mxu0
    %v4764 = vadd.f32 %v4651, %v4763
    %v4765 = vpop.f32.mrb[0].mxu0
    %v4766 = vadd.f32 %v4653, %v4765
    %4767 = vmatprep.mubr.f32.mxu0 %v2272
    %4768 = vmatmul.mubr.f32.gmra.mrb[0].mxu0 %v2271
    %v4769 = vpop.f32.mrb[0].mxu0
    %v4770 = vadd.f32 %v4657, %v4769
    %v4771 = vpop.f32.mrb[0].mxu0
    %v4772 = vadd.f32 %v4659, %v4771
    %4773 = vmatprep.mubr.f32.mxu0 %v2287
    %4774 = vmatmul.mubr.f32.gmra.mrb[0].mxu0 %v2286
    %v4775 = vpop.f32.mrb[0].mxu0
    %v4776 = vadd.f32 %v4663, %v4775
    %v4777 = vpop.f32.mrb[0].mxu0
    %v4778 = vadd.f32 %v4665, %v4777
    %4779 = vmatprep.mubr.f32.mxu0 %v2302
    %4780 = vmatmul.mubr.f32.gmra.mrb[0].mxu0 %v2301
    %v4781 = vpop.f32.mrb[0].mxu0
    %v4782 = vadd.f32 %v4669, %v4781
    %v4783 = vpop.f32.mrb[0].mxu0
    %v4784 = vadd.f32 %v4671, %v4783
    %4785 = vmatprep.mubr.f32.mxu0 %v2317
    %4786 = vmatmul.mubr.f32.gmra.mrb[0].mxu0 %v2316
    %v4787 = vpop.f32.mrb[0].mxu0
    %v4788 = vadd.f32 %v4675, %v4787
    %v4789 = vpop.f32.mrb[0].mxu0
    %v4790 = vadd.f32 %v4677, %v4789
    %4791 = vmatprep.mubr.f32.mxu0 %v2332
    %4792 = vmatmul.mubr.f32.gmra.mrb[0].mxu0 %v2331
    %v4793 = vpop.f32.mrb[0].mxu0
    %v4794 = vadd.f32 %v4681, %v4793
    %v4795 = vpop.f32.mrb[0].mxu0
    %v4796 = vadd.f32 %v4683, %v4795
    %4797 = vmatprep.mubr.f32.mxu0 %v2347
    %4798 = vmatmul.mubr.f32.gmra.mrb[0].mxu0 %v2346
    %v4799 = vpop.f32.mrb[0].mxu0
    %v4800 = vadd.f32 %v4687, %v4799
    %v4801 = vpop.f32.mrb[0].mxu0
    %v4802 = vadd.f32 %v4689, %v4801
    %4803 = vdwg.mxu0
    %4804 = vmatprep.subr.mxu0 %v2996
    %4805 = vmatpush1.msra.mxu0 %v2995
    %4806 = vmatprep.subr.mxu0 %v3000
    %4807 = vmatpush1.msra.mxu0 %v2999
    %4808 = vmatprep.subr.mxu0 %v3004
    %4809 = vmatpush1.msra.mxu0 %v3003
    %4810 = vmatprep.subr.mxu0 %v3008
    %4811 = vmatpush1.msra.mxu0 %v3007
    %4812 = vmatprep.subr.mxu0 %v3012
    %4813 = vmatpush1.msra.mxu0 %v3011
    %4814 = vmatprep.subr.mxu0 %v3016
    %4815 = vmatpush1.msra.mxu0 %v3015
    %4816 = vmatprep.subr.mxu0 %v3020
    %4817 = vmatpush1.msra.mxu0 %v3019
    %4818 = vmatprep.subr.mxu0 %v3024
    %4819 = vmatpush1.msra.mxu0 %v3023
    %4820 = vmatprep.subr.mxu0 %v3028
    %4821 = vmatpush1.msra.mxu0 %v3027
    %4822 = vmatprep.subr.mxu0 %v3032
    %4823 = vmatpush1.msra.mxu0 %v3031
    %4824 = vmatprep.subr.mxu0 %v3036
    %4825 = vmatpush1.msra.mxu0 %v3035
    %4826 = vmatprep.subr.mxu0 %v3040
    %4827 = vmatpush1.msra.mxu0 %v3039
    %4828 = vmatprep.subr.mxu0 %v3044
    %4829 = vmatpush1.msra.mxu0 %v3043
    %4830 = vmatprep.subr.mxu0 %v3048
    %4831 = vmatpush1.msra.mxu0 %v3047
    %4832 = vmatprep.subr.mxu0 %v3052
    %4833 = vmatpush1.msra.mxu0 %v3051
    %4834 = vmatprep.subr.mxu0 %v3056
    %4835 = vmatpush1.msra.mxu0 %v3055
    %4836 = vmatprep.subr.mxu0 %v3060
    %4837 = vmatpush1.msra.mxu0 %v3059
    %4838 = vmatprep.subr.mxu0 %v3064
    %4839 = vmatpush1.msra.mxu0 %v3063
    %4840 = vmatprep.subr.mxu0 %v3068
    %4841 = vmatpush1.msra.mxu0 %v3067
    %4842 = vmatprep.subr.mxu0 %v3072
    %4843 = vmatpush1.msra.mxu0 %v3071
    %4844 = vmatprep.subr.mxu0 %v3076
    %4845 = vmatpush1.msra.mxu0 %v3075
    %4846 = vmatprep.subr.mxu0 %v3080
    %4847 = vmatpush1.msra.mxu0 %v3079
    %4848 = vmatprep.subr.mxu0 %v3084
    %4849 = vmatpush1.msra.mxu0 %v3083
    %4850 = vmatprep.subr.mxu0 %v3088
    %4851 = vmatpush1.msra.mxu0 %v3087
    %4852 = vmatprep.subr.mxu0 %v3092
    %4853 = vmatpush1.msra.mxu0 %v3091
    %4854 = vmatprep.subr.mxu0 %v3096
    %4855 = vmatpush1.msra.mxu0 %v3095
    %4856 = vmatprep.subr.mxu0 %v3100
    %4857 = vmatpush1.msra.mxu0 %v3099
    %4858 = vmatprep.subr.mxu0 %v3104
    %4859 = vmatpush1.msra.mxu0 %v3103
    %4860 = vmatprep.subr.mxu0 %v3108
    %4861 = vmatpush1.msra.mxu0 %v3107
    %4862 = vmatprep.subr.mxu0 %v3112
    %4863 = vmatpush1.msra.mxu0 %v3111
    %4864 = vmatprep.subr.mxu0 %v3116
    %4865 = vmatpush1.msra.mxu0 %v3115
    %4866 = vmatprep.subr.mxu0 %v3120
    %4867 = vmatpush1.msra.mxu0 %v3119
    %4868 = vmatprep.mubr.f32.mxu0 %v2244
    %4869 = vmatmul.mubr.f32.gmra.mrb[0].mxu0 %v2243
    %v4870 = vpop.f32.mrb[0].mxu0
    %v4871 = vadd.f32 %v4758, %v4870
    %v4872 = vpop.f32.mrb[0].mxu0
    %v4873 = vadd.f32 %v4760, %v4872
    %4874 = vmatprep.mubr.f32.mxu0 %v2259
    %4875 = vmatmul.mubr.f32.gmra.mrb[0].mxu0 %v2258
    %v4876 = vpop.f32.mrb[0].mxu0
    %v4877 = vadd.f32 %v4764, %v4876
    %v4878 = vpop.f32.mrb[0].mxu0
    %v4879 = vadd.f32 %v4766, %v4878
    %4880 = vmatprep.mubr.f32.mxu0 %v2274
    %4881 = vmatmul.mubr.f32.gmra.mrb[0].mxu0 %v2273
    %v4882 = vpop.f32.mrb[0].mxu0
    %v4883 = vadd.f32 %v4770, %v4882
    %v4884 = vpop.f32.mrb[0].mxu0
    %v4885 = vadd.f32 %v4772, %v4884
    %4886 = vmatprep.mubr.f32.mxu0 %v2289
    %4887 = vmatmul.mubr.f32.gmra.mrb[0].mxu0 %v2288
    %v4888 = vpop.f32.mrb[0].mxu0
    %v4889 = vadd.f32 %v4776, %v4888
    %v4890 = vpop.f32.mrb[0].mxu0
    %v4891 = vadd.f32 %v4778, %v4890
    %4892 = vmatprep.mubr.f32.mxu0 %v2304
    %4893 = vmatmul.mubr.f32.gmra.mrb[0].mxu0 %v2303
    %v4894 = vpop.f32.mrb[0].mxu0
    %v4895 = vadd.f32 %v4782, %v4894
    %v4896 = vpop.f32.mrb[0].mxu0
    %v4897 = vadd.f32 %v4784, %v4896
    %4898 = vmatprep.mubr.f32.mxu0 %v2319
    %4899 = vmatmul.mubr.f32.gmra.mrb[0].mxu0 %v2318
    %v4900 = vpop.f32.mrb[0].mxu0
    %v4901 = vadd.f32 %v4788, %v4900
    %v4902 = vpop.f32.mrb[0].mxu0
    %v4903 = vadd.f32 %v4790, %v4902
    %4904 = vmatprep.mubr.f32.mxu0 %v2334
    %4905 = vmatmul.mubr.f32.gmra.mrb[0].mxu0 %v2333
    %v4906 = vpop.f32.mrb[0].mxu0
    %v4907 = vadd.f32 %v4794, %v4906
    %v4908 = vpop.f32.mrb[0].mxu0
    %v4909 = vadd.f32 %v4796, %v4908
    %4910 = vmatprep.mubr.f32.mxu0 %v2349
    %4911 = vmatmul.mubr.f32.gmra.mrb[0].mxu0 %v2348
    %v4912 = vpop.f32.mrb[0].mxu0
    %v4913 = vadd.f32 %v4800, %v4912
    %v4914 = vpop.f32.mrb[0].mxu0
    %v4915 = vadd.f32 %v4802, %v4914
    %4916 = vdwg.mxu0
    %4917 = vmatprep.subr.mxu0 %v3124
    %4918 = vmatpush1.msra.mxu0 %v3123
    %4919 = vmatprep.subr.mxu0 %v3128
    %4920 = vmatpush1.msra.mxu0 %v3127
    %4921 = vmatprep.subr.mxu0 %v3132
    %4922 = vmatpush1.msra.mxu0 %v3131
    %4923 = vmatprep.subr.mxu0 %v3136
    %4924 = vmatpush1.msra.mxu0 %v3135
    %4925 = vmatprep.subr.mxu0 %v3140
    %4926 = vmatpush1.msra.mxu0 %v3139
    %4927 = vmatprep.subr.mxu0 %v3144
    %4928 = vmatpush1.msra.mxu0 %v3143
    %4929 = vmatprep.subr.mxu0 %v3148
    %4930 = vmatpush1.msra.mxu0 %v3147
    %4931 = vmatprep.subr.mxu0 %v3152
    %4932 = vmatpush1.msra.mxu0 %v3151
    %4933 = vmatprep.subr.mxu0 %v3156
    %4934 = vmatpush1.msra.mxu0 %v3155
    %4935 = vmatprep.subr.mxu0 %v3160
    %4936 = vmatpush1.msra.mxu0 %v3159
    %4937 = vmatprep.subr.mxu0 %v3164
    %4938 = vmatpush1.msra.mxu0 %v3163
    %4939 = vmatprep.subr.mxu0 %v3168
    %4940 = vmatpush1.msra.mxu0 %v3167
    %4941 = vmatprep.subr.mxu0 %v3172
    %4942 = vmatpush1.msra.mxu0 %v3171
    %4943 = vmatprep.subr.mxu0 %v3176
    %4944 = vmatpush1.msra.mxu0 %v3175
    %4945 = vmatprep.subr.mxu0 %v3180
    %4946 = vmatpush1.msra.mxu0 %v3179
    %4947 = vmatprep.subr.mxu0 %v3184
    %4948 = vmatpush1.msra.mxu0 %v3183
    %4949 = vmatprep.subr.mxu0 %v3188
    %4950 = vmatpush1.msra.mxu0 %v3187
    %4951 = vmatprep.subr.mxu0 %v3192
    %4952 = vmatpush1.msra.mxu0 %v3191
    %4953 = vmatprep.subr.mxu0 %v3196
    %4954 = vmatpush1.msra.mxu0 %v3195
    %4955 = vmatprep.subr.mxu0 %v3200
    %4956 = vmatpush1.msra.mxu0 %v3199
    %4957 = vmatprep.subr.mxu0 %v3204
    %4958 = vmatpush1.msra.mxu0 %v3203
    %4959 = vmatprep.subr.mxu0 %v3208
    %4960 = vmatpush1.msra.mxu0 %v3207
    %4961 = vmatprep.subr.mxu0 %v3212
    %4962 = vmatpush1.msra.mxu0 %v3211
    %4963 = vmatprep.subr.mxu0 %v3216
    %4964 = vmatpush1.msra.mxu0 %v3215
    %4965 = vmatprep.subr.mxu0 %v3220
    %4966 = vmatpush1.msra.mxu0 %v3219
    %4967 = vmatprep.subr.mxu0 %v3224
    %4968 = vmatpush1.msra.mxu0 %v3223
    %4969 = vmatprep.subr.mxu0 %v3228
    %4970 = vmatpush1.msra.mxu0 %v3227
    %4971 = vmatprep.subr.mxu0 %v3232
    %4972 = vmatpush1.msra.mxu0 %v3231
    %4973 = vmatprep.subr.mxu0 %v3236
    %4974 = vmatpush1.msra.mxu0 %v3235
    %4975 = vmatprep.subr.mxu0 %v3240
    %4976 = vmatpush1.msra.mxu0 %v3239
    %4977 = vmatprep.subr.mxu0 %v3244
    %4978 = vmatpush1.msra.mxu0 %v3243
    %4979 = vmatprep.subr.mxu0 %v3248
    %4980 = vmatpush1.msra.mxu0 %v3247
    %4981 = vmatprep.mubr.f32.mxu0 %v2246
    %4982 = vmatmul.mubr.f32.gmra.mrb[0].mxu0 %v2245
    %v4983 = vpop.f32.mrb[0].mxu0
    %v4984 = vadd.f32 %v4871, %v4983
    %v4985 = vpop.f32.mrb[0].mxu0
    %v4986 = vadd.f32 %v4873, %v4985
    %4987 = vmatprep.mubr.f32.mxu0 %v2261
    %4988 = vmatmul.mubr.f32.gmra.mrb[0].mxu0 %v2260
    %v4989 = vpop.f32.mrb[0].mxu0
    %v4990 = vadd.f32 %v4877, %v4989
    %v4991 = vpop.f32.mrb[0].mxu0
    %v4992 = vadd.f32 %v4879, %v4991
    %4993 = vmatprep.mubr.f32.mxu0 %v2276
    %4994 = vmatmul.mubr.f32.gmra.mrb[0].mxu0 %v2275
    %v4995 = vpop.f32.mrb[0].mxu0
    %v4996 = vadd.f32 %v4883, %v4995
    %v4997 = vpop.f32.mrb[0].mxu0
    %v4998 = vadd.f32 %v4885, %v4997
    %4999 = vmatprep.mubr.f32.mxu0 %v2291
    %5000 = vmatmul.mubr.f32.gmra.mrb[0].mxu0 %v2290
    %v5001 = vpop.f32.mrb[0].mxu0
    %v5002 = vadd.f32 %v4889, %v5001
    %v5003 = vpop.f32.mrb[0].mxu0
    %v5004 = vadd.f32 %v4891, %v5003
    %5005 = vmatprep.mubr.f32.mxu0 %v2306
    %5006 = vmatmul.mubr.f32.gmra.mrb[0].mxu0 %v2305
    %v5007 = vpop.f32.mrb[0].mxu0
    %v5008 = vadd.f32 %v4895, %v5007
    %v5009 = vpop.f32.mrb[0].mxu0
    %v5010 = vadd.f32 %v4897, %v5009
    %5011 = vmatprep.mubr.f32.mxu0 %v2321
    %5012 = vmatmul.mubr.f32.gmra.mrb[0].mxu0 %v2320
    %v5013 = vpop.f32.mrb[0].mxu0
    %v5014 = vadd.f32 %v4901, %v5013
    %v5015 = vpop.f32.mrb[0].mxu0
    %v5016 = vadd.f32 %v4903, %v5015
    %5017 = vmatprep.mubr.f32.mxu0 %v2336
    %5018 = vmatmul.mubr.f32.gmra.mrb[0].mxu0 %v2335
    %v5019 = vpop.f32.mrb[0].mxu0
    %v5020 = vadd.f32 %v4907, %v5019
    %v5021 = vpop.f32.mrb[0].mxu0
    %v5022 = vadd.f32 %v4909, %v5021
    %5023 = vmatprep.mubr.f32.mxu0 %v2351
    %5024 = vmatmul.mubr.f32.gmra.mrb[0].mxu0 %v2350
    %v5025 = vpop.f32.mrb[0].mxu0
    %v5026 = vadd.f32 %v4913, %v5025
    %v5027 = vpop.f32.mrb[0].mxu0
    %v5028 = vadd.f32 %v4915, %v5027
    %5029 = vdwg.mxu0
    %5030 = vmatprep.subr.mxu0 %v3252
    %5031 = vmatpush1.msra.mxu0 %v3251
    %5032 = vmatprep.subr.mxu0 %v3256
    %5033 = vmatpush1.msra.mxu0 %v3255
    %5034 = vmatprep.subr.mxu0 %v3260
    %5035 = vmatpush1.msra.mxu0 %v3259
    %5036 = vmatprep.subr.mxu0 %v3264
    %5037 = vmatpush1.msra.mxu0 %v3263
    %5038 = vmatprep.subr.mxu0 %v3268
    %5039 = vmatpush1.msra.mxu0 %v3267
    %5040 = vmatprep.subr.mxu0 %v3272
    %5041 = vmatpush1.msra.mxu0 %v3271
    %5042 = vmatprep.subr.mxu0 %v3276
    %5043 = vmatpush1.msra.mxu0 %v3275
    %5044 = vmatprep.subr.mxu0 %v3280
    %5045 = vmatpush1.msra.mxu0 %v3279
    %5046 = vmatprep.subr.mxu0 %v3284
    %5047 = vmatpush1.msra.mxu0 %v3283
    %5048 = vmatprep.subr.mxu0 %v3288
    %5049 = vmatpush1.msra.mxu0 %v3287
    %5050 = vmatprep.subr.mxu0 %v3292
    %5051 = vmatpush1.msra.mxu0 %v3291
    %5052 = vmatprep.subr.mxu0 %v3296
    %5053 = vmatpush1.msra.mxu0 %v3295
    %5054 = vmatprep.subr.mxu0 %v3300
    %5055 = vmatpush1.msra.mxu0 %v3299
    %5056 = vmatprep.subr.mxu0 %v3304
    %5057 = vmatpush1.msra.mxu0 %v3303
    %5058 = vmatprep.subr.mxu0 %v3308
    %5059 = vmatpush1.msra.mxu0 %v3307
    %5060 = vmatprep.subr.mxu0 %v3312
    %5061 = vmatpush1.msra.mxu0 %v3311
    %5062 = vmatprep.subr.mxu0 0.0
    %5063 = vmatpush1.msra.mxu0 0.0
    %5064 = vmatprep.subr.mxu0 0.0
    %5065 = vmatpush1.msra.mxu0 0.0
    %5066 = vmatprep.subr.mxu0 0.0
    %5067 = vmatpush1.msra.mxu0 0.0
    %5068 = vmatprep.subr.mxu0 0.0
    %5069 = vmatpush1.msra.mxu0 0.0
    %5070 = vmatprep.subr.mxu0 0.0
    %5071 = vmatpush1.msra.mxu0 0.0
    %5072 = vmatprep.subr.mxu0 0.0
    %5073 = vmatpush1.msra.mxu0 0.0
    %5074 = vmatprep.subr.mxu0 0.0
    %5075 = vmatpush1.msra.mxu0 0.0
    %5076 = vmatprep.subr.mxu0 0.0
    %5077 = vmatpush1.msra.mxu0 0.0
    %5078 = vmatprep.subr.mxu0 0.0
    %5079 = vmatpush1.msra.mxu0 0.0
    %5080 = vmatprep.subr.mxu0 0.0
    %5081 = vmatpush1.msra.mxu0 0.0
    %5082 = vmatprep.subr.mxu0 0.0
    %5083 = vmatpush1.msra.mxu0 0.0
    %5084 = vmatprep.subr.mxu0 0.0
    %5085 = vmatpush1.msra.mxu0 0.0
    %5086 = vmatprep.subr.mxu0 0.0
    %5087 = vmatpush1.msra.mxu0 0.0
    %5088 = vmatprep.subr.mxu0 0.0
    %5089 = vmatpush1.msra.mxu0 0.0
    %5090 = vmatprep.subr.mxu0 0.0
    %5091 = vmatpush1.msra.mxu0 0.0
    %5092 = vmatprep.subr.mxu0 0.0
    %5093 = vmatpush1.msra.mxu0 0.0
    %5094 = vmatprep.mubr.f32.mxu0 0.0
    %5095 = vmatmul.mubr.f32.gmra.mrb[0].mxu0 %v2247
    %v5096 = vpop.f32.mrb[0].mxu0
    %v5097 = vadd.f32 %v4984, %v5096
    %v5098 = vpop.f32.mrb[0].mxu0
    %v5099 = vadd.f32 %v4986, %v5098
    %5100 = vmatprep.mubr.f32.mxu0 0.0
    %5101 = vmatmul.mubr.f32.gmra.mrb[0].mxu0 %v2262
    %v5102 = vpop.f32.mrb[0].mxu0
    %v5103 = vadd.f32 %v4990, %v5102
    %v5104 = vpop.f32.mrb[0].mxu0
    %v5105 = vadd.f32 %v4992, %v5104
    %5106 = vmatprep.mubr.f32.mxu0 0.0
    %5107 = vmatmul.mubr.f32.gmra.mrb[0].mxu0 %v2277
    %v5108 = vpop.f32.mrb[0].mxu0
    %v5109 = vadd.f32 %v4996, %v5108
    %v5110 = vpop.f32.mrb[0].mxu0
    %v5111 = vadd.f32 %v4998, %v5110
    %5112 = vmatprep.mubr.f32.mxu0 0.0
    %5113 = vmatmul.mubr.f32.gmra.mrb[0].mxu0 %v2292
    %v5114 = vpop.f32.mrb[0].mxu0
    %v5115 = vadd.f32 %v5002, %v5114
    %v5116 = vpop.f32.mrb[0].mxu0
    %v5117 = vadd.f32 %v5004, %v5116
    %5118 = vmatprep.mubr.f32.mxu0 0.0
    %5119 = vmatmul.mubr.f32.gmra.mrb[0].mxu0 %v2307
    %v5120 = vpop.f32.mrb[0].mxu0
    %v5121 = vadd.f32 %v5008, %v5120
    %v5122 = vpop.f32.mrb[0].mxu0
    %v5123 = vadd.f32 %v5010, %v5122
    %5124 = vmatprep.mubr.f32.mxu0 0.0
    %5125 = vmatmul.mubr.f32.gmra.mrb[0].mxu0 %v2322
    %v5126 = vpop.f32.mrb[0].mxu0
    %v5127 = vadd.f32 %v5014, %v5126
    %v5128 = vpop.f32.mrb[0].mxu0
    %v5129 = vadd.f32 %v5016, %v5128
    %5130 = vmatprep.mubr.f32.mxu0 0.0
    %5131 = vmatmul.mubr.f32.gmra.mrb[0].mxu0 %v2337
    %v5132 = vpop.f32.mrb[0].mxu0
    %v5133 = vadd.f32 %v5020, %v5132
    %v5134 = vpop.f32.mrb[0].mxu0
    %v5135 = vadd.f32 %v5022, %v5134
    %5136 = vmatprep.mubr.f32.mxu0 0.0
    %5137 = vmatmul.mubr.f32.gmra.mrb[0].mxu0 %v2352
    %v5138 = vpop.f32.mrb[0].mxu0
    %v5139 = vadd.f32 %v5026, %v5138
    %v5140 = vpop.f32.mrb[0].mxu0
    %v5141 = vadd.f32 %v5028, %v5140
    %5142 = vdwg.mxu0
    %v5143 = vmax.f32 %v4193, 0.0
    %v5144 = vmax.f32 %v4195, 0.0
    %v5145 = vmax.f32 %v5097, 0.0
    %v5146 = vmax.f32 %v5099, 0.0
    %v5147 = vmax.f32 %v4199, 0.0
    %v5148 = vmax.f32 %v4201, 0.0
    %v5149 = vmax.f32 %v5103, 0.0
    %v5150 = vmax.f32 %v5105, 0.0
    %v5151 = vmax.f32 %v4205, 0.0
    %v5152 = vmax.f32 %v4207, 0.0
    %v5153 = vmax.f32 %v5109, 0.0
    %v5154 = vmax.f32 %v5111, 0.0
    %v5155 = vmax.f32 %v4211, 0.0
    %v5156 = vmax.f32 %v4213, 0.0
    %v5157 = vmax.f32 %v5115, 0.0
    %v5158 = vmax.f32 %v5117, 0.0
    %v5159 = vmax.f32 %v4217, 0.0
    %v5160 = vmax.f32 %v4219, 0.0
    %v5161 = vmax.f32 %v5121, 0.0
    %v5162 = vmax.f32 %v5123, 0.0
    %v5163 = vmax.f32 %v4223, 0.0
    %v5164 = vmax.f32 %v4225, 0.0
    %v5165 = vmax.f32 %v5127, 0.0
    %v5166 = vmax.f32 %v5129, 0.0
    %v5167 = vmax.f32 %v4229, 0.0
    %v5168 = vmax.f32 %v4231, 0.0
    %v5169 = vmax.f32 %v5133, 0.0
    %v5170 = vmax.f32 %v5135, 0.0
    %v5171 = vmax.f32 %v4235, 0.0
    %v5172 = vmax.f32 %v4237, 0.0
    %v5173 = vmax.f32 %v5139, 0.0
    %v5174 = vmax.f32 %v5141, 0.0
    %v5175 = vld [vmem:[#allocation14] sm:$0xff]
    %v5176 = vld [vmem:[#allocation14 + $0x8] sm:$0xff]
    %v5177 = vld [vmem:[#allocation14 + $0x10] sm:$0xff]
    %v5178 = vld [vmem:[#allocation14 + $0x18] sm:$0xff]
    %v5179 = vld [vmem:[#allocation14 + $0x20] sm:$0xff]
    %v5180 = vld [vmem:[#allocation14 + $0x28] sm:$0xff]
    %v5181 = vld [vmem:[#allocation14 + $0x30] sm:$0xff]
    %v5182 = vld [vmem:[#allocation14 + $0x38] sm:$0xff]
    %v5183 = vld [vmem:[#allocation14 + $0x40] sm:$0xff]
    %v5184 = vld [vmem:[#allocation14 + $0x48] sm:$0xff]
    %v5185 = vld [vmem:[#allocation14 + $0x50] sm:$0xff]
    %v5186 = vld [vmem:[#allocation14 + $0x58] sm:$0xff]
    %v5187 = vld [vmem:[#allocation14 + $0x60] sm:$0xff]
    %v5188 = vld [vmem:[#allocation14 + $0x68] sm:$0xff]
    %v5189 = vld [vmem:[#allocation14 + $0x70] sm:$0xff]
    %v5190 = vld [vmem:[#allocation14 + $0x78] sm:$0xff]
    %v5191 = vld [vmem:[#allocation14 + $0x80] sm:$0xff]
    %v5192 = vld [vmem:[#allocation14 + $0x88] sm:$0xff]
    %v5193 = vld [vmem:[#allocation14 + $0x90] sm:$0xff]
    %v5194 = vld [vmem:[#allocation14 + $0x98] sm:$0xff]
    %v5195 = vld [vmem:[#allocation14 + $0xa0] sm:$0xff]
    %v5196 = vld [vmem:[#allocation14 + $0xa8] sm:$0xff]
    %v5197 = vld [vmem:[#allocation14 + $0xb0] sm:$0xff]
    %v5198 = vld [vmem:[#allocation14 + $0xb8] sm:$0xff]
    %v5199 = vld [vmem:[#allocation14 + $0xc0] sm:$0xff]
    %v5200 = vld [vmem:[#allocation14 + $0xc8] sm:$0xff]
    %v5201 = vld [vmem:[#allocation14 + $0xd0] sm:$0xff]
    %v5202 = vld [vmem:[#allocation14 + $0xd8] sm:$0xff]
    %v5203 = vld [vmem:[#allocation14 + $0xe0] sm:$0xff]
    %v5204 = vld [vmem:[#allocation14 + $0xe8] sm:$0xff]
    %v5205 = vld [vmem:[#allocation14 + $0xf0] sm:$0xff]
    %v5206 = vld [vmem:[#allocation14 + $0xf8] sm:$0xff]
    %v5207 = vld [vmem:[#allocation14 + $0x100] sm:$0xff]
    %v5208 = vld [vmem:[#allocation14 + $0x108] sm:$0xff]
    %v5209 = vld [vmem:[#allocation14 + $0x110] sm:$0xff]
    %v5210 = vld [vmem:[#allocation14 + $0x118] sm:$0xff]
    %v5211 = vld [vmem:[#allocation14 + $0x120] sm:$0xff]
    %v5212 = vld [vmem:[#allocation14 + $0x128] sm:$0xff]
    %v5213 = vld [vmem:[#allocation14 + $0x130] sm:$0xff]
    %v5214 = vld [vmem:[#allocation14 + $0x138] sm:$0xff]
    %v5215 = vld [vmem:[#allocation14 + $0x140] sm:$0xff]
    %v5216 = vld [vmem:[#allocation14 + $0x148] sm:$0xff]
    %v5217 = vld [vmem:[#allocation14 + $0x150] sm:$0xff]
    %v5218 = vld [vmem:[#allocation14 + $0x158] sm:$0xff]
    %v5219 = vld [vmem:[#allocation14 + $0x160] sm:$0xff]
    %v5220 = vld [vmem:[#allocation14 + $0x168] sm:$0xff]
    %v5221 = vld [vmem:[#allocation14 + $0x170] sm:$0xff]
    %v5222 = vld [vmem:[#allocation14 + $0x178] sm:$0xff]
    %v5223 = vld [vmem:[#allocation14 + $0x180] sm:$0xff]
    %v5224 = vld [vmem:[#allocation14 + $0x188] sm:$0xff]
    %v5225 = vld [vmem:[#allocation14 + $0x190] sm:$0xff]
    %v5226 = vld [vmem:[#allocation14 + $0x198] sm:$0xff]
    %v5227 = vld [vmem:[#allocation14 + $0x1a0] sm:$0xff]
    %v5228 = vld [vmem:[#allocation14 + $0x1a8] sm:$0xff]
    %v5229 = vld [vmem:[#allocation14 + $0x1b0] sm:$0xff]
    %v5230 = vld [vmem:[#allocation14 + $0x1b8] sm:$0xff]
    %v5231 = vld [vmem:[#allocation14 + $0x1c0] sm:$0xff]
    %v5232 = vld [vmem:[#allocation14 + $0x1c8] sm:$0xff]
    %v5233 = vld [vmem:[#allocation14 + $0x1d0] sm:$0xff]
    %v5234 = vld [vmem:[#allocation14 + $0x1d8] sm:$0xff]
    %v5235 = vld [vmem:[#allocation14 + $0x1e0] sm:$0xff]
    %v5236 = vld [vmem:[#allocation14 + $0x1e8] sm:$0xff]
    %v5237 = vld [vmem:[#allocation14 + $0x1f0] sm:$0xff]
    %v5238 = vld [vmem:[#allocation14 + $0x1f8] sm:$0xff]
    %s5239 = scalar_lea.vmem [#allocation14], 512
    %v5240 = vld [vmem:[%s5239] sm:$0xff]
    %v5241 = vld [vmem:[%s5239 + $0x8] sm:$0xff]
    %v5242 = vld [vmem:[%s5239 + $0x10] sm:$0xff]
    %v5243 = vld [vmem:[%s5239 + $0x18] sm:$0xff]
    %v5244 = vld [vmem:[%s5239 + $0x20] sm:$0xff]
    %v5245 = vld [vmem:[%s5239 + $0x28] sm:$0xff]
    %v5246 = vld [vmem:[%s5239 + $0x30] sm:$0xff]
    %v5247 = vld [vmem:[%s5239 + $0x38] sm:$0xff]
    %v5248 = vld [vmem:[%s5239 + $0x40] sm:$0xff]
    %v5249 = vld [vmem:[%s5239 + $0x48] sm:$0xff]
    %v5250 = vld [vmem:[%s5239 + $0x50] sm:$0xff]
    %v5251 = vld [vmem:[%s5239 + $0x58] sm:$0xff]
    %v5252 = vld [vmem:[%s5239 + $0x60] sm:$0xff]
    %v5253 = vld [vmem:[%s5239 + $0x68] sm:$0xff]
    %v5254 = vld [vmem:[%s5239 + $0x70] sm:$0xff]
    %v5255 = vld [vmem:[%s5239 + $0x78] sm:$0xff]
    %v5256 = vld [vmem:[%s5239 + $0x80] sm:$0xff]
    %v5257 = vld [vmem:[%s5239 + $0x88] sm:$0xff]
    %v5258 = vld [vmem:[%s5239 + $0x90] sm:$0xff]
    %v5259 = vld [vmem:[%s5239 + $0x98] sm:$0xff]
    %v5260 = vld [vmem:[%s5239 + $0xa0] sm:$0xff]
    %v5261 = vld [vmem:[%s5239 + $0xa8] sm:$0xff]
    %v5262 = vld [vmem:[%s5239 + $0xb0] sm:$0xff]
    %v5263 = vld [vmem:[%s5239 + $0xb8] sm:$0xff]
    %v5264 = vld [vmem:[%s5239 + $0xc0] sm:$0xff]
    %v5265 = vld [vmem:[%s5239 + $0xc8] sm:$0xff]
    %v5266 = vld [vmem:[%s5239 + $0xd0] sm:$0xff]
    %v5267 = vld [vmem:[%s5239 + $0xd8] sm:$0xff]
    %v5268 = vld [vmem:[%s5239 + $0xe0] sm:$0xff]
    %v5269 = vld [vmem:[%s5239 + $0xe8] sm:$0xff]
    %v5270 = vld [vmem:[%s5239 + $0xf0] sm:$0xff]
    %v5271 = vld [vmem:[%s5239 + $0xf8] sm:$0xff]
    %v5272 = vld [vmem:[%s5239 + $0x100] sm:$0xff]
    %v5273 = vld [vmem:[%s5239 + $0x108] sm:$0xff]
    %v5274 = vld [vmem:[%s5239 + $0x110] sm:$0xff]
    %v5275 = vld [vmem:[%s5239 + $0x118] sm:$0xff]
    %v5276 = vld [vmem:[%s5239 + $0x120] sm:$0xff]
    %v5277 = vld [vmem:[%s5239 + $0x128] sm:$0xff]
    %v5278 = vld [vmem:[%s5239 + $0x130] sm:$0xff]
    %v5279 = vld [vmem:[%s5239 + $0x138] sm:$0xff]
    %v5280 = vld [vmem:[%s5239 + $0x140] sm:$0xff]
    %v5281 = vld [vmem:[%s5239 + $0x148] sm:$0xff]
    %v5282 = vld [vmem:[%s5239 + $0x150] sm:$0xff]
    %v5283 = vld [vmem:[%s5239 + $0x158] sm:$0xff]
    %v5284 = vld [vmem:[%s5239 + $0x160] sm:$0xff]
    %v5285 = vld [vmem:[%s5239 + $0x168] sm:$0xff]
    %v5286 = vld [vmem:[%s5239 + $0x170] sm:$0xff]
    %v5287 = vld [vmem:[%s5239 + $0x178] sm:$0xff]
    %v5288 = vld [vmem:[%s5239 + $0x180] sm:$0xff]
    %v5289 = vld [vmem:[%s5239 + $0x188] sm:$0xff]
    %v5290 = vld [vmem:[%s5239 + $0x190] sm:$0xff]
    %v5291 = vld [vmem:[%s5239 + $0x198] sm:$0xff]
    %v5292 = vld [vmem:[%s5239 + $0x1a0] sm:$0xff]
    %v5293 = vld [vmem:[%s5239 + $0x1a8] sm:$0xff]
    %v5294 = vld [vmem:[%s5239 + $0x1b0] sm:$0xff]
    %v5295 = vld [vmem:[%s5239 + $0x1b8] sm:$0xff]
    %v5296 = vld [vmem:[%s5239 + $0x1c0] sm:$0xff]
    %v5297 = vld [vmem:[%s5239 + $0x1c8] sm:$0xff]
    %v5298 = vld [vmem:[%s5239 + $0x1d0] sm:$0xff]
    %v5299 = vld [vmem:[%s5239 + $0x1d8] sm:$0xff]
    %v5300 = vld [vmem:[%s5239 + $0x1e0] sm:$0xff]
    %v5301 = vld [vmem:[%s5239 + $0x1e8] sm:$0xff]
    %v5302 = vld [vmem:[%s5239 + $0x1f0] sm:$0xff]
    %v5303 = vld [vmem:[%s5239 + $0x1f8] sm:$0xff]
    %5304 = vmatprep.subr.mxu0 0.0
    %5305 = vmatpush1.msra.mxu0 %v5240
    %5306 = vmatprep.subr.mxu0 0.0
    %5307 = vmatpush1.msra.mxu0 %v5241
    %5308 = vmatprep.subr.mxu0 0.0
    %5309 = vmatpush1.msra.mxu0 %v5242
    %5310 = vmatprep.subr.mxu0 0.0
    %5311 = vmatpush1.msra.mxu0 %v5243
    %5312 = vmatprep.subr.mxu0 0.0
    %5313 = vmatpush1.msra.mxu0 %v5244
    %5314 = vmatprep.subr.mxu0 0.0
    %5315 = vmatpush1.msra.mxu0 %v5245
    %5316 = vmatprep.subr.mxu0 0.0
    %5317 = vmatpush1.msra.mxu0 %v5246
    %5318 = vmatprep.subr.mxu0 0.0
    %5319 = vmatpush1.msra.mxu0 %v5247
    %5320 = vmatprep.subr.mxu0 0.0
    %5321 = vmatpush1.msra.mxu0 %v5248
    %5322 = vmatprep.subr.mxu0 0.0
    %5323 = vmatpush1.msra.mxu0 %v5249
    %5324 = vmatprep.subr.mxu0 0.0
    %5325 = vmatpush1.msra.mxu0 %v5250
    %5326 = vmatprep.subr.mxu0 0.0
    %5327 = vmatpush1.msra.mxu0 %v5251
    %5328 = vmatprep.subr.mxu0 0.0
    %5329 = vmatpush1.msra.mxu0 %v5252
    %5330 = vmatprep.subr.mxu0 0.0
    %5331 = vmatpush1.msra.mxu0 %v5253
    %5332 = vmatprep.subr.mxu0 0.0
    %5333 = vmatpush1.msra.mxu0 %v5254
    %5334 = vmatprep.subr.mxu0 0.0
    %5335 = vmatpush1.msra.mxu0 %v5255
    %5336 = vmatprep.subr.mxu0 0.0
    %5337 = vmatpush1.msra.mxu0 %v5256
    %5338 = vmatprep.subr.mxu0 0.0
    %5339 = vmatpush1.msra.mxu0 %v5257
    %5340 = vmatprep.subr.mxu0 0.0
    %5341 = vmatpush1.msra.mxu0 %v5258
    %5342 = vmatprep.subr.mxu0 0.0
    %5343 = vmatpush1.msra.mxu0 %v5259
    %5344 = vmatprep.subr.mxu0 0.0
    %5345 = vmatpush1.msra.mxu0 %v5260
    %5346 = vmatprep.subr.mxu0 0.0
    %5347 = vmatpush1.msra.mxu0 %v5261
    %5348 = vmatprep.subr.mxu0 0.0
    %5349 = vmatpush1.msra.mxu0 %v5262
    %5350 = vmatprep.subr.mxu0 0.0
    %5351 = vmatpush1.msra.mxu0 %v5263
    %5352 = vmatprep.subr.mxu0 0.0
    %5353 = vmatpush1.msra.mxu0 %v5264
    %5354 = vmatprep.subr.mxu0 0.0
    %5355 = vmatpush1.msra.mxu0 %v5265
    %5356 = vmatprep.subr.mxu0 0.0
    %5357 = vmatpush1.msra.mxu0 %v5266
    %5358 = vmatprep.subr.mxu0 0.0
    %5359 = vmatpush1.msra.mxu0 %v5267
    %5360 = vmatprep.subr.mxu0 0.0
    %5361 = vmatpush1.msra.mxu0 %v5268
    %5362 = vmatprep.subr.mxu0 0.0
    %5363 = vmatpush1.msra.mxu0 %v5269
    %5364 = vmatprep.subr.mxu0 0.0
    %5365 = vmatpush1.msra.mxu0 %v5270
    %5366 = vmatprep.subr.mxu0 0.0
    %5367 = vmatpush1.msra.mxu0 %v5271
    %5368 = vmatprep.mubr.f32.mxu0 %v5148
    %5369 = vmatmul.mubr.f32.gmra.mrb[0].mxu0 %v5147
    %v5370 = vpop.f32.mrb[0].mxu0
    %v5371 = vadd.f32 0.0, %v5370
    %v5372 = vpop.f32.mrb[0].mxu0
    %5373 = vdwg.mxu0
    %5374 = vmatprep.subr.mxu0 0.0
    %5375 = vmatpush1.msra.mxu0 %v5272
    %5376 = vmatprep.subr.mxu0 0.0
    %5377 = vmatpush1.msra.mxu0 %v5273
    %5378 = vmatprep.subr.mxu0 0.0
    %5379 = vmatpush1.msra.mxu0 %v5274
    %5380 = vmatprep.subr.mxu0 0.0
    %5381 = vmatpush1.msra.mxu0 %v5275
    %5382 = vmatprep.subr.mxu0 0.0
    %5383 = vmatpush1.msra.mxu0 %v5276
    %5384 = vmatprep.subr.mxu0 0.0
    %5385 = vmatpush1.msra.mxu0 %v5277
    %5386 = vmatprep.subr.mxu0 0.0
    %5387 = vmatpush1.msra.mxu0 %v5278
    %5388 = vmatprep.subr.mxu0 0.0
    %5389 = vmatpush1.msra.mxu0 %v5279
    %5390 = vmatprep.subr.mxu0 0.0
    %5391 = vmatpush1.msra.mxu0 %v5280
    %5392 = vmatprep.subr.mxu0 0.0
    %5393 = vmatpush1.msra.mxu0 %v5281
    %5394 = vmatprep.subr.mxu0 0.0
    %5395 = vmatpush1.msra.mxu0 %v5282
    %5396 = vmatprep.subr.mxu0 0.0
    %5397 = vmatpush1.msra.mxu0 %v5283
    %5398 = vmatprep.subr.mxu0 0.0
    %5399 = vmatpush1.msra.mxu0 %v5284
    %5400 = vmatprep.subr.mxu0 0.0
    %5401 = vmatpush1.msra.mxu0 %v5285
    %5402 = vmatprep.subr.mxu0 0.0
    %5403 = vmatpush1.msra.mxu0 %v5286
    %5404 = vmatprep.subr.mxu0 0.0
    %5405 = vmatpush1.msra.mxu0 %v5287
    %5406 = vmatprep.subr.mxu0 0.0
    %5407 = vmatpush1.msra.mxu0 %v5288
    %5408 = vmatprep.subr.mxu0 0.0
    %5409 = vmatpush1.msra.mxu0 %v5289
    %5410 = vmatprep.subr.mxu0 0.0
    %5411 = vmatpush1.msra.mxu0 %v5290
    %5412 = vmatprep.subr.mxu0 0.0
    %5413 = vmatpush1.msra.mxu0 %v5291
    %5414 = vmatprep.subr.mxu0 0.0
    %5415 = vmatpush1.msra.mxu0 %v5292
    %5416 = vmatprep.subr.mxu0 0.0
    %5417 = vmatpush1.msra.mxu0 %v5293
    %5418 = vmatprep.subr.mxu0 0.0
    %5419 = vmatpush1.msra.mxu0 %v5294
    %5420 = vmatprep.subr.mxu0 0.0
    %5421 = vmatpush1.msra.mxu0 %v5295
    %5422 = vmatprep.subr.mxu0 0.0
    %5423 = vmatpush1.msra.mxu0 %v5296
    %5424 = vmatprep.subr.mxu0 0.0
    %5425 = vmatpush1.msra.mxu0 %v5297
    %5426 = vmatprep.subr.mxu0 0.0
    %5427 = vmatpush1.msra.mxu0 %v5298
    %5428 = vmatprep.subr.mxu0 0.0
    %5429 = vmatpush1.msra.mxu0 %v5299
    %5430 = vmatprep.subr.mxu0 0.0
    %5431 = vmatpush1.msra.mxu0 %v5300
    %5432 = vmatprep.subr.mxu0 0.0
    %5433 = vmatpush1.msra.mxu0 %v5301
    %5434 = vmatprep.subr.mxu0 0.0
    %5435 = vmatpush1.msra.mxu0 %v5302
    %5436 = vmatprep.subr.mxu0 0.0
    %5437 = vmatpush1.msra.mxu0 %v5303
    %5438 = vmatprep.mubr.f32.mxu0 %v5150
    %5439 = vmatmul.mubr.f32.gmra.mrb[0].mxu0 %v5149
    %v5440 = vpop.f32.mrb[0].mxu0
    %v5441 = vadd.f32 %v5371, %v5440
    %v5442 = vpop.f32.mrb[0].mxu0
    %5443 = vdwg.mxu0
    %5444 = vmatprep.subr.mxu0 0.0
    %5445 = vmatpush1.msra.mxu0 %v5175
    %5446 = vmatprep.subr.mxu0 0.0
    %5447 = vmatpush1.msra.mxu0 %v5176
    %5448 = vmatprep.subr.mxu0 0.0
    %5449 = vmatpush1.msra.mxu0 %v5177
    %5450 = vmatprep.subr.mxu0 0.0
    %5451 = vmatpush1.msra.mxu0 %v5178
    %5452 = vmatprep.subr.mxu0 0.0
    %5453 = vmatpush1.msra.mxu0 %v5179
    %5454 = vmatprep.subr.mxu0 0.0
    %5455 = vmatpush1.msra.mxu0 %v5180
    %5456 = vmatprep.subr.mxu0 0.0
    %5457 = vmatpush1.msra.mxu0 %v5181
    %5458 = vmatprep.subr.mxu0 0.0
    %5459 = vmatpush1.msra.mxu0 %v5182
    %5460 = vmatprep.subr.mxu0 0.0
    %5461 = vmatpush1.msra.mxu0 %v5183
    %5462 = vmatprep.subr.mxu0 0.0
    %5463 = vmatpush1.msra.mxu0 %v5184
    %5464 = vmatprep.subr.mxu0 0.0
    %5465 = vmatpush1.msra.mxu0 %v5185
    %5466 = vmatprep.subr.mxu0 0.0
    %5467 = vmatpush1.msra.mxu0 %v5186
    %5468 = vmatprep.subr.mxu0 0.0
    %5469 = vmatpush1.msra.mxu0 %v5187
    %5470 = vmatprep.subr.mxu0 0.0
    %5471 = vmatpush1.msra.mxu0 %v5188
    %5472 = vmatprep.subr.mxu0 0.0
    %5473 = vmatpush1.msra.mxu0 %v5189
    %5474 = vmatprep.subr.mxu0 0.0
    %5475 = vmatpush1.msra.mxu0 %v5190
    %5476 = vmatprep.subr.mxu0 0.0
    %5477 = vmatpush1.msra.mxu0 %v5191
    %5478 = vmatprep.subr.mxu0 0.0
    %5479 = vmatpush1.msra.mxu0 %v5192
    %5480 = vmatprep.subr.mxu0 0.0
    %5481 = vmatpush1.msra.mxu0 %v5193
    %5482 = vmatprep.subr.mxu0 0.0
    %5483 = vmatpush1.msra.mxu0 %v5194
    %5484 = vmatprep.subr.mxu0 0.0
    %5485 = vmatpush1.msra.mxu0 %v5195
    %5486 = vmatprep.subr.mxu0 0.0
    %5487 = vmatpush1.msra.mxu0 %v5196
    %5488 = vmatprep.subr.mxu0 0.0
    %5489 = vmatpush1.msra.mxu0 %v5197
    %5490 = vmatprep.subr.mxu0 0.0
    %5491 = vmatpush1.msra.mxu0 %v5198
    %5492 = vmatprep.subr.mxu0 0.0
    %5493 = vmatpush1.msra.mxu0 %v5199
    %5494 = vmatprep.subr.mxu0 0.0
    %5495 = vmatpush1.msra.mxu0 %v5200
    %5496 = vmatprep.subr.mxu0 0.0
    %5497 = vmatpush1.msra.mxu0 %v5201
    %5498 = vmatprep.subr.mxu0 0.0
    %5499 = vmatpush1.msra.mxu0 %v5202
    %5500 = vmatprep.subr.mxu0 0.0
    %5501 = vmatpush1.msra.mxu0 %v5203
    %5502 = vmatprep.subr.mxu0 0.0
    %5503 = vmatpush1.msra.mxu0 %v5204
    %5504 = vmatprep.subr.mxu0 0.0
    %5505 = vmatpush1.msra.mxu0 %v5205
    %5506 = vmatprep.subr.mxu0 0.0
    %5507 = vmatpush1.msra.mxu0 %v5206
    %5508 = vmatprep.mubr.f32.mxu0 %v5144
    %5509 = vmatmul.mubr.f32.gmra.mrb[0].mxu0 %v5143
    %v5510 = vpop.f32.mrb[0].mxu0
    %v5511 = vadd.f32 %v5441, %v5510
    %v5512 = vpop.f32.mrb[0].mxu0
    %5513 = vdwg.mxu0
    %5514 = vmatprep.subr.mxu0 0.0
    %5515 = vmatpush1.msra.mxu0 %v5207
    %5516 = vmatprep.subr.mxu0 0.0
    %5517 = vmatpush1.msra.mxu0 %v5208
    %5518 = vmatprep.subr.mxu0 0.0
    %5519 = vmatpush1.msra.mxu0 %v5209
    %5520 = vmatprep.subr.mxu0 0.0
    %5521 = vmatpush1.msra.mxu0 %v5210
    %5522 = vmatprep.subr.mxu0 0.0
    %5523 = vmatpush1.msra.mxu0 %v5211
    %5524 = vmatprep.subr.mxu0 0.0
    %5525 = vmatpush1.msra.mxu0 %v5212
    %5526 = vmatprep.subr.mxu0 0.0
    %5527 = vmatpush1.msra.mxu0 %v5213
    %5528 = vmatprep.subr.mxu0 0.0
    %5529 = vmatpush1.msra.mxu0 %v5214
    %5530 = vmatprep.subr.mxu0 0.0
    %5531 = vmatpush1.msra.mxu0 %v5215
    %5532 = vmatprep.subr.mxu0 0.0
    %5533 = vmatpush1.msra.mxu0 %v5216
    %5534 = vmatprep.subr.mxu0 0.0
    %5535 = vmatpush1.msra.mxu0 %v5217
    %5536 = vmatprep.subr.mxu0 0.0
    %5537 = vmatpush1.msra.mxu0 %v5218
    %5538 = vmatprep.subr.mxu0 0.0
    %5539 = vmatpush1.msra.mxu0 %v5219
    %5540 = vmatprep.subr.mxu0 0.0
    %5541 = vmatpush1.msra.mxu0 %v5220
    %5542 = vmatprep.subr.mxu0 0.0
    %5543 = vmatpush1.msra.mxu0 %v5221
    %5544 = vmatprep.subr.mxu0 0.0
    %5545 = vmatpush1.msra.mxu0 %v5222
    %5546 = vmatprep.subr.mxu0 0.0
    %5547 = vmatpush1.msra.mxu0 %v5223
    %5548 = vmatprep.subr.mxu0 0.0
    %5549 = vmatpush1.msra.mxu0 %v5224
    %5550 = vmatprep.subr.mxu0 0.0
    %5551 = vmatpush1.msra.mxu0 %v5225
    %5552 = vmatprep.subr.mxu0 0.0
    %5553 = vmatpush1.msra.mxu0 %v5226
    %5554 = vmatprep.subr.mxu0 0.0
    %5555 = vmatpush1.msra.mxu0 %v5227
    %5556 = vmatprep.subr.mxu0 0.0
    %5557 = vmatpush1.msra.mxu0 %v5228
    %5558 = vmatprep.subr.mxu0 0.0
    %5559 = vmatpush1.msra.mxu0 %v5229
    %5560 = vmatprep.subr.mxu0 0.0
    %5561 = vmatpush1.msra.mxu0 %v5230
    %5562 = vmatprep.subr.mxu0 0.0
    %5563 = vmatpush1.msra.mxu0 %v5231
    %5564 = vmatprep.subr.mxu0 0.0
    %5565 = vmatpush1.msra.mxu0 %v5232
    %5566 = vmatprep.subr.mxu0 0.0
    %5567 = vmatpush1.msra.mxu0 %v5233
    %5568 = vmatprep.subr.mxu0 0.0
    %5569 = vmatpush1.msra.mxu0 %v5234
    %5570 = vmatprep.subr.mxu0 0.0
    %5571 = vmatpush1.msra.mxu0 %v5235
    %5572 = vmatprep.subr.mxu0 0.0
    %5573 = vmatpush1.msra.mxu0 %v5236
    %5574 = vmatprep.subr.mxu0 0.0
    %5575 = vmatpush1.msra.mxu0 %v5237
    %5576 = vmatprep.subr.mxu0 0.0
    %5577 = vmatpush1.msra.mxu0 %v5238
    %5578 = vmatprep.mubr.f32.mxu0 %v5146
    %5579 = vmatmul.mubr.f32.gmra.mrb[0].mxu0 %v5145
    %v5580 = vpop.f32.mrb[0].mxu0
    %v5581 = vadd.f32 %v5511, %v5580
    %v5582 = vpop.f32.mrb[0].mxu0
    %5583 = vdwg.mxu0
    %s5584 = scalar_lea.vmem [#allocation14], 1024
    %v5585 = vld [vmem:[%s5584] sm:$0xff]
    %v5586 = vld [vmem:[%s5584 + $0x8] sm:$0xff]
    %v5587 = vld [vmem:[%s5584 + $0x10] sm:$0xff]
    %v5588 = vld [vmem:[%s5584 + $0x18] sm:$0xff]
    %v5589 = vld [vmem:[%s5584 + $0x20] sm:$0xff]
    %v5590 = vld [vmem:[%s5584 + $0x28] sm:$0xff]
    %v5591 = vld [vmem:[%s5584 + $0x30] sm:$0xff]
    %v5592 = vld [vmem:[%s5584 + $0x38] sm:$0xff]
    %v5593 = vld [vmem:[%s5584 + $0x40] sm:$0xff]
    %v5594 = vld [vmem:[%s5584 + $0x48] sm:$0xff]
    %v5595 = vld [vmem:[%s5584 + $0x50] sm:$0xff]
    %v5596 = vld [vmem:[%s5584 + $0x58] sm:$0xff]
    %v5597 = vld [vmem:[%s5584 + $0x60] sm:$0xff]
    %v5598 = vld [vmem:[%s5584 + $0x68] sm:$0xff]
    %v5599 = vld [vmem:[%s5584 + $0x70] sm:$0xff]
    %v5600 = vld [vmem:[%s5584 + $0x78] sm:$0xff]
    %v5601 = vld [vmem:[%s5584 + $0x80] sm:$0xff]
    %v5602 = vld [vmem:[%s5584 + $0x88] sm:$0xff]
    %v5603 = vld [vmem:[%s5584 + $0x90] sm:$0xff]
    %v5604 = vld [vmem:[%s5584 + $0x98] sm:$0xff]
    %v5605 = vld [vmem:[%s5584 + $0xa0] sm:$0xff]
    %v5606 = vld [vmem:[%s5584 + $0xa8] sm:$0xff]
    %v5607 = vld [vmem:[%s5584 + $0xb0] sm:$0xff]
    %v5608 = vld [vmem:[%s5584 + $0xb8] sm:$0xff]
    %v5609 = vld [vmem:[%s5584 + $0xc0] sm:$0xff]
    %v5610 = vld [vmem:[%s5584 + $0xc8] sm:$0xff]
    %v5611 = vld [vmem:[%s5584 + $0xd0] sm:$0xff]
    %v5612 = vld [vmem:[%s5584 + $0xd8] sm:$0xff]
    %v5613 = vld [vmem:[%s5584 + $0xe0] sm:$0xff]
    %v5614 = vld [vmem:[%s5584 + $0xe8] sm:$0xff]
    %v5615 = vld [vmem:[%s5584 + $0xf0] sm:$0xff]
    %v5616 = vld [vmem:[%s5584 + $0xf8] sm:$0xff]
    %v5617 = vld [vmem:[%s5584 + $0x100] sm:$0xff]
    %v5618 = vld [vmem:[%s5584 + $0x108] sm:$0xff]
    %v5619 = vld [vmem:[%s5584 + $0x110] sm:$0xff]
    %v5620 = vld [vmem:[%s5584 + $0x118] sm:$0xff]
    %v5621 = vld [vmem:[%s5584 + $0x120] sm:$0xff]
    %v5622 = vld [vmem:[%s5584 + $0x128] sm:$0xff]
    %v5623 = vld [vmem:[%s5584 + $0x130] sm:$0xff]
    %v5624 = vld [vmem:[%s5584 + $0x138] sm:$0xff]
    %v5625 = vld [vmem:[%s5584 + $0x140] sm:$0xff]
    %v5626 = vld [vmem:[%s5584 + $0x148] sm:$0xff]
    %v5627 = vld [vmem:[%s5584 + $0x150] sm:$0xff]
    %v5628 = vld [vmem:[%s5584 + $0x158] sm:$0xff]
    %v5629 = vld [vmem:[%s5584 + $0x160] sm:$0xff]
    %v5630 = vld [vmem:[%s5584 + $0x168] sm:$0xff]
    %v5631 = vld [vmem:[%s5584 + $0x170] sm:$0xff]
    %v5632 = vld [vmem:[%s5584 + $0x178] sm:$0xff]
    %v5633 = vld [vmem:[%s5584 + $0x180] sm:$0xff]
    %v5634 = vld [vmem:[%s5584 + $0x188] sm:$0xff]
    %v5635 = vld [vmem:[%s5584 + $0x190] sm:$0xff]
    %v5636 = vld [vmem:[%s5584 + $0x198] sm:$0xff]
    %v5637 = vld [vmem:[%s5584 + $0x1a0] sm:$0xff]
    %v5638 = vld [vmem:[%s5584 + $0x1a8] sm:$0xff]
    %v5639 = vld [vmem:[%s5584 + $0x1b0] sm:$0xff]
    %v5640 = vld [vmem:[%s5584 + $0x1b8] sm:$0xff]
    %v5641 = vld [vmem:[%s5584 + $0x1c0] sm:$0xff]
    %v5642 = vld [vmem:[%s5584 + $0x1c8] sm:$0xff]
    %v5643 = vld [vmem:[%s5584 + $0x1d0] sm:$0xff]
    %v5644 = vld [vmem:[%s5584 + $0x1d8] sm:$0xff]
    %v5645 = vld [vmem:[%s5584 + $0x1e0] sm:$0xff]
    %v5646 = vld [vmem:[%s5584 + $0x1e8] sm:$0xff]
    %v5647 = vld [vmem:[%s5584 + $0x1f0] sm:$0xff]
    %v5648 = vld [vmem:[%s5584 + $0x1f8] sm:$0xff]
    %5649 = vmatprep.subr.mxu0 0.0
    %5650 = vmatpush1.msra.mxu0 %v5585
    %5651 = vmatprep.subr.mxu0 0.0
    %5652 = vmatpush1.msra.mxu0 %v5586
    %5653 = vmatprep.subr.mxu0 0.0
    %5654 = vmatpush1.msra.mxu0 %v5587
    %5655 = vmatprep.subr.mxu0 0.0
    %5656 = vmatpush1.msra.mxu0 %v5588
    %5657 = vmatprep.subr.mxu0 0.0
    %5658 = vmatpush1.msra.mxu0 %v5589
    %5659 = vmatprep.subr.mxu0 0.0
    %5660 = vmatpush1.msra.mxu0 %v5590
    %5661 = vmatprep.subr.mxu0 0.0
    %5662 = vmatpush1.msra.mxu0 %v5591
    %5663 = vmatprep.subr.mxu0 0.0
    %5664 = vmatpush1.msra.mxu0 %v5592
    %5665 = vmatprep.subr.mxu0 0.0
    %5666 = vmatpush1.msra.mxu0 %v5593
    %5667 = vmatprep.subr.mxu0 0.0
    %5668 = vmatpush1.msra.mxu0 %v5594
    %5669 = vmatprep.subr.mxu0 0.0
    %5670 = vmatpush1.msra.mxu0 %v5595
    %5671 = vmatprep.subr.mxu0 0.0
    %5672 = vmatpush1.msra.mxu0 %v5596
    %5673 = vmatprep.subr.mxu0 0.0
    %5674 = vmatpush1.msra.mxu0 %v5597
    %5675 = vmatprep.subr.mxu0 0.0
    %5676 = vmatpush1.msra.mxu0 %v5598
    %5677 = vmatprep.subr.mxu0 0.0
    %5678 = vmatpush1.msra.mxu0 %v5599
    %5679 = vmatprep.subr.mxu0 0.0
    %5680 = vmatpush1.msra.mxu0 %v5600
    %5681 = vmatprep.subr.mxu0 0.0
    %5682 = vmatpush1.msra.mxu0 %v5601
    %5683 = vmatprep.subr.mxu0 0.0
    %5684 = vmatpush1.msra.mxu0 %v5602
    %5685 = vmatprep.subr.mxu0 0.0
    %5686 = vmatpush1.msra.mxu0 %v5603
    %5687 = vmatprep.subr.mxu0 0.0
    %5688 = vmatpush1.msra.mxu0 %v5604
    %5689 = vmatprep.subr.mxu0 0.0
    %5690 = vmatpush1.msra.mxu0 %v5605
    %5691 = vmatprep.subr.mxu0 0.0
    %5692 = vmatpush1.msra.mxu0 %v5606
    %5693 = vmatprep.subr.mxu0 0.0
    %5694 = vmatpush1.msra.mxu0 %v5607
    %5695 = vmatprep.subr.mxu0 0.0
    %5696 = vmatpush1.msra.mxu0 %v5608
    %5697 = vmatprep.subr.mxu0 0.0
    %5698 = vmatpush1.msra.mxu0 %v5609
    %5699 = vmatprep.subr.mxu0 0.0
    %5700 = vmatpush1.msra.mxu0 %v5610
    %5701 = vmatprep.subr.mxu0 0.0
    %5702 = vmatpush1.msra.mxu0 %v5611
    %5703 = vmatprep.subr.mxu0 0.0
    %5704 = vmatpush1.msra.mxu0 %v5612
    %5705 = vmatprep.subr.mxu0 0.0
    %5706 = vmatpush1.msra.mxu0 %v5613
    %5707 = vmatprep.subr.mxu0 0.0
    %5708 = vmatpush1.msra.mxu0 %v5614
    %5709 = vmatprep.subr.mxu0 0.0
    %5710 = vmatpush1.msra.mxu0 %v5615
    %5711 = vmatprep.subr.mxu0 0.0
    %5712 = vmatpush1.msra.mxu0 %v5616
    %5713 = vmatprep.mubr.f32.mxu0 %v5152
    %5714 = vmatmul.mubr.f32.gmra.mrb[0].mxu0 %v5151
    %v5715 = vpop.f32.mrb[0].mxu0
    %v5716 = vadd.f32 0.0, %v5715
    %v5717 = vpop.f32.mrb[0].mxu0
    %5718 = vdwg.mxu0
    %5719 = vmatprep.subr.mxu0 0.0
    %5720 = vmatpush1.msra.mxu0 %v5617
    %5721 = vmatprep.subr.mxu0 0.0
    %5722 = vmatpush1.msra.mxu0 %v5618
    %5723 = vmatprep.subr.mxu0 0.0
    %5724 = vmatpush1.msra.mxu0 %v5619
    %5725 = vmatprep.subr.mxu0 0.0
    %5726 = vmatpush1.msra.mxu0 %v5620
    %5727 = vmatprep.subr.mxu0 0.0
    %5728 = vmatpush1.msra.mxu0 %v5621
    %5729 = vmatprep.subr.mxu0 0.0
    %5730 = vmatpush1.msra.mxu0 %v5622
    %5731 = vmatprep.subr.mxu0 0.0
    %5732 = vmatpush1.msra.mxu0 %v5623
    %5733 = vmatprep.subr.mxu0 0.0
    %5734 = vmatpush1.msra.mxu0 %v5624
    %5735 = vmatprep.subr.mxu0 0.0
    %5736 = vmatpush1.msra.mxu0 %v5625
    %5737 = vmatprep.subr.mxu0 0.0
    %5738 = vmatpush1.msra.mxu0 %v5626
    %5739 = vmatprep.subr.mxu0 0.0
    %5740 = vmatpush1.msra.mxu0 %v5627
    %5741 = vmatprep.subr.mxu0 0.0
    %5742 = vmatpush1.msra.mxu0 %v5628
    %5743 = vmatprep.subr.mxu0 0.0
    %5744 = vmatpush1.msra.mxu0 %v5629
    %5745 = vmatprep.subr.mxu0 0.0
    %5746 = vmatpush1.msra.mxu0 %v5630
    %5747 = vmatprep.subr.mxu0 0.0
    %5748 = vmatpush1.msra.mxu0 %v5631
    %5749 = vmatprep.subr.mxu0 0.0
    %5750 = vmatpush1.msra.mxu0 %v5632
    %5751 = vmatprep.subr.mxu0 0.0
    %5752 = vmatpush1.msra.mxu0 %v5633
    %5753 = vmatprep.subr.mxu0 0.0
    %5754 = vmatpush1.msra.mxu0 %v5634
    %5755 = vmatprep.subr.mxu0 0.0
    %5756 = vmatpush1.msra.mxu0 %v5635
    %5757 = vmatprep.subr.mxu0 0.0
    %5758 = vmatpush1.msra.mxu0 %v5636
    %5759 = vmatprep.subr.mxu0 0.0
    %5760 = vmatpush1.msra.mxu0 %v5637
    %5761 = vmatprep.subr.mxu0 0.0
    %5762 = vmatpush1.msra.mxu0 %v5638
    %5763 = vmatprep.subr.mxu0 0.0
    %5764 = vmatpush1.msra.mxu0 %v5639
    %5765 = vmatprep.subr.mxu0 0.0
    %5766 = vmatpush1.msra.mxu0 %v5640
    %5767 = vmatprep.subr.mxu0 0.0
    %5768 = vmatpush1.msra.mxu0 %v5641
    %5769 = vmatprep.subr.mxu0 0.0
    %5770 = vmatpush1.msra.mxu0 %v5642
    %5771 = vmatprep.subr.mxu0 0.0
    %5772 = vmatpush1.msra.mxu0 %v5643
    %5773 = vmatprep.subr.mxu0 0.0
    %5774 = vmatpush1.msra.mxu0 %v5644
    %5775 = vmatprep.subr.mxu0 0.0
    %5776 = vmatpush1.msra.mxu0 %v5645
    %5777 = vmatprep.subr.mxu0 0.0
    %5778 = vmatpush1.msra.mxu0 %v5646
    %5779 = vmatprep.subr.mxu0 0.0
    %5780 = vmatpush1.msra.mxu0 %v5647
    %5781 = vmatprep.subr.mxu0 0.0
    %5782 = vmatpush1.msra.mxu0 %v5648
    %5783 = vmatprep.mubr.f32.mxu0 %v5154
    %5784 = vmatmul.mubr.f32.gmra.mrb[0].mxu0 %v5153
    %v5785 = vpop.f32.mrb[0].mxu0
    %v5786 = vadd.f32 %v5716, %v5785
    %v5787 = vpop.f32.mrb[0].mxu0
    %5788 = vdwg.mxu0
    %v5789 = vadd.f32 %v5581, %v5786
    %s5790 = scalar_lea.vmem [#allocation14], 1536
    %v5791 = vld [vmem:[%s5790] sm:$0xff]
    %v5792 = vld [vmem:[%s5790 + $0x8] sm:$0xff]
    %v5793 = vld [vmem:[%s5790 + $0x10] sm:$0xff]
    %v5794 = vld [vmem:[%s5790 + $0x18] sm:$0xff]
    %v5795 = vld [vmem:[%s5790 + $0x20] sm:$0xff]
    %v5796 = vld [vmem:[%s5790 + $0x28] sm:$0xff]
    %v5797 = vld [vmem:[%s5790 + $0x30] sm:$0xff]
    %v5798 = vld [vmem:[%s5790 + $0x38] sm:$0xff]
    %v5799 = vld [vmem:[%s5790 + $0x40] sm:$0xff]
    %v5800 = vld [vmem:[%s5790 + $0x48] sm:$0xff]
    %v5801 = vld [vmem:[%s5790 + $0x50] sm:$0xff]
    %v5802 = vld [vmem:[%s5790 + $0x58] sm:$0xff]
    %v5803 = vld [vmem:[%s5790 + $0x60] sm:$0xff]
    %v5804 = vld [vmem:[%s5790 + $0x68] sm:$0xff]
    %v5805 = vld [vmem:[%s5790 + $0x70] sm:$0xff]
    %v5806 = vld [vmem:[%s5790 + $0x78] sm:$0xff]
    %v5807 = vld [vmem:[%s5790 + $0x80] sm:$0xff]
    %v5808 = vld [vmem:[%s5790 + $0x88] sm:$0xff]
    %v5809 = vld [vmem:[%s5790 + $0x90] sm:$0xff]
    %v5810 = vld [vmem:[%s5790 + $0x98] sm:$0xff]
    %v5811 = vld [vmem:[%s5790 + $0xa0] sm:$0xff]
    %v5812 = vld [vmem:[%s5790 + $0xa8] sm:$0xff]
    %v5813 = vld [vmem:[%s5790 + $0xb0] sm:$0xff]
    %v5814 = vld [vmem:[%s5790 + $0xb8] sm:$0xff]
    %v5815 = vld [vmem:[%s5790 + $0xc0] sm:$0xff]
    %v5816 = vld [vmem:[%s5790 + $0xc8] sm:$0xff]
    %v5817 = vld [vmem:[%s5790 + $0xd0] sm:$0xff]
    %v5818 = vld [vmem:[%s5790 + $0xd8] sm:$0xff]
    %v5819 = vld [vmem:[%s5790 + $0xe0] sm:$0xff]
    %v5820 = vld [vmem:[%s5790 + $0xe8] sm:$0xff]
    %v5821 = vld [vmem:[%s5790 + $0xf0] sm:$0xff]
    %v5822 = vld [vmem:[%s5790 + $0xf8] sm:$0xff]
    %v5823 = vld [vmem:[%s5790 + $0x100] sm:$0xff]
    %v5824 = vld [vmem:[%s5790 + $0x108] sm:$0xff]
    %v5825 = vld [vmem:[%s5790 + $0x110] sm:$0xff]
    %v5826 = vld [vmem:[%s5790 + $0x118] sm:$0xff]
    %v5827 = vld [vmem:[%s5790 + $0x120] sm:$0xff]
    %v5828 = vld [vmem:[%s5790 + $0x128] sm:$0xff]
    %v5829 = vld [vmem:[%s5790 + $0x130] sm:$0xff]
    %v5830 = vld [vmem:[%s5790 + $0x138] sm:$0xff]
    %v5831 = vld [vmem:[%s5790 + $0x140] sm:$0xff]
    %v5832 = vld [vmem:[%s5790 + $0x148] sm:$0xff]
    %v5833 = vld [vmem:[%s5790 + $0x150] sm:$0xff]
    %v5834 = vld [vmem:[%s5790 + $0x158] sm:$0xff]
    %v5835 = vld [vmem:[%s5790 + $0x160] sm:$0xff]
    %v5836 = vld [vmem:[%s5790 + $0x168] sm:$0xff]
    %v5837 = vld [vmem:[%s5790 + $0x170] sm:$0xff]
    %v5838 = vld [vmem:[%s5790 + $0x178] sm:$0xff]
    %v5839 = vld [vmem:[%s5790 + $0x180] sm:$0xff]
    %v5840 = vld [vmem:[%s5790 + $0x188] sm:$0xff]
    %v5841 = vld [vmem:[%s5790 + $0x190] sm:$0xff]
    %v5842 = vld [vmem:[%s5790 + $0x198] sm:$0xff]
    %v5843 = vld [vmem:[%s5790 + $0x1a0] sm:$0xff]
    %v5844 = vld [vmem:[%s5790 + $0x1a8] sm:$0xff]
    %v5845 = vld [vmem:[%s5790 + $0x1b0] sm:$0xff]
    %v5846 = vld [vmem:[%s5790 + $0x1b8] sm:$0xff]
    %v5847 = vld [vmem:[%s5790 + $0x1c0] sm:$0xff]
    %v5848 = vld [vmem:[%s5790 + $0x1c8] sm:$0xff]
    %v5849 = vld [vmem:[%s5790 + $0x1d0] sm:$0xff]
    %v5850 = vld [vmem:[%s5790 + $0x1d8] sm:$0xff]
    %v5851 = vld [vmem:[%s5790 + $0x1e0] sm:$0xff]
    %v5852 = vld [vmem:[%s5790 + $0x1e8] sm:$0xff]
    %v5853 = vld [vmem:[%s5790 + $0x1f0] sm:$0xff]
    %v5854 = vld [vmem:[%s5790 + $0x1f8] sm:$0xff]
    %5855 = vmatprep.subr.mxu0 0.0
    %5856 = vmatpush1.msra.mxu0 %v5791
    %5857 = vmatprep.subr.mxu0 0.0
    %5858 = vmatpush1.msra.mxu0 %v5792
    %5859 = vmatprep.subr.mxu0 0.0
    %5860 = vmatpush1.msra.mxu0 %v5793
    %5861 = vmatprep.subr.mxu0 0.0
    %5862 = vmatpush1.msra.mxu0 %v5794
    %5863 = vmatprep.subr.mxu0 0.0
    %5864 = vmatpush1.msra.mxu0 %v5795
    %5865 = vmatprep.subr.mxu0 0.0
    %5866 = vmatpush1.msra.mxu0 %v5796
    %5867 = vmatprep.subr.mxu0 0.0
    %5868 = vmatpush1.msra.mxu0 %v5797
    %5869 = vmatprep.subr.mxu0 0.0
    %5870 = vmatpush1.msra.mxu0 %v5798
    %5871 = vmatprep.subr.mxu0 0.0
    %5872 = vmatpush1.msra.mxu0 %v5799
    %5873 = vmatprep.subr.mxu0 0.0
    %5874 = vmatpush1.msra.mxu0 %v5800
    %5875 = vmatprep.subr.mxu0 0.0
    %5876 = vmatpush1.msra.mxu0 %v5801
    %5877 = vmatprep.subr.mxu0 0.0
    %5878 = vmatpush1.msra.mxu0 %v5802
    %5879 = vmatprep.subr.mxu0 0.0
    %5880 = vmatpush1.msra.mxu0 %v5803
    %5881 = vmatprep.subr.mxu0 0.0
    %5882 = vmatpush1.msra.mxu0 %v5804
    %5883 = vmatprep.subr.mxu0 0.0
    %5884 = vmatpush1.msra.mxu0 %v5805
    %5885 = vmatprep.subr.mxu0 0.0
    %5886 = vmatpush1.msra.mxu0 %v5806
    %5887 = vmatprep.subr.mxu0 0.0
    %5888 = vmatpush1.msra.mxu0 %v5807
    %5889 = vmatprep.subr.mxu0 0.0
    %5890 = vmatpush1.msra.mxu0 %v5808
    %5891 = vmatprep.subr.mxu0 0.0
    %5892 = vmatpush1.msra.mxu0 %v5809
    %5893 = vmatprep.subr.mxu0 0.0
    %5894 = vmatpush1.msra.mxu0 %v5810
    %5895 = vmatprep.subr.mxu0 0.0
    %5896 = vmatpush1.msra.mxu0 %v5811
    %5897 = vmatprep.subr.mxu0 0.0
    %5898 = vmatpush1.msra.mxu0 %v5812
    %5899 = vmatprep.subr.mxu0 0.0
    %5900 = vmatpush1.msra.mxu0 %v5813
    %5901 = vmatprep.subr.mxu0 0.0
    %5902 = vmatpush1.msra.mxu0 %v5814
    %5903 = vmatprep.subr.mxu0 0.0
    %5904 = vmatpush1.msra.mxu0 %v5815
    %5905 = vmatprep.subr.mxu0 0.0
    %5906 = vmatpush1.msra.mxu0 %v5816
    %5907 = vmatprep.subr.mxu0 0.0
    %5908 = vmatpush1.msra.mxu0 %v5817
    %5909 = vmatprep.subr.mxu0 0.0
    %5910 = vmatpush1.msra.mxu0 %v5818
    %5911 = vmatprep.subr.mxu0 0.0
    %5912 = vmatpush1.msra.mxu0 %v5819
    %5913 = vmatprep.subr.mxu0 0.0
    %5914 = vmatpush1.msra.mxu0 %v5820
    %5915 = vmatprep.subr.mxu0 0.0
    %5916 = vmatpush1.msra.mxu0 %v5821
    %5917 = vmatprep.subr.mxu0 0.0
    %5918 = vmatpush1.msra.mxu0 %v5822
    %5919 = vmatprep.mubr.f32.mxu0 %v5156
    %5920 = vmatmul.mubr.f32.gmra.mrb[0].mxu0 %v5155
    %v5921 = vpop.f32.mrb[0].mxu0
    %v5922 = vadd.f32 0.0, %v5921
    %v5923 = vpop.f32.mrb[0].mxu0
    %5924 = vdwg.mxu0
    %5925 = vmatprep.subr.mxu0 0.0
    %5926 = vmatpush1.msra.mxu0 %v5823
    %5927 = vmatprep.subr.mxu0 0.0
    %5928 = vmatpush1.msra.mxu0 %v5824
    %5929 = vmatprep.subr.mxu0 0.0
    %5930 = vmatpush1.msra.mxu0 %v5825
    %5931 = vmatprep.subr.mxu0 0.0
    %5932 = vmatpush1.msra.mxu0 %v5826
    %5933 = vmatprep.subr.mxu0 0.0
    %5934 = vmatpush1.msra.mxu0 %v5827
    %5935 = vmatprep.subr.mxu0 0.0
    %5936 = vmatpush1.msra.mxu0 %v5828
    %5937 = vmatprep.subr.mxu0 0.0
    %5938 = vmatpush1.msra.mxu0 %v5829
    %5939 = vmatprep.subr.mxu0 0.0
    %5940 = vmatpush1.msra.mxu0 %v5830
    %5941 = vmatprep.subr.mxu0 0.0
    %5942 = vmatpush1.msra.mxu0 %v5831
    %5943 = vmatprep.subr.mxu0 0.0
    %5944 = vmatpush1.msra.mxu0 %v5832
    %5945 = vmatprep.subr.mxu0 0.0
    %5946 = vmatpush1.msra.mxu0 %v5833
    %5947 = vmatprep.subr.mxu0 0.0
    %5948 = vmatpush1.msra.mxu0 %v5834
    %5949 = vmatprep.subr.mxu0 0.0
    %5950 = vmatpush1.msra.mxu0 %v5835
    %5951 = vmatprep.subr.mxu0 0.0
    %5952 = vmatpush1.msra.mxu0 %v5836
    %5953 = vmatprep.subr.mxu0 0.0
    %5954 = vmatpush1.msra.mxu0 %v5837
    %5955 = vmatprep.subr.mxu0 0.0
    %5956 = vmatpush1.msra.mxu0 %v5838
    %5957 = vmatprep.subr.mxu0 0.0
    %5958 = vmatpush1.msra.mxu0 %v5839
    %5959 = vmatprep.subr.mxu0 0.0
    %5960 = vmatpush1.msra.mxu0 %v5840
    %5961 = vmatprep.subr.mxu0 0.0
    %5962 = vmatpush1.msra.mxu0 %v5841
    %5963 = vmatprep.subr.mxu0 0.0
    %5964 = vmatpush1.msra.mxu0 %v5842
    %5965 = vmatprep.subr.mxu0 0.0
    %5966 = vmatpush1.msra.mxu0 %v5843
    %5967 = vmatprep.subr.mxu0 0.0
    %5968 = vmatpush1.msra.mxu0 %v5844
    %5969 = vmatprep.subr.mxu0 0.0
    %5970 = vmatpush1.msra.mxu0 %v5845
    %5971 = vmatprep.subr.mxu0 0.0
    %5972 = vmatpush1.msra.mxu0 %v5846
    %5973 = vmatprep.subr.mxu0 0.0
    %5974 = vmatpush1.msra.mxu0 %v5847
    %5975 = vmatprep.subr.mxu0 0.0
    %5976 = vmatpush1.msra.mxu0 %v5848
    %5977 = vmatprep.subr.mxu0 0.0
    %5978 = vmatpush1.msra.mxu0 %v5849
    %5979 = vmatprep.subr.mxu0 0.0
    %5980 = vmatpush1.msra.mxu0 %v5850
    %5981 = vmatprep.subr.mxu0 0.0
    %5982 = vmatpush1.msra.mxu0 %v5851
    %5983 = vmatprep.subr.mxu0 0.0
    %5984 = vmatpush1.msra.mxu0 %v5852
    %5985 = vmatprep.subr.mxu0 0.0
    %5986 = vmatpush1.msra.mxu0 %v5853
    %5987 = vmatprep.subr.mxu0 0.0
    %5988 = vmatpush1.msra.mxu0 %v5854
    %5989 = vmatprep.mubr.f32.mxu0 %v5158
    %5990 = vmatmul.mubr.f32.gmra.mrb[0].mxu0 %v5157
    %v5991 = vpop.f32.mrb[0].mxu0
    %v5992 = vadd.f32 %v5922, %v5991
    %v5993 = vpop.f32.mrb[0].mxu0
    %5994 = vdwg.mxu0
    %v5995 = vadd.f32 %v5789, %v5992
    %s5996 = scalar_lea.vmem [#allocation14], 2048
    %v5997 = vld [vmem:[%s5996] sm:$0xff]
    %v5998 = vld [vmem:[%s5996 + $0x8] sm:$0xff]
    %v5999 = vld [vmem:[%s5996 + $0x10] sm:$0xff]
    %v6000 = vld [vmem:[%s5996 + $0x18] sm:$0xff]
    %v6001 = vld [vmem:[%s5996 + $0x20] sm:$0xff]
    %v6002 = vld [vmem:[%s5996 + $0x28] sm:$0xff]
    %v6003 = vld [vmem:[%s5996 + $0x30] sm:$0xff]
    %v6004 = vld [vmem:[%s5996 + $0x38] sm:$0xff]
    %v6005 = vld [vmem:[%s5996 + $0x40] sm:$0xff]
    %v6006 = vld [vmem:[%s5996 + $0x48] sm:$0xff]
    %v6007 = vld [vmem:[%s5996 + $0x50] sm:$0xff]
    %v6008 = vld [vmem:[%s5996 + $0x58] sm:$0xff]
    %v6009 = vld [vmem:[%s5996 + $0x60] sm:$0xff]
    %v6010 = vld [vmem:[%s5996 + $0x68] sm:$0xff]
    %v6011 = vld [vmem:[%s5996 + $0x70] sm:$0xff]
    %v6012 = vld [vmem:[%s5996 + $0x78] sm:$0xff]
    %v6013 = vld [vmem:[%s5996 + $0x80] sm:$0xff]
    %v6014 = vld [vmem:[%s5996 + $0x88] sm:$0xff]
    %v6015 = vld [vmem:[%s5996 + $0x90] sm:$0xff]
    %v6016 = vld [vmem:[%s5996 + $0x98] sm:$0xff]
    %v6017 = vld [vmem:[%s5996 + $0xa0] sm:$0xff]
    %v6018 = vld [vmem:[%s5996 + $0xa8] sm:$0xff]
    %v6019 = vld [vmem:[%s5996 + $0xb0] sm:$0xff]
    %v6020 = vld [vmem:[%s5996 + $0xb8] sm:$0xff]
    %v6021 = vld [vmem:[%s5996 + $0xc0] sm:$0xff]
    %v6022 = vld [vmem:[%s5996 + $0xc8] sm:$0xff]
    %v6023 = vld [vmem:[%s5996 + $0xd0] sm:$0xff]
    %v6024 = vld [vmem:[%s5996 + $0xd8] sm:$0xff]
    %v6025 = vld [vmem:[%s5996 + $0xe0] sm:$0xff]
    %v6026 = vld [vmem:[%s5996 + $0xe8] sm:$0xff]
    %v6027 = vld [vmem:[%s5996 + $0xf0] sm:$0xff]
    %v6028 = vld [vmem:[%s5996 + $0xf8] sm:$0xff]
    %v6029 = vld [vmem:[%s5996 + $0x100] sm:$0xff]
    %v6030 = vld [vmem:[%s5996 + $0x108] sm:$0xff]
    %v6031 = vld [vmem:[%s5996 + $0x110] sm:$0xff]
    %v6032 = vld [vmem:[%s5996 + $0x118] sm:$0xff]
    %v6033 = vld [vmem:[%s5996 + $0x120] sm:$0xff]
    %v6034 = vld [vmem:[%s5996 + $0x128] sm:$0xff]
    %v6035 = vld [vmem:[%s5996 + $0x130] sm:$0xff]
    %v6036 = vld [vmem:[%s5996 + $0x138] sm:$0xff]
    %v6037 = vld [vmem:[%s5996 + $0x140] sm:$0xff]
    %v6038 = vld [vmem:[%s5996 + $0x148] sm:$0xff]
    %v6039 = vld [vmem:[%s5996 + $0x150] sm:$0xff]
    %v6040 = vld [vmem:[%s5996 + $0x158] sm:$0xff]
    %v6041 = vld [vmem:[%s5996 + $0x160] sm:$0xff]
    %v6042 = vld [vmem:[%s5996 + $0x168] sm:$0xff]
    %v6043 = vld [vmem:[%s5996 + $0x170] sm:$0xff]
    %v6044 = vld [vmem:[%s5996 + $0x178] sm:$0xff]
    %v6045 = vld [vmem:[%s5996 + $0x180] sm:$0xff]
    %v6046 = vld [vmem:[%s5996 + $0x188] sm:$0xff]
    %v6047 = vld [vmem:[%s5996 + $0x190] sm:$0xff]
    %v6048 = vld [vmem:[%s5996 + $0x198] sm:$0xff]
    %v6049 = vld [vmem:[%s5996 + $0x1a0] sm:$0xff]
    %v6050 = vld [vmem:[%s5996 + $0x1a8] sm:$0xff]
    %v6051 = vld [vmem:[%s5996 + $0x1b0] sm:$0xff]
    %v6052 = vld [vmem:[%s5996 + $0x1b8] sm:$0xff]
    %v6053 = vld [vmem:[%s5996 + $0x1c0] sm:$0xff]
    %v6054 = vld [vmem:[%s5996 + $0x1c8] sm:$0xff]
    %v6055 = vld [vmem:[%s5996 + $0x1d0] sm:$0xff]
    %v6056 = vld [vmem:[%s5996 + $0x1d8] sm:$0xff]
    %v6057 = vld [vmem:[%s5996 + $0x1e0] sm:$0xff]
    %v6058 = vld [vmem:[%s5996 + $0x1e8] sm:$0xff]
    %v6059 = vld [vmem:[%s5996 + $0x1f0] sm:$0xff]
    %v6060 = vld [vmem:[%s5996 + $0x1f8] sm:$0xff]
    %6061 = vmatprep.subr.mxu0 0.0
    %6062 = vmatpush1.msra.mxu0 %v5997
    %6063 = vmatprep.subr.mxu0 0.0
    %6064 = vmatpush1.msra.mxu0 %v5998
    %6065 = vmatprep.subr.mxu0 0.0
    %6066 = vmatpush1.msra.mxu0 %v5999
    %6067 = vmatprep.subr.mxu0 0.0
    %6068 = vmatpush1.msra.mxu0 %v6000
    %6069 = vmatprep.subr.mxu0 0.0
    %6070 = vmatpush1.msra.mxu0 %v6001
    %6071 = vmatprep.subr.mxu0 0.0
    %6072 = vmatpush1.msra.mxu0 %v6002
    %6073 = vmatprep.subr.mxu0 0.0
    %6074 = vmatpush1.msra.mxu0 %v6003
    %6075 = vmatprep.subr.mxu0 0.0
    %6076 = vmatpush1.msra.mxu0 %v6004
    %6077 = vmatprep.subr.mxu0 0.0
    %6078 = vmatpush1.msra.mxu0 %v6005
    %6079 = vmatprep.subr.mxu0 0.0
    %6080 = vmatpush1.msra.mxu0 %v6006
    %6081 = vmatprep.subr.mxu0 0.0
    %6082 = vmatpush1.msra.mxu0 %v6007
    %6083 = vmatprep.subr.mxu0 0.0
    %6084 = vmatpush1.msra.mxu0 %v6008
    %6085 = vmatprep.subr.mxu0 0.0
    %6086 = vmatpush1.msra.mxu0 %v6009
    %6087 = vmatprep.subr.mxu0 0.0
    %6088 = vmatpush1.msra.mxu0 %v6010
    %6089 = vmatprep.subr.mxu0 0.0
    %6090 = vmatpush1.msra.mxu0 %v6011
    %6091 = vmatprep.subr.mxu0 0.0
    %6092 = vmatpush1.msra.mxu0 %v6012
    %6093 = vmatprep.subr.mxu0 0.0
    %6094 = vmatpush1.msra.mxu0 %v6013
    %6095 = vmatprep.subr.mxu0 0.0
    %6096 = vmatpush1.msra.mxu0 %v6014
    %6097 = vmatprep.subr.mxu0 0.0
    %6098 = vmatpush1.msra.mxu0 %v6015
    %6099 = vmatprep.subr.mxu0 0.0
    %6100 = vmatpush1.msra.mxu0 %v6016
    %6101 = vmatprep.subr.mxu0 0.0
    %6102 = vmatpush1.msra.mxu0 %v6017
    %6103 = vmatprep.subr.mxu0 0.0
    %6104 = vmatpush1.msra.mxu0 %v6018
    %6105 = vmatprep.subr.mxu0 0.0
    %6106 = vmatpush1.msra.mxu0 %v6019
    %6107 = vmatprep.subr.mxu0 0.0
    %6108 = vmatpush1.msra.mxu0 %v6020
    %6109 = vmatprep.subr.mxu0 0.0
    %6110 = vmatpush1.msra.mxu0 %v6021
    %6111 = vmatprep.subr.mxu0 0.0
    %6112 = vmatpush1.msra.mxu0 %v6022
    %6113 = vmatprep.subr.mxu0 0.0
    %6114 = vmatpush1.msra.mxu0 %v6023
    %6115 = vmatprep.subr.mxu0 0.0
    %6116 = vmatpush1.msra.mxu0 %v6024
    %6117 = vmatprep.subr.mxu0 0.0
    %6118 = vmatpush1.msra.mxu0 %v6025
    %6119 = vmatprep.subr.mxu0 0.0
    %6120 = vmatpush1.msra.mxu0 %v6026
    %6121 = vmatprep.subr.mxu0 0.0
    %6122 = vmatpush1.msra.mxu0 %v6027
    %6123 = vmatprep.subr.mxu0 0.0
    %6124 = vmatpush1.msra.mxu0 %v6028
    %6125 = vmatprep.mubr.f32.mxu0 %v5160
    %6126 = vmatmul.mubr.f32.gmra.mrb[0].mxu0 %v5159
    %v6127 = vpop.f32.mrb[0].mxu0
    %v6128 = vadd.f32 0.0, %v6127
    %v6129 = vpop.f32.mrb[0].mxu0
    %6130 = vdwg.mxu0
    %6131 = vmatprep.subr.mxu0 0.0
    %6132 = vmatpush1.msra.mxu0 %v6029
    %6133 = vmatprep.subr.mxu0 0.0
    %6134 = vmatpush1.msra.mxu0 %v6030
    %6135 = vmatprep.subr.mxu0 0.0
    %6136 = vmatpush1.msra.mxu0 %v6031
    %6137 = vmatprep.subr.mxu0 0.0
    %6138 = vmatpush1.msra.mxu0 %v6032
    %6139 = vmatprep.subr.mxu0 0.0
    %6140 = vmatpush1.msra.mxu0 %v6033
    %6141 = vmatprep.subr.mxu0 0.0
    %6142 = vmatpush1.msra.mxu0 %v6034
    %6143 = vmatprep.subr.mxu0 0.0
    %6144 = vmatpush1.msra.mxu0 %v6035
    %6145 = vmatprep.subr.mxu0 0.0
    %6146 = vmatpush1.msra.mxu0 %v6036
    %6147 = vmatprep.subr.mxu0 0.0
    %6148 = vmatpush1.msra.mxu0 %v6037
    %6149 = vmatprep.subr.mxu0 0.0
    %6150 = vmatpush1.msra.mxu0 %v6038
    %6151 = vmatprep.subr.mxu0 0.0
    %6152 = vmatpush1.msra.mxu0 %v6039
    %6153 = vmatprep.subr.mxu0 0.0
    %6154 = vmatpush1.msra.mxu0 %v6040
    %6155 = vmatprep.subr.mxu0 0.0
    %6156 = vmatpush1.msra.mxu0 %v6041
    %6157 = vmatprep.subr.mxu0 0.0
    %6158 = vmatpush1.msra.mxu0 %v6042
    %6159 = vmatprep.subr.mxu0 0.0
    %6160 = vmatpush1.msra.mxu0 %v6043
    %6161 = vmatprep.subr.mxu0 0.0
    %6162 = vmatpush1.msra.mxu0 %v6044
    %6163 = vmatprep.subr.mxu0 0.0
    %6164 = vmatpush1.msra.mxu0 %v6045
    %6165 = vmatprep.subr.mxu0 0.0
    %6166 = vmatpush1.msra.mxu0 %v6046
    %6167 = vmatprep.subr.mxu0 0.0
    %6168 = vmatpush1.msra.mxu0 %v6047
    %6169 = vmatprep.subr.mxu0 0.0
    %6170 = vmatpush1.msra.mxu0 %v6048
    %6171 = vmatprep.subr.mxu0 0.0
    %6172 = vmatpush1.msra.mxu0 %v6049
    %6173 = vmatprep.subr.mxu0 0.0
    %6174 = vmatpush1.msra.mxu0 %v6050
    %6175 = vmatprep.subr.mxu0 0.0
    %6176 = vmatpush1.msra.mxu0 %v6051
    %6177 = vmatprep.subr.mxu0 0.0
    %6178 = vmatpush1.msra.mxu0 %v6052
    %6179 = vmatprep.subr.mxu0 0.0
    %6180 = vmatpush1.msra.mxu0 %v6053
    %6181 = vmatprep.subr.mxu0 0.0
    %6182 = vmatpush1.msra.mxu0 %v6054
    %6183 = vmatprep.subr.mxu0 0.0
    %6184 = vmatpush1.msra.mxu0 %v6055
    %6185 = vmatprep.subr.mxu0 0.0
    %6186 = vmatpush1.msra.mxu0 %v6056
    %6187 = vmatprep.subr.mxu0 0.0
    %6188 = vmatpush1.msra.mxu0 %v6057
    %6189 = vmatprep.subr.mxu0 0.0
    %6190 = vmatpush1.msra.mxu0 %v6058
    %6191 = vmatprep.subr.mxu0 0.0
    %6192 = vmatpush1.msra.mxu0 %v6059
    %6193 = vmatprep.subr.mxu0 0.0
    %6194 = vmatpush1.msra.mxu0 %v6060
    %6195 = vmatprep.mubr.f32.mxu0 %v5162
    %6196 = vmatmul.mubr.f32.gmra.mrb[0].mxu0 %v5161
    %v6197 = vpop.f32.mrb[0].mxu0
    %v6198 = vadd.f32 %v6128, %v6197
    %v6199 = vpop.f32.mrb[0].mxu0
    %6200 = vdwg.mxu0
    %v6201 = vadd.f32 %v5995, %v6198
    %s6202 = scalar_lea.vmem [#allocation14], 2560
    %v6203 = vld [vmem:[%s6202] sm:$0xff]
    %v6204 = vld [vmem:[%s6202 + $0x8] sm:$0xff]
    %v6205 = vld [vmem:[%s6202 + $0x10] sm:$0xff]
    %v6206 = vld [vmem:[%s6202 + $0x18] sm:$0xff]
    %v6207 = vld [vmem:[%s6202 + $0x20] sm:$0xff]
    %v6208 = vld [vmem:[%s6202 + $0x28] sm:$0xff]
    %v6209 = vld [vmem:[%s6202 + $0x30] sm:$0xff]
    %v6210 = vld [vmem:[%s6202 + $0x38] sm:$0xff]
    %v6211 = vld [vmem:[%s6202 + $0x40] sm:$0xff]
    %v6212 = vld [vmem:[%s6202 + $0x48] sm:$0xff]
    %v6213 = vld [vmem:[%s6202 + $0x50] sm:$0xff]
    %v6214 = vld [vmem:[%s6202 + $0x58] sm:$0xff]
    %v6215 = vld [vmem:[%s6202 + $0x60] sm:$0xff]
    %v6216 = vld [vmem:[%s6202 + $0x68] sm:$0xff]
    %v6217 = vld [vmem:[%s6202 + $0x70] sm:$0xff]
    %v6218 = vld [vmem:[%s6202 + $0x78] sm:$0xff]
    %v6219 = vld [vmem:[%s6202 + $0x80] sm:$0xff]
    %v6220 = vld [vmem:[%s6202 + $0x88] sm:$0xff]
    %v6221 = vld [vmem:[%s6202 + $0x90] sm:$0xff]
    %v6222 = vld [vmem:[%s6202 + $0x98] sm:$0xff]
    %v6223 = vld [vmem:[%s6202 + $0xa0] sm:$0xff]
    %v6224 = vld [vmem:[%s6202 + $0xa8] sm:$0xff]
    %v6225 = vld [vmem:[%s6202 + $0xb0] sm:$0xff]
    %v6226 = vld [vmem:[%s6202 + $0xb8] sm:$0xff]
    %v6227 = vld [vmem:[%s6202 + $0xc0] sm:$0xff]
    %v6228 = vld [vmem:[%s6202 + $0xc8] sm:$0xff]
    %v6229 = vld [vmem:[%s6202 + $0xd0] sm:$0xff]
    %v6230 = vld [vmem:[%s6202 + $0xd8] sm:$0xff]
    %v6231 = vld [vmem:[%s6202 + $0xe0] sm:$0xff]
    %v6232 = vld [vmem:[%s6202 + $0xe8] sm:$0xff]
    %v6233 = vld [vmem:[%s6202 + $0xf0] sm:$0xff]
    %v6234 = vld [vmem:[%s6202 + $0xf8] sm:$0xff]
    %v6235 = vld [vmem:[%s6202 + $0x100] sm:$0xff]
    %v6236 = vld [vmem:[%s6202 + $0x108] sm:$0xff]
    %v6237 = vld [vmem:[%s6202 + $0x110] sm:$0xff]
    %v6238 = vld [vmem:[%s6202 + $0x118] sm:$0xff]
    %v6239 = vld [vmem:[%s6202 + $0x120] sm:$0xff]
    %v6240 = vld [vmem:[%s6202 + $0x128] sm:$0xff]
    %v6241 = vld [vmem:[%s6202 + $0x130] sm:$0xff]
    %v6242 = vld [vmem:[%s6202 + $0x138] sm:$0xff]
    %v6243 = vld [vmem:[%s6202 + $0x140] sm:$0xff]
    %v6244 = vld [vmem:[%s6202 + $0x148] sm:$0xff]
    %v6245 = vld [vmem:[%s6202 + $0x150] sm:$0xff]
    %v6246 = vld [vmem:[%s6202 + $0x158] sm:$0xff]
    %v6247 = vld [vmem:[%s6202 + $0x160] sm:$0xff]
    %v6248 = vld [vmem:[%s6202 + $0x168] sm:$0xff]
    %v6249 = vld [vmem:[%s6202 + $0x170] sm:$0xff]
    %v6250 = vld [vmem:[%s6202 + $0x178] sm:$0xff]
    %v6251 = vld [vmem:[%s6202 + $0x180] sm:$0xff]
    %v6252 = vld [vmem:[%s6202 + $0x188] sm:$0xff]
    %v6253 = vld [vmem:[%s6202 + $0x190] sm:$0xff]
    %v6254 = vld [vmem:[%s6202 + $0x198] sm:$0xff]
    %v6255 = vld [vmem:[%s6202 + $0x1a0] sm:$0xff]
    %v6256 = vld [vmem:[%s6202 + $0x1a8] sm:$0xff]
    %v6257 = vld [vmem:[%s6202 + $0x1b0] sm:$0xff]
    %v6258 = vld [vmem:[%s6202 + $0x1b8] sm:$0xff]
    %v6259 = vld [vmem:[%s6202 + $0x1c0] sm:$0xff]
    %v6260 = vld [vmem:[%s6202 + $0x1c8] sm:$0xff]
    %v6261 = vld [vmem:[%s6202 + $0x1d0] sm:$0xff]
    %v6262 = vld [vmem:[%s6202 + $0x1d8] sm:$0xff]
    %v6263 = vld [vmem:[%s6202 + $0x1e0] sm:$0xff]
    %v6264 = vld [vmem:[%s6202 + $0x1e8] sm:$0xff]
    %v6265 = vld [vmem:[%s6202 + $0x1f0] sm:$0xff]
    %v6266 = vld [vmem:[%s6202 + $0x1f8] sm:$0xff]
    %6267 = vmatprep.subr.mxu0 0.0
    %6268 = vmatpush1.msra.mxu0 %v6203
    %6269 = vmatprep.subr.mxu0 0.0
    %6270 = vmatpush1.msra.mxu0 %v6204
    %6271 = vmatprep.subr.mxu0 0.0
    %6272 = vmatpush1.msra.mxu0 %v6205
    %6273 = vmatprep.subr.mxu0 0.0
    %6274 = vmatpush1.msra.mxu0 %v6206
    %6275 = vmatprep.subr.mxu0 0.0
    %6276 = vmatpush1.msra.mxu0 %v6207
    %6277 = vmatprep.subr.mxu0 0.0
    %6278 = vmatpush1.msra.mxu0 %v6208
    %6279 = vmatprep.subr.mxu0 0.0
    %6280 = vmatpush1.msra.mxu0 %v6209
    %6281 = vmatprep.subr.mxu0 0.0
    %6282 = vmatpush1.msra.mxu0 %v6210
    %6283 = vmatprep.subr.mxu0 0.0
    %6284 = vmatpush1.msra.mxu0 %v6211
    %6285 = vmatprep.subr.mxu0 0.0
    %6286 = vmatpush1.msra.mxu0 %v6212
    %6287 = vmatprep.subr.mxu0 0.0
    %6288 = vmatpush1.msra.mxu0 %v6213
    %6289 = vmatprep.subr.mxu0 0.0
    %6290 = vmatpush1.msra.mxu0 %v6214
    %6291 = vmatprep.subr.mxu0 0.0
    %6292 = vmatpush1.msra.mxu0 %v6215
    %6293 = vmatprep.subr.mxu0 0.0
    %6294 = vmatpush1.msra.mxu0 %v6216
    %6295 = vmatprep.subr.mxu0 0.0
    %6296 = vmatpush1.msra.mxu0 %v6217
    %6297 = vmatprep.subr.mxu0 0.0
    %6298 = vmatpush1.msra.mxu0 %v6218
    %6299 = vmatprep.subr.mxu0 0.0
    %6300 = vmatpush1.msra.mxu0 %v6219
    %6301 = vmatprep.subr.mxu0 0.0
    %6302 = vmatpush1.msra.mxu0 %v6220
    %6303 = vmatprep.subr.mxu0 0.0
    %6304 = vmatpush1.msra.mxu0 %v6221
    %6305 = vmatprep.subr.mxu0 0.0
    %6306 = vmatpush1.msra.mxu0 %v6222
    %6307 = vmatprep.subr.mxu0 0.0
    %6308 = vmatpush1.msra.mxu0 %v6223
    %6309 = vmatprep.subr.mxu0 0.0
    %6310 = vmatpush1.msra.mxu0 %v6224
    %6311 = vmatprep.subr.mxu0 0.0
    %6312 = vmatpush1.msra.mxu0 %v6225
    %6313 = vmatprep.subr.mxu0 0.0
    %6314 = vmatpush1.msra.mxu0 %v6226
    %6315 = vmatprep.subr.mxu0 0.0
    %6316 = vmatpush1.msra.mxu0 %v6227
    %6317 = vmatprep.subr.mxu0 0.0
    %6318 = vmatpush1.msra.mxu0 %v6228
    %6319 = vmatprep.subr.mxu0 0.0
    %6320 = vmatpush1.msra.mxu0 %v6229
    %6321 = vmatprep.subr.mxu0 0.0
    %6322 = vmatpush1.msra.mxu0 %v6230
    %6323 = vmatprep.subr.mxu0 0.0
    %6324 = vmatpush1.msra.mxu0 %v6231
    %6325 = vmatprep.subr.mxu0 0.0
    %6326 = vmatpush1.msra.mxu0 %v6232
    %6327 = vmatprep.subr.mxu0 0.0
    %6328 = vmatpush1.msra.mxu0 %v6233
    %6329 = vmatprep.subr.mxu0 0.0
    %6330 = vmatpush1.msra.mxu0 %v6234
    %6331 = vmatprep.mubr.f32.mxu0 %v5164
    %6332 = vmatmul.mubr.f32.gmra.mrb[0].mxu0 %v5163
    %v6333 = vpop.f32.mrb[0].mxu0
    %v6334 = vadd.f32 0.0, %v6333
    %v6335 = vpop.f32.mrb[0].mxu0
    %6336 = vdwg.mxu0
    %6337 = vmatprep.subr.mxu0 0.0
    %6338 = vmatpush1.msra.mxu0 %v6235
    %6339 = vmatprep.subr.mxu0 0.0
    %6340 = vmatpush1.msra.mxu0 %v6236
    %6341 = vmatprep.subr.mxu0 0.0
    %6342 = vmatpush1.msra.mxu0 %v6237
    %6343 = vmatprep.subr.mxu0 0.0
    %6344 = vmatpush1.msra.mxu0 %v6238
    %6345 = vmatprep.subr.mxu0 0.0
    %6346 = vmatpush1.msra.mxu0 %v6239
    %6347 = vmatprep.subr.mxu0 0.0
    %6348 = vmatpush1.msra.mxu0 %v6240
    %6349 = vmatprep.subr.mxu0 0.0
    %6350 = vmatpush1.msra.mxu0 %v6241
    %6351 = vmatprep.subr.mxu0 0.0
    %6352 = vmatpush1.msra.mxu0 %v6242
    %6353 = vmatprep.subr.mxu0 0.0
    %6354 = vmatpush1.msra.mxu0 %v6243
    %6355 = vmatprep.subr.mxu0 0.0
    %6356 = vmatpush1.msra.mxu0 %v6244
    %6357 = vmatprep.subr.mxu0 0.0
    %6358 = vmatpush1.msra.mxu0 %v6245
    %6359 = vmatprep.subr.mxu0 0.0
    %6360 = vmatpush1.msra.mxu0 %v6246
    %6361 = vmatprep.subr.mxu0 0.0
    %6362 = vmatpush1.msra.mxu0 %v6247
    %6363 = vmatprep.subr.mxu0 0.0
    %6364 = vmatpush1.msra.mxu0 %v6248
    %6365 = vmatprep.subr.mxu0 0.0
    %6366 = vmatpush1.msra.mxu0 %v6249
    %6367 = vmatprep.subr.mxu0 0.0
    %6368 = vmatpush1.msra.mxu0 %v6250
    %6369 = vmatprep.subr.mxu0 0.0
    %6370 = vmatpush1.msra.mxu0 %v6251
    %6371 = vmatprep.subr.mxu0 0.0
    %6372 = vmatpush1.msra.mxu0 %v6252
    %6373 = vmatprep.subr.mxu0 0.0
    %6374 = vmatpush1.msra.mxu0 %v6253
    %6375 = vmatprep.subr.mxu0 0.0
    %6376 = vmatpush1.msra.mxu0 %v6254
    %6377 = vmatprep.subr.mxu0 0.0
    %6378 = vmatpush1.msra.mxu0 %v6255
    %6379 = vmatprep.subr.mxu0 0.0
    %6380 = vmatpush1.msra.mxu0 %v6256
    %6381 = vmatprep.subr.mxu0 0.0
    %6382 = vmatpush1.msra.mxu0 %v6257
    %6383 = vmatprep.subr.mxu0 0.0
    %6384 = vmatpush1.msra.mxu0 %v6258
    %6385 = vmatprep.subr.mxu0 0.0
    %6386 = vmatpush1.msra.mxu0 %v6259
    %6387 = vmatprep.subr.mxu0 0.0
    %6388 = vmatpush1.msra.mxu0 %v6260
    %6389 = vmatprep.subr.mxu0 0.0
    %6390 = vmatpush1.msra.mxu0 %v6261
    %6391 = vmatprep.subr.mxu0 0.0
    %6392 = vmatpush1.msra.mxu0 %v6262
    %6393 = vmatprep.subr.mxu0 0.0
    %6394 = vmatpush1.msra.mxu0 %v6263
    %6395 = vmatprep.subr.mxu0 0.0
    %6396 = vmatpush1.msra.mxu0 %v6264
    %6397 = vmatprep.subr.mxu0 0.0
    %6398 = vmatpush1.msra.mxu0 %v6265
    %6399 = vmatprep.subr.mxu0 0.0
    %6400 = vmatpush1.msra.mxu0 %v6266
    %6401 = vmatprep.mubr.f32.mxu0 %v5166
    %6402 = vmatmul.mubr.f32.gmra.mrb[0].mxu0 %v5165
    %v6403 = vpop.f32.mrb[0].mxu0
    %v6404 = vadd.f32 %v6334, %v6403
    %v6405 = vpop.f32.mrb[0].mxu0
    %6406 = vdwg.mxu0
    %v6407 = vadd.f32 %v6201, %v6404
    %s6408 = scalar_lea.vmem [#allocation14], 3072
    %v6409 = vld [vmem:[%s6408] sm:$0xff]
    %v6410 = vld [vmem:[%s6408 + $0x8] sm:$0xff]
    %v6411 = vld [vmem:[%s6408 + $0x10] sm:$0xff]
    %v6412 = vld [vmem:[%s6408 + $0x18] sm:$0xff]
    %v6413 = vld [vmem:[%s6408 + $0x20] sm:$0xff]
    %v6414 = vld [vmem:[%s6408 + $0x28] sm:$0xff]
    %v6415 = vld [vmem:[%s6408 + $0x30] sm:$0xff]
    %v6416 = vld [vmem:[%s6408 + $0x38] sm:$0xff]
    %v6417 = vld [vmem:[%s6408 + $0x40] sm:$0xff]
    %v6418 = vld [vmem:[%s6408 + $0x48] sm:$0xff]
    %v6419 = vld [vmem:[%s6408 + $0x50] sm:$0xff]
    %v6420 = vld [vmem:[%s6408 + $0x58] sm:$0xff]
    %v6421 = vld [vmem:[%s6408 + $0x60] sm:$0xff]
    %v6422 = vld [vmem:[%s6408 + $0x68] sm:$0xff]
    %v6423 = vld [vmem:[%s6408 + $0x70] sm:$0xff]
    %v6424 = vld [vmem:[%s6408 + $0x78] sm:$0xff]
    %v6425 = vld [vmem:[%s6408 + $0x80] sm:$0xff]
    %v6426 = vld [vmem:[%s6408 + $0x88] sm:$0xff]
    %v6427 = vld [vmem:[%s6408 + $0x90] sm:$0xff]
    %v6428 = vld [vmem:[%s6408 + $0x98] sm:$0xff]
    %v6429 = vld [vmem:[%s6408 + $0xa0] sm:$0xff]
    %v6430 = vld [vmem:[%s6408 + $0xa8] sm:$0xff]
    %v6431 = vld [vmem:[%s6408 + $0xb0] sm:$0xff]
    %v6432 = vld [vmem:[%s6408 + $0xb8] sm:$0xff]
    %v6433 = vld [vmem:[%s6408 + $0xc0] sm:$0xff]
    %v6434 = vld [vmem:[%s6408 + $0xc8] sm:$0xff]
    %v6435 = vld [vmem:[%s6408 + $0xd0] sm:$0xff]
    %v6436 = vld [vmem:[%s6408 + $0xd8] sm:$0xff]
    %v6437 = vld [vmem:[%s6408 + $0xe0] sm:$0xff]
    %v6438 = vld [vmem:[%s6408 + $0xe8] sm:$0xff]
    %v6439 = vld [vmem:[%s6408 + $0xf0] sm:$0xff]
    %v6440 = vld [vmem:[%s6408 + $0xf8] sm:$0xff]
    %v6441 = vld [vmem:[%s6408 + $0x100] sm:$0xff]
    %v6442 = vld [vmem:[%s6408 + $0x108] sm:$0xff]
    %v6443 = vld [vmem:[%s6408 + $0x110] sm:$0xff]
    %v6444 = vld [vmem:[%s6408 + $0x118] sm:$0xff]
    %v6445 = vld [vmem:[%s6408 + $0x120] sm:$0xff]
    %v6446 = vld [vmem:[%s6408 + $0x128] sm:$0xff]
    %v6447 = vld [vmem:[%s6408 + $0x130] sm:$0xff]
    %v6448 = vld [vmem:[%s6408 + $0x138] sm:$0xff]
    %v6449 = vld [vmem:[%s6408 + $0x140] sm:$0xff]
    %v6450 = vld [vmem:[%s6408 + $0x148] sm:$0xff]
    %v6451 = vld [vmem:[%s6408 + $0x150] sm:$0xff]
    %v6452 = vld [vmem:[%s6408 + $0x158] sm:$0xff]
    %v6453 = vld [vmem:[%s6408 + $0x160] sm:$0xff]
    %v6454 = vld [vmem:[%s6408 + $0x168] sm:$0xff]
    %v6455 = vld [vmem:[%s6408 + $0x170] sm:$0xff]
    %v6456 = vld [vmem:[%s6408 + $0x178] sm:$0xff]
    %v6457 = vld [vmem:[%s6408 + $0x180] sm:$0xff]
    %v6458 = vld [vmem:[%s6408 + $0x188] sm:$0xff]
    %v6459 = vld [vmem:[%s6408 + $0x190] sm:$0xff]
    %v6460 = vld [vmem:[%s6408 + $0x198] sm:$0xff]
    %v6461 = vld [vmem:[%s6408 + $0x1a0] sm:$0xff]
    %v6462 = vld [vmem:[%s6408 + $0x1a8] sm:$0xff]
    %v6463 = vld [vmem:[%s6408 + $0x1b0] sm:$0xff]
    %v6464 = vld [vmem:[%s6408 + $0x1b8] sm:$0xff]
    %v6465 = vld [vmem:[%s6408 + $0x1c0] sm:$0xff]
    %v6466 = vld [vmem:[%s6408 + $0x1c8] sm:$0xff]
    %v6467 = vld [vmem:[%s6408 + $0x1d0] sm:$0xff]
    %v6468 = vld [vmem:[%s6408 + $0x1d8] sm:$0xff]
    %v6469 = vld [vmem:[%s6408 + $0x1e0] sm:$0xff]
    %v6470 = vld [vmem:[%s6408 + $0x1e8] sm:$0xff]
    %v6471 = vld [vmem:[%s6408 + $0x1f0] sm:$0xff]
    %v6472 = vld [vmem:[%s6408 + $0x1f8] sm:$0xff]
    %6473 = vmatprep.subr.mxu0 0.0
    %6474 = vmatpush1.msra.mxu0 %v6409
    %6475 = vmatprep.subr.mxu0 0.0
    %6476 = vmatpush1.msra.mxu0 %v6410
    %6477 = vmatprep.subr.mxu0 0.0
    %6478 = vmatpush1.msra.mxu0 %v6411
    %6479 = vmatprep.subr.mxu0 0.0
    %6480 = vmatpush1.msra.mxu0 %v6412
    %6481 = vmatprep.subr.mxu0 0.0
    %6482 = vmatpush1.msra.mxu0 %v6413
    %6483 = vmatprep.subr.mxu0 0.0
    %6484 = vmatpush1.msra.mxu0 %v6414
    %6485 = vmatprep.subr.mxu0 0.0
    %6486 = vmatpush1.msra.mxu0 %v6415
    %6487 = vmatprep.subr.mxu0 0.0
    %6488 = vmatpush1.msra.mxu0 %v6416
    %6489 = vmatprep.subr.mxu0 0.0
    %6490 = vmatpush1.msra.mxu0 %v6417
    %6491 = vmatprep.subr.mxu0 0.0
    %6492 = vmatpush1.msra.mxu0 %v6418
    %6493 = vmatprep.subr.mxu0 0.0
    %6494 = vmatpush1.msra.mxu0 %v6419
    %6495 = vmatprep.subr.mxu0 0.0
    %6496 = vmatpush1.msra.mxu0 %v6420
    %6497 = vmatprep.subr.mxu0 0.0
    %6498 = vmatpush1.msra.mxu0 %v6421
    %6499 = vmatprep.subr.mxu0 0.0
    %6500 = vmatpush1.msra.mxu0 %v6422
    %6501 = vmatprep.subr.mxu0 0.0
    %6502 = vmatpush1.msra.mxu0 %v6423
    %6503 = vmatprep.subr.mxu0 0.0
    %6504 = vmatpush1.msra.mxu0 %v6424
    %6505 = vmatprep.subr.mxu0 0.0
    %6506 = vmatpush1.msra.mxu0 %v6425
    %6507 = vmatprep.subr.mxu0 0.0
    %6508 = vmatpush1.msra.mxu0 %v6426
    %6509 = vmatprep.subr.mxu0 0.0
    %6510 = vmatpush1.msra.mxu0 %v6427
    %6511 = vmatprep.subr.mxu0 0.0
    %6512 = vmatpush1.msra.mxu0 %v6428
    %6513 = vmatprep.subr.mxu0 0.0
    %6514 = vmatpush1.msra.mxu0 %v6429
    %6515 = vmatprep.subr.mxu0 0.0
    %6516 = vmatpush1.msra.mxu0 %v6430
    %6517 = vmatprep.subr.mxu0 0.0
    %6518 = vmatpush1.msra.mxu0 %v6431
    %6519 = vmatprep.subr.mxu0 0.0
    %6520 = vmatpush1.msra.mxu0 %v6432
    %6521 = vmatprep.subr.mxu0 0.0
    %6522 = vmatpush1.msra.mxu0 %v6433
    %6523 = vmatprep.subr.mxu0 0.0
    %6524 = vmatpush1.msra.mxu0 %v6434
    %6525 = vmatprep.subr.mxu0 0.0
    %6526 = vmatpush1.msra.mxu0 %v6435
    %6527 = vmatprep.subr.mxu0 0.0
    %6528 = vmatpush1.msra.mxu0 %v6436
    %6529 = vmatprep.subr.mxu0 0.0
    %6530 = vmatpush1.msra.mxu0 %v6437
    %6531 = vmatprep.subr.mxu0 0.0
    %6532 = vmatpush1.msra.mxu0 %v6438
    %6533 = vmatprep.subr.mxu0 0.0
    %6534 = vmatpush1.msra.mxu0 %v6439
    %6535 = vmatprep.subr.mxu0 0.0
    %6536 = vmatpush1.msra.mxu0 %v6440
    %6537 = vmatprep.mubr.f32.mxu0 %v5168
    %6538 = vmatmul.mubr.f32.gmra.mrb[0].mxu0 %v5167
    %v6539 = vpop.f32.mrb[0].mxu0
    %v6540 = vadd.f32 0.0, %v6539
    %v6541 = vpop.f32.mrb[0].mxu0
    %6542 = vdwg.mxu0
    %6543 = vmatprep.subr.mxu0 0.0
    %6544 = vmatpush1.msra.mxu0 %v6441
    %6545 = vmatprep.subr.mxu0 0.0
    %6546 = vmatpush1.msra.mxu0 %v6442
    %6547 = vmatprep.subr.mxu0 0.0
    %6548 = vmatpush1.msra.mxu0 %v6443
    %6549 = vmatprep.subr.mxu0 0.0
    %6550 = vmatpush1.msra.mxu0 %v6444
    %6551 = vmatprep.subr.mxu0 0.0
    %6552 = vmatpush1.msra.mxu0 %v6445
    %6553 = vmatprep.subr.mxu0 0.0
    %6554 = vmatpush1.msra.mxu0 %v6446
    %6555 = vmatprep.subr.mxu0 0.0
    %6556 = vmatpush1.msra.mxu0 %v6447
    %6557 = vmatprep.subr.mxu0 0.0
    %6558 = vmatpush1.msra.mxu0 %v6448
    %6559 = vmatprep.subr.mxu0 0.0
    %6560 = vmatpush1.msra.mxu0 %v6449
    %6561 = vmatprep.subr.mxu0 0.0
    %6562 = vmatpush1.msra.mxu0 %v6450
    %6563 = vmatprep.subr.mxu0 0.0
    %6564 = vmatpush1.msra.mxu0 %v6451
    %6565 = vmatprep.subr.mxu0 0.0
    %6566 = vmatpush1.msra.mxu0 %v6452
    %6567 = vmatprep.subr.mxu0 0.0
    %6568 = vmatpush1.msra.mxu0 %v6453
    %6569 = vmatprep.subr.mxu0 0.0
    %6570 = vmatpush1.msra.mxu0 %v6454
    %6571 = vmatprep.subr.mxu0 0.0
    %6572 = vmatpush1.msra.mxu0 %v6455
    %6573 = vmatprep.subr.mxu0 0.0
    %6574 = vmatpush1.msra.mxu0 %v6456
    %6575 = vmatprep.subr.mxu0 0.0
    %6576 = vmatpush1.msra.mxu0 %v6457
    %6577 = vmatprep.subr.mxu0 0.0
    %6578 = vmatpush1.msra.mxu0 %v6458
    %6579 = vmatprep.subr.mxu0 0.0
    %6580 = vmatpush1.msra.mxu0 %v6459
    %6581 = vmatprep.subr.mxu0 0.0
    %6582 = vmatpush1.msra.mxu0 %v6460
    %6583 = vmatprep.subr.mxu0 0.0
    %6584 = vmatpush1.msra.mxu0 %v6461
    %6585 = vmatprep.subr.mxu0 0.0
    %6586 = vmatpush1.msra.mxu0 %v6462
    %6587 = vmatprep.subr.mxu0 0.0
    %6588 = vmatpush1.msra.mxu0 %v6463
    %6589 = vmatprep.subr.mxu0 0.0
    %6590 = vmatpush1.msra.mxu0 %v6464
    %6591 = vmatprep.subr.mxu0 0.0
    %6592 = vmatpush1.msra.mxu0 %v6465
    %6593 = vmatprep.subr.mxu0 0.0
    %6594 = vmatpush1.msra.mxu0 %v6466
    %6595 = vmatprep.subr.mxu0 0.0
    %6596 = vmatpush1.msra.mxu0 %v6467
    %6597 = vmatprep.subr.mxu0 0.0
    %6598 = vmatpush1.msra.mxu0 %v6468
    %6599 = vmatprep.subr.mxu0 0.0
    %6600 = vmatpush1.msra.mxu0 %v6469
    %6601 = vmatprep.subr.mxu0 0.0
    %6602 = vmatpush1.msra.mxu0 %v6470
    %6603 = vmatprep.subr.mxu0 0.0
    %6604 = vmatpush1.msra.mxu0 %v6471
    %6605 = vmatprep.subr.mxu0 0.0
    %6606 = vmatpush1.msra.mxu0 %v6472
    %6607 = vmatprep.mubr.f32.mxu0 %v5170
    %6608 = vmatmul.mubr.f32.gmra.mrb[0].mxu0 %v5169
    %v6609 = vpop.f32.mrb[0].mxu0
    %v6610 = vadd.f32 %v6540, %v6609
    %v6611 = vpop.f32.mrb[0].mxu0
    %6612 = vdwg.mxu0
    %v6613 = vadd.f32 %v6407, %v6610
    %s6614 = scalar_lea.vmem [#allocation14], 3584
    %v6615 = vld [vmem:[%s6614] sm:$0xff]
    %v6616 = vld [vmem:[%s6614 + $0x8] sm:$0xff]
    %v6617 = vld [vmem:[%s6614 + $0x10] sm:$0xff]
    %v6618 = vld [vmem:[%s6614 + $0x18] sm:$0xff]
    %v6619 = vld [vmem:[%s6614 + $0x20] sm:$0xff]
    %v6620 = vld [vmem:[%s6614 + $0x28] sm:$0xff]
    %v6621 = vld [vmem:[%s6614 + $0x30] sm:$0xff]
    %v6622 = vld [vmem:[%s6614 + $0x38] sm:$0xff]
    %v6623 = vld [vmem:[%s6614 + $0x40] sm:$0xff]
    %v6624 = vld [vmem:[%s6614 + $0x48] sm:$0xff]
    %v6625 = vld [vmem:[%s6614 + $0x50] sm:$0xff]
    %v6626 = vld [vmem:[%s6614 + $0x58] sm:$0xff]
    %v6627 = vld [vmem:[%s6614 + $0x60] sm:$0xff]
    %v6628 = vld [vmem:[%s6614 + $0x68] sm:$0xff]
    %v6629 = vld [vmem:[%s6614 + $0x70] sm:$0xff]
    %v6630 = vld [vmem:[%s6614 + $0x78] sm:$0xff]
    %v6631 = vld [vmem:[%s6614 + $0x80] sm:$0xff]
    %v6632 = vld [vmem:[%s6614 + $0x88] sm:$0xff]
    %v6633 = vld [vmem:[%s6614 + $0x90] sm:$0xff]
    %v6634 = vld [vmem:[%s6614 + $0x98] sm:$0xff]
    %v6635 = vld [vmem:[%s6614 + $0xa0] sm:$0xff]
    %v6636 = vld [vmem:[%s6614 + $0xa8] sm:$0xff]
    %v6637 = vld [vmem:[%s6614 + $0xb0] sm:$0xff]
    %v6638 = vld [vmem:[%s6614 + $0xb8] sm:$0xff]
    %v6639 = vld [vmem:[%s6614 + $0xc0] sm:$0xff]
    %v6640 = vld [vmem:[%s6614 + $0xc8] sm:$0xff]
    %v6641 = vld [vmem:[%s6614 + $0xd0] sm:$0xff]
    %v6642 = vld [vmem:[%s6614 + $0xd8] sm:$0xff]
    %v6643 = vld [vmem:[%s6614 + $0xe0] sm:$0xff]
    %v6644 = vld [vmem:[%s6614 + $0xe8] sm:$0xff]
    %v6645 = vld [vmem:[%s6614 + $0xf0] sm:$0xff]
    %v6646 = vld [vmem:[%s6614 + $0xf8] sm:$0xff]
    %v6647 = vld [vmem:[%s6614 + $0x100] sm:$0xff]
    %v6648 = vld [vmem:[%s6614 + $0x108] sm:$0xff]
    %v6649 = vld [vmem:[%s6614 + $0x110] sm:$0xff]
    %v6650 = vld [vmem:[%s6614 + $0x118] sm:$0xff]
    %v6651 = vld [vmem:[%s6614 + $0x120] sm:$0xff]
    %v6652 = vld [vmem:[%s6614 + $0x128] sm:$0xff]
    %v6653 = vld [vmem:[%s6614 + $0x130] sm:$0xff]
    %v6654 = vld [vmem:[%s6614 + $0x138] sm:$0xff]
    %v6655 = vld [vmem:[%s6614 + $0x140] sm:$0xff]
    %v6656 = vld [vmem:[%s6614 + $0x148] sm:$0xff]
    %v6657 = vld [vmem:[%s6614 + $0x150] sm:$0xff]
    %v6658 = vld [vmem:[%s6614 + $0x158] sm:$0xff]
    %v6659 = vld [vmem:[%s6614 + $0x160] sm:$0xff]
    %v6660 = vld [vmem:[%s6614 + $0x168] sm:$0xff]
    %v6661 = vld [vmem:[%s6614 + $0x170] sm:$0xff]
    %v6662 = vld [vmem:[%s6614 + $0x178] sm:$0xff]
    %v6663 = vld [vmem:[%s6614 + $0x180] sm:$0xff]
    %v6664 = vld [vmem:[%s6614 + $0x188] sm:$0xff]
    %v6665 = vld [vmem:[%s6614 + $0x190] sm:$0xff]
    %v6666 = vld [vmem:[%s6614 + $0x198] sm:$0xff]
    %v6667 = vld [vmem:[%s6614 + $0x1a0] sm:$0xff]
    %v6668 = vld [vmem:[%s6614 + $0x1a8] sm:$0xff]
    %v6669 = vld [vmem:[%s6614 + $0x1b0] sm:$0xff]
    %v6670 = vld [vmem:[%s6614 + $0x1b8] sm:$0xff]
    %v6671 = vld [vmem:[%s6614 + $0x1c0] sm:$0xff]
    %v6672 = vld [vmem:[%s6614 + $0x1c8] sm:$0xff]
    %v6673 = vld [vmem:[%s6614 + $0x1d0] sm:$0xff]
    %v6674 = vld [vmem:[%s6614 + $0x1d8] sm:$0xff]
    %v6675 = vld [vmem:[%s6614 + $0x1e0] sm:$0xff]
    %v6676 = vld [vmem:[%s6614 + $0x1e8] sm:$0xff]
    %v6677 = vld [vmem:[%s6614 + $0x1f0] sm:$0xff]
    %v6678 = vld [vmem:[%s6614 + $0x1f8] sm:$0xff]
    %6679 = vmatprep.subr.mxu0 0.0
    %6680 = vmatpush1.msra.mxu0 %v6615
    %6681 = vmatprep.subr.mxu0 0.0
    %6682 = vmatpush1.msra.mxu0 %v6616
    %6683 = vmatprep.subr.mxu0 0.0
    %6684 = vmatpush1.msra.mxu0 %v6617
    %6685 = vmatprep.subr.mxu0 0.0
    %6686 = vmatpush1.msra.mxu0 %v6618
    %6687 = vmatprep.subr.mxu0 0.0
    %6688 = vmatpush1.msra.mxu0 %v6619
    %6689 = vmatprep.subr.mxu0 0.0
    %6690 = vmatpush1.msra.mxu0 %v6620
    %6691 = vmatprep.subr.mxu0 0.0
    %6692 = vmatpush1.msra.mxu0 %v6621
    %6693 = vmatprep.subr.mxu0 0.0
    %6694 = vmatpush1.msra.mxu0 %v6622
    %6695 = vmatprep.subr.mxu0 0.0
    %6696 = vmatpush1.msra.mxu0 %v6623
    %6697 = vmatprep.subr.mxu0 0.0
    %6698 = vmatpush1.msra.mxu0 %v6624
    %6699 = vmatprep.subr.mxu0 0.0
    %6700 = vmatpush1.msra.mxu0 %v6625
    %6701 = vmatprep.subr.mxu0 0.0
    %6702 = vmatpush1.msra.mxu0 %v6626
    %6703 = vmatprep.subr.mxu0 0.0
    %6704 = vmatpush1.msra.mxu0 %v6627
    %6705 = vmatprep.subr.mxu0 0.0
    %6706 = vmatpush1.msra.mxu0 %v6628
    %6707 = vmatprep.subr.mxu0 0.0
    %6708 = vmatpush1.msra.mxu0 %v6629
    %6709 = vmatprep.subr.mxu0 0.0
    %6710 = vmatpush1.msra.mxu0 %v6630
    %6711 = vmatprep.subr.mxu0 0.0
    %6712 = vmatpush1.msra.mxu0 %v6631
    %6713 = vmatprep.subr.mxu0 0.0
    %6714 = vmatpush1.msra.mxu0 %v6632
    %6715 = vmatprep.subr.mxu0 0.0
    %6716 = vmatpush1.msra.mxu0 %v6633
    %6717 = vmatprep.subr.mxu0 0.0
    %6718 = vmatpush1.msra.mxu0 %v6634
    %6719 = vmatprep.subr.mxu0 0.0
    %6720 = vmatpush1.msra.mxu0 %v6635
    %6721 = vmatprep.subr.mxu0 0.0
    %6722 = vmatpush1.msra.mxu0 %v6636
    %6723 = vmatprep.subr.mxu0 0.0
    %6724 = vmatpush1.msra.mxu0 %v6637
    %6725 = vmatprep.subr.mxu0 0.0
    %6726 = vmatpush1.msra.mxu0 %v6638
    %6727 = vmatprep.subr.mxu0 0.0
    %6728 = vmatpush1.msra.mxu0 %v6639
    %6729 = vmatprep.subr.mxu0 0.0
    %6730 = vmatpush1.msra.mxu0 %v6640
    %6731 = vmatprep.subr.mxu0 0.0
    %6732 = vmatpush1.msra.mxu0 %v6641
    %6733 = vmatprep.subr.mxu0 0.0
    %6734 = vmatpush1.msra.mxu0 %v6642
    %6735 = vmatprep.subr.mxu0 0.0
    %6736 = vmatpush1.msra.mxu0 %v6643
    %6737 = vmatprep.subr.mxu0 0.0
    %6738 = vmatpush1.msra.mxu0 %v6644
    %6739 = vmatprep.subr.mxu0 0.0
    %6740 = vmatpush1.msra.mxu0 %v6645
    %6741 = vmatprep.subr.mxu0 0.0
    %6742 = vmatpush1.msra.mxu0 %v6646
    %6743 = vmatprep.mubr.f32.mxu0 %v5172
    %6744 = vmatmul.mubr.f32.gmra.mrb[0].mxu0 %v5171
    %v6745 = vpop.f32.mrb[0].mxu0
    %v6746 = vadd.f32 0.0, %v6745
    %v6747 = vpop.f32.mrb[0].mxu0
    %6748 = vdwg.mxu0
    %6749 = vmatprep.subr.mxu0 0.0
    %6750 = vmatpush1.msra.mxu0 %v6647
    %6751 = vmatprep.subr.mxu0 0.0
    %6752 = vmatpush1.msra.mxu0 %v6648
    %6753 = vmatprep.subr.mxu0 0.0
    %6754 = vmatpush1.msra.mxu0 %v6649
    %6755 = vmatprep.subr.mxu0 0.0
    %6756 = vmatpush1.msra.mxu0 %v6650
    %6757 = vmatprep.subr.mxu0 0.0
    %6758 = vmatpush1.msra.mxu0 %v6651
    %6759 = vmatprep.subr.mxu0 0.0
    %6760 = vmatpush1.msra.mxu0 %v6652
    %6761 = vmatprep.subr.mxu0 0.0
    %6762 = vmatpush1.msra.mxu0 %v6653
    %6763 = vmatprep.subr.mxu0 0.0
    %6764 = vmatpush1.msra.mxu0 %v6654
    %6765 = vmatprep.subr.mxu0 0.0
    %6766 = vmatpush1.msra.mxu0 %v6655
    %6767 = vmatprep.subr.mxu0 0.0
    %6768 = vmatpush1.msra.mxu0 %v6656
    %6769 = vmatprep.subr.mxu0 0.0
    %6770 = vmatpush1.msra.mxu0 %v6657
    %6771 = vmatprep.subr.mxu0 0.0
    %6772 = vmatpush1.msra.mxu0 %v6658
    %6773 = vmatprep.subr.mxu0 0.0
    %6774 = vmatpush1.msra.mxu0 %v6659
    %6775 = vmatprep.subr.mxu0 0.0
    %6776 = vmatpush1.msra.mxu0 %v6660
    %6777 = vmatprep.subr.mxu0 0.0
    %6778 = vmatpush1.msra.mxu0 %v6661
    %6779 = vmatprep.subr.mxu0 0.0
    %6780 = vmatpush1.msra.mxu0 %v6662
    %6781 = vmatprep.subr.mxu0 0.0
    %6782 = vmatpush1.msra.mxu0 %v6663
    %6783 = vmatprep.subr.mxu0 0.0
    %6784 = vmatpush1.msra.mxu0 %v6664
    %6785 = vmatprep.subr.mxu0 0.0
    %6786 = vmatpush1.msra.mxu0 %v6665
    %6787 = vmatprep.subr.mxu0 0.0
    %6788 = vmatpush1.msra.mxu0 %v6666
    %6789 = vmatprep.subr.mxu0 0.0
    %6790 = vmatpush1.msra.mxu0 %v6667
    %6791 = vmatprep.subr.mxu0 0.0
    %6792 = vmatpush1.msra.mxu0 %v6668
    %6793 = vmatprep.subr.mxu0 0.0
    %6794 = vmatpush1.msra.mxu0 %v6669
    %6795 = vmatprep.subr.mxu0 0.0
    %6796 = vmatpush1.msra.mxu0 %v6670
    %6797 = vmatprep.subr.mxu0 0.0
    %6798 = vmatpush1.msra.mxu0 %v6671
    %6799 = vmatprep.subr.mxu0 0.0
    %6800 = vmatpush1.msra.mxu0 %v6672
    %6801 = vmatprep.subr.mxu0 0.0
    %6802 = vmatpush1.msra.mxu0 %v6673
    %6803 = vmatprep.subr.mxu0 0.0
    %6804 = vmatpush1.msra.mxu0 %v6674
    %6805 = vmatprep.subr.mxu0 0.0
    %6806 = vmatpush1.msra.mxu0 %v6675
    %6807 = vmatprep.subr.mxu0 0.0
    %6808 = vmatpush1.msra.mxu0 %v6676
    %6809 = vmatprep.subr.mxu0 0.0
    %6810 = vmatpush1.msra.mxu0 %v6677
    %6811 = vmatprep.subr.mxu0 0.0
    %6812 = vmatpush1.msra.mxu0 %v6678
    %6813 = vmatprep.mubr.f32.mxu0 %v5174
    %6814 = vmatmul.mubr.f32.gmra.mrb[0].mxu0 %v5173
    %v6815 = vpop.f32.mrb[0].mxu0
    %v6816 = vadd.f32 %v6746, %v6815
    %v6817 = vpop.f32.mrb[0].mxu0
    %6818 = vdwg.mxu0
    %v6819 = vadd.f32 %v6613, %v6816
    %v6820 = vld [vmem:[#allocation15] sm:$0x1]
    %v6822 = vlaneseq
    %v6823 = vshrl.u32 %v6822, 7
    %v6824 = vsub.s32 0, %v6823
    %v6825 = vrot.slane %v6820, %v6824
    %v6827 = vadd.f32 %v6819, %v6825
    %v6828 = vmax.f32 %v6827, 0.0
    %v6829 = vld [vmem:[%s9] sm:$0xff]
    %v6830 = vld [vmem:[%s9 + $0x8] sm:$0xff]
    %v6831 = vld [vmem:[%s9 + $0x10] sm:$0xff]
    %v6832 = vld [vmem:[%s9 + $0x18] sm:$0xff]
    %v6833 = vld [vmem:[%s9 + $0x20] sm:$0xff]
    %v6834 = vld [vmem:[%s9 + $0x28] sm:$0xff]
    %v6835 = vld [vmem:[%s9 + $0x30] sm:$0xff]
    %v6836 = vld [vmem:[%s9 + $0x38] sm:$0xff]
    %v6837 = vld [vmem:[%s9 + $0x40] sm:$0xff]
    %v6838 = vld [vmem:[%s9 + $0x48] sm:$0xff]
    %v6839 = vld [vmem:[%s9 + $0x50] sm:$0xff]
    %v6840 = vld [vmem:[%s9 + $0x58] sm:$0xff]
    %v6841 = vld [vmem:[%s9 + $0x60] sm:$0xff]
    %v6842 = vld [vmem:[%s9 + $0x68] sm:$0xff]
    %v6843 = vld [vmem:[%s9 + $0x70] sm:$0xff]
    %v6844 = vld [vmem:[%s9 + $0x78] sm:$0xff]
    %v6845 = vld [vmem:[#allocation17] sm:$0x1]
    %v6847 = vlaneseq
    %v6848 = vshrl.u32 %v6847, 7
    %v6849 = vsub.s32 0, %v6848
    %v6850 = vrot.slane %v6845, %v6849
    %6852 = vmatprep.subr.mxu0 0.0
    %6853 = vmatpush1.msra.mxu0 %v6829
    %6854 = vmatprep.subr.mxu0 0.0
    %6855 = vmatpush1.msra.mxu0 %v6830
    %6856 = vmatprep.subr.mxu0 0.0
    %6857 = vmatpush1.msra.mxu0 %v6831
    %6858 = vmatprep.subr.mxu0 0.0
    %6859 = vmatpush1.msra.mxu0 %v6832
    %6860 = vmatprep.subr.mxu0 0.0
    %6861 = vmatpush1.msra.mxu0 %v6833
    %6862 = vmatprep.subr.mxu0 0.0
    %6863 = vmatpush1.msra.mxu0 %v6834
    %6864 = vmatprep.subr.mxu0 0.0
    %6865 = vmatpush1.msra.mxu0 %v6835
    %6866 = vmatprep.subr.mxu0 0.0
    %6867 = vmatpush1.msra.mxu0 %v6836
    %6868 = vmatprep.subr.mxu0 0.0
    %6869 = vmatpush1.msra.mxu0 %v6837
    %6870 = vmatprep.subr.mxu0 0.0
    %6871 = vmatpush1.msra.mxu0 %v6838
    %6872 = vmatprep.subr.mxu0 0.0
    %6873 = vmatpush1.msra.mxu0 %v6839
    %6874 = vmatprep.subr.mxu0 0.0
    %6875 = vmatpush1.msra.mxu0 %v6840
    %6876 = vmatprep.subr.mxu0 0.0
    %6877 = vmatpush1.msra.mxu0 %v6841
    %6878 = vmatprep.subr.mxu0 0.0
    %6879 = vmatpush1.msra.mxu0 %v6842
    %6880 = vmatprep.subr.mxu0 0.0
    %6881 = vmatpush1.msra.mxu0 %v6843
    %6882 = vmatprep.subr.mxu0 0.0
    %6883 = vmatpush1.msra.mxu0 %v6844
    %6884 = vmatprep.subr.mxu0 0.0
    %6885 = vmatpush1.msra.mxu0 0.0
    %6886 = vmatprep.subr.mxu0 0.0
    %6887 = vmatpush1.msra.mxu0 0.0
    %6888 = vmatprep.subr.mxu0 0.0
    %6889 = vmatpush1.msra.mxu0 0.0
    %6890 = vmatprep.subr.mxu0 0.0
    %6891 = vmatpush1.msra.mxu0 0.0
    %6892 = vmatprep.subr.mxu0 0.0
    %6893 = vmatpush1.msra.mxu0 0.0
    %6894 = vmatprep.subr.mxu0 0.0
    %6895 = vmatpush1.msra.mxu0 0.0
    %6896 = vmatprep.subr.mxu0 0.0
    %6897 = vmatpush1.msra.mxu0 0.0
    %6898 = vmatprep.subr.mxu0 0.0
    %6899 = vmatpush1.msra.mxu0 0.0
    %6900 = vmatprep.subr.mxu0 0.0
    %6901 = vmatpush1.msra.mxu0 0.0
    %6902 = vmatprep.subr.mxu0 0.0
    %6903 = vmatpush1.msra.mxu0 0.0
    %6904 = vmatprep.subr.mxu0 0.0
    %6905 = vmatpush1.msra.mxu0 0.0
    %6906 = vmatprep.subr.mxu0 0.0
    %6907 = vmatpush1.msra.mxu0 0.0
    %6908 = vmatprep.subr.mxu0 0.0
    %6909 = vmatpush1.msra.mxu0 0.0
    %6910 = vmatprep.subr.mxu0 0.0
    %6911 = vmatpush1.msra.mxu0 0.0
    %6912 = vmatprep.subr.mxu0 0.0
    %6913 = vmatpush1.msra.mxu0 0.0
    %6914 = vmatprep.subr.mxu0 0.0
    %6915 = vmatpush1.msra.mxu0 0.0
    %6916 = vmatprep.mubr.f32.mxu0 0.0
    %6917 = vmatmul.mubr.f32.gmra.mrb[0].mxu0 %v6828
    %v6918 = vpop.f32.mrb[0].mxu0
    %v6919 = vadd.f32 %v6850, %v6918
    %v6920 = vpop.f32.mrb[0].mxu0
    %6921 = vdwg.mxu0
    %vm6922 = vcmask 80896
    %6923 = vst.msk [vmem:[%s11] sm:$0xff] %vm6922, %v6919
    // Predicated region
    $region82: #{simple_cnn_forward.1} parent=1 // pred_check
      _
    $region83: #{simple_cnn_forward.1} parent=1 // pred_check_branch
      %6925 = sbr.rel (0) target = $region85
    $region84: #{simple_cnn_forward.1} parent=1 // pred_region
      _
    $region85: #{simple_cnn_forward.1} parent=1 // pred_fallthru
      _
    // Predicated region
    $region86: #{simple_cnn_forward.1} parent=1 // pred_check
      _
    $region87: #{simple_cnn_forward.1} parent=1 // pred_check_branch
      %6927 = sbr.rel (0) target = $region89
    $region88: #{simple_cnn_forward.1} parent=1 // pred_region
      _
    $region89: #{simple_cnn_forward.1} parent=1 // pred_fallthru
      _
    %6928 = vsyncpa [#allocation5], 1
    %6929 = vsyncpa [#allocation7], 1
    %6930 = vsyncpa [#allocation10], 1
    %6931 = vsyncpa [#allocation13], 1
    %6932 = vsyncpa [#allocation16], 1

</llo_original>
